<compile_context>
chip_gen: v6e
topology: v6e:2x2x1
jax: 0.10.0
libtpu: 0.0.40
codegen_flags: <defaults>
</compile_context>

<pallas_src>
import functools

import jax
import jax.numpy as jnp
from jax import lax
from jax.experimental import pallas as pl
from jax.experimental.pallas import tpu as pltpu


# ------------------------------------------------------------------ kernel --

def _fused_refconv_kernel(*args, BT, H, W, R, F, layer_dims):
    """Whole RefConv forward for one batch tile of BT elements.

    args = (o_ref, o2_ref, refs_ref, [other_ref,] w0, b0, w1, b1, ...,
            out_ref, pad_ref)
      o_ref/o2_ref : (BT, HW, C)
      refs_ref     : (BT, C, R)
      other_ref    : (BT, 1, F)                     (only if F > 0)
      w_i          : (9, cin_i, cout_i)             conv weight, HWIO flattened
      b_i          : (1, cout_i)
      out_ref      : (BT, C, out_dim)
      pad_ref      : (H+2, W+2, cin_max) VMEM scratch (zero-padded conv input)
    """
    n_layers = len(layer_dims)
    it = iter(args)
    o_ref = next(it)
    o2_ref = next(it)
    refs_ref = next(it)
    other_ref = next(it) if F > 0 else None
    wb_refs = [(next(it), next(it)) for _ in range(n_layers)]
    out_ref = next(it)
    pad_ref = next(it)

    HW = H * W

    # Zero the padded scratch once per grid step.  The border is never
    # written below, so SAME zero-padding holds for every batch element and
    # layer processed in this step.  (Do NOT guard with program_id==0: under
    # megacore "parallel" sharding a second TensorCore never runs step 0.)
    pad_ref[...] = jnp.zeros(pad_ref.shape, jnp.float32)

    # Statically unrolled loop over the local batch tile.
    for j in range(BT):
        o = o_ref[j]          # (HW, C)
        o2 = o2_ref[j]        # (HW, C)
        refs = refs_ref[j]    # (C, R)

        # --- projection, written straight into the padded interior at the
        #     correct channel offsets (no lane concat) ----------------------
        fea_o = jnp.dot(o, refs, preferred_element_type=jnp.float32)   # (HW,R)
        fea_o2 = jnp.dot(o2, refs, preferred_element_type=jnp.float32)
        pad_ref[1:H + 1, 1:W + 1, 0:R] = fea_o.reshape(H, W, R)
        pad_ref[1:H + 1, 1:W + 1, R:2 * R] = fea_o2.reshape(H, W, R)
        if F > 0:
            other = other_ref[j].reshape(1, 1, F)
            pad_ref[1:H + 1, 1:W + 1, 2 * R:2 * R + F] = jnp.broadcast_to(
                other, (H, W, F))

        # --- conv stack: 3x3 / stride 1 / SAME padding.  Nine accumulated
        #     K = cin matmuls per layer (no im2col concat); border stays 0 ---
        x = None
        for i, (cin, cout) in enumerate(layer_dims):
            w_ref, b_ref = wb_refs[i]
            if i > 0:
                pad_ref[1:H + 1, 1:W + 1, 0:cin] = x.reshape(H, W, cin)
            acc = jnp.zeros((HW, cout), jnp.float32)
            for dh in range(3):                 # statically unrolled 3x3 taps
                for dw in range(3):
                    patch = pad_ref[dh:dh + H, dw:dw + W, 0:cin].reshape(HW,
                                                                         cin)
                    acc = acc + jnp.dot(patch, w_ref[dh * 3 + dw],
                                        preferred_element_type=jnp.float32)
            x = acc + b_ref[...]
            if i < n_layers - 1:
                x = jnp.maximum(x, 0.0)         # ReLU

        fea = x                                  # (HW, out_dim)

        # --- back-projection + normalization --------------------------------
        # Denominators via column reduction (XLU), 1/d folded into o/o2, then
        # a single merged matmul for n1/d1 + n2/d2.  Exact f32 divides.
        inv_d1 = 1.0 / jnp.maximum(jnp.sum(o, axis=0, keepdims=True), 1.0)
        inv_d2 = 1.0 / jnp.maximum(jnp.sum(o2, axis=0, keepdims=True), 1.0)
        combined = o * inv_d1 + o2 * inv_d2                         # (HW, C)
        dn = (((0,), (0,)), ((), ()))                               # over HW
        out_ref[j] = lax.dot_general(combined, fea, dn,
                                     preferred_element_type=jnp.float32)


# ------------------------------------------------------------------ wrapper --

def _batch_spec(shape, bt):
    nd = len(shape)
    return pl.BlockSpec((bt,) + tuple(shape[1:]),
                        lambda b, _nd=nd: (b,) + (0,) * (_nd - 1))


def _const_spec(shape):
    nd = len(shape)
    return pl.BlockSpec(tuple(shape), lambda b, _nd=nd: (0,) * _nd)


def _choose_btile(B, target=8):
    """Largest divisor of B <= target; keep >= 2 grid steps (for v7x's two
    TensorCores) when that does not shrink the tile below 4."""
    divs = [d for d in range(1, B + 1) if B % d == 0 and d <= target]
    best = max(divs)
    multi = [d for d in divs if B // d >= 2]
    if multi and max(multi) >= 4:
        best = max(multi)
    return best


def refconv_forward(o, o2, refs, other_fea, conv_weights, conv_biases,
                    *, btile=None):
    B, H, W, C = o.shape
    HW = H * W
    R = refs.shape[-1]
    F = 0 if other_fea is None else other_fea.shape[-1]

    layer_dims = []
    cin = 2 * R + F
    for w in conv_weights:
        cout = w.shape[-1]
        layer_dims.append((cin, cout))
        cin = cout
    out_dim = layer_dims[-1][1]
    cmax = max(d[0] for d in layer_dims)

    if btile is None:
        btile = _choose_btile(B)
    assert B % btile == 0, (B, btile)
    grid = (B // btile,)

    o3 = o.reshape(B, HW, C)
    o23 = o2.reshape(B, HW, C)

    inputs = [o3, o23, refs]
    in_specs = [_batch_spec(o3.shape, btile),
                _batch_spec(o23.shape, btile),
                _batch_spec(refs.shape, btile)]
    if F > 0:
        other3 = other_fea.reshape(B, 1, F)
        inputs.append(other3)
        in_specs.append(_batch_spec(other3.shape, btile))
    for w, b, (ci, co) in zip(conv_weights, conv_biases, layer_dims):
        w9 = w.reshape(9, ci, co)            # HWIO (3,3,ci,co) -> (9, ci, co)
        b2 = b.reshape(1, co)
        inputs += [w9, b2]
        in_specs += [_const_spec(w9.shape), _const_spec(b2.shape)]

    kernel = functools.partial(_fused_refconv_kernel, BT=btile, H=H, W=W,
                               R=R, F=F, layer_dims=tuple(layer_dims))

    return pl.pallas_call(
        kernel,
        out_shape=jax.ShapeDtypeStruct((B, C, out_dim), jnp.float32),
        grid=grid,
        in_specs=in_specs,
        out_specs=_batch_spec((B, C, out_dim), btile),
        scratch_shapes=[pltpu.VMEM((H + 2, W + 2, cmax), jnp.float32)],
        compiler_params=pltpu.CompilerParams(
            dimension_semantics=("parallel",),
            vmem_limit_bytes=32 * 1024 * 1024),
    )(*inputs)


# --------------------------------------------------------- pure-JAX reference

def refconv_reference(o, o2, refs, other_fea, conv_weights, conv_biases):
    B, H, W, C = o.shape
    HW = H * W
    fea_o = jnp.einsum('bsc,bcr->bsr', o.reshape(B, HW, C), refs
                       ).reshape(B, H, W, -1)
    fea_o2 = jnp.einsum('bsc,bcr->bsr', o2.reshape(B, HW, C), refs
                        ).reshape(B, H, W, -1)
    other_b = jnp.broadcast_to(other_fea[:, None, None, :],
                               (B, H, W, other_fea.shape[-1]))
    x = jnp.concatenate([fea_o, fea_o2, other_b], axis=-1)
    n = len(conv_weights)
    for i, (w, bias) in enumerate(zip(conv_weights, conv_biases)):
        x = lax.conv_general_dilated(
            x, w, window_strides=(1, 1), padding='SAME',
            dimension_numbers=('NHWC', 'HWIO', 'NHWC')) + bias
        if i < n - 1:
            x = jax.nn.relu(x)
    out_fea = x.reshape(B, HW, -1)
    ot = jnp.swapaxes(o.reshape(B, HW, C), 1, 2)
    o2t = jnp.swapaxes(o2.reshape(B, HW, C), 1, 2)
    d1 = jnp.maximum(jnp.sum(ot, axis=-1, keepdims=True), 1.0)
    d2 = jnp.maximum(jnp.sum(o2t, axis=-1, keepdims=True), 1.0)
    return (jnp.einsum('bcs,bso->bco', ot, out_fea) / d1
            + jnp.einsum('bcs,bso->bco', o2t, out_fea) / d2)


# --------------------------------------------------------------------- main --

if __name__ == "__main__":
    B, H, W, C = 2, 8, 8, 4
    R, F, OUT_DIM, NUM_LAYERS = 8, 8, 16, 2

    key = jax.random.PRNGKey(0)
    ks = jax.random.split(key, 4 + 2 * NUM_LAYERS)
    o = jax.random.normal(ks[0], (B, H, W, C), jnp.float32)
    o2 = jax.random.normal(ks[1], (B, H, W, C), jnp.float32)
    refs = jax.random.normal(ks[2], (B, C, R), jnp.float32)
    other = jax.random.normal(ks[3], (B, F), jnp.float32)

    # Deterministic synthetic conv parameters (HWIO), matching
    # nn.Conv2d(in_dim=2R+F, out_dim, 3, 1, 1) [+ ReLU + Conv2d(out, out)].
    conv_ws, conv_bs = [], []
    cin = 2 * R + F
    for l in range(NUM_LAYERS):
        conv_ws.append(0.1 * jax.random.normal(
            ks[4 + 2 * l], (3, 3, cin, OUT_DIM), jnp.float32))
        conv_bs.append(0.1 * jax.random.normal(
            ks[5 + 2 * l], (OUT_DIM,), jnp.float32))
        cin = OUT_DIM

    out = jax.block_until_ready(
        refconv_forward(o, o2, refs, other, conv_ws, conv_bs))
    ref = refconv_reference(o, o2, refs, other, conv_ws, conv_bs)

    assert out.shape == (B, C, OUT_DIM), out.shape
    if not jnp.allclose(out, ref, rtol=1e-4, atol=1e-4):
        raise AssertionError(
            f"mismatch: max abs err = {jnp.max(jnp.abs(out - ref))}")
    print("KERNEL_OK")
</pallas_src>

<mosaic_0001>
module attributes {stable_mosaic.version = 11 : i64} {
  func.func @_fused_refconv_kernel(%arg0: i32, %arg1: memref<2x64x4xf32, #tpu.memory_space<vmem>>, %arg2: memref<2x64x4xf32, #tpu.memory_space<vmem>>, %arg3: memref<2x4x8xf32, #tpu.memory_space<vmem>>, %arg4: memref<2x1x8xf32, #tpu.memory_space<vmem>>, %arg5: memref<9x24x16xf32, #tpu.memory_space<vmem>>, %arg6: memref<1x16xf32, #tpu.memory_space<vmem>>, %arg7: memref<9x16x16xf32, #tpu.memory_space<vmem>>, %arg8: memref<1x16xf32, #tpu.memory_space<vmem>>, %arg9: memref<2x4x16xf32, #tpu.memory_space<vmem>>, %arg10: memref<10x10x24xf32, #tpu.memory_space<vmem>>) attributes {dimension_semantics = [#tpu.dimension_semantics<parallel>], iteration_bounds = array<i64: 1>, scalar_prefetch = 0 : i64, scratch_operands = 1 : i64, tpu.core_type = #tpu.core_type<tc>, window_params = [{transform_indices = @transform_0, window_bounds = array<i64: 2, 64, 4>}, {transform_indices = @transform_1, window_bounds = array<i64: 2, 64, 4>}, {transform_indices = @transform_2, window_bounds = array<i64: 2, 4, 8>}, {transform_indices = @transform_3, window_bounds = array<i64: 2, 1, 8>}, {pipeline_mode = #tpu.pipeline_mode<synchronous>, transform_indices = @transform_4, window_bounds = array<i64: 9, 24, 16>}, {pipeline_mode = #tpu.pipeline_mode<synchronous>, transform_indices = @transform_5, window_bounds = array<i64: 1, 16>}, {pipeline_mode = #tpu.pipeline_mode<synchronous>, transform_indices = @transform_6, window_bounds = array<i64: 9, 16, 16>}, {pipeline_mode = #tpu.pipeline_mode<synchronous>, transform_indices = @transform_7, window_bounds = array<i64: 1, 16>}, {transform_indices = @transform_8, window_bounds = array<i64: 2, 4, 16>}]} {
    %cst = arith.constant 0.000000e+00 : f32
    %0 = vector.broadcast %cst : f32 to vector<10x10x24xf32>
    %c0 = arith.constant 0 : index
    %c0_0 = arith.constant 0 : index
    %c0_1 = arith.constant 0 : index
    %1 = vector.load %arg10[%c0, %c0_0, %c0_1] : memref<10x10x24xf32, #tpu.memory_space<vmem>>, vector<10x10x24xf32>
    tpu.vector_store %arg10[%c0, %c0_0, %c0_1], %0 {strides = array<i32>} : memref<10x10x24xf32, #tpu.memory_space<vmem>>, vector<10x10x24xf32>,
    %c0_2 = arith.constant 0 : index
    %c0_3 = arith.constant 0 : index
    %c0_4 = arith.constant 0 : index
    %2 = vector.load %arg1[%c0_2, %c0_3, %c0_4] : memref<2x64x4xf32, #tpu.memory_space<vmem>>, vector<1x64x4xf32>
    %3 = vector.shape_cast %2 : vector<1x64x4xf32> to vector<64x4xf32>
    %c0_5 = arith.constant 0 : index
    %c0_6 = arith.constant 0 : index
    %c0_7 = arith.constant 0 : index
    %4 = vector.load %arg2[%c0_5, %c0_6, %c0_7] : memref<2x64x4xf32, #tpu.memory_space<vmem>>, vector<1x64x4xf32>
    %5 = vector.shape_cast %4 : vector<1x64x4xf32> to vector<64x4xf32>
    %c0_8 = arith.constant 0 : index
    %c0_9 = arith.constant 0 : index
    %c0_10 = arith.constant 0 : index
    %6 = vector.load %arg3[%c0_8, %c0_9, %c0_10] : memref<2x4x8xf32, #tpu.memory_space<vmem>>, vector<1x4x8xf32>
    %7 = vector.shape_cast %6 : vector<1x4x8xf32> to vector<4x8xf32>
    %cst_11 = arith.constant dense<0.000000e+00> : vector<64x8xf32>
    %8 = tpu.matmul %3, %7, %cst_11 {dimension_numbers = #tpu.dot_dimension_numbers<[1], [0], [0], [1], [0, 0, 1, 1], [], []>} : vector<64x4xf32>, vector<4x8xf32>, vector<64x8xf32> -> vector<64x8xf32>
    %cst_12 = arith.constant dense<0.000000e+00> : vector<64x8xf32>
    %9 = tpu.matmul %5, %7, %cst_12 {dimension_numbers = #tpu.dot_dimension_numbers<[1], [0], [0], [1], [0, 0, 1, 1], [], []>} : vector<64x4xf32>, vector<4x8xf32>, vector<64x8xf32> -> vector<64x8xf32>
    %10 = vector.shape_cast %8 : vector<64x8xf32> to vector<8x8x8xf32>
    %c1 = arith.constant 1 : index
    %c1_13 = arith.constant 1 : index
    %c0_14 = arith.constant 0 : index
    %11 = vector.load %arg10[%c1, %c1_13, %c0_14] : memref<10x10x24xf32, #tpu.memory_space<vmem>>, vector<8x8x8xf32>
    tpu.vector_store %arg10[%c1, %c1_13, %c0_14], %10 {strides = array<i32>} : memref<10x10x24xf32, #tpu.memory_space<vmem>>, vector<8x8x8xf32>,
    %12 = vector.shape_cast %9 : vector<64x8xf32> to vector<8x8x8xf32>
    %c1_15 = arith.constant 1 : index
    %c1_16 = arith.constant 1 : index
    %c8 = arith.constant 8 : index
    %13 = vector.load %arg10[%c1_15, %c1_16, %c8] : memref<10x10x24xf32, #tpu.memory_space<vmem>>, vector<8x8x8xf32>
    tpu.vector_store %arg10[%c1_15, %c1_16, %c8], %12 {strides = array<i32>} : memref<10x10x24xf32, #tpu.memory_space<vmem>>, vector<8x8x8xf32>,
    %c0_17 = arith.constant 0 : index
    %c0_18 = arith.constant 0 : index
    %c0_19 = arith.constant 0 : index
    %14 = vector.load %arg4[%c0_17, %c0_18, %c0_19] : memref<2x1x8xf32, #tpu.memory_space<vmem>>, vector<1x1x8xf32>
    %15 = vector.shape_cast %14 : vector<1x1x8xf32> to vector<1x8xf32>
    %16 = vector.shape_cast %15 : vector<1x8xf32> to vector<1x1x8xf32>
    %17 = vector.shape_cast %16 : vector<1x1x8xf32> to vector<1x1x8xf32>
    %18 = vector.broadcast %17 : vector<1x1x8xf32> to vector<8x8x8xf32>
    %c1_20 = arith.constant 1 : index
    %c1_21 = arith.constant 1 : index
    %c16 = arith.constant 16 : index
    %19 = vector.load %arg10[%c1_20, %c1_21, %c16] : memref<10x10x24xf32, #tpu.memory_space<vmem>>, vector<8x8x8xf32>
    tpu.vector_store %arg10[%c1_20, %c1_21, %c16], %18 {strides = array<i32>} : memref<10x10x24xf32, #tpu.memory_space<vmem>>, vector<8x8x8xf32>,
    %cst_22 = arith.constant 0.000000e+00 : f32
    %20 = vector.broadcast %cst_22 : f32 to vector<64x16xf32>
    %c0_23 = arith.constant 0 : index
    %c0_24 = arith.constant 0 : index
    %c0_25 = arith.constant 0 : index
    %21 = vector.load %arg10[%c0_23, %c0_24, %c0_25] : memref<10x10x24xf32, #tpu.memory_space<vmem>>, vector<8x8x24xf32>
    %22 = vector.shape_cast %21 : vector<8x8x24xf32> to vector<64x24xf32>
    %c0_26 = arith.constant 0 : index
    %c0_27 = arith.constant 0 : index
    %c0_28 = arith.constant 0 : index
    %23 = vector.load %arg5[%c0_26, %c0_27, %c0_28] : memref<9x24x16xf32, #tpu.memory_space<vmem>>, vector<1x24x16xf32>
    %24 = vector.shape_cast %23 : vector<1x24x16xf32> to vector<24x16xf32>
    %cst_29 = arith.constant dense<0.000000e+00> : vector<64x16xf32>
    %25 = tpu.matmul %22, %24, %cst_29 {dimension_numbers = #tpu.dot_dimension_numbers<[1], [0], [0], [1], [0, 0, 1, 1], [], []>} : vector<64x24xf32>, vector<24x16xf32>, vector<64x16xf32> -> vector<64x16xf32>
    %26 = arith.addf %20, %25 : vector<64x16xf32>
    %c0_30 = arith.constant 0 : index
    %c1_31 = arith.constant 1 : index
    %c0_32 = arith.constant 0 : index
    %27 = vector.load %arg10[%c0_30, %c1_31, %c0_32] : memref<10x10x24xf32, #tpu.memory_space<vmem>>, vector<8x8x24xf32>
    %28 = vector.shape_cast %27 : vector<8x8x24xf32> to vector<64x24xf32>
    %c1_33 = arith.constant 1 : index
    %c0_34 = arith.constant 0 : index
    %c0_35 = arith.constant 0 : index
    %29 = vector.load %arg5[%c1_33, %c0_34, %c0_35] : memref<9x24x16xf32, #tpu.memory_space<vmem>>, vector<1x24x16xf32>
    %30 = vector.shape_cast %29 : vector<1x24x16xf32> to vector<24x16xf32>
    %cst_36 = arith.constant dense<0.000000e+00> : vector<64x16xf32>
    %31 = tpu.matmul %28, %30, %cst_36 {dimension_numbers = #tpu.dot_dimension_numbers<[1], [0], [0], [1], [0, 0, 1, 1], [], []>} : vector<64x24xf32>, vector<24x16xf32>, vector<64x16xf32> -> vector<64x16xf32>
    %32 = arith.addf %26, %31 : vector<64x16xf32>
    %c0_37 = arith.constant 0 : index
    %c2 = arith.constant 2 : index
    %c0_38 = arith.constant 0 : index
    %33 = vector.load %arg10[%c0_37, %c2, %c0_38] : memref<10x10x24xf32, #tpu.memory_space<vmem>>, vector<8x8x24xf32>
    %34 = vector.shape_cast %33 : vector<8x8x24xf32> to vector<64x24xf32>
    %c2_39 = arith.constant 2 : index
    %c0_40 = arith.constant 0 : index
    %c0_41 = arith.constant 0 : index
    %35 = vector.load %arg5[%c2_39, %c0_40, %c0_41] : memref<9x24x16xf32, #tpu.memory_space<vmem>>, vector<1x24x16xf32>
    %36 = vector.shape_cast %35 : vector<1x24x16xf32> to vector<24x16xf32>
    %cst_42 = arith.constant dense<0.000000e+00> : vector<64x16xf32>
    %37 = tpu.matmul %34, %36, %cst_42 {dimension_numbers = #tpu.dot_dimension_numbers<[1], [0], [0], [1], [0, 0, 1, 1], [], []>} : vector<64x24xf32>, vector<24x16xf32>, vector<64x16xf32> -> vector<64x16xf32>
    %38 = arith.addf %32, %37 : vector<64x16xf32>
    %c1_43 = arith.constant 1 : index
    %c0_44 = arith.constant 0 : index
    %c0_45 = arith.constant 0 : index
    %39 = vector.load %arg10[%c1_43, %c0_44, %c0_45] : memref<10x10x24xf32, #tpu.memory_space<vmem>>, vector<8x8x24xf32>
    %40 = vector.shape_cast %39 : vector<8x8x24xf32> to vector<64x24xf32>
    %c3 = arith.constant 3 : index
    %c0_46 = arith.constant 0 : index
    %c0_47 = arith.constant 0 : index
    %41 = vector.load %arg5[%c3, %c0_46, %c0_47] : memref<9x24x16xf32, #tpu.memory_space<vmem>>, vector<1x24x16xf32>
    %42 = vector.shape_cast %41 : vector<1x24x16xf32> to vector<24x16xf32>
    %cst_48 = arith.constant dense<0.000000e+00> : vector<64x16xf32>
    %43 = tpu.matmul %40, %42, %cst_48 {dimension_numbers = #tpu.dot_dimension_numbers<[1], [0], [0], [1], [0, 0, 1, 1], [], []>} : vector<64x24xf32>, vector<24x16xf32>, vector<64x16xf32> -> vector<64x16xf32>
    %44 = arith.addf %38, %43 : vector<64x16xf32>
    %c1_49 = arith.constant 1 : index
    %c1_50 = arith.constant 1 : index
    %c0_51 = arith.constant 0 : index
    %45 = vector.load %arg10[%c1_49, %c1_50, %c0_51] : memref<10x10x24xf32, #tpu.memory_space<vmem>>, vector<8x8x24xf32>
    %46 = vector.shape_cast %45 : vector<8x8x24xf32> to vector<64x24xf32>
    %c4 = arith.constant 4 : index
    %c0_52 = arith.constant 0 : index
    %c0_53 = arith.constant 0 : index
    %47 = vector.load %arg5[%c4, %c0_52, %c0_53] : memref<9x24x16xf32, #tpu.memory_space<vmem>>, vector<1x24x16xf32>
    %48 = vector.shape_cast %47 : vector<1x24x16xf32> to vector<24x16xf32>
    %cst_54 = arith.constant dense<0.000000e+00> : vector<64x16xf32>
    %49 = tpu.matmul %46, %48, %cst_54 {dimension_numbers = #tpu.dot_dimension_numbers<[1], [0], [0], [1], [0, 0, 1, 1], [], []>} : vector<64x24xf32>, vector<24x16xf32>, vector<64x16xf32> -> vector<64x16xf32>
    %50 = arith.addf %44, %49 : vector<64x16xf32>
    %c1_55 = arith.constant 1 : index
    %c2_56 = arith.constant 2 : index
    %c0_57 = arith.constant 0 : index
    %51 = vector.load %arg10[%c1_55, %c2_56, %c0_57] : memref<10x10x24xf32, #tpu.memory_space<vmem>>, vector<8x8x24xf32>
    %52 = vector.shape_cast %51 : vector<8x8x24xf32> to vector<64x24xf32>
    %c5 = arith.constant 5 : index
    %c0_58 = arith.constant 0 : index
    %c0_59 = arith.constant 0 : index
    %53 = vector.load %arg5[%c5, %c0_58, %c0_59] : memref<9x24x16xf32, #tpu.memory_space<vmem>>, vector<1x24x16xf32>
    %54 = vector.shape_cast %53 : vector<1x24x16xf32> to vector<24x16xf32>
    %cst_60 = arith.constant dense<0.000000e+00> : vector<64x16xf32>
    %55 = tpu.matmul %52, %54, %cst_60 {dimension_numbers = #tpu.dot_dimension_numbers<[1], [0], [0], [1], [0, 0, 1, 1], [], []>} : vector<64x24xf32>, vector<24x16xf32>, vector<64x16xf32> -> vector<64x16xf32>
    %56 = arith.addf %50, %55 : vector<64x16xf32>
    %c2_61 = arith.constant 2 : index
    %c0_62 = arith.constant 0 : index
    %c0_63 = arith.constant 0 : index
    %57 = vector.load %arg10[%c2_61, %c0_62, %c0_63] : memref<10x10x24xf32, #tpu.memory_space<vmem>>, vector<8x8x24xf32>
    %58 = vector.shape_cast %57 : vector<8x8x24xf32> to vector<64x24xf32>
    %c6 = arith.constant 6 : index
    %c0_64 = arith.constant 0 : index
    %c0_65 = arith.constant 0 : index
    %59 = vector.load %arg5[%c6, %c0_64, %c0_65] : memref<9x24x16xf32, #tpu.memory_space<vmem>>, vector<1x24x16xf32>
    %60 = vector.shape_cast %59 : vector<1x24x16xf32> to vector<24x16xf32>
    %cst_66 = arith.constant dense<0.000000e+00> : vector<64x16xf32>
    %61 = tpu.matmul %58, %60, %cst_66 {dimension_numbers = #tpu.dot_dimension_numbers<[1], [0], [0], [1], [0, 0, 1, 1], [], []>} : vector<64x24xf32>, vector<24x16xf32>, vector<64x16xf32> -> vector<64x16xf32>
    %62 = arith.addf %56, %61 : vector<64x16xf32>
    %c2_67 = arith.constant 2 : index
    %c1_68 = arith.constant 1 : index
    %c0_69 = arith.constant 0 : index
    %63 = vector.load %arg10[%c2_67, %c1_68, %c0_69] : memref<10x10x24xf32, #tpu.memory_space<vmem>>, vector<8x8x24xf32>
    %64 = vector.shape_cast %63 : vector<8x8x24xf32> to vector<64x24xf32>
    %c7 = arith.constant 7 : index
    %c0_70 = arith.constant 0 : index
    %c0_71 = arith.constant 0 : index
    %65 = vector.load %arg5[%c7, %c0_70, %c0_71] : memref<9x24x16xf32, #tpu.memory_space<vmem>>, vector<1x24x16xf32>
    %66 = vector.shape_cast %65 : vector<1x24x16xf32> to vector<24x16xf32>
    %cst_72 = arith.constant dense<0.000000e+00> : vector<64x16xf32>
    %67 = tpu.matmul %64, %66, %cst_72 {dimension_numbers = #tpu.dot_dimension_numbers<[1], [0], [0], [1], [0, 0, 1, 1], [], []>} : vector<64x24xf32>, vector<24x16xf32>, vector<64x16xf32> -> vector<64x16xf32>
    %68 = arith.addf %62, %67 : vector<64x16xf32>
    %c2_73 = arith.constant 2 : index
    %c2_74 = arith.constant 2 : index
    %c0_75 = arith.constant 0 : index
    %69 = vector.load %arg10[%c2_73, %c2_74, %c0_75] : memref<10x10x24xf32, #tpu.memory_space<vmem>>, vector<8x8x24xf32>
    %70 = vector.shape_cast %69 : vector<8x8x24xf32> to vector<64x24xf32>
    %c8_76 = arith.constant 8 : index
    %c0_77 = arith.constant 0 : index
    %c0_78 = arith.constant 0 : index
    %71 = vector.load %arg5[%c8_76, %c0_77, %c0_78] : memref<9x24x16xf32, #tpu.memory_space<vmem>>, vector<1x24x16xf32>
    %72 = vector.shape_cast %71 : vector<1x24x16xf32> to vector<24x16xf32>
    %cst_79 = arith.constant dense<0.000000e+00> : vector<64x16xf32>
    %73 = tpu.matmul %70, %72, %cst_79 {dimension_numbers = #tpu.dot_dimension_numbers<[1], [0], [0], [1], [0, 0, 1, 1], [], []>} : vector<64x24xf32>, vector<24x16xf32>, vector<64x16xf32> -> vector<64x16xf32>
    %74 = arith.addf %68, %73 : vector<64x16xf32>
    %c0_80 = arith.constant 0 : index
    %c0_81 = arith.constant 0 : index
    %75 = vector.load %arg6[%c0_80, %c0_81] : memref<1x16xf32, #tpu.memory_space<vmem>>, vector<1x16xf32>
    %76 = vector.broadcast %75 : vector<1x16xf32> to vector<64x16xf32>
    %77 = arith.addf %74, %76 : vector<64x16xf32>
    %cst_82 = arith.constant 0.000000e+00 : f32
    %78 = vector.broadcast %cst_82 : f32 to vector<64x16xf32>
    %79 = arith.maximumf %77, %78 : vector<64x16xf32>
    %80 = vector.shape_cast %79 : vector<64x16xf32> to vector<8x8x16xf32>
    %c1_83 = arith.constant 1 : index
    %c1_84 = arith.constant 1 : index
    %c0_85 = arith.constant 0 : index
    %81 = vector.load %arg10[%c1_83, %c1_84, %c0_85] : memref<10x10x24xf32, #tpu.memory_space<vmem>>, vector<8x8x16xf32>
    tpu.vector_store %arg10[%c1_83, %c1_84, %c0_85], %80 {strides = array<i32>} : memref<10x10x24xf32, #tpu.memory_space<vmem>>, vector<8x8x16xf32>,
    %cst_86 = arith.constant 0.000000e+00 : f32
    %82 = vector.broadcast %cst_86 : f32 to vector<64x16xf32>
    %c0_87 = arith.constant 0 : index
    %c0_88 = arith.constant 0 : index
    %c0_89 = arith.constant 0 : index
    %83 = vector.load %arg10[%c0_87, %c0_88, %c0_89] : memref<10x10x24xf32, #tpu.memory_space<vmem>>, vector<8x8x16xf32>
    %84 = vector.shape_cast %83 : vector<8x8x16xf32> to vector<64x16xf32>
    %c0_90 = arith.constant 0 : index
    %c0_91 = arith.constant 0 : index
    %c0_92 = arith.constant 0 : index
    %85 = vector.load %arg7[%c0_90, %c0_91, %c0_92] : memref<9x16x16xf32, #tpu.memory_space<vmem>>, vector<1x16x16xf32>
    %86 = vector.shape_cast %85 : vector<1x16x16xf32> to vector<16x16xf32>
    %cst_93 = arith.constant dense<0.000000e+00> : vector<64x16xf32>
    %87 = tpu.matmul %84, %86, %cst_93 {dimension_numbers = #tpu.dot_dimension_numbers<[1], [0], [0], [1], [0, 0, 1, 1], [], []>} : vector<64x16xf32>, vector<16x16xf32>, vector<64x16xf32> -> vector<64x16xf32>
    %88 = arith.addf %82, %87 : vector<64x16xf32>
    %c0_94 = arith.constant 0 : index
    %c1_95 = arith.constant 1 : index
    %c0_96 = arith.constant 0 : index
    %89 = vector.load %arg10[%c0_94, %c1_95, %c0_96] : memref<10x10x24xf32, #tpu.memory_space<vmem>>, vector<8x8x16xf32>
    %90 = vector.shape_cast %89 : vector<8x8x16xf32> to vector<64x16xf32>
    %c1_97 = arith.constant 1 : index
    %c0_98 = arith.constant 0 : index
    %c0_99 = arith.constant 0 : index
    %91 = vector.load %arg7[%c1_97, %c0_98, %c0_99] : memref<9x16x16xf32, #tpu.memory_space<vmem>>, vector<1x16x16xf32>
    %92 = vector.shape_cast %91 : vector<1x16x16xf32> to vector<16x16xf32>
    %cst_100 = arith.constant dense<0.000000e+00> : vector<64x16xf32>
    %93 = tpu.matmul %90, %92, %cst_100 {dimension_numbers = #tpu.dot_dimension_numbers<[1], [0], [0], [1], [0, 0, 1, 1], [], []>} : vector<64x16xf32>, vector<16x16xf32>, vector<64x16xf32> -> vector<64x16xf32>
    %94 = arith.addf %88, %93 : vector<64x16xf32>
    %c0_101 = arith.constant 0 : index
    %c2_102 = arith.constant 2 : index
    %c0_103 = arith.constant 0 : index
    %95 = vector.load %arg10[%c0_101, %c2_102, %c0_103] : memref<10x10x24xf32, #tpu.memory_space<vmem>>, vector<8x8x16xf32>
    %96 = vector.shape_cast %95 : vector<8x8x16xf32> to vector<64x16xf32>
    %c2_104 = arith.constant 2 : index
    %c0_105 = arith.constant 0 : index
    %c0_106 = arith.constant 0 : index
    %97 = vector.load %arg7[%c2_104, %c0_105, %c0_106] : memref<9x16x16xf32, #tpu.memory_space<vmem>>, vector<1x16x16xf32>
    %98 = vector.shape_cast %97 : vector<1x16x16xf32> to vector<16x16xf32>
    %cst_107 = arith.constant dense<0.000000e+00> : vector<64x16xf32>
    %99 = tpu.matmul %96, %98, %cst_107 {dimension_numbers = #tpu.dot_dimension_numbers<[1], [0], [0], [1], [0, 0, 1, 1], [], []>} : vector<64x16xf32>, vector<16x16xf32>, vector<64x16xf32> -> vector<64x16xf32>
    %100 = arith.addf %94, %99 : vector<64x16xf32>
    %c1_108 = arith.constant 1 : index
    %c0_109 = arith.constant 0 : index
    %c0_110 = arith.constant 0 : index
    %101 = vector.load %arg10[%c1_108, %c0_109, %c0_110] : memref<10x10x24xf32, #tpu.memory_space<vmem>>, vector<8x8x16xf32>
    %102 = vector.shape_cast %101 : vector<8x8x16xf32> to vector<64x16xf32>
    %c3_111 = arith.constant 3 : index
    %c0_112 = arith.constant 0 : index
    %c0_113 = arith.constant 0 : index
    %103 = vector.load %arg7[%c3_111, %c0_112, %c0_113] : memref<9x16x16xf32, #tpu.memory_space<vmem>>, vector<1x16x16xf32>
    %104 = vector.shape_cast %103 : vector<1x16x16xf32> to vector<16x16xf32>
    %cst_114 = arith.constant dense<0.000000e+00> : vector<64x16xf32>
    %105 = tpu.matmul %102, %104, %cst_114 {dimension_numbers = #tpu.dot_dimension_numbers<[1], [0], [0], [1], [0, 0, 1, 1], [], []>} : vector<64x16xf32>, vector<16x16xf32>, vector<64x16xf32> -> vector<64x16xf32>
    %106 = arith.addf %100, %105 : vector<64x16xf32>
    %c1_115 = arith.constant 1 : index
    %c1_116 = arith.constant 1 : index
    %c0_117 = arith.constant 0 : index
    %107 = vector.load %arg10[%c1_115, %c1_116, %c0_117] : memref<10x10x24xf32, #tpu.memory_space<vmem>>, vector<8x8x16xf32>
    %108 = vector.shape_cast %107 : vector<8x8x16xf32> to vector<64x16xf32>
    %c4_118 = arith.constant 4 : index
    %c0_119 = arith.constant 0 : index
    %c0_120 = arith.constant 0 : index
    %109 = vector.load %arg7[%c4_118, %c0_119, %c0_120] : memref<9x16x16xf32, #tpu.memory_space<vmem>>, vector<1x16x16xf32>
    %110 = vector.shape_cast %109 : vector<1x16x16xf32> to vector<16x16xf32>
    %cst_121 = arith.constant dense<0.000000e+00> : vector<64x16xf32>
    %111 = tpu.matmul %108, %110, %cst_121 {dimension_numbers = #tpu.dot_dimension_numbers<[1], [0], [0], [1], [0, 0, 1, 1], [], []>} : vector<64x16xf32>, vector<16x16xf32>, vector<64x16xf32> -> vector<64x16xf32>
    %112 = arith.addf %106, %111 : vector<64x16xf32>
    %c1_122 = arith.constant 1 : index
    %c2_123 = arith.constant 2 : index
    %c0_124 = arith.constant 0 : index
    %113 = vector.load %arg10[%c1_122, %c2_123, %c0_124] : memref<10x10x24xf32, #tpu.memory_space<vmem>>, vector<8x8x16xf32>
    %114 = vector.shape_cast %113 : vector<8x8x16xf32> to vector<64x16xf32>
    %c5_125 = arith.constant 5 : index
    %c0_126 = arith.constant 0 : index
    %c0_127 = arith.constant 0 : index
    %115 = vector.load %arg7[%c5_125, %c0_126, %c0_127] : memref<9x16x16xf32, #tpu.memory_space<vmem>>, vector<1x16x16xf32>
    %116 = vector.shape_cast %115 : vector<1x16x16xf32> to vector<16x16xf32>
    %cst_128 = arith.constant dense<0.000000e+00> : vector<64x16xf32>
    %117 = tpu.matmul %114, %116, %cst_128 {dimension_numbers = #tpu.dot_dimension_numbers<[1], [0], [0], [1], [0, 0, 1, 1], [], []>} : vector<64x16xf32>, vector<16x16xf32>, vector<64x16xf32> -> vector<64x16xf32>
    %118 = arith.addf %112, %117 : vector<64x16xf32>
    %c2_129 = arith.constant 2 : index
    %c0_130 = arith.constant 0 : index
    %c0_131 = arith.constant 0 : index
    %119 = vector.load %arg10[%c2_129, %c0_130, %c0_131] : memref<10x10x24xf32, #tpu.memory_space<vmem>>, vector<8x8x16xf32>
    %120 = vector.shape_cast %119 : vector<8x8x16xf32> to vector<64x16xf32>
    %c6_132 = arith.constant 6 : index
    %c0_133 = arith.constant 0 : index
    %c0_134 = arith.constant 0 : index
    %121 = vector.load %arg7[%c6_132, %c0_133, %c0_134] : memref<9x16x16xf32, #tpu.memory_space<vmem>>, vector<1x16x16xf32>
    %122 = vector.shape_cast %121 : vector<1x16x16xf32> to vector<16x16xf32>
    %cst_135 = arith.constant dense<0.000000e+00> : vector<64x16xf32>
    %123 = tpu.matmul %120, %122, %cst_135 {dimension_numbers = #tpu.dot_dimension_numbers<[1], [0], [0], [1], [0, 0, 1, 1], [], []>} : vector<64x16xf32>, vector<16x16xf32>, vector<64x16xf32> -> vector<64x16xf32>
    %124 = arith.addf %118, %123 : vector<64x16xf32>
    %c2_136 = arith.constant 2 : index
    %c1_137 = arith.constant 1 : index
    %c0_138 = arith.constant 0 : index
    %125 = vector.load %arg10[%c2_136, %c1_137, %c0_138] : memref<10x10x24xf32, #tpu.memory_space<vmem>>, vector<8x8x16xf32>
    %126 = vector.shape_cast %125 : vector<8x8x16xf32> to vector<64x16xf32>
    %c7_139 = arith.constant 7 : index
    %c0_140 = arith.constant 0 : index
    %c0_141 = arith.constant 0 : index
    %127 = vector.load %arg7[%c7_139, %c0_140, %c0_141] : memref<9x16x16xf32, #tpu.memory_space<vmem>>, vector<1x16x16xf32>
    %128 = vector.shape_cast %127 : vector<1x16x16xf32> to vector<16x16xf32>
    %cst_142 = arith.constant dense<0.000000e+00> : vector<64x16xf32>
    %129 = tpu.matmul %126, %128, %cst_142 {dimension_numbers = #tpu.dot_dimension_numbers<[1], [0], [0], [1], [0, 0, 1, 1], [], []>} : vector<64x16xf32>, vector<16x16xf32>, vector<64x16xf32> -> vector<64x16xf32>
    %130 = arith.addf %124, %129 : vector<64x16xf32>
    %c2_143 = arith.constant 2 : index
    %c2_144 = arith.constant 2 : index
    %c0_145 = arith.constant 0 : index
    %131 = vector.load %arg10[%c2_143, %c2_144, %c0_145] : memref<10x10x24xf32, #tpu.memory_space<vmem>>, vector<8x8x16xf32>
    %132 = vector.shape_cast %131 : vector<8x8x16xf32> to vector<64x16xf32>
    %c8_146 = arith.constant 8 : index
    %c0_147 = arith.constant 0 : index
    %c0_148 = arith.constant 0 : index
    %133 = vector.load %arg7[%c8_146, %c0_147, %c0_148] : memref<9x16x16xf32, #tpu.memory_space<vmem>>, vector<1x16x16xf32>
    %134 = vector.shape_cast %133 : vector<1x16x16xf32> to vector<16x16xf32>
    %cst_149 = arith.constant dense<0.000000e+00> : vector<64x16xf32>
    %135 = tpu.matmul %132, %134, %cst_149 {dimension_numbers = #tpu.dot_dimension_numbers<[1], [0], [0], [1], [0, 0, 1, 1], [], []>} : vector<64x16xf32>, vector<16x16xf32>, vector<64x16xf32> -> vector<64x16xf32>
    %136 = arith.addf %130, %135 : vector<64x16xf32>
    %c0_150 = arith.constant 0 : index
    %c0_151 = arith.constant 0 : index
    %137 = vector.load %arg8[%c0_150, %c0_151] : memref<1x16xf32, #tpu.memory_space<vmem>>, vector<1x16xf32>
    %138 = vector.broadcast %137 : vector<1x16xf32> to vector<64x16xf32>
    %139 = arith.addf %136, %138 : vector<64x16xf32>
    %cst_152 = arith.constant dense<0.000000e+00> : vector<4xf32>
    %140 = vector.multi_reduction <add>, %3, %cst_152 [0] : vector<64x4xf32> to vector<4xf32>
    %141 = vector.shape_cast %140 : vector<4xf32> to vector<1x4xf32>
    %cst_153 = arith.constant 1.000000e+00 : f32
    %142 = vector.broadcast %cst_153 : f32 to vector<1x4xf32>
    %143 = arith.maximumf %141, %142 : vector<1x4xf32>
    %cst_154 = arith.constant 1.000000e+00 : f32
    %144 = vector.broadcast %cst_154 : f32 to vector<1x4xf32>
    %145 = arith.divf %144, %143 : vector<1x4xf32>
    %cst_155 = arith.constant dense<0.000000e+00> : vector<4xf32>
    %146 = vector.multi_reduction <add>, %5, %cst_155 [0] : vector<64x4xf32> to vector<4xf32>
    %147 = vector.shape_cast %146 : vector<4xf32> to vector<1x4xf32>
    %cst_156 = arith.constant 1.000000e+00 : f32
    %148 = vector.broadcast %cst_156 : f32 to vector<1x4xf32>
    %149 = arith.maximumf %147, %148 : vector<1x4xf32>
    %cst_157 = arith.constant 1.000000e+00 : f32
    %150 = vector.broadcast %cst_157 : f32 to vector<1x4xf32>
    %151 = arith.divf %150, %149 : vector<1x4xf32>
    %152 = vector.broadcast %145 : vector<1x4xf32> to vector<64x4xf32>
    %153 = arith.mulf %3, %152 : vector<64x4xf32>
    %154 = vector.broadcast %151 : vector<1x4xf32> to vector<64x4xf32>
    %155 = arith.mulf %5, %154 : vector<64x4xf32>
    %156 = arith.addf %153, %155 : vector<64x4xf32>
    %cst_158 = arith.constant dense<0.000000e+00> : vector<4x16xf32>
    %157 = tpu.matmul %156, %139, %cst_158 {dimension_numbers = #tpu.dot_dimension_numbers<[0], [0], [1], [1], [0, 1, 1, 1], [], []>} : vector<64x4xf32>, vector<64x16xf32>, vector<4x16xf32> -> vector<4x16xf32>
    %c0_159 = arith.constant 0 : index
    %c0_160 = arith.constant 0 : index
    %c0_161 = arith.constant 0 : index
    %158 = vector.load %arg9[%c0_159, %c0_160, %c0_161] : memref<2x4x16xf32, #tpu.memory_space<vmem>>, vector<1x4x16xf32>
    %159 = vector.shape_cast %158 : vector<1x4x16xf32> to vector<4x16xf32>
    %160 = vector.shape_cast %157 : vector<4x16xf32> to vector<1x4x16xf32>
    tpu.vector_store %arg9[%c0_159, %c0_160, %c0_161], %160 {strides = array<i32>} : memref<2x4x16xf32, #tpu.memory_space<vmem>>, vector<1x4x16xf32>,
    %c1_162 = arith.constant 1 : index
    %c0_163 = arith.constant 0 : index
    %c0_164 = arith.constant 0 : index
    %161 = vector.load %arg1[%c1_162, %c0_163, %c0_164] : memref<2x64x4xf32, #tpu.memory_space<vmem>>, vector<1x64x4xf32>
    %162 = vector.shape_cast %161 : vector<1x64x4xf32> to vector<64x4xf32>
    %c1_165 = arith.constant 1 : index
    %c0_166 = arith.constant 0 : index
    %c0_167 = arith.constant 0 : index
    %163 = vector.load %arg2[%c1_165, %c0_166, %c0_167] : memref<2x64x4xf32, #tpu.memory_space<vmem>>, vector<1x64x4xf32>
    %164 = vector.shape_cast %163 : vector<1x64x4xf32> to vector<64x4xf32>
    %c1_168 = arith.constant 1 : index
    %c0_169 = arith.constant 0 : index
    %c0_170 = arith.constant 0 : index
    %165 = vector.load %arg3[%c1_168, %c0_169, %c0_170] : memref<2x4x8xf32, #tpu.memory_space<vmem>>, vector<1x4x8xf32>
    %166 = vector.shape_cast %165 : vector<1x4x8xf32> to vector<4x8xf32>
    %cst_171 = arith.constant dense<0.000000e+00> : vector<64x8xf32>
    %167 = tpu.matmul %162, %166, %cst_171 {dimension_numbers = #tpu.dot_dimension_numbers<[1], [0], [0], [1], [0, 0, 1, 1], [], []>} : vector<64x4xf32>, vector<4x8xf32>, vector<64x8xf32> -> vector<64x8xf32>
    %cst_172 = arith.constant dense<0.000000e+00> : vector<64x8xf32>
    %168 = tpu.matmul %164, %166, %cst_172 {dimension_numbers = #tpu.dot_dimension_numbers<[1], [0], [0], [1], [0, 0, 1, 1], [], []>} : vector<64x4xf32>, vector<4x8xf32>, vector<64x8xf32> -> vector<64x8xf32>
    %169 = vector.shape_cast %167 : vector<64x8xf32> to vector<8x8x8xf32>
    %c1_173 = arith.constant 1 : index
    %c1_174 = arith.constant 1 : index
    %c0_175 = arith.constant 0 : index
    %170 = vector.load %arg10[%c1_173, %c1_174, %c0_175] : memref<10x10x24xf32, #tpu.memory_space<vmem>>, vector<8x8x8xf32>
    tpu.vector_store %arg10[%c1_173, %c1_174, %c0_175], %169 {strides = array<i32>} : memref<10x10x24xf32, #tpu.memory_space<vmem>>, vector<8x8x8xf32>,
    %171 = vector.shape_cast %168 : vector<64x8xf32> to vector<8x8x8xf32>
    %c1_176 = arith.constant 1 : index
    %c1_177 = arith.constant 1 : index
    %c8_178 = arith.constant 8 : index
    %172 = vector.load %arg10[%c1_176, %c1_177, %c8_178] : memref<10x10x24xf32, #tpu.memory_space<vmem>>, vector<8x8x8xf32>
    tpu.vector_store %arg10[%c1_176, %c1_177, %c8_178], %171 {strides = array<i32>} : memref<10x10x24xf32, #tpu.memory_space<vmem>>, vector<8x8x8xf32>,
    %c1_179 = arith.constant 1 : index
    %c0_180 = arith.constant 0 : index
    %c0_181 = arith.constant 0 : index
    %173 = vector.load %arg4[%c1_179, %c0_180, %c0_181] : memref<2x1x8xf32, #tpu.memory_space<vmem>>, vector<1x1x8xf32>
    %174 = vector.shape_cast %173 : vector<1x1x8xf32> to vector<1x8xf32>
    %175 = vector.shape_cast %174 : vector<1x8xf32> to vector<1x1x8xf32>
    %176 = vector.shape_cast %175 : vector<1x1x8xf32> to vector<1x1x8xf32>
    %177 = vector.broadcast %176 : vector<1x1x8xf32> to vector<8x8x8xf32>
    %c1_182 = arith.constant 1 : index
    %c1_183 = arith.constant 1 : index
    %c16_184 = arith.constant 16 : index
    %178 = vector.load %arg10[%c1_182, %c1_183, %c16_184] : memref<10x10x24xf32, #tpu.memory_space<vmem>>, vector<8x8x8xf32>
    tpu.vector_store %arg10[%c1_182, %c1_183, %c16_184], %177 {strides = array<i32>} : memref<10x10x24xf32, #tpu.memory_space<vmem>>, vector<8x8x8xf32>,
    %cst_185 = arith.constant 0.000000e+00 : f32
    %179 = vector.broadcast %cst_185 : f32 to vector<64x16xf32>
    %c0_186 = arith.constant 0 : index
    %c0_187 = arith.constant 0 : index
    %c0_188 = arith.constant 0 : index
    %180 = vector.load %arg10[%c0_186, %c0_187, %c0_188] : memref<10x10x24xf32, #tpu.memory_space<vmem>>, vector<8x8x24xf32>
    %181 = vector.shape_cast %180 : vector<8x8x24xf32> to vector<64x24xf32>
    %c0_189 = arith.constant 0 : index
    %c0_190 = arith.constant 0 : index
    %c0_191 = arith.constant 0 : index
    %182 = vector.load %arg5[%c0_189, %c0_190, %c0_191] : memref<9x24x16xf32, #tpu.memory_space<vmem>>, vector<1x24x16xf32>
    %183 = vector.shape_cast %182 : vector<1x24x16xf32> to vector<24x16xf32>
    %cst_192 = arith.constant dense<0.000000e+00> : vector<64x16xf32>
    %184 = tpu.matmul %181, %183, %cst_192 {dimension_numbers = #tpu.dot_dimension_numbers<[1], [0], [0], [1], [0, 0, 1, 1], [], []>} : vector<64x24xf32>, vector<24x16xf32>, vector<64x16xf32> -> vector<64x16xf32>
    %185 = arith.addf %179, %184 : vector<64x16xf32>
    %c0_193 = arith.constant 0 : index
    %c1_194 = arith.constant 1 : index
    %c0_195 = arith.constant 0 : index
    %186 = vector.load %arg10[%c0_193, %c1_194, %c0_195] : memref<10x10x24xf32, #tpu.memory_space<vmem>>, vector<8x8x24xf32>
    %187 = vector.shape_cast %186 : vector<8x8x24xf32> to vector<64x24xf32>
    %c1_196 = arith.constant 1 : index
    %c0_197 = arith.constant 0 : index
    %c0_198 = arith.constant 0 : index
    %188 = vector.load %arg5[%c1_196, %c0_197, %c0_198] : memref<9x24x16xf32, #tpu.memory_space<vmem>>, vector<1x24x16xf32>
    %189 = vector.shape_cast %188 : vector<1x24x16xf32> to vector<24x16xf32>
    %cst_199 = arith.constant dense<0.000000e+00> : vector<64x16xf32>
    %190 = tpu.matmul %187, %189, %cst_199 {dimension_numbers = #tpu.dot_dimension_numbers<[1], [0], [0], [1], [0, 0, 1, 1], [], []>} : vector<64x24xf32>, vector<24x16xf32>, vector<64x16xf32> -> vector<64x16xf32>
    %191 = arith.addf %185, %190 : vector<64x16xf32>
    %c0_200 = arith.constant 0 : index
    %c2_201 = arith.constant 2 : index
    %c0_202 = arith.constant 0 : index
    %192 = vector.load %arg10[%c0_200, %c2_201, %c0_202] : memref<10x10x24xf32, #tpu.memory_space<vmem>>, vector<8x8x24xf32>
    %193 = vector.shape_cast %192 : vector<8x8x24xf32> to vector<64x24xf32>
    %c2_203 = arith.constant 2 : index
    %c0_204 = arith.constant 0 : index
    %c0_205 = arith.constant 0 : index
    %194 = vector.load %arg5[%c2_203, %c0_204, %c0_205] : memref<9x24x16xf32, #tpu.memory_space<vmem>>, vector<1x24x16xf32>
    %195 = vector.shape_cast %194 : vector<1x24x16xf32> to vector<24x16xf32>
    %cst_206 = arith.constant dense<0.000000e+00> : vector<64x16xf32>
    %196 = tpu.matmul %193, %195, %cst_206 {dimension_numbers = #tpu.dot_dimension_numbers<[1], [0], [0], [1], [0, 0, 1, 1], [], []>} : vector<64x24xf32>, vector<24x16xf32>, vector<64x16xf32> -> vector<64x16xf32>
    %197 = arith.addf %191, %196 : vector<64x16xf32>
    %c1_207 = arith.constant 1 : index
    %c0_208 = arith.constant 0 : index
    %c0_209 = arith.constant 0 : index
    %198 = vector.load %arg10[%c1_207, %c0_208, %c0_209] : memref<10x10x24xf32, #tpu.memory_space<vmem>>, vector<8x8x24xf32>
    %199 = vector.shape_cast %198 : vector<8x8x24xf32> to vector<64x24xf32>
    %c3_210 = arith.constant 3 : index
    %c0_211 = arith.constant 0 : index
    %c0_212 = arith.constant 0 : index
    %200 = vector.load %arg5[%c3_210, %c0_211, %c0_212] : memref<9x24x16xf32, #tpu.memory_space<vmem>>, vector<1x24x16xf32>
    %201 = vector.shape_cast %200 : vector<1x24x16xf32> to vector<24x16xf32>
    %cst_213 = arith.constant dense<0.000000e+00> : vector<64x16xf32>
    %202 = tpu.matmul %199, %201, %cst_213 {dimension_numbers = #tpu.dot_dimension_numbers<[1], [0], [0], [1], [0, 0, 1, 1], [], []>} : vector<64x24xf32>, vector<24x16xf32>, vector<64x16xf32> -> vector<64x16xf32>
    %203 = arith.addf %197, %202 : vector<64x16xf32>
    %c1_214 = arith.constant 1 : index
    %c1_215 = arith.constant 1 : index
    %c0_216 = arith.constant 0 : index
    %204 = vector.load %arg10[%c1_214, %c1_215, %c0_216] : memref<10x10x24xf32, #tpu.memory_space<vmem>>, vector<8x8x24xf32>
    %205 = vector.shape_cast %204 : vector<8x8x24xf32> to vector<64x24xf32>
    %c4_217 = arith.constant 4 : index
    %c0_218 = arith.constant 0 : index
    %c0_219 = arith.constant 0 : index
    %206 = vector.load %arg5[%c4_217, %c0_218, %c0_219] : memref<9x24x16xf32, #tpu.memory_space<vmem>>, vector<1x24x16xf32>
    %207 = vector.shape_cast %206 : vector<1x24x16xf32> to vector<24x16xf32>
    %cst_220 = arith.constant dense<0.000000e+00> : vector<64x16xf32>
    %208 = tpu.matmul %205, %207, %cst_220 {dimension_numbers = #tpu.dot_dimension_numbers<[1], [0], [0], [1], [0, 0, 1, 1], [], []>} : vector<64x24xf32>, vector<24x16xf32>, vector<64x16xf32> -> vector<64x16xf32>
    %209 = arith.addf %203, %208 : vector<64x16xf32>
    %c1_221 = arith.constant 1 : index
    %c2_222 = arith.constant 2 : index
    %c0_223 = arith.constant 0 : index
    %210 = vector.load %arg10[%c1_221, %c2_222, %c0_223] : memref<10x10x24xf32, #tpu.memory_space<vmem>>, vector<8x8x24xf32>
    %211 = vector.shape_cast %210 : vector<8x8x24xf32> to vector<64x24xf32>
    %c5_224 = arith.constant 5 : index
    %c0_225 = arith.constant 0 : index
    %c0_226 = arith.constant 0 : index
    %212 = vector.load %arg5[%c5_224, %c0_225, %c0_226] : memref<9x24x16xf32, #tpu.memory_space<vmem>>, vector<1x24x16xf32>
    %213 = vector.shape_cast %212 : vector<1x24x16xf32> to vector<24x16xf32>
    %cst_227 = arith.constant dense<0.000000e+00> : vector<64x16xf32>
    %214 = tpu.matmul %211, %213, %cst_227 {dimension_numbers = #tpu.dot_dimension_numbers<[1], [0], [0], [1], [0, 0, 1, 1], [], []>} : vector<64x24xf32>, vector<24x16xf32>, vector<64x16xf32> -> vector<64x16xf32>
    %215 = arith.addf %209, %214 : vector<64x16xf32>
    %c2_228 = arith.constant 2 : index
    %c0_229 = arith.constant 0 : index
    %c0_230 = arith.constant 0 : index
    %216 = vector.load %arg10[%c2_228, %c0_229, %c0_230] : memref<10x10x24xf32, #tpu.memory_space<vmem>>, vector<8x8x24xf32>
    %217 = vector.shape_cast %216 : vector<8x8x24xf32> to vector<64x24xf32>
    %c6_231 = arith.constant 6 : index
    %c0_232 = arith.constant 0 : index
    %c0_233 = arith.constant 0 : index
    %218 = vector.load %arg5[%c6_231, %c0_232, %c0_233] : memref<9x24x16xf32, #tpu.memory_space<vmem>>, vector<1x24x16xf32>
    %219 = vector.shape_cast %218 : vector<1x24x16xf32> to vector<24x16xf32>
    %cst_234 = arith.constant dense<0.000000e+00> : vector<64x16xf32>
    %220 = tpu.matmul %217, %219, %cst_234 {dimension_numbers = #tpu.dot_dimension_numbers<[1], [0], [0], [1], [0, 0, 1, 1], [], []>} : vector<64x24xf32>, vector<24x16xf32>, vector<64x16xf32> -> vector<64x16xf32>
    %221 = arith.addf %215, %220 : vector<64x16xf32>
    %c2_235 = arith.constant 2 : index
    %c1_236 = arith.constant 1 : index
    %c0_237 = arith.constant 0 : index
    %222 = vector.load %arg10[%c2_235, %c1_236, %c0_237] : memref<10x10x24xf32, #tpu.memory_space<vmem>>, vector<8x8x24xf32>
    %223 = vector.shape_cast %222 : vector<8x8x24xf32> to vector<64x24xf32>
    %c7_238 = arith.constant 7 : index
    %c0_239 = arith.constant 0 : index
    %c0_240 = arith.constant 0 : index
    %224 = vector.load %arg5[%c7_238, %c0_239, %c0_240] : memref<9x24x16xf32, #tpu.memory_space<vmem>>, vector<1x24x16xf32>
    %225 = vector.shape_cast %224 : vector<1x24x16xf32> to vector<24x16xf32>
    %cst_241 = arith.constant dense<0.000000e+00> : vector<64x16xf32>
    %226 = tpu.matmul %223, %225, %cst_241 {dimension_numbers = #tpu.dot_dimension_numbers<[1], [0], [0], [1], [0, 0, 1, 1], [], []>} : vector<64x24xf32>, vector<24x16xf32>, vector<64x16xf32> -> vector<64x16xf32>
    %227 = arith.addf %221, %226 : vector<64x16xf32>
    %c2_242 = arith.constant 2 : index
    %c2_243 = arith.constant 2 : index
    %c0_244 = arith.constant 0 : index
    %228 = vector.load %arg10[%c2_242, %c2_243, %c0_244] : memref<10x10x24xf32, #tpu.memory_space<vmem>>, vector<8x8x24xf32>
    %229 = vector.shape_cast %228 : vector<8x8x24xf32> to vector<64x24xf32>
    %c8_245 = arith.constant 8 : index
    %c0_246 = arith.constant 0 : index
    %c0_247 = arith.constant 0 : index
    %230 = vector.load %arg5[%c8_245, %c0_246, %c0_247] : memref<9x24x16xf32, #tpu.memory_space<vmem>>, vector<1x24x16xf32>
    %231 = vector.shape_cast %230 : vector<1x24x16xf32> to vector<24x16xf32>
    %cst_248 = arith.constant dense<0.000000e+00> : vector<64x16xf32>
    %232 = tpu.matmul %229, %231, %cst_248 {dimension_numbers = #tpu.dot_dimension_numbers<[1], [0], [0], [1], [0, 0, 1, 1], [], []>} : vector<64x24xf32>, vector<24x16xf32>, vector<64x16xf32> -> vector<64x16xf32>
    %233 = arith.addf %227, %232 : vector<64x16xf32>
    %c0_249 = arith.constant 0 : index
    %c0_250 = arith.constant 0 : index
    %234 = vector.load %arg6[%c0_249, %c0_250] : memref<1x16xf32, #tpu.memory_space<vmem>>, vector<1x16xf32>
    %235 = vector.broadcast %234 : vector<1x16xf32> to vector<64x16xf32>
    %236 = arith.addf %233, %235 : vector<64x16xf32>
    %cst_251 = arith.constant 0.000000e+00 : f32
    %237 = vector.broadcast %cst_251 : f32 to vector<64x16xf32>
    %238 = arith.maximumf %236, %237 : vector<64x16xf32>
    %239 = vector.shape_cast %238 : vector<64x16xf32> to vector<8x8x16xf32>
    %c1_252 = arith.constant 1 : index
    %c1_253 = arith.constant 1 : index
    %c0_254 = arith.constant 0 : index
    %240 = vector.load %arg10[%c1_252, %c1_253, %c0_254] : memref<10x10x24xf32, #tpu.memory_space<vmem>>, vector<8x8x16xf32>
    tpu.vector_store %arg10[%c1_252, %c1_253, %c0_254], %239 {strides = array<i32>} : memref<10x10x24xf32, #tpu.memory_space<vmem>>, vector<8x8x16xf32>,
    %cst_255 = arith.constant 0.000000e+00 : f32
    %241 = vector.broadcast %cst_255 : f32 to vector<64x16xf32>
    %c0_256 = arith.constant 0 : index
    %c0_257 = arith.constant 0 : index
    %c0_258 = arith.constant 0 : index
    %242 = vector.load %arg10[%c0_256, %c0_257, %c0_258] : memref<10x10x24xf32, #tpu.memory_space<vmem>>, vector<8x8x16xf32>
    %243 = vector.shape_cast %242 : vector<8x8x16xf32> to vector<64x16xf32>
    %c0_259 = arith.constant 0 : index
    %c0_260 = arith.constant 0 : index
    %c0_261 = arith.constant 0 : index
    %244 = vector.load %arg7[%c0_259, %c0_260, %c0_261] : memref<9x16x16xf32, #tpu.memory_space<vmem>>, vector<1x16x16xf32>
    %245 = vector.shape_cast %244 : vector<1x16x16xf32> to vector<16x16xf32>
    %cst_262 = arith.constant dense<0.000000e+00> : vector<64x16xf32>
    %246 = tpu.matmul %243, %245, %cst_262 {dimension_numbers = #tpu.dot_dimension_numbers<[1], [0], [0], [1], [0, 0, 1, 1], [], []>} : vector<64x16xf32>, vector<16x16xf32>, vector<64x16xf32> -> vector<64x16xf32>
    %247 = arith.addf %241, %246 : vector<64x16xf32>
    %c0_263 = arith.constant 0 : index
    %c1_264 = arith.constant 1 : index
    %c0_265 = arith.constant 0 : index
    %248 = vector.load %arg10[%c0_263, %c1_264, %c0_265] : memref<10x10x24xf32, #tpu.memory_space<vmem>>, vector<8x8x16xf32>
    %249 = vector.shape_cast %248 : vector<8x8x16xf32> to vector<64x16xf32>
    %c1_266 = arith.constant 1 : index
    %c0_267 = arith.constant 0 : index
    %c0_268 = arith.constant 0 : index
    %250 = vector.load %arg7[%c1_266, %c0_267, %c0_268] : memref<9x16x16xf32, #tpu.memory_space<vmem>>, vector<1x16x16xf32>
    %251 = vector.shape_cast %250 : vector<1x16x16xf32> to vector<16x16xf32>
    %cst_269 = arith.constant dense<0.000000e+00> : vector<64x16xf32>
    %252 = tpu.matmul %249, %251, %cst_269 {dimension_numbers = #tpu.dot_dimension_numbers<[1], [0], [0], [1], [0, 0, 1, 1], [], []>} : vector<64x16xf32>, vector<16x16xf32>, vector<64x16xf32> -> vector<64x16xf32>
    %253 = arith.addf %247, %252 : vector<64x16xf32>
    %c0_270 = arith.constant 0 : index
    %c2_271 = arith.constant 2 : index
    %c0_272 = arith.constant 0 : index
    %254 = vector.load %arg10[%c0_270, %c2_271, %c0_272] : memref<10x10x24xf32, #tpu.memory_space<vmem>>, vector<8x8x16xf32>
    %255 = vector.shape_cast %254 : vector<8x8x16xf32> to vector<64x16xf32>
    %c2_273 = arith.constant 2 : index
    %c0_274 = arith.constant 0 : index
    %c0_275 = arith.constant 0 : index
    %256 = vector.load %arg7[%c2_273, %c0_274, %c0_275] : memref<9x16x16xf32, #tpu.memory_space<vmem>>, vector<1x16x16xf32>
    %257 = vector.shape_cast %256 : vector<1x16x16xf32> to vector<16x16xf32>
    %cst_276 = arith.constant dense<0.000000e+00> : vector<64x16xf32>
    %258 = tpu.matmul %255, %257, %cst_276 {dimension_numbers = #tpu.dot_dimension_numbers<[1], [0], [0], [1], [0, 0, 1, 1], [], []>} : vector<64x16xf32>, vector<16x16xf32>, vector<64x16xf32> -> vector<64x16xf32>
    %259 = arith.addf %253, %258 : vector<64x16xf32>
    %c1_277 = arith.constant 1 : index
    %c0_278 = arith.constant 0 : index
    %c0_279 = arith.constant 0 : index
    %260 = vector.load %arg10[%c1_277, %c0_278, %c0_279] : memref<10x10x24xf32, #tpu.memory_space<vmem>>, vector<8x8x16xf32>
    %261 = vector.shape_cast %260 : vector<8x8x16xf32> to vector<64x16xf32>
    %c3_280 = arith.constant 3 : index
    %c0_281 = arith.constant 0 : index
    %c0_282 = arith.constant 0 : index
    %262 = vector.load %arg7[%c3_280, %c0_281, %c0_282] : memref<9x16x16xf32, #tpu.memory_space<vmem>>, vector<1x16x16xf32>
    %263 = vector.shape_cast %262 : vector<1x16x16xf32> to vector<16x16xf32>
    %cst_283 = arith.constant dense<0.000000e+00> : vector<64x16xf32>
    %264 = tpu.matmul %261, %263, %cst_283 {dimension_numbers = #tpu.dot_dimension_numbers<[1], [0], [0], [1], [0, 0, 1, 1], [], []>} : vector<64x16xf32>, vector<16x16xf32>, vector<64x16xf32> -> vector<64x16xf32>
    %265 = arith.addf %259, %264 : vector<64x16xf32>
    %c1_284 = arith.constant 1 : index
    %c1_285 = arith.constant 1 : index
    %c0_286 = arith.constant 0 : index
    %266 = vector.load %arg10[%c1_284, %c1_285, %c0_286] : memref<10x10x24xf32, #tpu.memory_space<vmem>>, vector<8x8x16xf32>
    %267 = vector.shape_cast %266 : vector<8x8x16xf32> to vector<64x16xf32>
    %c4_287 = arith.constant 4 : index
    %c0_288 = arith.constant 0 : index
    %c0_289 = arith.constant 0 : index
    %268 = vector.load %arg7[%c4_287, %c0_288, %c0_289] : memref<9x16x16xf32, #tpu.memory_space<vmem>>, vector<1x16x16xf32>
    %269 = vector.shape_cast %268 : vector<1x16x16xf32> to vector<16x16xf32>
    %cst_290 = arith.constant dense<0.000000e+00> : vector<64x16xf32>
    %270 = tpu.matmul %267, %269, %cst_290 {dimension_numbers = #tpu.dot_dimension_numbers<[1], [0], [0], [1], [0, 0, 1, 1], [], []>} : vector<64x16xf32>, vector<16x16xf32>, vector<64x16xf32> -> vector<64x16xf32>
    %271 = arith.addf %265, %270 : vector<64x16xf32>
    %c1_291 = arith.constant 1 : index
    %c2_292 = arith.constant 2 : index
    %c0_293 = arith.constant 0 : index
    %272 = vector.load %arg10[%c1_291, %c2_292, %c0_293] : memref<10x10x24xf32, #tpu.memory_space<vmem>>, vector<8x8x16xf32>
    %273 = vector.shape_cast %272 : vector<8x8x16xf32> to vector<64x16xf32>
    %c5_294 = arith.constant 5 : index
    %c0_295 = arith.constant 0 : index
    %c0_296 = arith.constant 0 : index
    %274 = vector.load %arg7[%c5_294, %c0_295, %c0_296] : memref<9x16x16xf32, #tpu.memory_space<vmem>>, vector<1x16x16xf32>
    %275 = vector.shape_cast %274 : vector<1x16x16xf32> to vector<16x16xf32>
    %cst_297 = arith.constant dense<0.000000e+00> : vector<64x16xf32>
    %276 = tpu.matmul %273, %275, %cst_297 {dimension_numbers = #tpu.dot_dimension_numbers<[1], [0], [0], [1], [0, 0, 1, 1], [], []>} : vector<64x16xf32>, vector<16x16xf32>, vector<64x16xf32> -> vector<64x16xf32>
    %277 = arith.addf %271, %276 : vector<64x16xf32>
    %c2_298 = arith.constant 2 : index
    %c0_299 = arith.constant 0 : index
    %c0_300 = arith.constant 0 : index
    %278 = vector.load %arg10[%c2_298, %c0_299, %c0_300] : memref<10x10x24xf32, #tpu.memory_space<vmem>>, vector<8x8x16xf32>
    %279 = vector.shape_cast %278 : vector<8x8x16xf32> to vector<64x16xf32>
    %c6_301 = arith.constant 6 : index
    %c0_302 = arith.constant 0 : index
    %c0_303 = arith.constant 0 : index
    %280 = vector.load %arg7[%c6_301, %c0_302, %c0_303] : memref<9x16x16xf32, #tpu.memory_space<vmem>>, vector<1x16x16xf32>
    %281 = vector.shape_cast %280 : vector<1x16x16xf32> to vector<16x16xf32>
    %cst_304 = arith.constant dense<0.000000e+00> : vector<64x16xf32>
    %282 = tpu.matmul %279, %281, %cst_304 {dimension_numbers = #tpu.dot_dimension_numbers<[1], [0], [0], [1], [0, 0, 1, 1], [], []>} : vector<64x16xf32>, vector<16x16xf32>, vector<64x16xf32> -> vector<64x16xf32>
    %283 = arith.addf %277, %282 : vector<64x16xf32>
    %c2_305 = arith.constant 2 : index
    %c1_306 = arith.constant 1 : index
    %c0_307 = arith.constant 0 : index
    %284 = vector.load %arg10[%c2_305, %c1_306, %c0_307] : memref<10x10x24xf32, #tpu.memory_space<vmem>>, vector<8x8x16xf32>
    %285 = vector.shape_cast %284 : vector<8x8x16xf32> to vector<64x16xf32>
    %c7_308 = arith.constant 7 : index
    %c0_309 = arith.constant 0 : index
    %c0_310 = arith.constant 0 : index
    %286 = vector.load %arg7[%c7_308, %c0_309, %c0_310] : memref<9x16x16xf32, #tpu.memory_space<vmem>>, vector<1x16x16xf32>
    %287 = vector.shape_cast %286 : vector<1x16x16xf32> to vector<16x16xf32>
    %cst_311 = arith.constant dense<0.000000e+00> : vector<64x16xf32>
    %288 = tpu.matmul %285, %287, %cst_311 {dimension_numbers = #tpu.dot_dimension_numbers<[1], [0], [0], [1], [0, 0, 1, 1], [], []>} : vector<64x16xf32>, vector<16x16xf32>, vector<64x16xf32> -> vector<64x16xf32>
    %289 = arith.addf %283, %288 : vector<64x16xf32>
    %c2_312 = arith.constant 2 : index
    %c2_313 = arith.constant 2 : index
    %c0_314 = arith.constant 0 : index
    %290 = vector.load %arg10[%c2_312, %c2_313, %c0_314] : memref<10x10x24xf32, #tpu.memory_space<vmem>>, vector<8x8x16xf32>
    %291 = vector.shape_cast %290 : vector<8x8x16xf32> to vector<64x16xf32>
    %c8_315 = arith.constant 8 : index
    %c0_316 = arith.constant 0 : index
    %c0_317 = arith.constant 0 : index
    %292 = vector.load %arg7[%c8_315, %c0_316, %c0_317] : memref<9x16x16xf32, #tpu.memory_space<vmem>>, vector<1x16x16xf32>
    %293 = vector.shape_cast %292 : vector<1x16x16xf32> to vector<16x16xf32>
    %cst_318 = arith.constant dense<0.000000e+00> : vector<64x16xf32>
    %294 = tpu.matmul %291, %293, %cst_318 {dimension_numbers = #tpu.dot_dimension_numbers<[1], [0], [0], [1], [0, 0, 1, 1], [], []>} : vector<64x16xf32>, vector<16x16xf32>, vector<64x16xf32> -> vector<64x16xf32>
    %295 = arith.addf %289, %294 : vector<64x16xf32>
    %c0_319 = arith.constant 0 : index
    %c0_320 = arith.constant 0 : index
    %296 = vector.load %arg8[%c0_319, %c0_320] : memref<1x16xf32, #tpu.memory_space<vmem>>, vector<1x16xf32>
    %297 = vector.broadcast %296 : vector<1x16xf32> to vector<64x16xf32>
    %298 = arith.addf %295, %297 : vector<64x16xf32>
    %cst_321 = arith.constant dense<0.000000e+00> : vector<4xf32>
    %299 = vector.multi_reduction <add>, %162, %cst_321 [0] : vector<64x4xf32> to vector<4xf32>
    %300 = vector.shape_cast %299 : vector<4xf32> to vector<1x4xf32>
    %cst_322 = arith.constant 1.000000e+00 : f32
    %301 = vector.broadcast %cst_322 : f32 to vector<1x4xf32>
    %302 = arith.maximumf %300, %301 : vector<1x4xf32>
    %cst_323 = arith.constant 1.000000e+00 : f32
    %303 = vector.broadcast %cst_323 : f32 to vector<1x4xf32>
    %304 = arith.divf %303, %302 : vector<1x4xf32>
    %cst_324 = arith.constant dense<0.000000e+00> : vector<4xf32>
    %305 = vector.multi_reduction <add>, %164, %cst_324 [0] : vector<64x4xf32> to vector<4xf32>
    %306 = vector.shape_cast %305 : vector<4xf32> to vector<1x4xf32>
    %cst_325 = arith.constant 1.000000e+00 : f32
    %307 = vector.broadcast %cst_325 : f32 to vector<1x4xf32>
    %308 = arith.maximumf %306, %307 : vector<1x4xf32>
    %cst_326 = arith.constant 1.000000e+00 : f32
    %309 = vector.broadcast %cst_326 : f32 to vector<1x4xf32>
    %310 = arith.divf %309, %308 : vector<1x4xf32>
    %311 = vector.broadcast %304 : vector<1x4xf32> to vector<64x4xf32>
    %312 = arith.mulf %162, %311 : vector<64x4xf32>
    %313 = vector.broadcast %310 : vector<1x4xf32> to vector<64x4xf32>
    %314 = arith.mulf %164, %313 : vector<64x4xf32>
    %315 = arith.addf %312, %314 : vector<64x4xf32>
    %cst_327 = arith.constant dense<0.000000e+00> : vector<4x16xf32>
    %316 = tpu.matmul %315, %298, %cst_327 {dimension_numbers = #tpu.dot_dimension_numbers<[0], [0], [1], [1], [0, 1, 1, 1], [], []>} : vector<64x4xf32>, vector<64x16xf32>, vector<4x16xf32> -> vector<4x16xf32>
    %c1_328 = arith.constant 1 : index
    %c0_329 = arith.constant 0 : index
    %c0_330 = arith.constant 0 : index
    %317 = vector.load %arg9[%c1_328, %c0_329, %c0_330] : memref<2x4x16xf32, #tpu.memory_space<vmem>>, vector<1x4x16xf32>
    %318 = vector.shape_cast %317 : vector<1x4x16xf32> to vector<4x16xf32>
    %319 = vector.shape_cast %316 : vector<4x16xf32> to vector<1x4x16xf32>
    tpu.vector_store %arg9[%c1_328, %c0_329, %c0_330], %319 {strides = array<i32>} : memref<2x4x16xf32, #tpu.memory_space<vmem>>, vector<1x4x16xf32>,
    return
  }
  func.func @transform_0(%arg0: i32) -> (i32, i32, i32) {
    %c0_i32 = arith.constant 0 : i32
    %c0_i32_0 = arith.constant 0 : i32
    %c0_i32_1 = arith.constant 0 : i32
    return %arg0, %c0_i32, %c0_i32_0 : i32, i32, i32
  }
  func.func @transform_1(%arg0: i32) -> (i32, i32, i32) {
    %c0_i32 = arith.constant 0 : i32
    %c0_i32_0 = arith.constant 0 : i32
    %c0_i32_1 = arith.constant 0 : i32
    return %arg0, %c0_i32, %c0_i32_0 : i32, i32, i32
  }
  func.func @transform_2(%arg0: i32) -> (i32, i32, i32) {
    %c0_i32 = arith.constant 0 : i32
    %c0_i32_0 = arith.constant 0 : i32
    %c0_i32_1 = arith.constant 0 : i32
    return %arg0, %c0_i32, %c0_i32_0 : i32, i32, i32
  }
  func.func @transform_3(%arg0: i32) -> (i32, i32, i32) {
    %c0_i32 = arith.constant 0 : i32
    %c0_i32_0 = arith.constant 0 : i32
    %c0_i32_1 = arith.constant 0 : i32
    return %arg0, %c0_i32, %c0_i32_0 : i32, i32, i32
  }
  func.func @transform_4(%arg0: i32) -> (i32, i32, i32) {
    %c0_i32 = arith.constant 0 : i32
    %c0_i32_0 = arith.constant 0 : i32
    %c0_i32_1 = arith.constant 0 : i32
    %c0_i32_2 = arith.constant 0 : i32
    return %c0_i32, %c0_i32_0, %c0_i32_1 : i32, i32, i32
  }
  func.func @transform_5(%arg0: i32) -> (i32, i32) {
    %c0_i32 = arith.constant 0 : i32
    %c0_i32_0 = arith.constant 0 : i32
    %c0_i32_1 = arith.constant 0 : i32
    return %c0_i32, %c0_i32_0 : i32, i32
  }
  func.func @transform_6(%arg0: i32) -> (i32, i32, i32) {
    %c0_i32 = arith.constant 0 : i32
    %c0_i32_0 = arith.constant 0 : i32
    %c0_i32_1 = arith.constant 0 : i32
    %c0_i32_2 = arith.constant 0 : i32
    return %c0_i32, %c0_i32_0, %c0_i32_1 : i32, i32, i32
  }
  func.func @transform_7(%arg0: i32) -> (i32, i32) {
    %c0_i32 = arith.constant 0 : i32
    %c0_i32_0 = arith.constant 0 : i32
    %c0_i32_1 = arith.constant 0 : i32
    return %c0_i32, %c0_i32_0 : i32, i32
  }
  func.func @transform_8(%arg0: i32) -> (i32, i32, i32) {
    %c0_i32 = arith.constant 0 : i32
    %c0_i32_0 = arith.constant 0 : i32
    %c0_i32_1 = arith.constant 0 : i32
    return %arg0, %c0_i32, %c0_i32_0 : i32, i32, i32
  }
}

</mosaic_0001>

<llo_original>
// kernel: tpu_custom_call.1
$region0: #{tpu_custom_call.1}
  #allocation0 [shape = 'u32[]', space=smem, size = 0x4, offset = 0x4, fixed_abs, tag = 'smem constant byte address 0x4 - core index']
  #allocation1 [shape = 'u32[144,128]{1,0:T(1,128)}', space=vmem, size = 0x12000, scoped, tag = 'internal scratch']
  #allocation2 [shape = 'f32[10,10,24]{2,1,0:T(8,128)}', space=vmem, size = 0x14000, scoped, tag = 'scratch operand']
  %s0 = inlined_call_operand.vmem [shape: f32[2,64,4], index: 0, kind: input, shape index: {}]
  %s1 = inlined_call_operand.vmem [shape: f32[2,64,4], index: 1, kind: input, shape index: {}]
  %s2 = inlined_call_operand.vmem [shape: f32[2,4,8], index: 2, kind: input, shape index: {}]
  %s3 = inlined_call_operand.vmem [shape: f32[2,1,8], index: 3, kind: input, shape index: {}]
  %s4 = inlined_call_operand.vmem [shape: f32[9,24,16], index: 4, kind: input, shape index: {}]
  %s5 = inlined_call_operand.vmem [shape: f32[1,16], index: 5, kind: input, shape index: {}]
  %s6 = inlined_call_operand.vmem [shape: f32[9,16,16], index: 6, kind: input, shape index: {}]
  %s7 = inlined_call_operand.vmem [shape: f32[1,16], index: 7, kind: input, shape index: {}]
  %s8 = inlined_call_operand.hbm [shape: f32[2,4,16], index: 8, kind: output, shape index: {}]
  %s9 = sld [smem:[#allocation0]]
  $region42: #{tpu_custom_call.1} parent=0
    _
  %s11 = ssub.s32 1, %s9
  %s12 = scalar_select 0, %s11, %s9
  $region1: #{tpu_custom_call.1} parent=0
    #allocation3 [shape = 'u8[4096]{0}', space=vmem, size = 0x1000, scoped, tag = 'output window, operand 0, single buffered']
    #allocation4 [shape = 's32[1]{0}', space=sflag, size = 0x4, scoped, tag = 'scoped memory for tpu_custom_call.1']
    %13 = vsyncpa [#allocation4], 0
    // Predicated region
    $region2: #{tpu_custom_call.1} parent=1 // pred_check
      _
    $region3: #{tpu_custom_call.1} parent=1 // pred_check_branch
      %15 = sbr.rel (0) target = $region5
    $region4: #{tpu_custom_call.1} parent=1 // pred_region
      _
    $region5: #{tpu_custom_call.1} parent=1 // pred_fallthru
      _
    // Predicated region
    $region6: #{tpu_custom_call.1} parent=1 // pred_check
      _
    $region7: #{tpu_custom_call.1} parent=1 // pred_check_branch
      %17 = sbr.rel (0) target = $region9
    $region8: #{tpu_custom_call.1} parent=1 // pred_region
      _
    $region9: #{tpu_custom_call.1} parent=1 // pred_fallthru
      _
    // Predicated region
    $region10: #{tpu_custom_call.1} parent=1 // pred_check
      _
    $region11: #{tpu_custom_call.1} parent=1 // pred_check_branch
      %19 = sbr.rel (0) target = $region13
    $region12: #{tpu_custom_call.1} parent=1 // pred_region
      _
    $region13: #{tpu_custom_call.1} parent=1 // pred_fallthru
      _
    // Predicated region
    $region14: #{tpu_custom_call.1} parent=1 // pred_check
      _
    $region15: #{tpu_custom_call.1} parent=1 // pred_check_branch
      %21 = sbr.rel (0) target = $region17
    $region16: #{tpu_custom_call.1} parent=1 // pred_region
      _
    $region17: #{tpu_custom_call.1} parent=1 // pred_fallthru
      _
    // Predicated region
    $region18: #{tpu_custom_call.1} parent=1 // pred_check
      _
    $region19: #{tpu_custom_call.1} parent=1 // pred_check_branch
      %23 = sbr.rel (0) target = $region21
    $region20: #{tpu_custom_call.1} parent=1 // pred_region
      _
    $region21: #{tpu_custom_call.1} parent=1 // pred_fallthru
      _
    // Predicated region
    $region22: #{tpu_custom_call.1} parent=1 // pred_check
      _
    $region23: #{tpu_custom_call.1} parent=1 // pred_check_branch
      %25 = sbr.rel (0) target = $region25
    $region24: #{tpu_custom_call.1} parent=1 // pred_region
      _
    $region25: #{tpu_custom_call.1} parent=1 // pred_fallthru
      _
    // Predicated region
    $region26: #{tpu_custom_call.1} parent=1 // pred_check
      _
    $region27: #{tpu_custom_call.1} parent=1 // pred_check_branch
      %27 = sbr.rel (0) target = $region29
    $region28: #{tpu_custom_call.1} parent=1 // pred_region
      _
    $region29: #{tpu_custom_call.1} parent=1 // pred_fallthru
      _
    // Predicated region
    $region30: #{tpu_custom_call.1} parent=1 // pred_check
      _
    $region31: #{tpu_custom_call.1} parent=1 // pred_check_branch
      %29 = sbr.rel (0) target = $region33
    $region32: #{tpu_custom_call.1} parent=1 // pred_region
      _
    $region33: #{tpu_custom_call.1} parent=1 // pred_fallthru
      _
    %vm30 = vcmask 195584
    %31 = vst.msk [vmem:[#allocation2] sm:$0xff] %vm30, 0.0
    %vm32 = vcmask 189440
    %33 = vst.msk [vmem:[#allocation2 + $0x8] sm:$0x3] %vm32, 0.0
    %34 = vst.msk [vmem:[#allocation2 + $0x10] sm:$0xff] %vm30, 0.0
    %35 = vst.msk [vmem:[#allocation2 + $0x18] sm:$0x3] %vm32, 0.0
    %36 = vst.msk [vmem:[#allocation2 + $0x20] sm:$0xff] %vm30, 0.0
    %37 = vst.msk [vmem:[#allocation2 + $0x28] sm:$0x3] %vm32, 0.0
    %38 = vst.msk [vmem:[#allocation2 + $0x30] sm:$0xff] %vm30, 0.0
    %39 = vst.msk [vmem:[#allocation2 + $0x38] sm:$0x3] %vm32, 0.0
    %40 = vst.msk [vmem:[#allocation2 + $0x40] sm:$0xff] %vm30, 0.0
    %41 = vst.msk [vmem:[#allocation2 + $0x48] sm:$0x3] %vm32, 0.0
    %42 = vst.msk [vmem:[#allocation2 + $0x50] sm:$0xff] %vm30, 0.0
    %43 = vst.msk [vmem:[#allocation2 + $0x58] sm:$0x3] %vm32, 0.0
    %44 = vst.msk [vmem:[#allocation2 + $0x60] sm:$0xff] %vm30, 0.0
    %45 = vst.msk [vmem:[#allocation2 + $0x68] sm:$0x3] %vm32, 0.0
    %46 = vst.msk [vmem:[#allocation2 + $0x70] sm:$0xff] %vm30, 0.0
    %47 = vst.msk [vmem:[#allocation2 + $0x78] sm:$0x3] %vm32, 0.0
    %48 = vst.msk [vmem:[#allocation2 + $0x80] sm:$0xff] %vm30, 0.0
    %49 = vst.msk [vmem:[#allocation2 + $0x88] sm:$0x3] %vm32, 0.0
    %50 = vst.msk [vmem:[#allocation2 + $0x90] sm:$0xff] %vm30, 0.0
    %51 = vst.msk [vmem:[#allocation2 + $0x98] sm:$0x3] %vm32, 0.0
    %v52 = vld [vmem:[%s0] sm:$0xff]
    %v53 = vld [vmem:[%s0 + $0x8] sm:$0xff]
    %v54 = vld [vmem:[%s0 + $0x10] sm:$0xff]
    %v55 = vld [vmem:[%s0 + $0x18] sm:$0xff]
    %v56 = vld [vmem:[%s0 + $0x20] sm:$0xff]
    %v57 = vld [vmem:[%s0 + $0x28] sm:$0xff]
    %v58 = vld [vmem:[%s0 + $0x30] sm:$0xff]
    %v59 = vld [vmem:[%s0 + $0x38] sm:$0xff]
    %v60 = vld [vmem:[%s1] sm:$0xff]
    %v61 = vld [vmem:[%s1 + $0x8] sm:$0xff]
    %v62 = vld [vmem:[%s1 + $0x10] sm:$0xff]
    %v63 = vld [vmem:[%s1 + $0x18] sm:$0xff]
    %v64 = vld [vmem:[%s1 + $0x20] sm:$0xff]
    %v65 = vld [vmem:[%s1 + $0x28] sm:$0xff]
    %v66 = vld [vmem:[%s1 + $0x30] sm:$0xff]
    %v67 = vld [vmem:[%s1 + $0x38] sm:$0xff]
    %v68 = vld [vmem:[%s2] sm:$0xf]
    %vm69 = vcmask 31744
    %v71 = vsel %vm69, %v52, 0
    %v74 = vsel %vm69, %v53, 0
    %v77 = vsel %vm69, %v54, 0
    %v80 = vsel %vm69, %v55, 0
    %v83 = vsel %vm69, %v56, 0
    %v86 = vsel %vm69, %v57, 0
    %v89 = vsel %vm69, %v58, 0
    %v92 = vsel %vm69, %v59, 0
    %vm94 = vcmask 1043456
    %v96 = vsel %vm94, %v68, 0
    %98 = vmatprep.subr.mxu0 0.0
    %99 = vmatpush1.msra.mxu0 0.0
    %100 = vmatprep.subr.mxu0 0.0
    %101 = vmatpush1.msra.mxu0 0.0
    %102 = vmatprep.subr.mxu0 0.0
    %103 = vmatpush1.msra.mxu0 0.0
    %104 = vmatprep.subr.mxu0 0.0
    %105 = vmatpush1.msra.mxu0 0.0
    %106 = vmatprep.subr.mxu0 0.0
    %107 = vmatpush1.msra.mxu0 0.0
    %108 = vmatprep.subr.mxu0 0.0
    %109 = vmatpush1.msra.mxu0 0.0
    %110 = vmatprep.subr.mxu0 0.0
    %111 = vmatpush1.msra.mxu0 0.0
    %112 = vmatprep.subr.mxu0 0.0
    %113 = vmatpush1.msra.mxu0 0.0
    %114 = vmatprep.subr.mxu0 0.0
    %115 = vmatpush1.msra.mxu0 0.0
    %116 = vmatprep.subr.mxu0 0.0
    %117 = vmatpush1.msra.mxu0 0.0
    %118 = vmatprep.subr.mxu0 0.0
    %119 = vmatpush1.msra.mxu0 0.0
    %120 = vmatprep.subr.mxu0 0.0
    %121 = vmatpush1.msra.mxu0 0.0
    %122 = vmatprep.subr.mxu0 0.0
    %123 = vmatpush1.msra.mxu0 0.0
    %124 = vmatprep.subr.mxu0 0.0
    %125 = vmatpush1.msra.mxu0 0.0
    %126 = vmatprep.subr.mxu0 0.0
    %127 = vmatpush1.msra.mxu0 0.0
    %128 = vmatprep.subr.mxu0 0.0
    %129 = vmatpush1.msra.mxu0 %v96
    %130 = vmatprep.subr.mxu0 0.0
    %131 = vmatpush2.msra.mxu0 0.0
    %132 = vmatprep.subr.mxu0 0.0
    %133 = vmatpush2.msra.mxu0 0.0
    %134 = vmatprep.subr.mxu0 0.0
    %135 = vmatpush2.msra.mxu0 0.0
    %136 = vmatprep.subr.mxu0 0.0
    %137 = vmatpush2.msra.mxu0 0.0
    %138 = vmatprep.subr.mxu0 0.0
    %139 = vmatpush2.msra.mxu0 0.0
    %140 = vmatprep.subr.mxu0 0.0
    %141 = vmatpush2.msra.mxu0 0.0
    %142 = vmatprep.subr.mxu0 0.0
    %143 = vmatpush2.msra.mxu0 0.0
    %144 = vmatprep.subr.mxu0 0.0
    %145 = vmatpush2.msra.mxu0 0.0
    %146 = vmatprep.subr.mxu0 0.0
    %147 = vmatpush2.msra.mxu0 0.0
    %148 = vmatprep.subr.mxu0 0.0
    %149 = vmatpush2.msra.mxu0 0.0
    %150 = vmatprep.subr.mxu0 0.0
    %151 = vmatpush2.msra.mxu0 0.0
    %152 = vmatprep.subr.mxu0 0.0
    %153 = vmatpush2.msra.mxu0 0.0
    %154 = vmatprep.subr.mxu0 0.0
    %155 = vmatpush2.msra.mxu0 0.0
    %156 = vmatprep.subr.mxu0 0.0
    %157 = vmatpush2.msra.mxu0 0.0
    %158 = vmatprep.subr.mxu0 0.0
    %159 = vmatpush2.msra.mxu0 0.0
    %160 = vmatprep.subr.mxu0 0.0
    %161 = vmatpush2.msra.mxu0 0.0
    %162 = vmatprep.mubr.f32.mxu0 0.0
    %163 = vmatmul.mubr.f32.gmra.mxu0 %v71
    %v164 = vpop.f32.mrf.mxu0
    %v165 = vadd.f32 0.0, %v164
    %v166 = vpop.f32.mrf.mxu0
    %167 = vmatprep.mubr.f32.mxu0 0.0
    %168 = vmatmul.mubr.f32.gmra.mxu0 %v74
    %v169 = vpop.f32.mrf.mxu0
    %v170 = vadd.f32 0.0, %v169
    %v171 = vpop.f32.mrf.mxu0
    %172 = vmatprep.mubr.f32.mxu0 0.0
    %173 = vmatmul.mubr.f32.gmra.mxu0 %v77
    %v174 = vpop.f32.mrf.mxu0
    %v175 = vadd.f32 0.0, %v174
    %v176 = vpop.f32.mrf.mxu0
    %177 = vmatprep.mubr.f32.mxu0 0.0
    %178 = vmatmul.mubr.f32.gmra.mxu0 %v80
    %v179 = vpop.f32.mrf.mxu0
    %v180 = vadd.f32 0.0, %v179
    %v181 = vpop.f32.mrf.mxu0
    %182 = vmatprep.mubr.f32.mxu0 0.0
    %183 = vmatmul.mubr.f32.gmra.mxu0 %v83
    %v184 = vpop.f32.mrf.mxu0
    %v185 = vadd.f32 0.0, %v184
    %v186 = vpop.f32.mrf.mxu0
    %187 = vmatprep.mubr.f32.mxu0 0.0
    %188 = vmatmul.mubr.f32.gmra.mxu0 %v86
    %v189 = vpop.f32.mrf.mxu0
    %v190 = vadd.f32 0.0, %v189
    %v191 = vpop.f32.mrf.mxu0
    %192 = vmatprep.mubr.f32.mxu0 0.0
    %193 = vmatmul.mubr.f32.gmra.mxu0 %v89
    %v194 = vpop.f32.mrf.mxu0
    %v195 = vadd.f32 0.0, %v194
    %v196 = vpop.f32.mrf.mxu0
    %197 = vmatprep.mubr.f32.mxu0 0.0
    %198 = vmatmul.mubr.f32.gmra.mxu0 %v92
    %v199 = vpop.f32.mrf.mxu0
    %v200 = vadd.f32 0.0, %v199
    %v201 = vpop.f32.mrf.mxu0
    %202 = vdwg.mxu0
    %v204 = vsel %vm69, %v60, 0
    %v207 = vsel %vm69, %v61, 0
    %v210 = vsel %vm69, %v62, 0
    %v213 = vsel %vm69, %v63, 0
    %v216 = vsel %vm69, %v64, 0
    %v219 = vsel %vm69, %v65, 0
    %v222 = vsel %vm69, %v66, 0
    %v225 = vsel %vm69, %v67, 0
    %227 = vmatprep.subr.mxu0 0.0
    %228 = vmatpush1.msra.mxu0 0.0
    %229 = vmatprep.subr.mxu0 0.0
    %230 = vmatpush1.msra.mxu0 0.0
    %231 = vmatprep.subr.mxu0 0.0
    %232 = vmatpush1.msra.mxu0 0.0
    %233 = vmatprep.subr.mxu0 0.0
    %234 = vmatpush1.msra.mxu0 0.0
    %235 = vmatprep.subr.mxu0 0.0
    %236 = vmatpush1.msra.mxu0 0.0
    %237 = vmatprep.subr.mxu0 0.0
    %238 = vmatpush1.msra.mxu0 0.0
    %239 = vmatprep.subr.mxu0 0.0
    %240 = vmatpush1.msra.mxu0 0.0
    %241 = vmatprep.subr.mxu0 0.0
    %242 = vmatpush1.msra.mxu0 0.0
    %243 = vmatprep.subr.mxu0 0.0
    %244 = vmatpush1.msra.mxu0 0.0
    %245 = vmatprep.subr.mxu0 0.0
    %246 = vmatpush1.msra.mxu0 0.0
    %247 = vmatprep.subr.mxu0 0.0
    %248 = vmatpush1.msra.mxu0 0.0
    %249 = vmatprep.subr.mxu0 0.0
    %250 = vmatpush1.msra.mxu0 0.0
    %251 = vmatprep.subr.mxu0 0.0
    %252 = vmatpush1.msra.mxu0 0.0
    %253 = vmatprep.subr.mxu0 0.0
    %254 = vmatpush1.msra.mxu0 0.0
    %255 = vmatprep.subr.mxu0 0.0
    %256 = vmatpush1.msra.mxu0 0.0
    %257 = vmatprep.subr.mxu0 0.0
    %258 = vmatpush1.msra.mxu0 %v96
    %259 = vmatprep.subr.mxu0 0.0
    %260 = vmatpush2.msra.mxu0 0.0
    %261 = vmatprep.subr.mxu0 0.0
    %262 = vmatpush2.msra.mxu0 0.0
    %263 = vmatprep.subr.mxu0 0.0
    %264 = vmatpush2.msra.mxu0 0.0
    %265 = vmatprep.subr.mxu0 0.0
    %266 = vmatpush2.msra.mxu0 0.0
    %267 = vmatprep.subr.mxu0 0.0
    %268 = vmatpush2.msra.mxu0 0.0
    %269 = vmatprep.subr.mxu0 0.0
    %270 = vmatpush2.msra.mxu0 0.0
    %271 = vmatprep.subr.mxu0 0.0
    %272 = vmatpush2.msra.mxu0 0.0
    %273 = vmatprep.subr.mxu0 0.0
    %274 = vmatpush2.msra.mxu0 0.0
    %275 = vmatprep.subr.mxu0 0.0
    %276 = vmatpush2.msra.mxu0 0.0
    %277 = vmatprep.subr.mxu0 0.0
    %278 = vmatpush2.msra.mxu0 0.0
    %279 = vmatprep.subr.mxu0 0.0
    %280 = vmatpush2.msra.mxu0 0.0
    %281 = vmatprep.subr.mxu0 0.0
    %282 = vmatpush2.msra.mxu0 0.0
    %283 = vmatprep.subr.mxu0 0.0
    %284 = vmatpush2.msra.mxu0 0.0
    %285 = vmatprep.subr.mxu0 0.0
    %286 = vmatpush2.msra.mxu0 0.0
    %287 = vmatprep.subr.mxu0 0.0
    %288 = vmatpush2.msra.mxu0 0.0
    %289 = vmatprep.subr.mxu0 0.0
    %290 = vmatpush2.msra.mxu0 0.0
    %291 = vmatprep.mubr.f32.mxu0 0.0
    %292 = vmatmul.mubr.f32.gmra.mxu0 %v204
    %v293 = vpop.f32.mrf.mxu0
    %v294 = vadd.f32 0.0, %v293
    %v295 = vpop.f32.mrf.mxu0
    %296 = vmatprep.mubr.f32.mxu0 0.0
    %297 = vmatmul.mubr.f32.gmra.mxu0 %v207
    %v298 = vpop.f32.mrf.mxu0
    %v299 = vadd.f32 0.0, %v298
    %v300 = vpop.f32.mrf.mxu0
    %301 = vmatprep.mubr.f32.mxu0 0.0
    %302 = vmatmul.mubr.f32.gmra.mxu0 %v210
    %v303 = vpop.f32.mrf.mxu0
    %v304 = vadd.f32 0.0, %v303
    %v305 = vpop.f32.mrf.mxu0
    %306 = vmatprep.mubr.f32.mxu0 0.0
    %307 = vmatmul.mubr.f32.gmra.mxu0 %v213
    %v308 = vpop.f32.mrf.mxu0
    %v309 = vadd.f32 0.0, %v308
    %v310 = vpop.f32.mrf.mxu0
    %311 = vmatprep.mubr.f32.mxu0 0.0
    %312 = vmatmul.mubr.f32.gmra.mxu0 %v216
    %v313 = vpop.f32.mrf.mxu0
    %v314 = vadd.f32 0.0, %v313
    %v315 = vpop.f32.mrf.mxu0
    %316 = vmatprep.mubr.f32.mxu0 0.0
    %317 = vmatmul.mubr.f32.gmra.mxu0 %v219
    %v318 = vpop.f32.mrf.mxu0
    %v319 = vadd.f32 0.0, %v318
    %v320 = vpop.f32.mrf.mxu0
    %321 = vmatprep.mubr.f32.mxu0 0.0
    %322 = vmatmul.mubr.f32.gmra.mxu0 %v222
    %v323 = vpop.f32.mrf.mxu0
    %v324 = vadd.f32 0.0, %v323
    %v325 = vpop.f32.mrf.mxu0
    %326 = vmatprep.mubr.f32.mxu0 0.0
    %327 = vmatmul.mubr.f32.gmra.mxu0 %v225
    %v328 = vpop.f32.mrf.mxu0
    %v329 = vadd.f32 0.0, %v328
    %v330 = vpop.f32.mrf.mxu0
    %331 = vdwg.mxu0
    %s332 = scalar_lea.vmem [#allocation2], 16
    %vm333 = vcmask 64512
    %334 = vst.msk [vmem:[%s332 + $0x1] sm:$0xff] %vm333, %v165
    %335 = vst.msk [vmem:[%s332 + $0x11] sm:$0xff] %vm333, %v170
    %336 = vst.msk [vmem:[%s332 + $0x21] sm:$0xff] %vm333, %v175
    %337 = vst.msk [vmem:[%s332 + $0x31] sm:$0xff] %vm333, %v180
    %338 = vst.msk [vmem:[%s332 + $0x41] sm:$0xff] %vm333, %v185
    %339 = vst.msk [vmem:[%s332 + $0x51] sm:$0xff] %vm333, %v190
    %340 = vst.msk [vmem:[%s332 + $0x61] sm:$0xff] %vm333, %v195
    %341 = vst.msk [vmem:[%s332 + $0x71] sm:$0xff] %vm333, %v200
    %350 = vrot.lane.b32.xlu0 %v294, 8
    %v351 = vpop.permute.xlu0 %350
    %352 = vrot.lane.b32.xlu0 %v299, 8
    %v353 = vpop.permute.xlu0 %352
    %354 = vrot.lane.b32.xlu0 %v304, 8
    %v355 = vpop.permute.xlu0 %354
    %356 = vrot.lane.b32.xlu0 %v309, 8
    %v357 = vpop.permute.xlu0 %356
    %358 = vrot.lane.b32.xlu0 %v314, 8
    %v359 = vpop.permute.xlu0 %358
    %360 = vrot.lane.b32.xlu0 %v319, 8
    %v361 = vpop.permute.xlu0 %360
    %362 = vrot.lane.b32.xlu0 %v324, 8
    %v363 = vpop.permute.xlu0 %362
    %364 = vrot.lane.b32.xlu0 %v329, 8
    %v365 = vpop.permute.xlu0 %364
    %vm374 = vcmask 130112
    %375 = vst.msk [vmem:[%s332 + $0x1] sm:$0xff] %vm374, %v351
    %376 = vst.msk [vmem:[%s332 + $0x11] sm:$0xff] %vm374, %v353
    %377 = vst.msk [vmem:[%s332 + $0x21] sm:$0xff] %vm374, %v355
    %378 = vst.msk [vmem:[%s332 + $0x31] sm:$0xff] %vm374, %v357
    %379 = vst.msk [vmem:[%s332 + $0x41] sm:$0xff] %vm374, %v359
    %380 = vst.msk [vmem:[%s332 + $0x51] sm:$0xff] %vm374, %v361
    %381 = vst.msk [vmem:[%s332 + $0x61] sm:$0xff] %vm374, %v363
    %382 = vst.msk [vmem:[%s332 + $0x71] sm:$0xff] %vm374, %v365
    %v383 = vld [vmem:[%s3] sm:$0x1]
    %v385 = vlaneseq
    %v386 = vshrl.u32 %v385, 7
    %v387 = vsub.s32 0, %v386
    %v388 = vrot.slane %v383, %v387
    %389 = vrot.lane.b32.xlu0 %v388, 16
    %v390 = vpop.permute.xlu0 %389
    %vm392 = vcmask 195712
    %393 = vst.msk [vmem:[%s332 + $0x1] sm:$0xff] %vm392, %v390
    %394 = vst.msk [vmem:[%s332 + $0x11] sm:$0xff] %vm392, %v390
    %395 = vst.msk [vmem:[%s332 + $0x21] sm:$0xff] %vm392, %v390
    %396 = vst.msk [vmem:[%s332 + $0x31] sm:$0xff] %vm392, %v390
    %397 = vst.msk [vmem:[%s332 + $0x41] sm:$0xff] %vm392, %v390
    %398 = vst.msk [vmem:[%s332 + $0x51] sm:$0xff] %vm392, %v390
    %399 = vst.msk [vmem:[%s332 + $0x61] sm:$0xff] %vm392, %v390
    %400 = vst.msk [vmem:[%s332 + $0x71] sm:$0xff] %vm392, %v390
    %v401 = vld [vmem:[#allocation2] sm:$0xff]
    %v402 = vld [vmem:[#allocation2 + $0x10] sm:$0xff]
    %v403 = vld [vmem:[#allocation2 + $0x20] sm:$0xff]
    %v404 = vld [vmem:[#allocation2 + $0x30] sm:$0xff]
    %v405 = vld [vmem:[#allocation2 + $0x40] sm:$0xff]
    %v406 = vld [vmem:[#allocation2 + $0x50] sm:$0xff]
    %v407 = vld [vmem:[#allocation2 + $0x60] sm:$0xff]
    %v408 = vld [vmem:[#allocation2 + $0x70] sm:$0xff]
    %v409 = vld [vmem:[%s4] sm:$0xff]
    %v410 = vld [vmem:[%s4 + $0x8] sm:$0xff]
    %v411 = vld [vmem:[%s4 + $0x10] sm:$0xff]
    %v412 = vld [vmem:[#allocation2 + $0x1] sm:$0xff]
    %v413 = vld [vmem:[#allocation2 + $0x11] sm:$0xff]
    %v414 = vld [vmem:[#allocation2 + $0x21] sm:$0xff]
    %v415 = vld [vmem:[#allocation2 + $0x31] sm:$0xff]
    %v416 = vld [vmem:[#allocation2 + $0x41] sm:$0xff]
    %v417 = vld [vmem:[#allocation2 + $0x51] sm:$0xff]
    %v418 = vld [vmem:[#allocation2 + $0x61] sm:$0xff]
    %v419 = vld [vmem:[#allocation2 + $0x71] sm:$0xff]
    %s420 = scalar_lea.vmem %s4, 24
    %v421 = vld [vmem:[%s420] sm:$0xff]
    %v422 = vld [vmem:[%s420 + $0x8] sm:$0xff]
    %v423 = vld [vmem:[%s420 + $0x10] sm:$0xff]
    %v425 = vsel %vm30, %v412, 0
    %v428 = vsel %vm30, %v413, 0
    %v431 = vsel %vm30, %v414, 0
    %v434 = vsel %vm30, %v415, 0
    %v437 = vsel %vm30, %v416, 0
    %v440 = vsel %vm30, %v417, 0
    %v443 = vsel %vm30, %v418, 0
    %v446 = vsel %vm30, %v419, 0
    %448 = vmatprep.subr.mxu0 0.0
    %449 = vmatpush1.msra.mxu0 0.0
    %450 = vmatprep.subr.mxu0 0.0
    %451 = vmatpush1.msra.mxu0 0.0
    %452 = vmatprep.subr.mxu0 0.0
    %453 = vmatpush1.msra.mxu0 0.0
    %454 = vmatprep.subr.mxu0 0.0
    %455 = vmatpush1.msra.mxu0 0.0
    %456 = vmatprep.subr.mxu0 0.0
    %457 = vmatpush1.msra.mxu0 0.0
    %458 = vmatprep.subr.mxu0 0.0
    %459 = vmatpush1.msra.mxu0 0.0
    %460 = vmatprep.subr.mxu0 0.0
    %461 = vmatpush1.msra.mxu0 0.0
    %462 = vmatprep.subr.mxu0 0.0
    %463 = vmatpush1.msra.mxu0 0.0
    %464 = vmatprep.subr.mxu0 0.0
    %465 = vmatpush1.msra.mxu0 0.0
    %466 = vmatprep.subr.mxu0 0.0
    %467 = vmatpush1.msra.mxu0 0.0
    %468 = vmatprep.subr.mxu0 0.0
    %469 = vmatpush1.msra.mxu0 0.0
    %470 = vmatprep.subr.mxu0 0.0
    %471 = vmatpush1.msra.mxu0 0.0
    %472 = vmatprep.subr.mxu0 0.0
    %473 = vmatpush1.msra.mxu0 0.0
    %474 = vmatprep.subr.mxu0 0.0
    %475 = vmatpush1.msra.mxu0 %v423
    %476 = vmatprep.subr.mxu0 0.0
    %477 = vmatpush1.msra.mxu0 %v422
    %478 = vmatprep.subr.mxu0 0.0
    %479 = vmatpush1.msra.mxu0 %v421
    %480 = vmatprep.subr.mxu0 0.0
    %481 = vmatpush2.msra.mxu0 0.0
    %482 = vmatprep.subr.mxu0 0.0
    %483 = vmatpush2.msra.mxu0 0.0
    %484 = vmatprep.subr.mxu0 0.0
    %485 = vmatpush2.msra.mxu0 0.0
    %486 = vmatprep.subr.mxu0 0.0
    %487 = vmatpush2.msra.mxu0 0.0
    %488 = vmatprep.subr.mxu0 0.0
    %489 = vmatpush2.msra.mxu0 0.0
    %490 = vmatprep.subr.mxu0 0.0
    %491 = vmatpush2.msra.mxu0 0.0
    %492 = vmatprep.subr.mxu0 0.0
    %493 = vmatpush2.msra.mxu0 0.0
    %494 = vmatprep.subr.mxu0 0.0
    %495 = vmatpush2.msra.mxu0 0.0
    %496 = vmatprep.subr.mxu0 0.0
    %497 = vmatpush2.msra.mxu0 0.0
    %498 = vmatprep.subr.mxu0 0.0
    %499 = vmatpush2.msra.mxu0 0.0
    %500 = vmatprep.subr.mxu0 0.0
    %501 = vmatpush2.msra.mxu0 0.0
    %502 = vmatprep.subr.mxu0 0.0
    %503 = vmatpush2.msra.mxu0 0.0
    %504 = vmatprep.subr.mxu0 0.0
    %505 = vmatpush2.msra.mxu0 0.0
    %506 = vmatprep.subr.mxu0 0.0
    %507 = vmatpush2.msra.mxu0 0.0
    %508 = vmatprep.subr.mxu0 0.0
    %509 = vmatpush2.msra.mxu0 0.0
    %510 = vmatprep.subr.mxu0 0.0
    %511 = vmatpush2.msra.mxu0 0.0
    %512 = vmatprep.mubr.f32.mxu0 0.0
    %513 = vmatmul.mubr.f32.gmra.mxu0 %v425
    %v514 = vpop.f32.mrf.mxu0
    %v515 = vadd.f32 0.0, %v514
    %v516 = vpop.f32.mrf.mxu0
    %517 = vmatprep.mubr.f32.mxu0 0.0
    %518 = vmatmul.mubr.f32.gmra.mxu0 %v428
    %v519 = vpop.f32.mrf.mxu0
    %v520 = vadd.f32 0.0, %v519
    %v521 = vpop.f32.mrf.mxu0
    %522 = vmatprep.mubr.f32.mxu0 0.0
    %523 = vmatmul.mubr.f32.gmra.mxu0 %v431
    %v524 = vpop.f32.mrf.mxu0
    %v525 = vadd.f32 0.0, %v524
    %v526 = vpop.f32.mrf.mxu0
    %527 = vmatprep.mubr.f32.mxu0 0.0
    %528 = vmatmul.mubr.f32.gmra.mxu0 %v434
    %v529 = vpop.f32.mrf.mxu0
    %v530 = vadd.f32 0.0, %v529
    %v531 = vpop.f32.mrf.mxu0
    %532 = vmatprep.mubr.f32.mxu0 0.0
    %533 = vmatmul.mubr.f32.gmra.mxu0 %v437
    %v534 = vpop.f32.mrf.mxu0
    %v535 = vadd.f32 0.0, %v534
    %v536 = vpop.f32.mrf.mxu0
    %537 = vmatprep.mubr.f32.mxu0 0.0
    %538 = vmatmul.mubr.f32.gmra.mxu0 %v440
    %v539 = vpop.f32.mrf.mxu0
    %v540 = vadd.f32 0.0, %v539
    %v541 = vpop.f32.mrf.mxu0
    %542 = vmatprep.mubr.f32.mxu0 0.0
    %543 = vmatmul.mubr.f32.gmra.mxu0 %v443
    %v544 = vpop.f32.mrf.mxu0
    %v545 = vadd.f32 0.0, %v544
    %v546 = vpop.f32.mrf.mxu0
    %547 = vmatprep.mubr.f32.mxu0 0.0
    %548 = vmatmul.mubr.f32.gmra.mxu0 %v446
    %v549 = vpop.f32.mrf.mxu0
    %v550 = vadd.f32 0.0, %v549
    %v551 = vpop.f32.mrf.mxu0
    %552 = vdwg.mxu0
    %v554 = vsel %vm30, %v401, 0
    %v557 = vsel %vm30, %v402, 0
    %v560 = vsel %vm30, %v403, 0
    %v563 = vsel %vm30, %v404, 0
    %v566 = vsel %vm30, %v405, 0
    %v569 = vsel %vm30, %v406, 0
    %v572 = vsel %vm30, %v407, 0
    %v575 = vsel %vm30, %v408, 0
    %577 = vmatprep.subr.mxu0 0.0
    %578 = vmatpush1.msra.mxu0 0.0
    %579 = vmatprep.subr.mxu0 0.0
    %580 = vmatpush1.msra.mxu0 0.0
    %581 = vmatprep.subr.mxu0 0.0
    %582 = vmatpush1.msra.mxu0 0.0
    %583 = vmatprep.subr.mxu0 0.0
    %584 = vmatpush1.msra.mxu0 0.0
    %585 = vmatprep.subr.mxu0 0.0
    %586 = vmatpush1.msra.mxu0 0.0
    %587 = vmatprep.subr.mxu0 0.0
    %588 = vmatpush1.msra.mxu0 0.0
    %589 = vmatprep.subr.mxu0 0.0
    %590 = vmatpush1.msra.mxu0 0.0
    %591 = vmatprep.subr.mxu0 0.0
    %592 = vmatpush1.msra.mxu0 0.0
    %593 = vmatprep.subr.mxu0 0.0
    %594 = vmatpush1.msra.mxu0 0.0
    %595 = vmatprep.subr.mxu0 0.0
    %596 = vmatpush1.msra.mxu0 0.0
    %597 = vmatprep.subr.mxu0 0.0
    %598 = vmatpush1.msra.mxu0 0.0
    %599 = vmatprep.subr.mxu0 0.0
    %600 = vmatpush1.msra.mxu0 0.0
    %601 = vmatprep.subr.mxu0 0.0
    %602 = vmatpush1.msra.mxu0 0.0
    %603 = vmatprep.subr.mxu0 0.0
    %604 = vmatpush1.msra.mxu0 %v411
    %605 = vmatprep.subr.mxu0 0.0
    %606 = vmatpush1.msra.mxu0 %v410
    %607 = vmatprep.subr.mxu0 0.0
    %608 = vmatpush1.msra.mxu0 %v409
    %609 = vmatprep.subr.mxu0 0.0
    %610 = vmatpush2.msra.mxu0 0.0
    %611 = vmatprep.subr.mxu0 0.0
    %612 = vmatpush2.msra.mxu0 0.0
    %613 = vmatprep.subr.mxu0 0.0
    %614 = vmatpush2.msra.mxu0 0.0
    %615 = vmatprep.subr.mxu0 0.0
    %616 = vmatpush2.msra.mxu0 0.0
    %617 = vmatprep.subr.mxu0 0.0
    %618 = vmatpush2.msra.mxu0 0.0
    %619 = vmatprep.subr.mxu0 0.0
    %620 = vmatpush2.msra.mxu0 0.0
    %621 = vmatprep.subr.mxu0 0.0
    %622 = vmatpush2.msra.mxu0 0.0
    %623 = vmatprep.subr.mxu0 0.0
    %624 = vmatpush2.msra.mxu0 0.0
    %625 = vmatprep.subr.mxu0 0.0
    %626 = vmatpush2.msra.mxu0 0.0
    %627 = vmatprep.subr.mxu0 0.0
    %628 = vmatpush2.msra.mxu0 0.0
    %629 = vmatprep.subr.mxu0 0.0
    %630 = vmatpush2.msra.mxu0 0.0
    %631 = vmatprep.subr.mxu0 0.0
    %632 = vmatpush2.msra.mxu0 0.0
    %633 = vmatprep.subr.mxu0 0.0
    %634 = vmatpush2.msra.mxu0 0.0
    %635 = vmatprep.subr.mxu0 0.0
    %636 = vmatpush2.msra.mxu0 0.0
    %637 = vmatprep.subr.mxu0 0.0
    %638 = vmatpush2.msra.mxu0 0.0
    %639 = vmatprep.subr.mxu0 0.0
    %640 = vmatpush2.msra.mxu0 0.0
    %641 = vmatprep.mubr.f32.mxu0 0.0
    %642 = vmatmul.mubr.f32.gmra.mxu0 %v554
    %v643 = vpop.f32.mrf.mxu0
    %v644 = vadd.f32 %v515, %v643
    %v645 = vpop.f32.mrf.mxu0
    %646 = vmatprep.mubr.f32.mxu0 0.0
    %647 = vmatmul.mubr.f32.gmra.mxu0 %v557
    %v648 = vpop.f32.mrf.mxu0
    %v649 = vadd.f32 %v520, %v648
    %v650 = vpop.f32.mrf.mxu0
    %651 = vmatprep.mubr.f32.mxu0 0.0
    %652 = vmatmul.mubr.f32.gmra.mxu0 %v560
    %v653 = vpop.f32.mrf.mxu0
    %v654 = vadd.f32 %v525, %v653
    %v655 = vpop.f32.mrf.mxu0
    %656 = vmatprep.mubr.f32.mxu0 0.0
    %657 = vmatmul.mubr.f32.gmra.mxu0 %v563
    %v658 = vpop.f32.mrf.mxu0
    %v659 = vadd.f32 %v530, %v658
    %v660 = vpop.f32.mrf.mxu0
    %661 = vmatprep.mubr.f32.mxu0 0.0
    %662 = vmatmul.mubr.f32.gmra.mxu0 %v566
    %v663 = vpop.f32.mrf.mxu0
    %v664 = vadd.f32 %v535, %v663
    %v665 = vpop.f32.mrf.mxu0
    %666 = vmatprep.mubr.f32.mxu0 0.0
    %667 = vmatmul.mubr.f32.gmra.mxu0 %v569
    %v668 = vpop.f32.mrf.mxu0
    %v669 = vadd.f32 %v540, %v668
    %v670 = vpop.f32.mrf.mxu0
    %671 = vmatprep.mubr.f32.mxu0 0.0
    %672 = vmatmul.mubr.f32.gmra.mxu0 %v572
    %v673 = vpop.f32.mrf.mxu0
    %v674 = vadd.f32 %v545, %v673
    %v675 = vpop.f32.mrf.mxu0
    %676 = vmatprep.mubr.f32.mxu0 0.0
    %677 = vmatmul.mubr.f32.gmra.mxu0 %v575
    %v678 = vpop.f32.mrf.mxu0
    %v679 = vadd.f32 %v550, %v678
    %v680 = vpop.f32.mrf.mxu0
    %681 = vdwg.mxu0
    %v682 = vld [vmem:[#allocation2 + $0x2] sm:$0xff]
    %v683 = vld [vmem:[#allocation2 + $0x12] sm:$0xff]
    %v684 = vld [vmem:[#allocation2 + $0x22] sm:$0xff]
    %v685 = vld [vmem:[#allocation2 + $0x32] sm:$0xff]
    %v686 = vld [vmem:[#allocation2 + $0x42] sm:$0xff]
    %v687 = vld [vmem:[#allocation2 + $0x52] sm:$0xff]
    %v688 = vld [vmem:[#allocation2 + $0x62] sm:$0xff]
    %v689 = vld [vmem:[#allocation2 + $0x72] sm:$0xff]
    %s690 = scalar_lea.vmem %s4, 48
    %v691 = vld [vmem:[%s690] sm:$0xff]
    %v692 = vld [vmem:[%s690 + $0x8] sm:$0xff]
    %v693 = vld [vmem:[%s690 + $0x10] sm:$0xff]
    %v695 = vsel %vm30, %v682, 0
    %v698 = vsel %vm30, %v683, 0
    %v701 = vsel %vm30, %v684, 0
    %v704 = vsel %vm30, %v685, 0
    %v707 = vsel %vm30, %v686, 0
    %v710 = vsel %vm30, %v687, 0
    %v713 = vsel %vm30, %v688, 0
    %v716 = vsel %vm30, %v689, 0
    %718 = vmatprep.subr.mxu0 0.0
    %719 = vmatpush1.msra.mxu0 0.0
    %720 = vmatprep.subr.mxu0 0.0
    %721 = vmatpush1.msra.mxu0 0.0
    %722 = vmatprep.subr.mxu0 0.0
    %723 = vmatpush1.msra.mxu0 0.0
    %724 = vmatprep.subr.mxu0 0.0
    %725 = vmatpush1.msra.mxu0 0.0
    %726 = vmatprep.subr.mxu0 0.0
    %727 = vmatpush1.msra.mxu0 0.0
    %728 = vmatprep.subr.mxu0 0.0
    %729 = vmatpush1.msra.mxu0 0.0
    %730 = vmatprep.subr.mxu0 0.0
    %731 = vmatpush1.msra.mxu0 0.0
    %732 = vmatprep.subr.mxu0 0.0
    %733 = vmatpush1.msra.mxu0 0.0
    %734 = vmatprep.subr.mxu0 0.0
    %735 = vmatpush1.msra.mxu0 0.0
    %736 = vmatprep.subr.mxu0 0.0
    %737 = vmatpush1.msra.mxu0 0.0
    %738 = vmatprep.subr.mxu0 0.0
    %739 = vmatpush1.msra.mxu0 0.0
    %740 = vmatprep.subr.mxu0 0.0
    %741 = vmatpush1.msra.mxu0 0.0
    %742 = vmatprep.subr.mxu0 0.0
    %743 = vmatpush1.msra.mxu0 0.0
    %744 = vmatprep.subr.mxu0 0.0
    %745 = vmatpush1.msra.mxu0 %v693
    %746 = vmatprep.subr.mxu0 0.0
    %747 = vmatpush1.msra.mxu0 %v692
    %748 = vmatprep.subr.mxu0 0.0
    %749 = vmatpush1.msra.mxu0 %v691
    %750 = vmatprep.subr.mxu0 0.0
    %751 = vmatpush2.msra.mxu0 0.0
    %752 = vmatprep.subr.mxu0 0.0
    %753 = vmatpush2.msra.mxu0 0.0
    %754 = vmatprep.subr.mxu0 0.0
    %755 = vmatpush2.msra.mxu0 0.0
    %756 = vmatprep.subr.mxu0 0.0
    %757 = vmatpush2.msra.mxu0 0.0
    %758 = vmatprep.subr.mxu0 0.0
    %759 = vmatpush2.msra.mxu0 0.0
    %760 = vmatprep.subr.mxu0 0.0
    %761 = vmatpush2.msra.mxu0 0.0
    %762 = vmatprep.subr.mxu0 0.0
    %763 = vmatpush2.msra.mxu0 0.0
    %764 = vmatprep.subr.mxu0 0.0
    %765 = vmatpush2.msra.mxu0 0.0
    %766 = vmatprep.subr.mxu0 0.0
    %767 = vmatpush2.msra.mxu0 0.0
    %768 = vmatprep.subr.mxu0 0.0
    %769 = vmatpush2.msra.mxu0 0.0
    %770 = vmatprep.subr.mxu0 0.0
    %771 = vmatpush2.msra.mxu0 0.0
    %772 = vmatprep.subr.mxu0 0.0
    %773 = vmatpush2.msra.mxu0 0.0
    %774 = vmatprep.subr.mxu0 0.0
    %775 = vmatpush2.msra.mxu0 0.0
    %776 = vmatprep.subr.mxu0 0.0
    %777 = vmatpush2.msra.mxu0 0.0
    %778 = vmatprep.subr.mxu0 0.0
    %779 = vmatpush2.msra.mxu0 0.0
    %780 = vmatprep.subr.mxu0 0.0
    %781 = vmatpush2.msra.mxu0 0.0
    %782 = vmatprep.mubr.f32.mxu0 0.0
    %783 = vmatmul.mubr.f32.gmra.mxu0 %v695
    %v784 = vpop.f32.mrf.mxu0
    %v785 = vadd.f32 0.0, %v784
    %v786 = vpop.f32.mrf.mxu0
    %787 = vmatprep.mubr.f32.mxu0 0.0
    %788 = vmatmul.mubr.f32.gmra.mxu0 %v698
    %v789 = vpop.f32.mrf.mxu0
    %v790 = vadd.f32 0.0, %v789
    %v791 = vpop.f32.mrf.mxu0
    %792 = vmatprep.mubr.f32.mxu0 0.0
    %793 = vmatmul.mubr.f32.gmra.mxu0 %v701
    %v794 = vpop.f32.mrf.mxu0
    %v795 = vadd.f32 0.0, %v794
    %v796 = vpop.f32.mrf.mxu0
    %797 = vmatprep.mubr.f32.mxu0 0.0
    %798 = vmatmul.mubr.f32.gmra.mxu0 %v704
    %v799 = vpop.f32.mrf.mxu0
    %v800 = vadd.f32 0.0, %v799
    %v801 = vpop.f32.mrf.mxu0
    %802 = vmatprep.mubr.f32.mxu0 0.0
    %803 = vmatmul.mubr.f32.gmra.mxu0 %v707
    %v804 = vpop.f32.mrf.mxu0
    %v805 = vadd.f32 0.0, %v804
    %v806 = vpop.f32.mrf.mxu0
    %807 = vmatprep.mubr.f32.mxu0 0.0
    %808 = vmatmul.mubr.f32.gmra.mxu0 %v710
    %v809 = vpop.f32.mrf.mxu0
    %v810 = vadd.f32 0.0, %v809
    %v811 = vpop.f32.mrf.mxu0
    %812 = vmatprep.mubr.f32.mxu0 0.0
    %813 = vmatmul.mubr.f32.gmra.mxu0 %v713
    %v814 = vpop.f32.mrf.mxu0
    %v815 = vadd.f32 0.0, %v814
    %v816 = vpop.f32.mrf.mxu0
    %817 = vmatprep.mubr.f32.mxu0 0.0
    %818 = vmatmul.mubr.f32.gmra.mxu0 %v716
    %v819 = vpop.f32.mrf.mxu0
    %v820 = vadd.f32 0.0, %v819
    %v821 = vpop.f32.mrf.mxu0
    %822 = vdwg.mxu0
    %v823 = vadd.f32 %v644, %v785
    %v824 = vadd.f32 %v649, %v790
    %v825 = vadd.f32 %v654, %v795
    %v826 = vadd.f32 %v659, %v800
    %v827 = vadd.f32 %v664, %v805
    %v828 = vadd.f32 %v669, %v810
    %v829 = vadd.f32 %v674, %v815
    %v830 = vadd.f32 %v679, %v820
    %v831 = vld [vmem:[%s332] sm:$0xff]
    %v832 = vld [vmem:[%s332 + $0x10] sm:$0xff]
    %v833 = vld [vmem:[%s332 + $0x20] sm:$0xff]
    %v834 = vld [vmem:[%s332 + $0x30] sm:$0xff]
    %v835 = vld [vmem:[%s332 + $0x40] sm:$0xff]
    %v836 = vld [vmem:[%s332 + $0x50] sm:$0xff]
    %v837 = vld [vmem:[%s332 + $0x60] sm:$0xff]
    %v838 = vld [vmem:[%s332 + $0x70] sm:$0xff]
    %s839 = scalar_lea.vmem %s4, 72
    %v840 = vld [vmem:[%s839] sm:$0xff]
    %v841 = vld [vmem:[%s839 + $0x8] sm:$0xff]
    %v842 = vld [vmem:[%s839 + $0x10] sm:$0xff]
    %v844 = vsel %vm30, %v831, 0
    %v847 = vsel %vm30, %v832, 0
    %v850 = vsel %vm30, %v833, 0
    %v853 = vsel %vm30, %v834, 0
    %v856 = vsel %vm30, %v835, 0
    %v859 = vsel %vm30, %v836, 0
    %v862 = vsel %vm30, %v837, 0
    %v865 = vsel %vm30, %v838, 0
    %867 = vmatprep.subr.mxu0 0.0
    %868 = vmatpush1.msra.mxu0 0.0
    %869 = vmatprep.subr.mxu0 0.0
    %870 = vmatpush1.msra.mxu0 0.0
    %871 = vmatprep.subr.mxu0 0.0
    %872 = vmatpush1.msra.mxu0 0.0
    %873 = vmatprep.subr.mxu0 0.0
    %874 = vmatpush1.msra.mxu0 0.0
    %875 = vmatprep.subr.mxu0 0.0
    %876 = vmatpush1.msra.mxu0 0.0
    %877 = vmatprep.subr.mxu0 0.0
    %878 = vmatpush1.msra.mxu0 0.0
    %879 = vmatprep.subr.mxu0 0.0
    %880 = vmatpush1.msra.mxu0 0.0
    %881 = vmatprep.subr.mxu0 0.0
    %882 = vmatpush1.msra.mxu0 0.0
    %883 = vmatprep.subr.mxu0 0.0
    %884 = vmatpush1.msra.mxu0 0.0
    %885 = vmatprep.subr.mxu0 0.0
    %886 = vmatpush1.msra.mxu0 0.0
    %887 = vmatprep.subr.mxu0 0.0
    %888 = vmatpush1.msra.mxu0 0.0
    %889 = vmatprep.subr.mxu0 0.0
    %890 = vmatpush1.msra.mxu0 0.0
    %891 = vmatprep.subr.mxu0 0.0
    %892 = vmatpush1.msra.mxu0 0.0
    %893 = vmatprep.subr.mxu0 0.0
    %894 = vmatpush1.msra.mxu0 %v842
    %895 = vmatprep.subr.mxu0 0.0
    %896 = vmatpush1.msra.mxu0 %v841
    %897 = vmatprep.subr.mxu0 0.0
    %898 = vmatpush1.msra.mxu0 %v840
    %899 = vmatprep.subr.mxu0 0.0
    %900 = vmatpush2.msra.mxu0 0.0
    %901 = vmatprep.subr.mxu0 0.0
    %902 = vmatpush2.msra.mxu0 0.0
    %903 = vmatprep.subr.mxu0 0.0
    %904 = vmatpush2.msra.mxu0 0.0
    %905 = vmatprep.subr.mxu0 0.0
    %906 = vmatpush2.msra.mxu0 0.0
    %907 = vmatprep.subr.mxu0 0.0
    %908 = vmatpush2.msra.mxu0 0.0
    %909 = vmatprep.subr.mxu0 0.0
    %910 = vmatpush2.msra.mxu0 0.0
    %911 = vmatprep.subr.mxu0 0.0
    %912 = vmatpush2.msra.mxu0 0.0
    %913 = vmatprep.subr.mxu0 0.0
    %914 = vmatpush2.msra.mxu0 0.0
    %915 = vmatprep.subr.mxu0 0.0
    %916 = vmatpush2.msra.mxu0 0.0
    %917 = vmatprep.subr.mxu0 0.0
    %918 = vmatpush2.msra.mxu0 0.0
    %919 = vmatprep.subr.mxu0 0.0
    %920 = vmatpush2.msra.mxu0 0.0
    %921 = vmatprep.subr.mxu0 0.0
    %922 = vmatpush2.msra.mxu0 0.0
    %923 = vmatprep.subr.mxu0 0.0
    %924 = vmatpush2.msra.mxu0 0.0
    %925 = vmatprep.subr.mxu0 0.0
    %926 = vmatpush2.msra.mxu0 0.0
    %927 = vmatprep.subr.mxu0 0.0
    %928 = vmatpush2.msra.mxu0 0.0
    %929 = vmatprep.subr.mxu0 0.0
    %930 = vmatpush2.msra.mxu0 0.0
    %931 = vmatprep.mubr.f32.mxu0 0.0
    %932 = vmatmul.mubr.f32.gmra.mxu0 %v844
    %v933 = vpop.f32.mrf.mxu0
    %v934 = vadd.f32 0.0, %v933
    %v935 = vpop.f32.mrf.mxu0
    %936 = vmatprep.mubr.f32.mxu0 0.0
    %937 = vmatmul.mubr.f32.gmra.mxu0 %v847
    %v938 = vpop.f32.mrf.mxu0
    %v939 = vadd.f32 0.0, %v938
    %v940 = vpop.f32.mrf.mxu0
    %941 = vmatprep.mubr.f32.mxu0 0.0
    %942 = vmatmul.mubr.f32.gmra.mxu0 %v850
    %v943 = vpop.f32.mrf.mxu0
    %v944 = vadd.f32 0.0, %v943
    %v945 = vpop.f32.mrf.mxu0
    %946 = vmatprep.mubr.f32.mxu0 0.0
    %947 = vmatmul.mubr.f32.gmra.mxu0 %v853
    %v948 = vpop.f32.mrf.mxu0
    %v949 = vadd.f32 0.0, %v948
    %v950 = vpop.f32.mrf.mxu0
    %951 = vmatprep.mubr.f32.mxu0 0.0
    %952 = vmatmul.mubr.f32.gmra.mxu0 %v856
    %v953 = vpop.f32.mrf.mxu0
    %v954 = vadd.f32 0.0, %v953
    %v955 = vpop.f32.mrf.mxu0
    %956 = vmatprep.mubr.f32.mxu0 0.0
    %957 = vmatmul.mubr.f32.gmra.mxu0 %v859
    %v958 = vpop.f32.mrf.mxu0
    %v959 = vadd.f32 0.0, %v958
    %v960 = vpop.f32.mrf.mxu0
    %961 = vmatprep.mubr.f32.mxu0 0.0
    %962 = vmatmul.mubr.f32.gmra.mxu0 %v862
    %v963 = vpop.f32.mrf.mxu0
    %v964 = vadd.f32 0.0, %v963
    %v965 = vpop.f32.mrf.mxu0
    %966 = vmatprep.mubr.f32.mxu0 0.0
    %967 = vmatmul.mubr.f32.gmra.mxu0 %v865
    %v968 = vpop.f32.mrf.mxu0
    %v969 = vadd.f32 0.0, %v968
    %v970 = vpop.f32.mrf.mxu0
    %971 = vdwg.mxu0
    %v972 = vadd.f32 %v823, %v934
    %v973 = vadd.f32 %v824, %v939
    %v974 = vadd.f32 %v825, %v944
    %v975 = vadd.f32 %v826, %v949
    %v976 = vadd.f32 %v827, %v954
    %v977 = vadd.f32 %v828, %v959
    %v978 = vadd.f32 %v829, %v964
    %v979 = vadd.f32 %v830, %v969
    %v980 = vld [vmem:[%s332 + $0x1] sm:$0xff]
    %v981 = vld [vmem:[%s332 + $0x11] sm:$0xff]
    %v982 = vld [vmem:[%s332 + $0x21] sm:$0xff]
    %v983 = vld [vmem:[%s332 + $0x31] sm:$0xff]
    %v984 = vld [vmem:[%s332 + $0x41] sm:$0xff]
    %v985 = vld [vmem:[%s332 + $0x51] sm:$0xff]
    %v986 = vld [vmem:[%s332 + $0x61] sm:$0xff]
    %v987 = vld [vmem:[%s332 + $0x71] sm:$0xff]
    %s988 = scalar_lea.vmem %s4, 96
    %v989 = vld [vmem:[%s988] sm:$0xff]
    %v990 = vld [vmem:[%s988 + $0x8] sm:$0xff]
    %v991 = vld [vmem:[%s988 + $0x10] sm:$0xff]
    %v993 = vsel %vm30, %v980, 0
    %v996 = vsel %vm30, %v981, 0
    %v999 = vsel %vm30, %v982, 0
    %v1002 = vsel %vm30, %v983, 0
    %v1005 = vsel %vm30, %v984, 0
    %v1008 = vsel %vm30, %v985, 0
    %v1011 = vsel %vm30, %v986, 0
    %v1014 = vsel %vm30, %v987, 0
    %1016 = vmatprep.subr.mxu0 0.0
    %1017 = vmatpush1.msra.mxu0 0.0
    %1018 = vmatprep.subr.mxu0 0.0
    %1019 = vmatpush1.msra.mxu0 0.0
    %1020 = vmatprep.subr.mxu0 0.0
    %1021 = vmatpush1.msra.mxu0 0.0
    %1022 = vmatprep.subr.mxu0 0.0
    %1023 = vmatpush1.msra.mxu0 0.0
    %1024 = vmatprep.subr.mxu0 0.0
    %1025 = vmatpush1.msra.mxu0 0.0
    %1026 = vmatprep.subr.mxu0 0.0
    %1027 = vmatpush1.msra.mxu0 0.0
    %1028 = vmatprep.subr.mxu0 0.0
    %1029 = vmatpush1.msra.mxu0 0.0
    %1030 = vmatprep.subr.mxu0 0.0
    %1031 = vmatpush1.msra.mxu0 0.0
    %1032 = vmatprep.subr.mxu0 0.0
    %1033 = vmatpush1.msra.mxu0 0.0
    %1034 = vmatprep.subr.mxu0 0.0
    %1035 = vmatpush1.msra.mxu0 0.0
    %1036 = vmatprep.subr.mxu0 0.0
    %1037 = vmatpush1.msra.mxu0 0.0
    %1038 = vmatprep.subr.mxu0 0.0
    %1039 = vmatpush1.msra.mxu0 0.0
    %1040 = vmatprep.subr.mxu0 0.0
    %1041 = vmatpush1.msra.mxu0 0.0
    %1042 = vmatprep.subr.mxu0 0.0
    %1043 = vmatpush1.msra.mxu0 %v991
    %1044 = vmatprep.subr.mxu0 0.0
    %1045 = vmatpush1.msra.mxu0 %v990
    %1046 = vmatprep.subr.mxu0 0.0
    %1047 = vmatpush1.msra.mxu0 %v989
    %1048 = vmatprep.subr.mxu0 0.0
    %1049 = vmatpush2.msra.mxu0 0.0
    %1050 = vmatprep.subr.mxu0 0.0
    %1051 = vmatpush2.msra.mxu0 0.0
    %1052 = vmatprep.subr.mxu0 0.0
    %1053 = vmatpush2.msra.mxu0 0.0
    %1054 = vmatprep.subr.mxu0 0.0
    %1055 = vmatpush2.msra.mxu0 0.0
    %1056 = vmatprep.subr.mxu0 0.0
    %1057 = vmatpush2.msra.mxu0 0.0
    %1058 = vmatprep.subr.mxu0 0.0
    %1059 = vmatpush2.msra.mxu0 0.0
    %1060 = vmatprep.subr.mxu0 0.0
    %1061 = vmatpush2.msra.mxu0 0.0
    %1062 = vmatprep.subr.mxu0 0.0
    %1063 = vmatpush2.msra.mxu0 0.0
    %1064 = vmatprep.subr.mxu0 0.0
    %1065 = vmatpush2.msra.mxu0 0.0
    %1066 = vmatprep.subr.mxu0 0.0
    %1067 = vmatpush2.msra.mxu0 0.0
    %1068 = vmatprep.subr.mxu0 0.0
    %1069 = vmatpush2.msra.mxu0 0.0
    %1070 = vmatprep.subr.mxu0 0.0
    %1071 = vmatpush2.msra.mxu0 0.0
    %1072 = vmatprep.subr.mxu0 0.0
    %1073 = vmatpush2.msra.mxu0 0.0
    %1074 = vmatprep.subr.mxu0 0.0
    %1075 = vmatpush2.msra.mxu0 0.0
    %1076 = vmatprep.subr.mxu0 0.0
    %1077 = vmatpush2.msra.mxu0 0.0
    %1078 = vmatprep.subr.mxu0 0.0
    %1079 = vmatpush2.msra.mxu0 0.0
    %1080 = vmatprep.mubr.f32.mxu0 0.0
    %1081 = vmatmul.mubr.f32.gmra.mxu0 %v993
    %v1082 = vpop.f32.mrf.mxu0
    %v1083 = vadd.f32 0.0, %v1082
    %v1084 = vpop.f32.mrf.mxu0
    %1085 = vmatprep.mubr.f32.mxu0 0.0
    %1086 = vmatmul.mubr.f32.gmra.mxu0 %v996
    %v1087 = vpop.f32.mrf.mxu0
    %v1088 = vadd.f32 0.0, %v1087
    %v1089 = vpop.f32.mrf.mxu0
    %1090 = vmatprep.mubr.f32.mxu0 0.0
    %1091 = vmatmul.mubr.f32.gmra.mxu0 %v999
    %v1092 = vpop.f32.mrf.mxu0
    %v1093 = vadd.f32 0.0, %v1092
    %v1094 = vpop.f32.mrf.mxu0
    %1095 = vmatprep.mubr.f32.mxu0 0.0
    %1096 = vmatmul.mubr.f32.gmra.mxu0 %v1002
    %v1097 = vpop.f32.mrf.mxu0
    %v1098 = vadd.f32 0.0, %v1097
    %v1099 = vpop.f32.mrf.mxu0
    %1100 = vmatprep.mubr.f32.mxu0 0.0
    %1101 = vmatmul.mubr.f32.gmra.mxu0 %v1005
    %v1102 = vpop.f32.mrf.mxu0
    %v1103 = vadd.f32 0.0, %v1102
    %v1104 = vpop.f32.mrf.mxu0
    %1105 = vmatprep.mubr.f32.mxu0 0.0
    %1106 = vmatmul.mubr.f32.gmra.mxu0 %v1008
    %v1107 = vpop.f32.mrf.mxu0
    %v1108 = vadd.f32 0.0, %v1107
    %v1109 = vpop.f32.mrf.mxu0
    %1110 = vmatprep.mubr.f32.mxu0 0.0
    %1111 = vmatmul.mubr.f32.gmra.mxu0 %v1011
    %v1112 = vpop.f32.mrf.mxu0
    %v1113 = vadd.f32 0.0, %v1112
    %v1114 = vpop.f32.mrf.mxu0
    %1115 = vmatprep.mubr.f32.mxu0 0.0
    %1116 = vmatmul.mubr.f32.gmra.mxu0 %v1014
    %v1117 = vpop.f32.mrf.mxu0
    %v1118 = vadd.f32 0.0, %v1117
    %v1119 = vpop.f32.mrf.mxu0
    %1120 = vdwg.mxu0
    %v1121 = vadd.f32 %v972, %v1083
    %v1122 = vadd.f32 %v973, %v1088
    %v1123 = vadd.f32 %v974, %v1093
    %v1124 = vadd.f32 %v975, %v1098
    %v1125 = vadd.f32 %v976, %v1103
    %v1126 = vadd.f32 %v977, %v1108
    %v1127 = vadd.f32 %v978, %v1113
    %v1128 = vadd.f32 %v979, %v1118
    %v1129 = vld [vmem:[%s332 + $0x2] sm:$0xff]
    %v1130 = vld [vmem:[%s332 + $0x12] sm:$0xff]
    %v1131 = vld [vmem:[%s332 + $0x22] sm:$0xff]
    %v1132 = vld [vmem:[%s332 + $0x32] sm:$0xff]
    %v1133 = vld [vmem:[%s332 + $0x42] sm:$0xff]
    %v1134 = vld [vmem:[%s332 + $0x52] sm:$0xff]
    %v1135 = vld [vmem:[%s332 + $0x62] sm:$0xff]
    %v1136 = vld [vmem:[%s332 + $0x72] sm:$0xff]
    %s1137 = scalar_lea.vmem %s4, 120
    %v1138 = vld [vmem:[%s1137] sm:$0xff]
    %v1139 = vld [vmem:[%s1137 + $0x8] sm:$0xff]
    %v1140 = vld [vmem:[%s1137 + $0x10] sm:$0xff]
    %v1142 = vsel %vm30, %v1129, 0
    %v1145 = vsel %vm30, %v1130, 0
    %v1148 = vsel %vm30, %v1131, 0
    %v1151 = vsel %vm30, %v1132, 0
    %v1154 = vsel %vm30, %v1133, 0
    %v1157 = vsel %vm30, %v1134, 0
    %v1160 = vsel %vm30, %v1135, 0
    %v1163 = vsel %vm30, %v1136, 0
    %1165 = vmatprep.subr.mxu0 0.0
    %1166 = vmatpush1.msra.mxu0 0.0
    %1167 = vmatprep.subr.mxu0 0.0
    %1168 = vmatpush1.msra.mxu0 0.0
    %1169 = vmatprep.subr.mxu0 0.0
    %1170 = vmatpush1.msra.mxu0 0.0
    %1171 = vmatprep.subr.mxu0 0.0
    %1172 = vmatpush1.msra.mxu0 0.0
    %1173 = vmatprep.subr.mxu0 0.0
    %1174 = vmatpush1.msra.mxu0 0.0
    %1175 = vmatprep.subr.mxu0 0.0
    %1176 = vmatpush1.msra.mxu0 0.0
    %1177 = vmatprep.subr.mxu0 0.0
    %1178 = vmatpush1.msra.mxu0 0.0
    %1179 = vmatprep.subr.mxu0 0.0
    %1180 = vmatpush1.msra.mxu0 0.0
    %1181 = vmatprep.subr.mxu0 0.0
    %1182 = vmatpush1.msra.mxu0 0.0
    %1183 = vmatprep.subr.mxu0 0.0
    %1184 = vmatpush1.msra.mxu0 0.0
    %1185 = vmatprep.subr.mxu0 0.0
    %1186 = vmatpush1.msra.mxu0 0.0
    %1187 = vmatprep.subr.mxu0 0.0
    %1188 = vmatpush1.msra.mxu0 0.0
    %1189 = vmatprep.subr.mxu0 0.0
    %1190 = vmatpush1.msra.mxu0 0.0
    %1191 = vmatprep.subr.mxu0 0.0
    %1192 = vmatpush1.msra.mxu0 %v1140
    %1193 = vmatprep.subr.mxu0 0.0
    %1194 = vmatpush1.msra.mxu0 %v1139
    %1195 = vmatprep.subr.mxu0 0.0
    %1196 = vmatpush1.msra.mxu0 %v1138
    %1197 = vmatprep.subr.mxu0 0.0
    %1198 = vmatpush2.msra.mxu0 0.0
    %1199 = vmatprep.subr.mxu0 0.0
    %1200 = vmatpush2.msra.mxu0 0.0
    %1201 = vmatprep.subr.mxu0 0.0
    %1202 = vmatpush2.msra.mxu0 0.0
    %1203 = vmatprep.subr.mxu0 0.0
    %1204 = vmatpush2.msra.mxu0 0.0
    %1205 = vmatprep.subr.mxu0 0.0
    %1206 = vmatpush2.msra.mxu0 0.0
    %1207 = vmatprep.subr.mxu0 0.0
    %1208 = vmatpush2.msra.mxu0 0.0
    %1209 = vmatprep.subr.mxu0 0.0
    %1210 = vmatpush2.msra.mxu0 0.0
    %1211 = vmatprep.subr.mxu0 0.0
    %1212 = vmatpush2.msra.mxu0 0.0
    %1213 = vmatprep.subr.mxu0 0.0
    %1214 = vmatpush2.msra.mxu0 0.0
    %1215 = vmatprep.subr.mxu0 0.0
    %1216 = vmatpush2.msra.mxu0 0.0
    %1217 = vmatprep.subr.mxu0 0.0
    %1218 = vmatpush2.msra.mxu0 0.0
    %1219 = vmatprep.subr.mxu0 0.0
    %1220 = vmatpush2.msra.mxu0 0.0
    %1221 = vmatprep.subr.mxu0 0.0
    %1222 = vmatpush2.msra.mxu0 0.0
    %1223 = vmatprep.subr.mxu0 0.0
    %1224 = vmatpush2.msra.mxu0 0.0
    %1225 = vmatprep.subr.mxu0 0.0
    %1226 = vmatpush2.msra.mxu0 0.0
    %1227 = vmatprep.subr.mxu0 0.0
    %1228 = vmatpush2.msra.mxu0 0.0
    %1229 = vmatprep.mubr.f32.mxu0 0.0
    %1230 = vmatmul.mubr.f32.gmra.mxu0 %v1142
    %v1231 = vpop.f32.mrf.mxu0
    %v1232 = vadd.f32 0.0, %v1231
    %v1233 = vpop.f32.mrf.mxu0
    %1234 = vmatprep.mubr.f32.mxu0 0.0
    %1235 = vmatmul.mubr.f32.gmra.mxu0 %v1145
    %v1236 = vpop.f32.mrf.mxu0
    %v1237 = vadd.f32 0.0, %v1236
    %v1238 = vpop.f32.mrf.mxu0
    %1239 = vmatprep.mubr.f32.mxu0 0.0
    %1240 = vmatmul.mubr.f32.gmra.mxu0 %v1148
    %v1241 = vpop.f32.mrf.mxu0
    %v1242 = vadd.f32 0.0, %v1241
    %v1243 = vpop.f32.mrf.mxu0
    %1244 = vmatprep.mubr.f32.mxu0 0.0
    %1245 = vmatmul.mubr.f32.gmra.mxu0 %v1151
    %v1246 = vpop.f32.mrf.mxu0
    %v1247 = vadd.f32 0.0, %v1246
    %v1248 = vpop.f32.mrf.mxu0
    %1249 = vmatprep.mubr.f32.mxu0 0.0
    %1250 = vmatmul.mubr.f32.gmra.mxu0 %v1154
    %v1251 = vpop.f32.mrf.mxu0
    %v1252 = vadd.f32 0.0, %v1251
    %v1253 = vpop.f32.mrf.mxu0
    %1254 = vmatprep.mubr.f32.mxu0 0.0
    %1255 = vmatmul.mubr.f32.gmra.mxu0 %v1157
    %v1256 = vpop.f32.mrf.mxu0
    %v1257 = vadd.f32 0.0, %v1256
    %v1258 = vpop.f32.mrf.mxu0
    %1259 = vmatprep.mubr.f32.mxu0 0.0
    %1260 = vmatmul.mubr.f32.gmra.mxu0 %v1160
    %v1261 = vpop.f32.mrf.mxu0
    %v1262 = vadd.f32 0.0, %v1261
    %v1263 = vpop.f32.mrf.mxu0
    %1264 = vmatprep.mubr.f32.mxu0 0.0
    %1265 = vmatmul.mubr.f32.gmra.mxu0 %v1163
    %v1266 = vpop.f32.mrf.mxu0
    %v1267 = vadd.f32 0.0, %v1266
    %v1268 = vpop.f32.mrf.mxu0
    %1269 = vdwg.mxu0
    %v1270 = vadd.f32 %v1121, %v1232
    %v1271 = vadd.f32 %v1122, %v1237
    %v1272 = vadd.f32 %v1123, %v1242
    %v1273 = vadd.f32 %v1124, %v1247
    %v1274 = vadd.f32 %v1125, %v1252
    %v1275 = vadd.f32 %v1126, %v1257
    %v1276 = vadd.f32 %v1127, %v1262
    %v1277 = vadd.f32 %v1128, %v1267
    %s1278 = scalar_lea.vmem [#allocation2], 32
    %v1279 = vld [vmem:[%s1278] sm:$0xff]
    %v1280 = vld [vmem:[%s1278 + $0x10] sm:$0xff]
    %v1281 = vld [vmem:[%s1278 + $0x20] sm:$0xff]
    %v1282 = vld [vmem:[%s1278 + $0x30] sm:$0xff]
    %v1283 = vld [vmem:[%s1278 + $0x40] sm:$0xff]
    %v1284 = vld [vmem:[%s1278 + $0x50] sm:$0xff]
    %v1285 = vld [vmem:[%s1278 + $0x60] sm:$0xff]
    %v1286 = vld [vmem:[%s1278 + $0x70] sm:$0xff]
    %s1287 = scalar_lea.vmem %s4, 144
    %v1288 = vld [vmem:[%s1287] sm:$0xff]
    %v1289 = vld [vmem:[%s1287 + $0x8] sm:$0xff]
    %v1290 = vld [vmem:[%s1287 + $0x10] sm:$0xff]
    %v1292 = vsel %vm30, %v1279, 0
    %v1295 = vsel %vm30, %v1280, 0
    %v1298 = vsel %vm30, %v1281, 0
    %v1301 = vsel %vm30, %v1282, 0
    %v1304 = vsel %vm30, %v1283, 0
    %v1307 = vsel %vm30, %v1284, 0
    %v1310 = vsel %vm30, %v1285, 0
    %v1313 = vsel %vm30, %v1286, 0
    %1315 = vmatprep.subr.mxu0 0.0
    %1316 = vmatpush1.msra.mxu0 0.0
    %1317 = vmatprep.subr.mxu0 0.0
    %1318 = vmatpush1.msra.mxu0 0.0
    %1319 = vmatprep.subr.mxu0 0.0
    %1320 = vmatpush1.msra.mxu0 0.0
    %1321 = vmatprep.subr.mxu0 0.0
    %1322 = vmatpush1.msra.mxu0 0.0
    %1323 = vmatprep.subr.mxu0 0.0
    %1324 = vmatpush1.msra.mxu0 0.0
    %1325 = vmatprep.subr.mxu0 0.0
    %1326 = vmatpush1.msra.mxu0 0.0
    %1327 = vmatprep.subr.mxu0 0.0
    %1328 = vmatpush1.msra.mxu0 0.0
    %1329 = vmatprep.subr.mxu0 0.0
    %1330 = vmatpush1.msra.mxu0 0.0
    %1331 = vmatprep.subr.mxu0 0.0
    %1332 = vmatpush1.msra.mxu0 0.0
    %1333 = vmatprep.subr.mxu0 0.0
    %1334 = vmatpush1.msra.mxu0 0.0
    %1335 = vmatprep.subr.mxu0 0.0
    %1336 = vmatpush1.msra.mxu0 0.0
    %1337 = vmatprep.subr.mxu0 0.0
    %1338 = vmatpush1.msra.mxu0 0.0
    %1339 = vmatprep.subr.mxu0 0.0
    %1340 = vmatpush1.msra.mxu0 0.0
    %1341 = vmatprep.subr.mxu0 0.0
    %1342 = vmatpush1.msra.mxu0 %v1290
    %1343 = vmatprep.subr.mxu0 0.0
    %1344 = vmatpush1.msra.mxu0 %v1289
    %1345 = vmatprep.subr.mxu0 0.0
    %1346 = vmatpush1.msra.mxu0 %v1288
    %1347 = vmatprep.subr.mxu0 0.0
    %1348 = vmatpush2.msra.mxu0 0.0
    %1349 = vmatprep.subr.mxu0 0.0
    %1350 = vmatpush2.msra.mxu0 0.0
    %1351 = vmatprep.subr.mxu0 0.0
    %1352 = vmatpush2.msra.mxu0 0.0
    %1353 = vmatprep.subr.mxu0 0.0
    %1354 = vmatpush2.msra.mxu0 0.0
    %1355 = vmatprep.subr.mxu0 0.0
    %1356 = vmatpush2.msra.mxu0 0.0
    %1357 = vmatprep.subr.mxu0 0.0
    %1358 = vmatpush2.msra.mxu0 0.0
    %1359 = vmatprep.subr.mxu0 0.0
    %1360 = vmatpush2.msra.mxu0 0.0
    %1361 = vmatprep.subr.mxu0 0.0
    %1362 = vmatpush2.msra.mxu0 0.0
    %1363 = vmatprep.subr.mxu0 0.0
    %1364 = vmatpush2.msra.mxu0 0.0
    %1365 = vmatprep.subr.mxu0 0.0
    %1366 = vmatpush2.msra.mxu0 0.0
    %1367 = vmatprep.subr.mxu0 0.0
    %1368 = vmatpush2.msra.mxu0 0.0
    %1369 = vmatprep.subr.mxu0 0.0
    %1370 = vmatpush2.msra.mxu0 0.0
    %1371 = vmatprep.subr.mxu0 0.0
    %1372 = vmatpush2.msra.mxu0 0.0
    %1373 = vmatprep.subr.mxu0 0.0
    %1374 = vmatpush2.msra.mxu0 0.0
    %1375 = vmatprep.subr.mxu0 0.0
    %1376 = vmatpush2.msra.mxu0 0.0
    %1377 = vmatprep.subr.mxu0 0.0
    %1378 = vmatpush2.msra.mxu0 0.0
    %1379 = vmatprep.mubr.f32.mxu0 0.0
    %1380 = vmatmul.mubr.f32.gmra.mxu0 %v1292
    %v1381 = vpop.f32.mrf.mxu0
    %v1382 = vadd.f32 0.0, %v1381
    %v1383 = vpop.f32.mrf.mxu0
    %1384 = vmatprep.mubr.f32.mxu0 0.0
    %1385 = vmatmul.mubr.f32.gmra.mxu0 %v1295
    %v1386 = vpop.f32.mrf.mxu0
    %v1387 = vadd.f32 0.0, %v1386
    %v1388 = vpop.f32.mrf.mxu0
    %1389 = vmatprep.mubr.f32.mxu0 0.0
    %1390 = vmatmul.mubr.f32.gmra.mxu0 %v1298
    %v1391 = vpop.f32.mrf.mxu0
    %v1392 = vadd.f32 0.0, %v1391
    %v1393 = vpop.f32.mrf.mxu0
    %1394 = vmatprep.mubr.f32.mxu0 0.0
    %1395 = vmatmul.mubr.f32.gmra.mxu0 %v1301
    %v1396 = vpop.f32.mrf.mxu0
    %v1397 = vadd.f32 0.0, %v1396
    %v1398 = vpop.f32.mrf.mxu0
    %1399 = vmatprep.mubr.f32.mxu0 0.0
    %1400 = vmatmul.mubr.f32.gmra.mxu0 %v1304
    %v1401 = vpop.f32.mrf.mxu0
    %v1402 = vadd.f32 0.0, %v1401
    %v1403 = vpop.f32.mrf.mxu0
    %1404 = vmatprep.mubr.f32.mxu0 0.0
    %1405 = vmatmul.mubr.f32.gmra.mxu0 %v1307
    %v1406 = vpop.f32.mrf.mxu0
    %v1407 = vadd.f32 0.0, %v1406
    %v1408 = vpop.f32.mrf.mxu0
    %1409 = vmatprep.mubr.f32.mxu0 0.0
    %1410 = vmatmul.mubr.f32.gmra.mxu0 %v1310
    %v1411 = vpop.f32.mrf.mxu0
    %v1412 = vadd.f32 0.0, %v1411
    %v1413 = vpop.f32.mrf.mxu0
    %1414 = vmatprep.mubr.f32.mxu0 0.0
    %1415 = vmatmul.mubr.f32.gmra.mxu0 %v1313
    %v1416 = vpop.f32.mrf.mxu0
    %v1417 = vadd.f32 0.0, %v1416
    %v1418 = vpop.f32.mrf.mxu0
    %1419 = vdwg.mxu0
    %v1420 = vadd.f32 %v1270, %v1382
    %v1421 = vadd.f32 %v1271, %v1387
    %v1422 = vadd.f32 %v1272, %v1392
    %v1423 = vadd.f32 %v1273, %v1397
    %v1424 = vadd.f32 %v1274, %v1402
    %v1425 = vadd.f32 %v1275, %v1407
    %v1426 = vadd.f32 %v1276, %v1412
    %v1427 = vadd.f32 %v1277, %v1417
    %v1428 = vld [vmem:[%s1278 + $0x1] sm:$0xff]
    %v1429 = vld [vmem:[%s1278 + $0x11] sm:$0xff]
    %v1430 = vld [vmem:[%s1278 + $0x21] sm:$0xff]
    %v1431 = vld [vmem:[%s1278 + $0x31] sm:$0xff]
    %v1432 = vld [vmem:[%s1278 + $0x41] sm:$0xff]
    %v1433 = vld [vmem:[%s1278 + $0x51] sm:$0xff]
    %v1434 = vld [vmem:[%s1278 + $0x61] sm:$0xff]
    %v1435 = vld [vmem:[%s1278 + $0x71] sm:$0xff]
    %s1436 = scalar_lea.vmem %s4, 168
    %v1437 = vld [vmem:[%s1436] sm:$0xff]
    %v1438 = vld [vmem:[%s1436 + $0x8] sm:$0xff]
    %v1439 = vld [vmem:[%s1436 + $0x10] sm:$0xff]
    %v1441 = vsel %vm30, %v1428, 0
    %v1444 = vsel %vm30, %v1429, 0
    %v1447 = vsel %vm30, %v1430, 0
    %v1450 = vsel %vm30, %v1431, 0
    %v1453 = vsel %vm30, %v1432, 0
    %v1456 = vsel %vm30, %v1433, 0
    %v1459 = vsel %vm30, %v1434, 0
    %v1462 = vsel %vm30, %v1435, 0
    %1464 = vmatprep.subr.mxu0 0.0
    %1465 = vmatpush1.msra.mxu0 0.0
    %1466 = vmatprep.subr.mxu0 0.0
    %1467 = vmatpush1.msra.mxu0 0.0
    %1468 = vmatprep.subr.mxu0 0.0
    %1469 = vmatpush1.msra.mxu0 0.0
    %1470 = vmatprep.subr.mxu0 0.0
    %1471 = vmatpush1.msra.mxu0 0.0
    %1472 = vmatprep.subr.mxu0 0.0
    %1473 = vmatpush1.msra.mxu0 0.0
    %1474 = vmatprep.subr.mxu0 0.0
    %1475 = vmatpush1.msra.mxu0 0.0
    %1476 = vmatprep.subr.mxu0 0.0
    %1477 = vmatpush1.msra.mxu0 0.0
    %1478 = vmatprep.subr.mxu0 0.0
    %1479 = vmatpush1.msra.mxu0 0.0
    %1480 = vmatprep.subr.mxu0 0.0
    %1481 = vmatpush1.msra.mxu0 0.0
    %1482 = vmatprep.subr.mxu0 0.0
    %1483 = vmatpush1.msra.mxu0 0.0
    %1484 = vmatprep.subr.mxu0 0.0
    %1485 = vmatpush1.msra.mxu0 0.0
    %1486 = vmatprep.subr.mxu0 0.0
    %1487 = vmatpush1.msra.mxu0 0.0
    %1488 = vmatprep.subr.mxu0 0.0
    %1489 = vmatpush1.msra.mxu0 0.0
    %1490 = vmatprep.subr.mxu0 0.0
    %1491 = vmatpush1.msra.mxu0 %v1439
    %1492 = vmatprep.subr.mxu0 0.0
    %1493 = vmatpush1.msra.mxu0 %v1438
    %1494 = vmatprep.subr.mxu0 0.0
    %1495 = vmatpush1.msra.mxu0 %v1437
    %1496 = vmatprep.subr.mxu0 0.0
    %1497 = vmatpush2.msra.mxu0 0.0
    %1498 = vmatprep.subr.mxu0 0.0
    %1499 = vmatpush2.msra.mxu0 0.0
    %1500 = vmatprep.subr.mxu0 0.0
    %1501 = vmatpush2.msra.mxu0 0.0
    %1502 = vmatprep.subr.mxu0 0.0
    %1503 = vmatpush2.msra.mxu0 0.0
    %1504 = vmatprep.subr.mxu0 0.0
    %1505 = vmatpush2.msra.mxu0 0.0
    %1506 = vmatprep.subr.mxu0 0.0
    %1507 = vmatpush2.msra.mxu0 0.0
    %1508 = vmatprep.subr.mxu0 0.0
    %1509 = vmatpush2.msra.mxu0 0.0
    %1510 = vmatprep.subr.mxu0 0.0
    %1511 = vmatpush2.msra.mxu0 0.0
    %1512 = vmatprep.subr.mxu0 0.0
    %1513 = vmatpush2.msra.mxu0 0.0
    %1514 = vmatprep.subr.mxu0 0.0
    %1515 = vmatpush2.msra.mxu0 0.0
    %1516 = vmatprep.subr.mxu0 0.0
    %1517 = vmatpush2.msra.mxu0 0.0
    %1518 = vmatprep.subr.mxu0 0.0
    %1519 = vmatpush2.msra.mxu0 0.0
    %1520 = vmatprep.subr.mxu0 0.0
    %1521 = vmatpush2.msra.mxu0 0.0
    %1522 = vmatprep.subr.mxu0 0.0
    %1523 = vmatpush2.msra.mxu0 0.0
    %1524 = vmatprep.subr.mxu0 0.0
    %1525 = vmatpush2.msra.mxu0 0.0
    %1526 = vmatprep.subr.mxu0 0.0
    %1527 = vmatpush2.msra.mxu0 0.0
    %1528 = vmatprep.mubr.f32.mxu0 0.0
    %1529 = vmatmul.mubr.f32.gmra.mxu0 %v1441
    %v1530 = vpop.f32.mrf.mxu0
    %v1531 = vadd.f32 0.0, %v1530
    %v1532 = vpop.f32.mrf.mxu0
    %1533 = vmatprep.mubr.f32.mxu0 0.0
    %1534 = vmatmul.mubr.f32.gmra.mxu0 %v1444
    %v1535 = vpop.f32.mrf.mxu0
    %v1536 = vadd.f32 0.0, %v1535
    %v1537 = vpop.f32.mrf.mxu0
    %1538 = vmatprep.mubr.f32.mxu0 0.0
    %1539 = vmatmul.mubr.f32.gmra.mxu0 %v1447
    %v1540 = vpop.f32.mrf.mxu0
    %v1541 = vadd.f32 0.0, %v1540
    %v1542 = vpop.f32.mrf.mxu0
    %1543 = vmatprep.mubr.f32.mxu0 0.0
    %1544 = vmatmul.mubr.f32.gmra.mxu0 %v1450
    %v1545 = vpop.f32.mrf.mxu0
    %v1546 = vadd.f32 0.0, %v1545
    %v1547 = vpop.f32.mrf.mxu0
    %1548 = vmatprep.mubr.f32.mxu0 0.0
    %1549 = vmatmul.mubr.f32.gmra.mxu0 %v1453
    %v1550 = vpop.f32.mrf.mxu0
    %v1551 = vadd.f32 0.0, %v1550
    %v1552 = vpop.f32.mrf.mxu0
    %1553 = vmatprep.mubr.f32.mxu0 0.0
    %1554 = vmatmul.mubr.f32.gmra.mxu0 %v1456
    %v1555 = vpop.f32.mrf.mxu0
    %v1556 = vadd.f32 0.0, %v1555
    %v1557 = vpop.f32.mrf.mxu0
    %1558 = vmatprep.mubr.f32.mxu0 0.0
    %1559 = vmatmul.mubr.f32.gmra.mxu0 %v1459
    %v1560 = vpop.f32.mrf.mxu0
    %v1561 = vadd.f32 0.0, %v1560
    %v1562 = vpop.f32.mrf.mxu0
    %1563 = vmatprep.mubr.f32.mxu0 0.0
    %1564 = vmatmul.mubr.f32.gmra.mxu0 %v1462
    %v1565 = vpop.f32.mrf.mxu0
    %v1566 = vadd.f32 0.0, %v1565
    %v1567 = vpop.f32.mrf.mxu0
    %1568 = vdwg.mxu0
    %v1569 = vadd.f32 %v1420, %v1531
    %v1570 = vadd.f32 %v1421, %v1536
    %v1571 = vadd.f32 %v1422, %v1541
    %v1572 = vadd.f32 %v1423, %v1546
    %v1573 = vadd.f32 %v1424, %v1551
    %v1574 = vadd.f32 %v1425, %v1556
    %v1575 = vadd.f32 %v1426, %v1561
    %v1576 = vadd.f32 %v1427, %v1566
    %v1577 = vld [vmem:[%s1278 + $0x2] sm:$0xff]
    %v1578 = vld [vmem:[%s1278 + $0x12] sm:$0xff]
    %v1579 = vld [vmem:[%s1278 + $0x22] sm:$0xff]
    %v1580 = vld [vmem:[%s1278 + $0x32] sm:$0xff]
    %v1581 = vld [vmem:[%s1278 + $0x42] sm:$0xff]
    %v1582 = vld [vmem:[%s1278 + $0x52] sm:$0xff]
    %v1583 = vld [vmem:[%s1278 + $0x62] sm:$0xff]
    %v1584 = vld [vmem:[%s1278 + $0x72] sm:$0xff]
    %s1585 = scalar_lea.vmem %s4, 192
    %v1586 = vld [vmem:[%s1585] sm:$0xff]
    %v1587 = vld [vmem:[%s1585 + $0x8] sm:$0xff]
    %v1588 = vld [vmem:[%s1585 + $0x10] sm:$0xff]
    %v1590 = vsel %vm30, %v1577, 0
    %v1593 = vsel %vm30, %v1578, 0
    %v1596 = vsel %vm30, %v1579, 0
    %v1599 = vsel %vm30, %v1580, 0
    %v1602 = vsel %vm30, %v1581, 0
    %v1605 = vsel %vm30, %v1582, 0
    %v1608 = vsel %vm30, %v1583, 0
    %v1611 = vsel %vm30, %v1584, 0
    %1613 = vmatprep.subr.mxu0 0.0
    %1614 = vmatpush1.msra.mxu0 0.0
    %1615 = vmatprep.subr.mxu0 0.0
    %1616 = vmatpush1.msra.mxu0 0.0
    %1617 = vmatprep.subr.mxu0 0.0
    %1618 = vmatpush1.msra.mxu0 0.0
    %1619 = vmatprep.subr.mxu0 0.0
    %1620 = vmatpush1.msra.mxu0 0.0
    %1621 = vmatprep.subr.mxu0 0.0
    %1622 = vmatpush1.msra.mxu0 0.0
    %1623 = vmatprep.subr.mxu0 0.0
    %1624 = vmatpush1.msra.mxu0 0.0
    %1625 = vmatprep.subr.mxu0 0.0
    %1626 = vmatpush1.msra.mxu0 0.0
    %1627 = vmatprep.subr.mxu0 0.0
    %1628 = vmatpush1.msra.mxu0 0.0
    %1629 = vmatprep.subr.mxu0 0.0
    %1630 = vmatpush1.msra.mxu0 0.0
    %1631 = vmatprep.subr.mxu0 0.0
    %1632 = vmatpush1.msra.mxu0 0.0
    %1633 = vmatprep.subr.mxu0 0.0
    %1634 = vmatpush1.msra.mxu0 0.0
    %1635 = vmatprep.subr.mxu0 0.0
    %1636 = vmatpush1.msra.mxu0 0.0
    %1637 = vmatprep.subr.mxu0 0.0
    %1638 = vmatpush1.msra.mxu0 0.0
    %1639 = vmatprep.subr.mxu0 0.0
    %1640 = vmatpush1.msra.mxu0 %v1588
    %1641 = vmatprep.subr.mxu0 0.0
    %1642 = vmatpush1.msra.mxu0 %v1587
    %1643 = vmatprep.subr.mxu0 0.0
    %1644 = vmatpush1.msra.mxu0 %v1586
    %1645 = vmatprep.subr.mxu0 0.0
    %1646 = vmatpush2.msra.mxu0 0.0
    %1647 = vmatprep.subr.mxu0 0.0
    %1648 = vmatpush2.msra.mxu0 0.0
    %1649 = vmatprep.subr.mxu0 0.0
    %1650 = vmatpush2.msra.mxu0 0.0
    %1651 = vmatprep.subr.mxu0 0.0
    %1652 = vmatpush2.msra.mxu0 0.0
    %1653 = vmatprep.subr.mxu0 0.0
    %1654 = vmatpush2.msra.mxu0 0.0
    %1655 = vmatprep.subr.mxu0 0.0
    %1656 = vmatpush2.msra.mxu0 0.0
    %1657 = vmatprep.subr.mxu0 0.0
    %1658 = vmatpush2.msra.mxu0 0.0
    %1659 = vmatprep.subr.mxu0 0.0
    %1660 = vmatpush2.msra.mxu0 0.0
    %1661 = vmatprep.subr.mxu0 0.0
    %1662 = vmatpush2.msra.mxu0 0.0
    %1663 = vmatprep.subr.mxu0 0.0
    %1664 = vmatpush2.msra.mxu0 0.0
    %1665 = vmatprep.subr.mxu0 0.0
    %1666 = vmatpush2.msra.mxu0 0.0
    %1667 = vmatprep.subr.mxu0 0.0
    %1668 = vmatpush2.msra.mxu0 0.0
    %1669 = vmatprep.subr.mxu0 0.0
    %1670 = vmatpush2.msra.mxu0 0.0
    %1671 = vmatprep.subr.mxu0 0.0
    %1672 = vmatpush2.msra.mxu0 0.0
    %1673 = vmatprep.subr.mxu0 0.0
    %1674 = vmatpush2.msra.mxu0 0.0
    %1675 = vmatprep.subr.mxu0 0.0
    %1676 = vmatpush2.msra.mxu0 0.0
    %1677 = vmatprep.mubr.f32.mxu0 0.0
    %1678 = vmatmul.mubr.f32.gmra.mxu0 %v1590
    %v1679 = vpop.f32.mrf.mxu0
    %v1680 = vadd.f32 0.0, %v1679
    %v1681 = vpop.f32.mrf.mxu0
    %1682 = vmatprep.mubr.f32.mxu0 0.0
    %1683 = vmatmul.mubr.f32.gmra.mxu0 %v1593
    %v1684 = vpop.f32.mrf.mxu0
    %v1685 = vadd.f32 0.0, %v1684
    %v1686 = vpop.f32.mrf.mxu0
    %1687 = vmatprep.mubr.f32.mxu0 0.0
    %1688 = vmatmul.mubr.f32.gmra.mxu0 %v1596
    %v1689 = vpop.f32.mrf.mxu0
    %v1690 = vadd.f32 0.0, %v1689
    %v1691 = vpop.f32.mrf.mxu0
    %1692 = vmatprep.mubr.f32.mxu0 0.0
    %1693 = vmatmul.mubr.f32.gmra.mxu0 %v1599
    %v1694 = vpop.f32.mrf.mxu0
    %v1695 = vadd.f32 0.0, %v1694
    %v1696 = vpop.f32.mrf.mxu0
    %1697 = vmatprep.mubr.f32.mxu0 0.0
    %1698 = vmatmul.mubr.f32.gmra.mxu0 %v1602
    %v1699 = vpop.f32.mrf.mxu0
    %v1700 = vadd.f32 0.0, %v1699
    %v1701 = vpop.f32.mrf.mxu0
    %1702 = vmatprep.mubr.f32.mxu0 0.0
    %1703 = vmatmul.mubr.f32.gmra.mxu0 %v1605
    %v1704 = vpop.f32.mrf.mxu0
    %v1705 = vadd.f32 0.0, %v1704
    %v1706 = vpop.f32.mrf.mxu0
    %1707 = vmatprep.mubr.f32.mxu0 0.0
    %1708 = vmatmul.mubr.f32.gmra.mxu0 %v1608
    %v1709 = vpop.f32.mrf.mxu0
    %v1710 = vadd.f32 0.0, %v1709
    %v1711 = vpop.f32.mrf.mxu0
    %1712 = vmatprep.mubr.f32.mxu0 0.0
    %1713 = vmatmul.mubr.f32.gmra.mxu0 %v1611
    %v1714 = vpop.f32.mrf.mxu0
    %v1715 = vadd.f32 0.0, %v1714
    %v1716 = vpop.f32.mrf.mxu0
    %1717 = vdwg.mxu0
    %v1718 = vadd.f32 %v1569, %v1680
    %v1719 = vadd.f32 %v1570, %v1685
    %v1720 = vadd.f32 %v1571, %v1690
    %v1721 = vadd.f32 %v1572, %v1695
    %v1722 = vadd.f32 %v1573, %v1700
    %v1723 = vadd.f32 %v1574, %v1705
    %v1724 = vadd.f32 %v1575, %v1710
    %v1725 = vadd.f32 %v1576, %v1715
    %v1726 = vld [vmem:[%s5] sm:$0x1]
    %v1728 = vlaneseq
    %v1729 = vshrl.u32 %v1728, 7
    %v1730 = vsub.s32 0, %v1729
    %v1731 = vrot.slane %v1726, %v1730
    %v1733 = vadd.f32 %v1718, %v1731
    %v1734 = vadd.f32 %v1719, %v1731
    %v1735 = vadd.f32 %v1720, %v1731
    %v1736 = vadd.f32 %v1721, %v1731
    %v1737 = vadd.f32 %v1722, %v1731
    %v1738 = vadd.f32 %v1723, %v1731
    %v1739 = vadd.f32 %v1724, %v1731
    %v1740 = vadd.f32 %v1725, %v1731
    %v1741 = vmax.f32 %v1733, 0.0
    %v1742 = vmax.f32 %v1734, 0.0
    %v1743 = vmax.f32 %v1735, 0.0
    %v1744 = vmax.f32 %v1736, 0.0
    %v1745 = vmax.f32 %v1737, 0.0
    %v1746 = vmax.f32 %v1738, 0.0
    %v1747 = vmax.f32 %v1739, 0.0
    %v1748 = vmax.f32 %v1740, 0.0
    %vm1749 = vcmask 130048
    %1750 = vst.msk [vmem:[%s332 + $0x1] sm:$0xff] %vm1749, %v1741
    %1751 = vst.msk [vmem:[%s332 + $0x11] sm:$0xff] %vm1749, %v1742
    %1752 = vst.msk [vmem:[%s332 + $0x21] sm:$0xff] %vm1749, %v1743
    %1753 = vst.msk [vmem:[%s332 + $0x31] sm:$0xff] %vm1749, %v1744
    %1754 = vst.msk [vmem:[%s332 + $0x41] sm:$0xff] %vm1749, %v1745
    %1755 = vst.msk [vmem:[%s332 + $0x51] sm:$0xff] %vm1749, %v1746
    %1756 = vst.msk [vmem:[%s332 + $0x61] sm:$0xff] %vm1749, %v1747
    %1757 = vst.msk [vmem:[%s332 + $0x71] sm:$0xff] %vm1749, %v1748
    %v1758 = vld [vmem:[#allocation2] sm:$0xff]
    %v1759 = vld [vmem:[#allocation2 + $0x10] sm:$0xff]
    %v1760 = vld [vmem:[#allocation2 + $0x20] sm:$0xff]
    %v1761 = vld [vmem:[#allocation2 + $0x30] sm:$0xff]
    %v1762 = vld [vmem:[#allocation2 + $0x40] sm:$0xff]
    %v1763 = vld [vmem:[#allocation2 + $0x50] sm:$0xff]
    %v1764 = vld [vmem:[#allocation2 + $0x60] sm:$0xff]
    %v1765 = vld [vmem:[#allocation2 + $0x70] sm:$0xff]
    %v1766 = vld [vmem:[%s6] sm:$0xff]
    %v1767 = vld [vmem:[%s6 + $0x8] sm:$0xff]
    %v1768 = vld [vmem:[#allocation2 + $0x1] sm:$0xff]
    %v1769 = vld [vmem:[#allocation2 + $0x11] sm:$0xff]
    %v1770 = vld [vmem:[#allocation2 + $0x21] sm:$0xff]
    %v1771 = vld [vmem:[#allocation2 + $0x31] sm:$0xff]
    %v1772 = vld [vmem:[#allocation2 + $0x41] sm:$0xff]
    %v1773 = vld [vmem:[#allocation2 + $0x51] sm:$0xff]
    %v1774 = vld [vmem:[#allocation2 + $0x61] sm:$0xff]
    %v1775 = vld [vmem:[#allocation2 + $0x71] sm:$0xff]
    %s1776 = scalar_lea.vmem %s6, 16
    %v1777 = vld [vmem:[%s1776] sm:$0xff]
    %v1778 = vld [vmem:[%s1776 + $0x8] sm:$0xff]
    %v1780 = vsel %vm1749, %v1768, 0
    %v1783 = vsel %vm1749, %v1769, 0
    %v1786 = vsel %vm1749, %v1770, 0
    %v1789 = vsel %vm1749, %v1771, 0
    %v1792 = vsel %vm1749, %v1772, 0
    %v1795 = vsel %vm1749, %v1773, 0
    %v1798 = vsel %vm1749, %v1774, 0
    %v1801 = vsel %vm1749, %v1775, 0
    %1803 = vmatprep.subr.mxu0 0.0
    %1804 = vmatpush1.msra.mxu0 0.0
    %1805 = vmatprep.subr.mxu0 0.0
    %1806 = vmatpush1.msra.mxu0 0.0
    %1807 = vmatprep.subr.mxu0 0.0
    %1808 = vmatpush1.msra.mxu0 0.0
    %1809 = vmatprep.subr.mxu0 0.0
    %1810 = vmatpush1.msra.mxu0 0.0
    %1811 = vmatprep.subr.mxu0 0.0
    %1812 = vmatpush1.msra.mxu0 0.0
    %1813 = vmatprep.subr.mxu0 0.0
    %1814 = vmatpush1.msra.mxu0 0.0
    %1815 = vmatprep.subr.mxu0 0.0
    %1816 = vmatpush1.msra.mxu0 0.0
    %1817 = vmatprep.subr.mxu0 0.0
    %1818 = vmatpush1.msra.mxu0 0.0
    %1819 = vmatprep.subr.mxu0 0.0
    %1820 = vmatpush1.msra.mxu0 0.0
    %1821 = vmatprep.subr.mxu0 0.0
    %1822 = vmatpush1.msra.mxu0 0.0
    %1823 = vmatprep.subr.mxu0 0.0
    %1824 = vmatpush1.msra.mxu0 0.0
    %1825 = vmatprep.subr.mxu0 0.0
    %1826 = vmatpush1.msra.mxu0 0.0
    %1827 = vmatprep.subr.mxu0 0.0
    %1828 = vmatpush1.msra.mxu0 0.0
    %1829 = vmatprep.subr.mxu0 0.0
    %1830 = vmatpush1.msra.mxu0 0.0
    %1831 = vmatprep.subr.mxu0 0.0
    %1832 = vmatpush1.msra.mxu0 %v1778
    %1833 = vmatprep.subr.mxu0 0.0
    %1834 = vmatpush1.msra.mxu0 %v1777
    %1835 = vmatprep.subr.mxu0 0.0
    %1836 = vmatpush2.msra.mxu0 0.0
    %1837 = vmatprep.subr.mxu0 0.0
    %1838 = vmatpush2.msra.mxu0 0.0
    %1839 = vmatprep.subr.mxu0 0.0
    %1840 = vmatpush2.msra.mxu0 0.0
    %1841 = vmatprep.subr.mxu0 0.0
    %1842 = vmatpush2.msra.mxu0 0.0
    %1843 = vmatprep.subr.mxu0 0.0
    %1844 = vmatpush2.msra.mxu0 0.0
    %1845 = vmatprep.subr.mxu0 0.0
    %1846 = vmatpush2.msra.mxu0 0.0
    %1847 = vmatprep.subr.mxu0 0.0
    %1848 = vmatpush2.msra.mxu0 0.0
    %1849 = vmatprep.subr.mxu0 0.0
    %1850 = vmatpush2.msra.mxu0 0.0
    %1851 = vmatprep.subr.mxu0 0.0
    %1852 = vmatpush2.msra.mxu0 0.0
    %1853 = vmatprep.subr.mxu0 0.0
    %1854 = vmatpush2.msra.mxu0 0.0
    %1855 = vmatprep.subr.mxu0 0.0
    %1856 = vmatpush2.msra.mxu0 0.0
    %1857 = vmatprep.subr.mxu0 0.0
    %1858 = vmatpush2.msra.mxu0 0.0
    %1859 = vmatprep.subr.mxu0 0.0
    %1860 = vmatpush2.msra.mxu0 0.0
    %1861 = vmatprep.subr.mxu0 0.0
    %1862 = vmatpush2.msra.mxu0 0.0
    %1863 = vmatprep.subr.mxu0 0.0
    %1864 = vmatpush2.msra.mxu0 0.0
    %1865 = vmatprep.subr.mxu0 0.0
    %1866 = vmatpush2.msra.mxu0 0.0
    %1867 = vmatprep.mubr.f32.mxu0 0.0
    %1868 = vmatmul.mubr.f32.gmra.mxu0 %v1780
    %v1869 = vpop.f32.mrf.mxu0
    %v1870 = vadd.f32 0.0, %v1869
    %v1871 = vpop.f32.mrf.mxu0
    %1872 = vmatprep.mubr.f32.mxu0 0.0
    %1873 = vmatmul.mubr.f32.gmra.mxu0 %v1783
    %v1874 = vpop.f32.mrf.mxu0
    %v1875 = vadd.f32 0.0, %v1874
    %v1876 = vpop.f32.mrf.mxu0
    %1877 = vmatprep.mubr.f32.mxu0 0.0
    %1878 = vmatmul.mubr.f32.gmra.mxu0 %v1786
    %v1879 = vpop.f32.mrf.mxu0
    %v1880 = vadd.f32 0.0, %v1879
    %v1881 = vpop.f32.mrf.mxu0
    %1882 = vmatprep.mubr.f32.mxu0 0.0
    %1883 = vmatmul.mubr.f32.gmra.mxu0 %v1789
    %v1884 = vpop.f32.mrf.mxu0
    %v1885 = vadd.f32 0.0, %v1884
    %v1886 = vpop.f32.mrf.mxu0
    %1887 = vmatprep.mubr.f32.mxu0 0.0
    %1888 = vmatmul.mubr.f32.gmra.mxu0 %v1792
    %v1889 = vpop.f32.mrf.mxu0
    %v1890 = vadd.f32 0.0, %v1889
    %v1891 = vpop.f32.mrf.mxu0
    %1892 = vmatprep.mubr.f32.mxu0 0.0
    %1893 = vmatmul.mubr.f32.gmra.mxu0 %v1795
    %v1894 = vpop.f32.mrf.mxu0
    %v1895 = vadd.f32 0.0, %v1894
    %v1896 = vpop.f32.mrf.mxu0
    %1897 = vmatprep.mubr.f32.mxu0 0.0
    %1898 = vmatmul.mubr.f32.gmra.mxu0 %v1798
    %v1899 = vpop.f32.mrf.mxu0
    %v1900 = vadd.f32 0.0, %v1899
    %v1901 = vpop.f32.mrf.mxu0
    %1902 = vmatprep.mubr.f32.mxu0 0.0
    %1903 = vmatmul.mubr.f32.gmra.mxu0 %v1801
    %v1904 = vpop.f32.mrf.mxu0
    %v1905 = vadd.f32 0.0, %v1904
    %v1906 = vpop.f32.mrf.mxu0
    %1907 = vdwg.mxu0
    %v1909 = vsel %vm1749, %v1758, 0
    %v1912 = vsel %vm1749, %v1759, 0
    %v1915 = vsel %vm1749, %v1760, 0
    %v1918 = vsel %vm1749, %v1761, 0
    %v1921 = vsel %vm1749, %v1762, 0
    %v1924 = vsel %vm1749, %v1763, 0
    %v1927 = vsel %vm1749, %v1764, 0
    %v1930 = vsel %vm1749, %v1765, 0
    %1932 = vmatprep.subr.mxu0 0.0
    %1933 = vmatpush1.msra.mxu0 0.0
    %1934 = vmatprep.subr.mxu0 0.0
    %1935 = vmatpush1.msra.mxu0 0.0
    %1936 = vmatprep.subr.mxu0 0.0
    %1937 = vmatpush1.msra.mxu0 0.0
    %1938 = vmatprep.subr.mxu0 0.0
    %1939 = vmatpush1.msra.mxu0 0.0
    %1940 = vmatprep.subr.mxu0 0.0
    %1941 = vmatpush1.msra.mxu0 0.0
    %1942 = vmatprep.subr.mxu0 0.0
    %1943 = vmatpush1.msra.mxu0 0.0
    %1944 = vmatprep.subr.mxu0 0.0
    %1945 = vmatpush1.msra.mxu0 0.0
    %1946 = vmatprep.subr.mxu0 0.0
    %1947 = vmatpush1.msra.mxu0 0.0
    %1948 = vmatprep.subr.mxu0 0.0
    %1949 = vmatpush1.msra.mxu0 0.0
    %1950 = vmatprep.subr.mxu0 0.0
    %1951 = vmatpush1.msra.mxu0 0.0
    %1952 = vmatprep.subr.mxu0 0.0
    %1953 = vmatpush1.msra.mxu0 0.0
    %1954 = vmatprep.subr.mxu0 0.0
    %1955 = vmatpush1.msra.mxu0 0.0
    %1956 = vmatprep.subr.mxu0 0.0
    %1957 = vmatpush1.msra.mxu0 0.0
    %1958 = vmatprep.subr.mxu0 0.0
    %1959 = vmatpush1.msra.mxu0 0.0
    %1960 = vmatprep.subr.mxu0 0.0
    %1961 = vmatpush1.msra.mxu0 %v1767
    %1962 = vmatprep.subr.mxu0 0.0
    %1963 = vmatpush1.msra.mxu0 %v1766
    %1964 = vmatprep.subr.mxu0 0.0
    %1965 = vmatpush2.msra.mxu0 0.0
    %1966 = vmatprep.subr.mxu0 0.0
    %1967 = vmatpush2.msra.mxu0 0.0
    %1968 = vmatprep.subr.mxu0 0.0
    %1969 = vmatpush2.msra.mxu0 0.0
    %1970 = vmatprep.subr.mxu0 0.0
    %1971 = vmatpush2.msra.mxu0 0.0
    %1972 = vmatprep.subr.mxu0 0.0
    %1973 = vmatpush2.msra.mxu0 0.0
    %1974 = vmatprep.subr.mxu0 0.0
    %1975 = vmatpush2.msra.mxu0 0.0
    %1976 = vmatprep.subr.mxu0 0.0
    %1977 = vmatpush2.msra.mxu0 0.0
    %1978 = vmatprep.subr.mxu0 0.0
    %1979 = vmatpush2.msra.mxu0 0.0
    %1980 = vmatprep.subr.mxu0 0.0
    %1981 = vmatpush2.msra.mxu0 0.0
    %1982 = vmatprep.subr.mxu0 0.0
    %1983 = vmatpush2.msra.mxu0 0.0
    %1984 = vmatprep.subr.mxu0 0.0
    %1985 = vmatpush2.msra.mxu0 0.0
    %1986 = vmatprep.subr.mxu0 0.0
    %1987 = vmatpush2.msra.mxu0 0.0
    %1988 = vmatprep.subr.mxu0 0.0
    %1989 = vmatpush2.msra.mxu0 0.0
    %1990 = vmatprep.subr.mxu0 0.0
    %1991 = vmatpush2.msra.mxu0 0.0
    %1992 = vmatprep.subr.mxu0 0.0
    %1993 = vmatpush2.msra.mxu0 0.0
    %1994 = vmatprep.subr.mxu0 0.0
    %1995 = vmatpush2.msra.mxu0 0.0
    %1996 = vmatprep.mubr.f32.mxu0 0.0
    %1997 = vmatmul.mubr.f32.gmra.mxu0 %v1909
    %v1998 = vpop.f32.mrf.mxu0
    %v1999 = vadd.f32 %v1870, %v1998
    %v2000 = vpop.f32.mrf.mxu0
    %2001 = vmatprep.mubr.f32.mxu0 0.0
    %2002 = vmatmul.mubr.f32.gmra.mxu0 %v1912
    %v2003 = vpop.f32.mrf.mxu0
    %v2004 = vadd.f32 %v1875, %v2003
    %v2005 = vpop.f32.mrf.mxu0
    %2006 = vmatprep.mubr.f32.mxu0 0.0
    %2007 = vmatmul.mubr.f32.gmra.mxu0 %v1915
    %v2008 = vpop.f32.mrf.mxu0
    %v2009 = vadd.f32 %v1880, %v2008
    %v2010 = vpop.f32.mrf.mxu0
    %2011 = vmatprep.mubr.f32.mxu0 0.0
    %2012 = vmatmul.mubr.f32.gmra.mxu0 %v1918
    %v2013 = vpop.f32.mrf.mxu0
    %v2014 = vadd.f32 %v1885, %v2013
    %v2015 = vpop.f32.mrf.mxu0
    %2016 = vmatprep.mubr.f32.mxu0 0.0
    %2017 = vmatmul.mubr.f32.gmra.mxu0 %v1921
    %v2018 = vpop.f32.mrf.mxu0
    %v2019 = vadd.f32 %v1890, %v2018
    %v2020 = vpop.f32.mrf.mxu0
    %2021 = vmatprep.mubr.f32.mxu0 0.0
    %2022 = vmatmul.mubr.f32.gmra.mxu0 %v1924
    %v2023 = vpop.f32.mrf.mxu0
    %v2024 = vadd.f32 %v1895, %v2023
    %v2025 = vpop.f32.mrf.mxu0
    %2026 = vmatprep.mubr.f32.mxu0 0.0
    %2027 = vmatmul.mubr.f32.gmra.mxu0 %v1927
    %v2028 = vpop.f32.mrf.mxu0
    %v2029 = vadd.f32 %v1900, %v2028
    %v2030 = vpop.f32.mrf.mxu0
    %2031 = vmatprep.mubr.f32.mxu0 0.0
    %2032 = vmatmul.mubr.f32.gmra.mxu0 %v1930
    %v2033 = vpop.f32.mrf.mxu0
    %v2034 = vadd.f32 %v1905, %v2033
    %v2035 = vpop.f32.mrf.mxu0
    %2036 = vdwg.mxu0
    %v2037 = vld [vmem:[#allocation2 + $0x2] sm:$0xff]
    %v2038 = vld [vmem:[#allocation2 + $0x12] sm:$0xff]
    %v2039 = vld [vmem:[#allocation2 + $0x22] sm:$0xff]
    %v2040 = vld [vmem:[#allocation2 + $0x32] sm:$0xff]
    %v2041 = vld [vmem:[#allocation2 + $0x42] sm:$0xff]
    %v2042 = vld [vmem:[#allocation2 + $0x52] sm:$0xff]
    %v2043 = vld [vmem:[#allocation2 + $0x62] sm:$0xff]
    %v2044 = vld [vmem:[#allocation2 + $0x72] sm:$0xff]
    %s2045 = scalar_lea.vmem %s6, 32
    %v2046 = vld [vmem:[%s2045] sm:$0xff]
    %v2047 = vld [vmem:[%s2045 + $0x8] sm:$0xff]
    %v2049 = vsel %vm1749, %v2037, 0
    %v2052 = vsel %vm1749, %v2038, 0
    %v2055 = vsel %vm1749, %v2039, 0
    %v2058 = vsel %vm1749, %v2040, 0
    %v2061 = vsel %vm1749, %v2041, 0
    %v2064 = vsel %vm1749, %v2042, 0
    %v2067 = vsel %vm1749, %v2043, 0
    %v2070 = vsel %vm1749, %v2044, 0
    %2072 = vmatprep.subr.mxu0 0.0
    %2073 = vmatpush1.msra.mxu0 0.0
    %2074 = vmatprep.subr.mxu0 0.0
    %2075 = vmatpush1.msra.mxu0 0.0
    %2076 = vmatprep.subr.mxu0 0.0
    %2077 = vmatpush1.msra.mxu0 0.0
    %2078 = vmatprep.subr.mxu0 0.0
    %2079 = vmatpush1.msra.mxu0 0.0
    %2080 = vmatprep.subr.mxu0 0.0
    %2081 = vmatpush1.msra.mxu0 0.0
    %2082 = vmatprep.subr.mxu0 0.0
    %2083 = vmatpush1.msra.mxu0 0.0
    %2084 = vmatprep.subr.mxu0 0.0
    %2085 = vmatpush1.msra.mxu0 0.0
    %2086 = vmatprep.subr.mxu0 0.0
    %2087 = vmatpush1.msra.mxu0 0.0
    %2088 = vmatprep.subr.mxu0 0.0
    %2089 = vmatpush1.msra.mxu0 0.0
    %2090 = vmatprep.subr.mxu0 0.0
    %2091 = vmatpush1.msra.mxu0 0.0
    %2092 = vmatprep.subr.mxu0 0.0
    %2093 = vmatpush1.msra.mxu0 0.0
    %2094 = vmatprep.subr.mxu0 0.0
    %2095 = vmatpush1.msra.mxu0 0.0
    %2096 = vmatprep.subr.mxu0 0.0
    %2097 = vmatpush1.msra.mxu0 0.0
    %2098 = vmatprep.subr.mxu0 0.0
    %2099 = vmatpush1.msra.mxu0 0.0
    %2100 = vmatprep.subr.mxu0 0.0
    %2101 = vmatpush1.msra.mxu0 %v2047
    %2102 = vmatprep.subr.mxu0 0.0
    %2103 = vmatpush1.msra.mxu0 %v2046
    %2104 = vmatprep.subr.mxu0 0.0
    %2105 = vmatpush2.msra.mxu0 0.0
    %2106 = vmatprep.subr.mxu0 0.0
    %2107 = vmatpush2.msra.mxu0 0.0
    %2108 = vmatprep.subr.mxu0 0.0
    %2109 = vmatpush2.msra.mxu0 0.0
    %2110 = vmatprep.subr.mxu0 0.0
    %2111 = vmatpush2.msra.mxu0 0.0
    %2112 = vmatprep.subr.mxu0 0.0
    %2113 = vmatpush2.msra.mxu0 0.0
    %2114 = vmatprep.subr.mxu0 0.0
    %2115 = vmatpush2.msra.mxu0 0.0
    %2116 = vmatprep.subr.mxu0 0.0
    %2117 = vmatpush2.msra.mxu0 0.0
    %2118 = vmatprep.subr.mxu0 0.0
    %2119 = vmatpush2.msra.mxu0 0.0
    %2120 = vmatprep.subr.mxu0 0.0
    %2121 = vmatpush2.msra.mxu0 0.0
    %2122 = vmatprep.subr.mxu0 0.0
    %2123 = vmatpush2.msra.mxu0 0.0
    %2124 = vmatprep.subr.mxu0 0.0
    %2125 = vmatpush2.msra.mxu0 0.0
    %2126 = vmatprep.subr.mxu0 0.0
    %2127 = vmatpush2.msra.mxu0 0.0
    %2128 = vmatprep.subr.mxu0 0.0
    %2129 = vmatpush2.msra.mxu0 0.0
    %2130 = vmatprep.subr.mxu0 0.0
    %2131 = vmatpush2.msra.mxu0 0.0
    %2132 = vmatprep.subr.mxu0 0.0
    %2133 = vmatpush2.msra.mxu0 0.0
    %2134 = vmatprep.subr.mxu0 0.0
    %2135 = vmatpush2.msra.mxu0 0.0
    %2136 = vmatprep.mubr.f32.mxu0 0.0
    %2137 = vmatmul.mubr.f32.gmra.mxu0 %v2049
    %v2138 = vpop.f32.mrf.mxu0
    %v2139 = vadd.f32 0.0, %v2138
    %v2140 = vpop.f32.mrf.mxu0
    %2141 = vmatprep.mubr.f32.mxu0 0.0
    %2142 = vmatmul.mubr.f32.gmra.mxu0 %v2052
    %v2143 = vpop.f32.mrf.mxu0
    %v2144 = vadd.f32 0.0, %v2143
    %v2145 = vpop.f32.mrf.mxu0
    %2146 = vmatprep.mubr.f32.mxu0 0.0
    %2147 = vmatmul.mubr.f32.gmra.mxu0 %v2055
    %v2148 = vpop.f32.mrf.mxu0
    %v2149 = vadd.f32 0.0, %v2148
    %v2150 = vpop.f32.mrf.mxu0
    %2151 = vmatprep.mubr.f32.mxu0 0.0
    %2152 = vmatmul.mubr.f32.gmra.mxu0 %v2058
    %v2153 = vpop.f32.mrf.mxu0
    %v2154 = vadd.f32 0.0, %v2153
    %v2155 = vpop.f32.mrf.mxu0
    %2156 = vmatprep.mubr.f32.mxu0 0.0
    %2157 = vmatmul.mubr.f32.gmra.mxu0 %v2061
    %v2158 = vpop.f32.mrf.mxu0
    %v2159 = vadd.f32 0.0, %v2158
    %v2160 = vpop.f32.mrf.mxu0
    %2161 = vmatprep.mubr.f32.mxu0 0.0
    %2162 = vmatmul.mubr.f32.gmra.mxu0 %v2064
    %v2163 = vpop.f32.mrf.mxu0
    %v2164 = vadd.f32 0.0, %v2163
    %v2165 = vpop.f32.mrf.mxu0
    %2166 = vmatprep.mubr.f32.mxu0 0.0
    %2167 = vmatmul.mubr.f32.gmra.mxu0 %v2067
    %v2168 = vpop.f32.mrf.mxu0
    %v2169 = vadd.f32 0.0, %v2168
    %v2170 = vpop.f32.mrf.mxu0
    %2171 = vmatprep.mubr.f32.mxu0 0.0
    %2172 = vmatmul.mubr.f32.gmra.mxu0 %v2070
    %v2173 = vpop.f32.mrf.mxu0
    %v2174 = vadd.f32 0.0, %v2173
    %v2175 = vpop.f32.mrf.mxu0
    %2176 = vdwg.mxu0
    %v2177 = vadd.f32 %v1999, %v2139
    %v2178 = vadd.f32 %v2004, %v2144
    %v2179 = vadd.f32 %v2009, %v2149
    %v2180 = vadd.f32 %v2014, %v2154
    %v2181 = vadd.f32 %v2019, %v2159
    %v2182 = vadd.f32 %v2024, %v2164
    %v2183 = vadd.f32 %v2029, %v2169
    %v2184 = vadd.f32 %v2034, %v2174
    %v2185 = vld [vmem:[%s332] sm:$0xff]
    %v2186 = vld [vmem:[%s332 + $0x10] sm:$0xff]
    %v2187 = vld [vmem:[%s332 + $0x20] sm:$0xff]
    %v2188 = vld [vmem:[%s332 + $0x30] sm:$0xff]
    %v2189 = vld [vmem:[%s332 + $0x40] sm:$0xff]
    %v2190 = vld [vmem:[%s332 + $0x50] sm:$0xff]
    %v2191 = vld [vmem:[%s332 + $0x60] sm:$0xff]
    %v2192 = vld [vmem:[%s332 + $0x70] sm:$0xff]
    %s2193 = scalar_lea.vmem %s6, 48
    %v2194 = vld [vmem:[%s2193] sm:$0xff]
    %v2195 = vld [vmem:[%s2193 + $0x8] sm:$0xff]
    %v2197 = vsel %vm1749, %v2185, 0
    %v2200 = vsel %vm1749, %v2186, 0
    %v2203 = vsel %vm1749, %v2187, 0
    %v2206 = vsel %vm1749, %v2188, 0
    %v2209 = vsel %vm1749, %v2189, 0
    %v2212 = vsel %vm1749, %v2190, 0
    %v2215 = vsel %vm1749, %v2191, 0
    %v2218 = vsel %vm1749, %v2192, 0
    %2220 = vmatprep.subr.mxu0 0.0
    %2221 = vmatpush1.msra.mxu0 0.0
    %2222 = vmatprep.subr.mxu0 0.0
    %2223 = vmatpush1.msra.mxu0 0.0
    %2224 = vmatprep.subr.mxu0 0.0
    %2225 = vmatpush1.msra.mxu0 0.0
    %2226 = vmatprep.subr.mxu0 0.0
    %2227 = vmatpush1.msra.mxu0 0.0
    %2228 = vmatprep.subr.mxu0 0.0
    %2229 = vmatpush1.msra.mxu0 0.0
    %2230 = vmatprep.subr.mxu0 0.0
    %2231 = vmatpush1.msra.mxu0 0.0
    %2232 = vmatprep.subr.mxu0 0.0
    %2233 = vmatpush1.msra.mxu0 0.0
    %2234 = vmatprep.subr.mxu0 0.0
    %2235 = vmatpush1.msra.mxu0 0.0
    %2236 = vmatprep.subr.mxu0 0.0
    %2237 = vmatpush1.msra.mxu0 0.0
    %2238 = vmatprep.subr.mxu0 0.0
    %2239 = vmatpush1.msra.mxu0 0.0
    %2240 = vmatprep.subr.mxu0 0.0
    %2241 = vmatpush1.msra.mxu0 0.0
    %2242 = vmatprep.subr.mxu0 0.0
    %2243 = vmatpush1.msra.mxu0 0.0
    %2244 = vmatprep.subr.mxu0 0.0
    %2245 = vmatpush1.msra.mxu0 0.0
    %2246 = vmatprep.subr.mxu0 0.0
    %2247 = vmatpush1.msra.mxu0 0.0
    %2248 = vmatprep.subr.mxu0 0.0
    %2249 = vmatpush1.msra.mxu0 %v2195
    %2250 = vmatprep.subr.mxu0 0.0
    %2251 = vmatpush1.msra.mxu0 %v2194
    %2252 = vmatprep.subr.mxu0 0.0
    %2253 = vmatpush2.msra.mxu0 0.0
    %2254 = vmatprep.subr.mxu0 0.0
    %2255 = vmatpush2.msra.mxu0 0.0
    %2256 = vmatprep.subr.mxu0 0.0
    %2257 = vmatpush2.msra.mxu0 0.0
    %2258 = vmatprep.subr.mxu0 0.0
    %2259 = vmatpush2.msra.mxu0 0.0
    %2260 = vmatprep.subr.mxu0 0.0
    %2261 = vmatpush2.msra.mxu0 0.0
    %2262 = vmatprep.subr.mxu0 0.0
    %2263 = vmatpush2.msra.mxu0 0.0
    %2264 = vmatprep.subr.mxu0 0.0
    %2265 = vmatpush2.msra.mxu0 0.0
    %2266 = vmatprep.subr.mxu0 0.0
    %2267 = vmatpush2.msra.mxu0 0.0
    %2268 = vmatprep.subr.mxu0 0.0
    %2269 = vmatpush2.msra.mxu0 0.0
    %2270 = vmatprep.subr.mxu0 0.0
    %2271 = vmatpush2.msra.mxu0 0.0
    %2272 = vmatprep.subr.mxu0 0.0
    %2273 = vmatpush2.msra.mxu0 0.0
    %2274 = vmatprep.subr.mxu0 0.0
    %2275 = vmatpush2.msra.mxu0 0.0
    %2276 = vmatprep.subr.mxu0 0.0
    %2277 = vmatpush2.msra.mxu0 0.0
    %2278 = vmatprep.subr.mxu0 0.0
    %2279 = vmatpush2.msra.mxu0 0.0
    %2280 = vmatprep.subr.mxu0 0.0
    %2281 = vmatpush2.msra.mxu0 0.0
    %2282 = vmatprep.subr.mxu0 0.0
    %2283 = vmatpush2.msra.mxu0 0.0
    %2284 = vmatprep.mubr.f32.mxu0 0.0
    %2285 = vmatmul.mubr.f32.gmra.mxu0 %v2197
    %v2286 = vpop.f32.mrf.mxu0
    %v2287 = vadd.f32 0.0, %v2286
    %v2288 = vpop.f32.mrf.mxu0
    %2289 = vmatprep.mubr.f32.mxu0 0.0
    %2290 = vmatmul.mubr.f32.gmra.mxu0 %v2200
    %v2291 = vpop.f32.mrf.mxu0
    %v2292 = vadd.f32 0.0, %v2291
    %v2293 = vpop.f32.mrf.mxu0
    %2294 = vmatprep.mubr.f32.mxu0 0.0
    %2295 = vmatmul.mubr.f32.gmra.mxu0 %v2203
    %v2296 = vpop.f32.mrf.mxu0
    %v2297 = vadd.f32 0.0, %v2296
    %v2298 = vpop.f32.mrf.mxu0
    %2299 = vmatprep.mubr.f32.mxu0 0.0
    %2300 = vmatmul.mubr.f32.gmra.mxu0 %v2206
    %v2301 = vpop.f32.mrf.mxu0
    %v2302 = vadd.f32 0.0, %v2301
    %v2303 = vpop.f32.mrf.mxu0
    %2304 = vmatprep.mubr.f32.mxu0 0.0
    %2305 = vmatmul.mubr.f32.gmra.mxu0 %v2209
    %v2306 = vpop.f32.mrf.mxu0
    %v2307 = vadd.f32 0.0, %v2306
    %v2308 = vpop.f32.mrf.mxu0
    %2309 = vmatprep.mubr.f32.mxu0 0.0
    %2310 = vmatmul.mubr.f32.gmra.mxu0 %v2212
    %v2311 = vpop.f32.mrf.mxu0
    %v2312 = vadd.f32 0.0, %v2311
    %v2313 = vpop.f32.mrf.mxu0
    %2314 = vmatprep.mubr.f32.mxu0 0.0
    %2315 = vmatmul.mubr.f32.gmra.mxu0 %v2215
    %v2316 = vpop.f32.mrf.mxu0
    %v2317 = vadd.f32 0.0, %v2316
    %v2318 = vpop.f32.mrf.mxu0
    %2319 = vmatprep.mubr.f32.mxu0 0.0
    %2320 = vmatmul.mubr.f32.gmra.mxu0 %v2218
    %v2321 = vpop.f32.mrf.mxu0
    %v2322 = vadd.f32 0.0, %v2321
    %v2323 = vpop.f32.mrf.mxu0
    %2324 = vdwg.mxu0
    %v2325 = vadd.f32 %v2177, %v2287
    %v2326 = vadd.f32 %v2178, %v2292
    %v2327 = vadd.f32 %v2179, %v2297
    %v2328 = vadd.f32 %v2180, %v2302
    %v2329 = vadd.f32 %v2181, %v2307
    %v2330 = vadd.f32 %v2182, %v2312
    %v2331 = vadd.f32 %v2183, %v2317
    %v2332 = vadd.f32 %v2184, %v2322
    %v2333 = vld [vmem:[%s332 + $0x1] sm:$0xff]
    %v2334 = vld [vmem:[%s332 + $0x11] sm:$0xff]
    %v2335 = vld [vmem:[%s332 + $0x21] sm:$0xff]
    %v2336 = vld [vmem:[%s332 + $0x31] sm:$0xff]
    %v2337 = vld [vmem:[%s332 + $0x41] sm:$0xff]
    %v2338 = vld [vmem:[%s332 + $0x51] sm:$0xff]
    %v2339 = vld [vmem:[%s332 + $0x61] sm:$0xff]
    %v2340 = vld [vmem:[%s332 + $0x71] sm:$0xff]
    %s2341 = scalar_lea.vmem %s6, 64
    %v2342 = vld [vmem:[%s2341] sm:$0xff]
    %v2343 = vld [vmem:[%s2341 + $0x8] sm:$0xff]
    %v2345 = vsel %vm1749, %v2333, 0
    %v2348 = vsel %vm1749, %v2334, 0
    %v2351 = vsel %vm1749, %v2335, 0
    %v2354 = vsel %vm1749, %v2336, 0
    %v2357 = vsel %vm1749, %v2337, 0
    %v2360 = vsel %vm1749, %v2338, 0
    %v2363 = vsel %vm1749, %v2339, 0
    %v2366 = vsel %vm1749, %v2340, 0
    %2368 = vmatprep.subr.mxu0 0.0
    %2369 = vmatpush1.msra.mxu0 0.0
    %2370 = vmatprep.subr.mxu0 0.0
    %2371 = vmatpush1.msra.mxu0 0.0
    %2372 = vmatprep.subr.mxu0 0.0
    %2373 = vmatpush1.msra.mxu0 0.0
    %2374 = vmatprep.subr.mxu0 0.0
    %2375 = vmatpush1.msra.mxu0 0.0
    %2376 = vmatprep.subr.mxu0 0.0
    %2377 = vmatpush1.msra.mxu0 0.0
    %2378 = vmatprep.subr.mxu0 0.0
    %2379 = vmatpush1.msra.mxu0 0.0
    %2380 = vmatprep.subr.mxu0 0.0
    %2381 = vmatpush1.msra.mxu0 0.0
    %2382 = vmatprep.subr.mxu0 0.0
    %2383 = vmatpush1.msra.mxu0 0.0
    %2384 = vmatprep.subr.mxu0 0.0
    %2385 = vmatpush1.msra.mxu0 0.0
    %2386 = vmatprep.subr.mxu0 0.0
    %2387 = vmatpush1.msra.mxu0 0.0
    %2388 = vmatprep.subr.mxu0 0.0
    %2389 = vmatpush1.msra.mxu0 0.0
    %2390 = vmatprep.subr.mxu0 0.0
    %2391 = vmatpush1.msra.mxu0 0.0
    %2392 = vmatprep.subr.mxu0 0.0
    %2393 = vmatpush1.msra.mxu0 0.0
    %2394 = vmatprep.subr.mxu0 0.0
    %2395 = vmatpush1.msra.mxu0 0.0
    %2396 = vmatprep.subr.mxu0 0.0
    %2397 = vmatpush1.msra.mxu0 %v2343
    %2398 = vmatprep.subr.mxu0 0.0
    %2399 = vmatpush1.msra.mxu0 %v2342
    %2400 = vmatprep.subr.mxu0 0.0
    %2401 = vmatpush2.msra.mxu0 0.0
    %2402 = vmatprep.subr.mxu0 0.0
    %2403 = vmatpush2.msra.mxu0 0.0
    %2404 = vmatprep.subr.mxu0 0.0
    %2405 = vmatpush2.msra.mxu0 0.0
    %2406 = vmatprep.subr.mxu0 0.0
    %2407 = vmatpush2.msra.mxu0 0.0
    %2408 = vmatprep.subr.mxu0 0.0
    %2409 = vmatpush2.msra.mxu0 0.0
    %2410 = vmatprep.subr.mxu0 0.0
    %2411 = vmatpush2.msra.mxu0 0.0
    %2412 = vmatprep.subr.mxu0 0.0
    %2413 = vmatpush2.msra.mxu0 0.0
    %2414 = vmatprep.subr.mxu0 0.0
    %2415 = vmatpush2.msra.mxu0 0.0
    %2416 = vmatprep.subr.mxu0 0.0
    %2417 = vmatpush2.msra.mxu0 0.0
    %2418 = vmatprep.subr.mxu0 0.0
    %2419 = vmatpush2.msra.mxu0 0.0
    %2420 = vmatprep.subr.mxu0 0.0
    %2421 = vmatpush2.msra.mxu0 0.0
    %2422 = vmatprep.subr.mxu0 0.0
    %2423 = vmatpush2.msra.mxu0 0.0
    %2424 = vmatprep.subr.mxu0 0.0
    %2425 = vmatpush2.msra.mxu0 0.0
    %2426 = vmatprep.subr.mxu0 0.0
    %2427 = vmatpush2.msra.mxu0 0.0
    %2428 = vmatprep.subr.mxu0 0.0
    %2429 = vmatpush2.msra.mxu0 0.0
    %2430 = vmatprep.subr.mxu0 0.0
    %2431 = vmatpush2.msra.mxu0 0.0
    %2432 = vmatprep.mubr.f32.mxu0 0.0
    %2433 = vmatmul.mubr.f32.gmra.mxu0 %v2345
    %v2434 = vpop.f32.mrf.mxu0
    %v2435 = vadd.f32 0.0, %v2434
    %v2436 = vpop.f32.mrf.mxu0
    %2437 = vmatprep.mubr.f32.mxu0 0.0
    %2438 = vmatmul.mubr.f32.gmra.mxu0 %v2348
    %v2439 = vpop.f32.mrf.mxu0
    %v2440 = vadd.f32 0.0, %v2439
    %v2441 = vpop.f32.mrf.mxu0
    %2442 = vmatprep.mubr.f32.mxu0 0.0
    %2443 = vmatmul.mubr.f32.gmra.mxu0 %v2351
    %v2444 = vpop.f32.mrf.mxu0
    %v2445 = vadd.f32 0.0, %v2444
    %v2446 = vpop.f32.mrf.mxu0
    %2447 = vmatprep.mubr.f32.mxu0 0.0
    %2448 = vmatmul.mubr.f32.gmra.mxu0 %v2354
    %v2449 = vpop.f32.mrf.mxu0
    %v2450 = vadd.f32 0.0, %v2449
    %v2451 = vpop.f32.mrf.mxu0
    %2452 = vmatprep.mubr.f32.mxu0 0.0
    %2453 = vmatmul.mubr.f32.gmra.mxu0 %v2357
    %v2454 = vpop.f32.mrf.mxu0
    %v2455 = vadd.f32 0.0, %v2454
    %v2456 = vpop.f32.mrf.mxu0
    %2457 = vmatprep.mubr.f32.mxu0 0.0
    %2458 = vmatmul.mubr.f32.gmra.mxu0 %v2360
    %v2459 = vpop.f32.mrf.mxu0
    %v2460 = vadd.f32 0.0, %v2459
    %v2461 = vpop.f32.mrf.mxu0
    %2462 = vmatprep.mubr.f32.mxu0 0.0
    %2463 = vmatmul.mubr.f32.gmra.mxu0 %v2363
    %v2464 = vpop.f32.mrf.mxu0
    %v2465 = vadd.f32 0.0, %v2464
    %v2466 = vpop.f32.mrf.mxu0
    %2467 = vmatprep.mubr.f32.mxu0 0.0
    %2468 = vmatmul.mubr.f32.gmra.mxu0 %v2366
    %v2469 = vpop.f32.mrf.mxu0
    %v2470 = vadd.f32 0.0, %v2469
    %v2471 = vpop.f32.mrf.mxu0
    %2472 = vdwg.mxu0
    %v2473 = vadd.f32 %v2325, %v2435
    %v2474 = vadd.f32 %v2326, %v2440
    %v2475 = vadd.f32 %v2327, %v2445
    %v2476 = vadd.f32 %v2328, %v2450
    %v2477 = vadd.f32 %v2329, %v2455
    %v2478 = vadd.f32 %v2330, %v2460
    %v2479 = vadd.f32 %v2331, %v2465
    %v2480 = vadd.f32 %v2332, %v2470
    %v2481 = vld [vmem:[%s332 + $0x2] sm:$0xff]
    %v2482 = vld [vmem:[%s332 + $0x12] sm:$0xff]
    %v2483 = vld [vmem:[%s332 + $0x22] sm:$0xff]
    %v2484 = vld [vmem:[%s332 + $0x32] sm:$0xff]
    %v2485 = vld [vmem:[%s332 + $0x42] sm:$0xff]
    %v2486 = vld [vmem:[%s332 + $0x52] sm:$0xff]
    %v2487 = vld [vmem:[%s332 + $0x62] sm:$0xff]
    %v2488 = vld [vmem:[%s332 + $0x72] sm:$0xff]
    %s2489 = scalar_lea.vmem %s6, 80
    %v2490 = vld [vmem:[%s2489] sm:$0xff]
    %v2491 = vld [vmem:[%s2489 + $0x8] sm:$0xff]
    %v2493 = vsel %vm1749, %v2481, 0
    %v2496 = vsel %vm1749, %v2482, 0
    %v2499 = vsel %vm1749, %v2483, 0
    %v2502 = vsel %vm1749, %v2484, 0
    %v2505 = vsel %vm1749, %v2485, 0
    %v2508 = vsel %vm1749, %v2486, 0
    %v2511 = vsel %vm1749, %v2487, 0
    %v2514 = vsel %vm1749, %v2488, 0
    %2516 = vmatprep.subr.mxu0 0.0
    %2517 = vmatpush1.msra.mxu0 0.0
    %2518 = vmatprep.subr.mxu0 0.0
    %2519 = vmatpush1.msra.mxu0 0.0
    %2520 = vmatprep.subr.mxu0 0.0
    %2521 = vmatpush1.msra.mxu0 0.0
    %2522 = vmatprep.subr.mxu0 0.0
    %2523 = vmatpush1.msra.mxu0 0.0
    %2524 = vmatprep.subr.mxu0 0.0
    %2525 = vmatpush1.msra.mxu0 0.0
    %2526 = vmatprep.subr.mxu0 0.0
    %2527 = vmatpush1.msra.mxu0 0.0
    %2528 = vmatprep.subr.mxu0 0.0
    %2529 = vmatpush1.msra.mxu0 0.0
    %2530 = vmatprep.subr.mxu0 0.0
    %2531 = vmatpush1.msra.mxu0 0.0
    %2532 = vmatprep.subr.mxu0 0.0
    %2533 = vmatpush1.msra.mxu0 0.0
    %2534 = vmatprep.subr.mxu0 0.0
    %2535 = vmatpush1.msra.mxu0 0.0
    %2536 = vmatprep.subr.mxu0 0.0
    %2537 = vmatpush1.msra.mxu0 0.0
    %2538 = vmatprep.subr.mxu0 0.0
    %2539 = vmatpush1.msra.mxu0 0.0
    %2540 = vmatprep.subr.mxu0 0.0
    %2541 = vmatpush1.msra.mxu0 0.0
    %2542 = vmatprep.subr.mxu0 0.0
    %2543 = vmatpush1.msra.mxu0 0.0
    %2544 = vmatprep.subr.mxu0 0.0
    %2545 = vmatpush1.msra.mxu0 %v2491
    %2546 = vmatprep.subr.mxu0 0.0
    %2547 = vmatpush1.msra.mxu0 %v2490
    %2548 = vmatprep.subr.mxu0 0.0
    %2549 = vmatpush2.msra.mxu0 0.0
    %2550 = vmatprep.subr.mxu0 0.0
    %2551 = vmatpush2.msra.mxu0 0.0
    %2552 = vmatprep.subr.mxu0 0.0
    %2553 = vmatpush2.msra.mxu0 0.0
    %2554 = vmatprep.subr.mxu0 0.0
    %2555 = vmatpush2.msra.mxu0 0.0
    %2556 = vmatprep.subr.mxu0 0.0
    %2557 = vmatpush2.msra.mxu0 0.0
    %2558 = vmatprep.subr.mxu0 0.0
    %2559 = vmatpush2.msra.mxu0 0.0
    %2560 = vmatprep.subr.mxu0 0.0
    %2561 = vmatpush2.msra.mxu0 0.0
    %2562 = vmatprep.subr.mxu0 0.0
    %2563 = vmatpush2.msra.mxu0 0.0
    %2564 = vmatprep.subr.mxu0 0.0
    %2565 = vmatpush2.msra.mxu0 0.0
    %2566 = vmatprep.subr.mxu0 0.0
    %2567 = vmatpush2.msra.mxu0 0.0
    %2568 = vmatprep.subr.mxu0 0.0
    %2569 = vmatpush2.msra.mxu0 0.0
    %2570 = vmatprep.subr.mxu0 0.0
    %2571 = vmatpush2.msra.mxu0 0.0
    %2572 = vmatprep.subr.mxu0 0.0
    %2573 = vmatpush2.msra.mxu0 0.0
    %2574 = vmatprep.subr.mxu0 0.0
    %2575 = vmatpush2.msra.mxu0 0.0
    %2576 = vmatprep.subr.mxu0 0.0
    %2577 = vmatpush2.msra.mxu0 0.0
    %2578 = vmatprep.subr.mxu0 0.0
    %2579 = vmatpush2.msra.mxu0 0.0
    %2580 = vmatprep.mubr.f32.mxu0 0.0
    %2581 = vmatmul.mubr.f32.gmra.mxu0 %v2493
    %v2582 = vpop.f32.mrf.mxu0
    %v2583 = vadd.f32 0.0, %v2582
    %v2584 = vpop.f32.mrf.mxu0
    %2585 = vmatprep.mubr.f32.mxu0 0.0
    %2586 = vmatmul.mubr.f32.gmra.mxu0 %v2496
    %v2587 = vpop.f32.mrf.mxu0
    %v2588 = vadd.f32 0.0, %v2587
    %v2589 = vpop.f32.mrf.mxu0
    %2590 = vmatprep.mubr.f32.mxu0 0.0
    %2591 = vmatmul.mubr.f32.gmra.mxu0 %v2499
    %v2592 = vpop.f32.mrf.mxu0
    %v2593 = vadd.f32 0.0, %v2592
    %v2594 = vpop.f32.mrf.mxu0
    %2595 = vmatprep.mubr.f32.mxu0 0.0
    %2596 = vmatmul.mubr.f32.gmra.mxu0 %v2502
    %v2597 = vpop.f32.mrf.mxu0
    %v2598 = vadd.f32 0.0, %v2597
    %v2599 = vpop.f32.mrf.mxu0
    %2600 = vmatprep.mubr.f32.mxu0 0.0
    %2601 = vmatmul.mubr.f32.gmra.mxu0 %v2505
    %v2602 = vpop.f32.mrf.mxu0
    %v2603 = vadd.f32 0.0, %v2602
    %v2604 = vpop.f32.mrf.mxu0
    %2605 = vmatprep.mubr.f32.mxu0 0.0
    %2606 = vmatmul.mubr.f32.gmra.mxu0 %v2508
    %v2607 = vpop.f32.mrf.mxu0
    %v2608 = vadd.f32 0.0, %v2607
    %v2609 = vpop.f32.mrf.mxu0
    %2610 = vmatprep.mubr.f32.mxu0 0.0
    %2611 = vmatmul.mubr.f32.gmra.mxu0 %v2511
    %v2612 = vpop.f32.mrf.mxu0
    %v2613 = vadd.f32 0.0, %v2612
    %v2614 = vpop.f32.mrf.mxu0
    %2615 = vmatprep.mubr.f32.mxu0 0.0
    %2616 = vmatmul.mubr.f32.gmra.mxu0 %v2514
    %v2617 = vpop.f32.mrf.mxu0
    %v2618 = vadd.f32 0.0, %v2617
    %v2619 = vpop.f32.mrf.mxu0
    %2620 = vdwg.mxu0
    %v2621 = vadd.f32 %v2473, %v2583
    %v2622 = vadd.f32 %v2474, %v2588
    %v2623 = vadd.f32 %v2475, %v2593
    %v2624 = vadd.f32 %v2476, %v2598
    %v2625 = vadd.f32 %v2477, %v2603
    %v2626 = vadd.f32 %v2478, %v2608
    %v2627 = vadd.f32 %v2479, %v2613
    %v2628 = vadd.f32 %v2480, %v2618
    %v2629 = vld [vmem:[%s1278] sm:$0xff]
    %v2630 = vld [vmem:[%s1278 + $0x10] sm:$0xff]
    %v2631 = vld [vmem:[%s1278 + $0x20] sm:$0xff]
    %v2632 = vld [vmem:[%s1278 + $0x30] sm:$0xff]
    %v2633 = vld [vmem:[%s1278 + $0x40] sm:$0xff]
    %v2634 = vld [vmem:[%s1278 + $0x50] sm:$0xff]
    %v2635 = vld [vmem:[%s1278 + $0x60] sm:$0xff]
    %v2636 = vld [vmem:[%s1278 + $0x70] sm:$0xff]
    %s2637 = scalar_lea.vmem %s6, 96
    %v2638 = vld [vmem:[%s2637] sm:$0xff]
    %v2639 = vld [vmem:[%s2637 + $0x8] sm:$0xff]
    %v2641 = vsel %vm1749, %v2629, 0
    %v2644 = vsel %vm1749, %v2630, 0
    %v2647 = vsel %vm1749, %v2631, 0
    %v2650 = vsel %vm1749, %v2632, 0
    %v2653 = vsel %vm1749, %v2633, 0
    %v2656 = vsel %vm1749, %v2634, 0
    %v2659 = vsel %vm1749, %v2635, 0
    %v2662 = vsel %vm1749, %v2636, 0
    %2664 = vmatprep.subr.mxu0 0.0
    %2665 = vmatpush1.msra.mxu0 0.0
    %2666 = vmatprep.subr.mxu0 0.0
    %2667 = vmatpush1.msra.mxu0 0.0
    %2668 = vmatprep.subr.mxu0 0.0
    %2669 = vmatpush1.msra.mxu0 0.0
    %2670 = vmatprep.subr.mxu0 0.0
    %2671 = vmatpush1.msra.mxu0 0.0
    %2672 = vmatprep.subr.mxu0 0.0
    %2673 = vmatpush1.msra.mxu0 0.0
    %2674 = vmatprep.subr.mxu0 0.0
    %2675 = vmatpush1.msra.mxu0 0.0
    %2676 = vmatprep.subr.mxu0 0.0
    %2677 = vmatpush1.msra.mxu0 0.0
    %2678 = vmatprep.subr.mxu0 0.0
    %2679 = vmatpush1.msra.mxu0 0.0
    %2680 = vmatprep.subr.mxu0 0.0
    %2681 = vmatpush1.msra.mxu0 0.0
    %2682 = vmatprep.subr.mxu0 0.0
    %2683 = vmatpush1.msra.mxu0 0.0
    %2684 = vmatprep.subr.mxu0 0.0
    %2685 = vmatpush1.msra.mxu0 0.0
    %2686 = vmatprep.subr.mxu0 0.0
    %2687 = vmatpush1.msra.mxu0 0.0
    %2688 = vmatprep.subr.mxu0 0.0
    %2689 = vmatpush1.msra.mxu0 0.0
    %2690 = vmatprep.subr.mxu0 0.0
    %2691 = vmatpush1.msra.mxu0 0.0
    %2692 = vmatprep.subr.mxu0 0.0
    %2693 = vmatpush1.msra.mxu0 %v2639
    %2694 = vmatprep.subr.mxu0 0.0
    %2695 = vmatpush1.msra.mxu0 %v2638
    %2696 = vmatprep.subr.mxu0 0.0
    %2697 = vmatpush2.msra.mxu0 0.0
    %2698 = vmatprep.subr.mxu0 0.0
    %2699 = vmatpush2.msra.mxu0 0.0
    %2700 = vmatprep.subr.mxu0 0.0
    %2701 = vmatpush2.msra.mxu0 0.0
    %2702 = vmatprep.subr.mxu0 0.0
    %2703 = vmatpush2.msra.mxu0 0.0
    %2704 = vmatprep.subr.mxu0 0.0
    %2705 = vmatpush2.msra.mxu0 0.0
    %2706 = vmatprep.subr.mxu0 0.0
    %2707 = vmatpush2.msra.mxu0 0.0
    %2708 = vmatprep.subr.mxu0 0.0
    %2709 = vmatpush2.msra.mxu0 0.0
    %2710 = vmatprep.subr.mxu0 0.0
    %2711 = vmatpush2.msra.mxu0 0.0
    %2712 = vmatprep.subr.mxu0 0.0
    %2713 = vmatpush2.msra.mxu0 0.0
    %2714 = vmatprep.subr.mxu0 0.0
    %2715 = vmatpush2.msra.mxu0 0.0
    %2716 = vmatprep.subr.mxu0 0.0
    %2717 = vmatpush2.msra.mxu0 0.0
    %2718 = vmatprep.subr.mxu0 0.0
    %2719 = vmatpush2.msra.mxu0 0.0
    %2720 = vmatprep.subr.mxu0 0.0
    %2721 = vmatpush2.msra.mxu0 0.0
    %2722 = vmatprep.subr.mxu0 0.0
    %2723 = vmatpush2.msra.mxu0 0.0
    %2724 = vmatprep.subr.mxu0 0.0
    %2725 = vmatpush2.msra.mxu0 0.0
    %2726 = vmatprep.subr.mxu0 0.0
    %2727 = vmatpush2.msra.mxu0 0.0
    %2728 = vmatprep.mubr.f32.mxu0 0.0
    %2729 = vmatmul.mubr.f32.gmra.mxu0 %v2641
    %v2730 = vpop.f32.mrf.mxu0
    %v2731 = vadd.f32 0.0, %v2730
    %v2732 = vpop.f32.mrf.mxu0
    %2733 = vmatprep.mubr.f32.mxu0 0.0
    %2734 = vmatmul.mubr.f32.gmra.mxu0 %v2644
    %v2735 = vpop.f32.mrf.mxu0
    %v2736 = vadd.f32 0.0, %v2735
    %v2737 = vpop.f32.mrf.mxu0
    %2738 = vmatprep.mubr.f32.mxu0 0.0
    %2739 = vmatmul.mubr.f32.gmra.mxu0 %v2647
    %v2740 = vpop.f32.mrf.mxu0
    %v2741 = vadd.f32 0.0, %v2740
    %v2742 = vpop.f32.mrf.mxu0
    %2743 = vmatprep.mubr.f32.mxu0 0.0
    %2744 = vmatmul.mubr.f32.gmra.mxu0 %v2650
    %v2745 = vpop.f32.mrf.mxu0
    %v2746 = vadd.f32 0.0, %v2745
    %v2747 = vpop.f32.mrf.mxu0
    %2748 = vmatprep.mubr.f32.mxu0 0.0
    %2749 = vmatmul.mubr.f32.gmra.mxu0 %v2653
    %v2750 = vpop.f32.mrf.mxu0
    %v2751 = vadd.f32 0.0, %v2750
    %v2752 = vpop.f32.mrf.mxu0
    %2753 = vmatprep.mubr.f32.mxu0 0.0
    %2754 = vmatmul.mubr.f32.gmra.mxu0 %v2656
    %v2755 = vpop.f32.mrf.mxu0
    %v2756 = vadd.f32 0.0, %v2755
    %v2757 = vpop.f32.mrf.mxu0
    %2758 = vmatprep.mubr.f32.mxu0 0.0
    %2759 = vmatmul.mubr.f32.gmra.mxu0 %v2659
    %v2760 = vpop.f32.mrf.mxu0
    %v2761 = vadd.f32 0.0, %v2760
    %v2762 = vpop.f32.mrf.mxu0
    %2763 = vmatprep.mubr.f32.mxu0 0.0
    %2764 = vmatmul.mubr.f32.gmra.mxu0 %v2662
    %v2765 = vpop.f32.mrf.mxu0
    %v2766 = vadd.f32 0.0, %v2765
    %v2767 = vpop.f32.mrf.mxu0
    %2768 = vdwg.mxu0
    %v2769 = vadd.f32 %v2621, %v2731
    %v2770 = vadd.f32 %v2622, %v2736
    %v2771 = vadd.f32 %v2623, %v2741
    %v2772 = vadd.f32 %v2624, %v2746
    %v2773 = vadd.f32 %v2625, %v2751
    %v2774 = vadd.f32 %v2626, %v2756
    %v2775 = vadd.f32 %v2627, %v2761
    %v2776 = vadd.f32 %v2628, %v2766
    %v2777 = vld [vmem:[%s1278 + $0x1] sm:$0xff]
    %v2778 = vld [vmem:[%s1278 + $0x11] sm:$0xff]
    %v2779 = vld [vmem:[%s1278 + $0x21] sm:$0xff]
    %v2780 = vld [vmem:[%s1278 + $0x31] sm:$0xff]
    %v2781 = vld [vmem:[%s1278 + $0x41] sm:$0xff]
    %v2782 = vld [vmem:[%s1278 + $0x51] sm:$0xff]
    %v2783 = vld [vmem:[%s1278 + $0x61] sm:$0xff]
    %v2784 = vld [vmem:[%s1278 + $0x71] sm:$0xff]
    %s2785 = scalar_lea.vmem %s6, 112
    %v2786 = vld [vmem:[%s2785] sm:$0xff]
    %v2787 = vld [vmem:[%s2785 + $0x8] sm:$0xff]
    %v2789 = vsel %vm1749, %v2777, 0
    %v2792 = vsel %vm1749, %v2778, 0
    %v2795 = vsel %vm1749, %v2779, 0
    %v2798 = vsel %vm1749, %v2780, 0
    %v2801 = vsel %vm1749, %v2781, 0
    %v2804 = vsel %vm1749, %v2782, 0
    %v2807 = vsel %vm1749, %v2783, 0
    %v2810 = vsel %vm1749, %v2784, 0
    %2812 = vmatprep.subr.mxu0 0.0
    %2813 = vmatpush1.msra.mxu0 0.0
    %2814 = vmatprep.subr.mxu0 0.0
    %2815 = vmatpush1.msra.mxu0 0.0
    %2816 = vmatprep.subr.mxu0 0.0
    %2817 = vmatpush1.msra.mxu0 0.0
    %2818 = vmatprep.subr.mxu0 0.0
    %2819 = vmatpush1.msra.mxu0 0.0
    %2820 = vmatprep.subr.mxu0 0.0
    %2821 = vmatpush1.msra.mxu0 0.0
    %2822 = vmatprep.subr.mxu0 0.0
    %2823 = vmatpush1.msra.mxu0 0.0
    %2824 = vmatprep.subr.mxu0 0.0
    %2825 = vmatpush1.msra.mxu0 0.0
    %2826 = vmatprep.subr.mxu0 0.0
    %2827 = vmatpush1.msra.mxu0 0.0
    %2828 = vmatprep.subr.mxu0 0.0
    %2829 = vmatpush1.msra.mxu0 0.0
    %2830 = vmatprep.subr.mxu0 0.0
    %2831 = vmatpush1.msra.mxu0 0.0
    %2832 = vmatprep.subr.mxu0 0.0
    %2833 = vmatpush1.msra.mxu0 0.0
    %2834 = vmatprep.subr.mxu0 0.0
    %2835 = vmatpush1.msra.mxu0 0.0
    %2836 = vmatprep.subr.mxu0 0.0
    %2837 = vmatpush1.msra.mxu0 0.0
    %2838 = vmatprep.subr.mxu0 0.0
    %2839 = vmatpush1.msra.mxu0 0.0
    %2840 = vmatprep.subr.mxu0 0.0
    %2841 = vmatpush1.msra.mxu0 %v2787
    %2842 = vmatprep.subr.mxu0 0.0
    %2843 = vmatpush1.msra.mxu0 %v2786
    %2844 = vmatprep.subr.mxu0 0.0
    %2845 = vmatpush2.msra.mxu0 0.0
    %2846 = vmatprep.subr.mxu0 0.0
    %2847 = vmatpush2.msra.mxu0 0.0
    %2848 = vmatprep.subr.mxu0 0.0
    %2849 = vmatpush2.msra.mxu0 0.0
    %2850 = vmatprep.subr.mxu0 0.0
    %2851 = vmatpush2.msra.mxu0 0.0
    %2852 = vmatprep.subr.mxu0 0.0
    %2853 = vmatpush2.msra.mxu0 0.0
    %2854 = vmatprep.subr.mxu0 0.0
    %2855 = vmatpush2.msra.mxu0 0.0
    %2856 = vmatprep.subr.mxu0 0.0
    %2857 = vmatpush2.msra.mxu0 0.0
    %2858 = vmatprep.subr.mxu0 0.0
    %2859 = vmatpush2.msra.mxu0 0.0
    %2860 = vmatprep.subr.mxu0 0.0
    %2861 = vmatpush2.msra.mxu0 0.0
    %2862 = vmatprep.subr.mxu0 0.0
    %2863 = vmatpush2.msra.mxu0 0.0
    %2864 = vmatprep.subr.mxu0 0.0
    %2865 = vmatpush2.msra.mxu0 0.0
    %2866 = vmatprep.subr.mxu0 0.0
    %2867 = vmatpush2.msra.mxu0 0.0
    %2868 = vmatprep.subr.mxu0 0.0
    %2869 = vmatpush2.msra.mxu0 0.0
    %2870 = vmatprep.subr.mxu0 0.0
    %2871 = vmatpush2.msra.mxu0 0.0
    %2872 = vmatprep.subr.mxu0 0.0
    %2873 = vmatpush2.msra.mxu0 0.0
    %2874 = vmatprep.subr.mxu0 0.0
    %2875 = vmatpush2.msra.mxu0 0.0
    %2876 = vmatprep.mubr.f32.mxu0 0.0
    %2877 = vmatmul.mubr.f32.gmra.mxu0 %v2789
    %v2878 = vpop.f32.mrf.mxu0
    %v2879 = vadd.f32 0.0, %v2878
    %v2880 = vpop.f32.mrf.mxu0
    %2881 = vmatprep.mubr.f32.mxu0 0.0
    %2882 = vmatmul.mubr.f32.gmra.mxu0 %v2792
    %v2883 = vpop.f32.mrf.mxu0
    %v2884 = vadd.f32 0.0, %v2883
    %v2885 = vpop.f32.mrf.mxu0
    %2886 = vmatprep.mubr.f32.mxu0 0.0
    %2887 = vmatmul.mubr.f32.gmra.mxu0 %v2795
    %v2888 = vpop.f32.mrf.mxu0
    %v2889 = vadd.f32 0.0, %v2888
    %v2890 = vpop.f32.mrf.mxu0
    %2891 = vmatprep.mubr.f32.mxu0 0.0
    %2892 = vmatmul.mubr.f32.gmra.mxu0 %v2798
    %v2893 = vpop.f32.mrf.mxu0
    %v2894 = vadd.f32 0.0, %v2893
    %v2895 = vpop.f32.mrf.mxu0
    %2896 = vmatprep.mubr.f32.mxu0 0.0
    %2897 = vmatmul.mubr.f32.gmra.mxu0 %v2801
    %v2898 = vpop.f32.mrf.mxu0
    %v2899 = vadd.f32 0.0, %v2898
    %v2900 = vpop.f32.mrf.mxu0
    %2901 = vmatprep.mubr.f32.mxu0 0.0
    %2902 = vmatmul.mubr.f32.gmra.mxu0 %v2804
    %v2903 = vpop.f32.mrf.mxu0
    %v2904 = vadd.f32 0.0, %v2903
    %v2905 = vpop.f32.mrf.mxu0
    %2906 = vmatprep.mubr.f32.mxu0 0.0
    %2907 = vmatmul.mubr.f32.gmra.mxu0 %v2807
    %v2908 = vpop.f32.mrf.mxu0
    %v2909 = vadd.f32 0.0, %v2908
    %v2910 = vpop.f32.mrf.mxu0
    %2911 = vmatprep.mubr.f32.mxu0 0.0
    %2912 = vmatmul.mubr.f32.gmra.mxu0 %v2810
    %v2913 = vpop.f32.mrf.mxu0
    %v2914 = vadd.f32 0.0, %v2913
    %v2915 = vpop.f32.mrf.mxu0
    %2916 = vdwg.mxu0
    %v2917 = vadd.f32 %v2769, %v2879
    %v2918 = vadd.f32 %v2770, %v2884
    %v2919 = vadd.f32 %v2771, %v2889
    %v2920 = vadd.f32 %v2772, %v2894
    %v2921 = vadd.f32 %v2773, %v2899
    %v2922 = vadd.f32 %v2774, %v2904
    %v2923 = vadd.f32 %v2775, %v2909
    %v2924 = vadd.f32 %v2776, %v2914
    %v2925 = vld [vmem:[%s1278 + $0x2] sm:$0xff]
    %v2926 = vld [vmem:[%s1278 + $0x12] sm:$0xff]
    %v2927 = vld [vmem:[%s1278 + $0x22] sm:$0xff]
    %v2928 = vld [vmem:[%s1278 + $0x32] sm:$0xff]
    %v2929 = vld [vmem:[%s1278 + $0x42] sm:$0xff]
    %v2930 = vld [vmem:[%s1278 + $0x52] sm:$0xff]
    %v2931 = vld [vmem:[%s1278 + $0x62] sm:$0xff]
    %v2932 = vld [vmem:[%s1278 + $0x72] sm:$0xff]
    %s2933 = scalar_lea.vmem %s6, 128
    %v2934 = vld [vmem:[%s2933] sm:$0xff]
    %v2935 = vld [vmem:[%s2933 + $0x8] sm:$0xff]
    %v2937 = vsel %vm1749, %v2925, 0
    %v2940 = vsel %vm1749, %v2926, 0
    %v2943 = vsel %vm1749, %v2927, 0
    %v2946 = vsel %vm1749, %v2928, 0
    %v2949 = vsel %vm1749, %v2929, 0
    %v2952 = vsel %vm1749, %v2930, 0
    %v2955 = vsel %vm1749, %v2931, 0
    %v2958 = vsel %vm1749, %v2932, 0
    %2960 = vmatprep.subr.mxu0 0.0
    %2961 = vmatpush1.msra.mxu0 0.0
    %2962 = vmatprep.subr.mxu0 0.0
    %2963 = vmatpush1.msra.mxu0 0.0
    %2964 = vmatprep.subr.mxu0 0.0
    %2965 = vmatpush1.msra.mxu0 0.0
    %2966 = vmatprep.subr.mxu0 0.0
    %2967 = vmatpush1.msra.mxu0 0.0
    %2968 = vmatprep.subr.mxu0 0.0
    %2969 = vmatpush1.msra.mxu0 0.0
    %2970 = vmatprep.subr.mxu0 0.0
    %2971 = vmatpush1.msra.mxu0 0.0
    %2972 = vmatprep.subr.mxu0 0.0
    %2973 = vmatpush1.msra.mxu0 0.0
    %2974 = vmatprep.subr.mxu0 0.0
    %2975 = vmatpush1.msra.mxu0 0.0
    %2976 = vmatprep.subr.mxu0 0.0
    %2977 = vmatpush1.msra.mxu0 0.0
    %2978 = vmatprep.subr.mxu0 0.0
    %2979 = vmatpush1.msra.mxu0 0.0
    %2980 = vmatprep.subr.mxu0 0.0
    %2981 = vmatpush1.msra.mxu0 0.0
    %2982 = vmatprep.subr.mxu0 0.0
    %2983 = vmatpush1.msra.mxu0 0.0
    %2984 = vmatprep.subr.mxu0 0.0
    %2985 = vmatpush1.msra.mxu0 0.0
    %2986 = vmatprep.subr.mxu0 0.0
    %2987 = vmatpush1.msra.mxu0 0.0
    %2988 = vmatprep.subr.mxu0 0.0
    %2989 = vmatpush1.msra.mxu0 %v2935
    %2990 = vmatprep.subr.mxu0 0.0
    %2991 = vmatpush1.msra.mxu0 %v2934
    %2992 = vmatprep.subr.mxu0 0.0
    %2993 = vmatpush2.msra.mxu0 0.0
    %2994 = vmatprep.subr.mxu0 0.0
    %2995 = vmatpush2.msra.mxu0 0.0
    %2996 = vmatprep.subr.mxu0 0.0
    %2997 = vmatpush2.msra.mxu0 0.0
    %2998 = vmatprep.subr.mxu0 0.0
    %2999 = vmatpush2.msra.mxu0 0.0
    %3000 = vmatprep.subr.mxu0 0.0
    %3001 = vmatpush2.msra.mxu0 0.0
    %3002 = vmatprep.subr.mxu0 0.0
    %3003 = vmatpush2.msra.mxu0 0.0
    %3004 = vmatprep.subr.mxu0 0.0
    %3005 = vmatpush2.msra.mxu0 0.0
    %3006 = vmatprep.subr.mxu0 0.0
    %3007 = vmatpush2.msra.mxu0 0.0
    %3008 = vmatprep.subr.mxu0 0.0
    %3009 = vmatpush2.msra.mxu0 0.0
    %3010 = vmatprep.subr.mxu0 0.0
    %3011 = vmatpush2.msra.mxu0 0.0
    %3012 = vmatprep.subr.mxu0 0.0
    %3013 = vmatpush2.msra.mxu0 0.0
    %3014 = vmatprep.subr.mxu0 0.0
    %3015 = vmatpush2.msra.mxu0 0.0
    %3016 = vmatprep.subr.mxu0 0.0
    %3017 = vmatpush2.msra.mxu0 0.0
    %3018 = vmatprep.subr.mxu0 0.0
    %3019 = vmatpush2.msra.mxu0 0.0
    %3020 = vmatprep.subr.mxu0 0.0
    %3021 = vmatpush2.msra.mxu0 0.0
    %3022 = vmatprep.subr.mxu0 0.0
    %3023 = vmatpush2.msra.mxu0 0.0
    %3024 = vmatprep.mubr.f32.mxu0 0.0
    %3025 = vmatmul.mubr.f32.gmra.mxu0 %v2937
    %v3026 = vpop.f32.mrf.mxu0
    %v3027 = vadd.f32 0.0, %v3026
    %v3028 = vpop.f32.mrf.mxu0
    %3029 = vmatprep.mubr.f32.mxu0 0.0
    %3030 = vmatmul.mubr.f32.gmra.mxu0 %v2940
    %v3031 = vpop.f32.mrf.mxu0
    %v3032 = vadd.f32 0.0, %v3031
    %v3033 = vpop.f32.mrf.mxu0
    %3034 = vmatprep.mubr.f32.mxu0 0.0
    %3035 = vmatmul.mubr.f32.gmra.mxu0 %v2943
    %v3036 = vpop.f32.mrf.mxu0
    %v3037 = vadd.f32 0.0, %v3036
    %v3038 = vpop.f32.mrf.mxu0
    %3039 = vmatprep.mubr.f32.mxu0 0.0
    %3040 = vmatmul.mubr.f32.gmra.mxu0 %v2946
    %v3041 = vpop.f32.mrf.mxu0
    %v3042 = vadd.f32 0.0, %v3041
    %v3043 = vpop.f32.mrf.mxu0
    %3044 = vmatprep.mubr.f32.mxu0 0.0
    %3045 = vmatmul.mubr.f32.gmra.mxu0 %v2949
    %v3046 = vpop.f32.mrf.mxu0
    %v3047 = vadd.f32 0.0, %v3046
    %v3048 = vpop.f32.mrf.mxu0
    %3049 = vmatprep.mubr.f32.mxu0 0.0
    %3050 = vmatmul.mubr.f32.gmra.mxu0 %v2952
    %v3051 = vpop.f32.mrf.mxu0
    %v3052 = vadd.f32 0.0, %v3051
    %v3053 = vpop.f32.mrf.mxu0
    %3054 = vmatprep.mubr.f32.mxu0 0.0
    %3055 = vmatmul.mubr.f32.gmra.mxu0 %v2955
    %v3056 = vpop.f32.mrf.mxu0
    %v3057 = vadd.f32 0.0, %v3056
    %v3058 = vpop.f32.mrf.mxu0
    %3059 = vmatprep.mubr.f32.mxu0 0.0
    %3060 = vmatmul.mubr.f32.gmra.mxu0 %v2958
    %v3061 = vpop.f32.mrf.mxu0
    %v3062 = vadd.f32 0.0, %v3061
    %v3063 = vpop.f32.mrf.mxu0
    %3064 = vdwg.mxu0
    %v3065 = vadd.f32 %v2917, %v3027
    %v3066 = vadd.f32 %v2918, %v3032
    %v3067 = vadd.f32 %v2919, %v3037
    %v3068 = vadd.f32 %v2920, %v3042
    %v3069 = vadd.f32 %v2921, %v3047
    %v3070 = vadd.f32 %v2922, %v3052
    %v3071 = vadd.f32 %v2923, %v3057
    %v3072 = vadd.f32 %v2924, %v3062
    %v3073 = vld [vmem:[%s7] sm:$0x1]
    %v3075 = vlaneseq
    %v3076 = vshrl.u32 %v3075, 7
    %v3077 = vsub.s32 0, %v3076
    %v3078 = vrot.slane %v3073, %v3077
    %v3080 = vadd.f32 %v3065, %v3078
    %v3081 = vadd.f32 %v3066, %v3078
    %v3082 = vadd.f32 %v3067, %v3078
    %v3083 = vadd.f32 %v3068, %v3078
    %v3084 = vadd.f32 %v3069, %v3078
    %v3085 = vadd.f32 %v3070, %v3078
    %v3086 = vadd.f32 %v3071, %v3078
    %v3087 = vadd.f32 %v3072, %v3078
    %v3088 = vsel %vm69, %v52, 0.0
    %v3089 = vsel %vm69, %v53, 0.0
    %v3090 = vadd.f32 %v3088, %v3089
    %v3091 = vsel %vm69, %v54, 0.0
    %v3092 = vadd.f32 %v3090, %v3091
    %v3093 = vsel %vm69, %v55, 0.0
    %v3094 = vadd.f32 %v3092, %v3093
    %v3095 = vsel %vm69, %v56, 0.0
    %v3096 = vadd.f32 %v3094, %v3095
    %v3097 = vsel %vm69, %v57, 0.0
    %v3098 = vadd.f32 %v3096, %v3097
    %v3099 = vsel %vm69, %v58, 0.0
    %v3100 = vadd.f32 %v3098, %v3099
    %v3101 = vsel %vm69, %v59, 0.0
    %v3102 = vadd.f32 %v3100, %v3101
    %v3103 = vrot.slane %v3102, 4
    %v3104 = vadd.f32 %v3102, %v3103
    %v3105 = vrot.slane %v3104, 2
    %v3106 = vadd.f32 %v3104, %v3105
    %v3107 = vrot.slane %v3106, 1
    %v3108 = vadd.f32 %v3106, %v3107
    %v3109 = vmax.f32 %v3108, 1.0
    %v3110 = vrcp.pop %v3109
    %v3111 = vmul.f32 1.0, %v3110
    %v3112 = vsel %vm69, %v60, 0.0
    %v3113 = vsel %vm69, %v61, 0.0
    %v3114 = vadd.f32 %v3112, %v3113
    %v3115 = vsel %vm69, %v62, 0.0
    %v3116 = vadd.f32 %v3114, %v3115
    %v3117 = vsel %vm69, %v63, 0.0
    %v3118 = vadd.f32 %v3116, %v3117
    %v3119 = vsel %vm69, %v64, 0.0
    %v3120 = vadd.f32 %v3118, %v3119
    %v3121 = vsel %vm69, %v65, 0.0
    %v3122 = vadd.f32 %v3120, %v3121
    %v3123 = vsel %vm69, %v66, 0.0
    %v3124 = vadd.f32 %v3122, %v3123
    %v3125 = vsel %vm69, %v67, 0.0
    %v3126 = vadd.f32 %v3124, %v3125
    %v3127 = vrot.slane %v3126, 4
    %v3128 = vadd.f32 %v3126, %v3127
    %v3129 = vrot.slane %v3128, 2
    %v3130 = vadd.f32 %v3128, %v3129
    %v3131 = vrot.slane %v3130, 1
    %v3132 = vadd.f32 %v3130, %v3131
    %v3133 = vmax.f32 %v3132, 1.0
    %v3134 = vrcp.pop %v3133
    %v3135 = vmul.f32 1.0, %v3134
    %v3136 = vmul.f32 %v52, %v3111
    %v3137 = vmul.f32 %v53, %v3111
    %v3138 = vmul.f32 %v54, %v3111
    %v3139 = vmul.f32 %v55, %v3111
    %v3140 = vmul.f32 %v56, %v3111
    %v3141 = vmul.f32 %v57, %v3111
    %v3142 = vmul.f32 %v58, %v3111
    %v3143 = vmul.f32 %v59, %v3111
    %v3144 = vmul.f32 %v60, %v3135
    %v3145 = vmul.f32 %v61, %v3135
    %v3146 = vmul.f32 %v62, %v3135
    %v3147 = vmul.f32 %v63, %v3135
    %v3148 = vmul.f32 %v64, %v3135
    %v3149 = vmul.f32 %v65, %v3135
    %v3150 = vmul.f32 %v66, %v3135
    %v3151 = vmul.f32 %v67, %v3135
    %v3152 = vadd.f32 %v3136, %v3144
    %v3153 = vadd.f32 %v3137, %v3145
    %v3154 = vadd.f32 %v3138, %v3146
    %v3155 = vadd.f32 %v3139, %v3147
    %v3156 = vadd.f32 %v3140, %v3148
    %v3157 = vadd.f32 %v3141, %v3149
    %v3158 = vadd.f32 %v3142, %v3150
    %v3159 = vadd.f32 %v3143, %v3151
    %3160 = vxpose.xlu0.b32.start [1/16] %v3152, 128
    %3161 = vxpose.xlu0.b32.cont [2/16] %v3153, 128
    %3162 = vxpose.xlu0.b32.cont [3/16] %v3154, 128
    %3163 = vxpose.xlu0.b32.cont [4/16] %v3155, 128
    %3164 = vxpose.xlu0.b32.cont [5/16] %v3156, 128
    %3165 = vxpose.xlu0.b32.cont [6/16] %v3157, 128
    %3166 = vxpose.xlu0.b32.cont [7/16] %v3158, 128
    %3167 = vxpose.xlu0.b32.cont [8/16] %v3159, 128
    %3168 = vxpose.xlu0.b32.cont [9/16] 0.0, 128
    %3169 = vxpose.xlu0.b32.cont [10/16] 0.0, 128
    %3170 = vxpose.xlu0.b32.cont [11/16] 0.0, 128
    %3171 = vxpose.xlu0.b32.cont [12/16] 0.0, 128
    %3172 = vxpose.xlu0.b32.cont [13/16] 0.0, 128
    %3173 = vxpose.xlu0.b32.cont [14/16] 0.0, 128
    %3174 = vxpose.xlu0.b32.cont [15/16] 0.0, 128
    %3175 = vxpose.xlu0.b32.end [16/16] 0.0, 128
    %v3176 = vpop.trf.xlu0
    %v3177 = vpop.trf.xlu0
    %v3178 = vpop.trf.xlu0
    %v3179 = vpop.trf.xlu0
    %v3180 = vpop.trf.xlu0
    %v3181 = vpop.trf.xlu0
    %v3182 = vpop.trf.xlu0
    %v3183 = vpop.trf.xlu0
    %v3184 = vpop.trf.xlu0
    %v3185 = vpop.trf.xlu0
    %v3186 = vpop.trf.xlu0
    %v3187 = vpop.trf.xlu0
    %v3188 = vpop.trf.xlu0
    %v3189 = vpop.trf.xlu0
    %v3190 = vpop.trf.xlu0
    %v3191 = vpop.trf.xlu0
    %vm3192 = vcmask 523264
    %v3194 = vsel %vm3192, %v3176, 0
    %3196 = vmatprep.subr.mxu0 0.0
    %3197 = vmatpush1.msra.mxu0 0.0
    %3198 = vmatprep.subr.mxu0 0.0
    %3199 = vmatpush1.msra.mxu0 0.0
    %3200 = vmatprep.subr.mxu0 0.0
    %3201 = vmatpush1.msra.mxu0 0.0
    %3202 = vmatprep.subr.mxu0 0.0
    %3203 = vmatpush1.msra.mxu0 0.0
    %3204 = vmatprep.subr.mxu0 0.0
    %3205 = vmatpush1.msra.mxu0 0.0
    %3206 = vmatprep.subr.mxu0 0.0
    %3207 = vmatpush1.msra.mxu0 0.0
    %3208 = vmatprep.subr.mxu0 0.0
    %3209 = vmatpush1.msra.mxu0 0.0
    %3210 = vmatprep.subr.mxu0 0.0
    %3211 = vmatpush1.msra.mxu0 0.0
    %3212 = vmatprep.subr.mxu0 0.0
    %3213 = vmatpush1.msra.mxu0 %v3087
    %3214 = vmatprep.subr.mxu0 0.0
    %3215 = vmatpush1.msra.mxu0 %v3086
    %3216 = vmatprep.subr.mxu0 0.0
    %3217 = vmatpush1.msra.mxu0 %v3085
    %3218 = vmatprep.subr.mxu0 0.0
    %3219 = vmatpush1.msra.mxu0 %v3084
    %3220 = vmatprep.subr.mxu0 0.0
    %3221 = vmatpush1.msra.mxu0 %v3083
    %3222 = vmatprep.subr.mxu0 0.0
    %3223 = vmatpush1.msra.mxu0 %v3082
    %3224 = vmatprep.subr.mxu0 0.0
    %3225 = vmatpush1.msra.mxu0 %v3081
    %3226 = vmatprep.subr.mxu0 0.0
    %3227 = vmatpush1.msra.mxu0 %v3080
    %3228 = vmatprep.subr.mxu0 0.0
    %3229 = vmatpush2.msra.mxu0 0.0
    %3230 = vmatprep.subr.mxu0 0.0
    %3231 = vmatpush2.msra.mxu0 0.0
    %3232 = vmatprep.subr.mxu0 0.0
    %3233 = vmatpush2.msra.mxu0 0.0
    %3234 = vmatprep.subr.mxu0 0.0
    %3235 = vmatpush2.msra.mxu0 0.0
    %3236 = vmatprep.subr.mxu0 0.0
    %3237 = vmatpush2.msra.mxu0 0.0
    %3238 = vmatprep.subr.mxu0 0.0
    %3239 = vmatpush2.msra.mxu0 0.0
    %3240 = vmatprep.subr.mxu0 0.0
    %3241 = vmatpush2.msra.mxu0 0.0
    %3242 = vmatprep.subr.mxu0 0.0
    %3243 = vmatpush2.msra.mxu0 0.0
    %3244 = vmatprep.subr.mxu0 0.0
    %3245 = vmatpush2.msra.mxu0 0.0
    %3246 = vmatprep.subr.mxu0 0.0
    %3247 = vmatpush2.msra.mxu0 0.0
    %3248 = vmatprep.subr.mxu0 0.0
    %3249 = vmatpush2.msra.mxu0 0.0
    %3250 = vmatprep.subr.mxu0 0.0
    %3251 = vmatpush2.msra.mxu0 0.0
    %3252 = vmatprep.subr.mxu0 0.0
    %3253 = vmatpush2.msra.mxu0 0.0
    %3254 = vmatprep.subr.mxu0 0.0
    %3255 = vmatpush2.msra.mxu0 0.0
    %3256 = vmatprep.subr.mxu0 0.0
    %3257 = vmatpush2.msra.mxu0 0.0
    %3258 = vmatprep.subr.mxu0 0.0
    %3259 = vmatpush2.msra.mxu0 0.0
    %3260 = vmatprep.mubr.f32.mxu0 0.0
    %3261 = vmatmul.mubr.f32.gmra.mxu0 %v3194
    %v3262 = vpop.f32.mrf.mxu0
    %v3263 = vadd.f32 0.0, %v3262
    %v3264 = vpop.f32.mrf.mxu0
    %3265 = vdwg.mxu0
    %vm3266 = vcmask 125952
    %3267 = vst.msk [vmem:[#allocation3] sm:$0xf] %vm3266, %v3263
    %s3268 = scalar_lea.vmem %s0, 64
    %v3269 = vld [vmem:[%s3268] sm:$0xff]
    %v3270 = vld [vmem:[%s3268 + $0x8] sm:$0xff]
    %v3271 = vld [vmem:[%s3268 + $0x10] sm:$0xff]
    %v3272 = vld [vmem:[%s3268 + $0x18] sm:$0xff]
    %v3273 = vld [vmem:[%s3268 + $0x20] sm:$0xff]
    %v3274 = vld [vmem:[%s3268 + $0x28] sm:$0xff]
    %v3275 = vld [vmem:[%s3268 + $0x30] sm:$0xff]
    %v3276 = vld [vmem:[%s3268 + $0x38] sm:$0xff]
    %s3277 = scalar_lea.vmem %s1, 64
    %v3278 = vld [vmem:[%s3277] sm:$0xff]
    %v3279 = vld [vmem:[%s3277 + $0x8] sm:$0xff]
    %v3280 = vld [vmem:[%s3277 + $0x10] sm:$0xff]
    %v3281 = vld [vmem:[%s3277 + $0x18] sm:$0xff]
    %v3282 = vld [vmem:[%s3277 + $0x20] sm:$0xff]
    %v3283 = vld [vmem:[%s3277 + $0x28] sm:$0xff]
    %v3284 = vld [vmem:[%s3277 + $0x30] sm:$0xff]
    %v3285 = vld [vmem:[%s3277 + $0x38] sm:$0xff]
    %s3286 = scalar_lea.vmem %s2, 4
    %v3287 = vld [vmem:[%s3286] sm:$0xf]
    %v3289 = vsel %vm69, %v3269, 0
    %v3292 = vsel %vm69, %v3270, 0
    %v3295 = vsel %vm69, %v3271, 0
    %v3298 = vsel %vm69, %v3272, 0
    %v3301 = vsel %vm69, %v3273, 0
    %v3304 = vsel %vm69, %v3274, 0
    %v3307 = vsel %vm69, %v3275, 0
    %v3310 = vsel %vm69, %v3276, 0
    %v3313 = vsel %vm94, %v3287, 0
    %3315 = vmatprep.subr.mxu0 0.0
    %3316 = vmatpush1.msra.mxu0 0.0
    %3317 = vmatprep.subr.mxu0 0.0
    %3318 = vmatpush1.msra.mxu0 0.0
    %3319 = vmatprep.subr.mxu0 0.0
    %3320 = vmatpush1.msra.mxu0 0.0
    %3321 = vmatprep.subr.mxu0 0.0
    %3322 = vmatpush1.msra.mxu0 0.0
    %3323 = vmatprep.subr.mxu0 0.0
    %3324 = vmatpush1.msra.mxu0 0.0
    %3325 = vmatprep.subr.mxu0 0.0
    %3326 = vmatpush1.msra.mxu0 0.0
    %3327 = vmatprep.subr.mxu0 0.0
    %3328 = vmatpush1.msra.mxu0 0.0
    %3329 = vmatprep.subr.mxu0 0.0
    %3330 = vmatpush1.msra.mxu0 0.0
    %3331 = vmatprep.subr.mxu0 0.0
    %3332 = vmatpush1.msra.mxu0 0.0
    %3333 = vmatprep.subr.mxu0 0.0
    %3334 = vmatpush1.msra.mxu0 0.0
    %3335 = vmatprep.subr.mxu0 0.0
    %3336 = vmatpush1.msra.mxu0 0.0
    %3337 = vmatprep.subr.mxu0 0.0
    %3338 = vmatpush1.msra.mxu0 0.0
    %3339 = vmatprep.subr.mxu0 0.0
    %3340 = vmatpush1.msra.mxu0 0.0
    %3341 = vmatprep.subr.mxu0 0.0
    %3342 = vmatpush1.msra.mxu0 0.0
    %3343 = vmatprep.subr.mxu0 0.0
    %3344 = vmatpush1.msra.mxu0 0.0
    %3345 = vmatprep.subr.mxu0 0.0
    %3346 = vmatpush1.msra.mxu0 %v3313
    %3347 = vmatprep.subr.mxu0 0.0
    %3348 = vmatpush2.msra.mxu0 0.0
    %3349 = vmatprep.subr.mxu0 0.0
    %3350 = vmatpush2.msra.mxu0 0.0
    %3351 = vmatprep.subr.mxu0 0.0
    %3352 = vmatpush2.msra.mxu0 0.0
    %3353 = vmatprep.subr.mxu0 0.0
    %3354 = vmatpush2.msra.mxu0 0.0
    %3355 = vmatprep.subr.mxu0 0.0
    %3356 = vmatpush2.msra.mxu0 0.0
    %3357 = vmatprep.subr.mxu0 0.0
    %3358 = vmatpush2.msra.mxu0 0.0
    %3359 = vmatprep.subr.mxu0 0.0
    %3360 = vmatpush2.msra.mxu0 0.0
    %3361 = vmatprep.subr.mxu0 0.0
    %3362 = vmatpush2.msra.mxu0 0.0
    %3363 = vmatprep.subr.mxu0 0.0
    %3364 = vmatpush2.msra.mxu0 0.0
    %3365 = vmatprep.subr.mxu0 0.0
    %3366 = vmatpush2.msra.mxu0 0.0
    %3367 = vmatprep.subr.mxu0 0.0
    %3368 = vmatpush2.msra.mxu0 0.0
    %3369 = vmatprep.subr.mxu0 0.0
    %3370 = vmatpush2.msra.mxu0 0.0
    %3371 = vmatprep.subr.mxu0 0.0
    %3372 = vmatpush2.msra.mxu0 0.0
    %3373 = vmatprep.subr.mxu0 0.0
    %3374 = vmatpush2.msra.mxu0 0.0
    %3375 = vmatprep.subr.mxu0 0.0
    %3376 = vmatpush2.msra.mxu0 0.0
    %3377 = vmatprep.subr.mxu0 0.0
    %3378 = vmatpush2.msra.mxu0 0.0
    %3379 = vmatprep.mubr.f32.mxu0 0.0
    %3380 = vmatmul.mubr.f32.gmra.mxu0 %v3289
    %v3381 = vpop.f32.mrf.mxu0
    %v3382 = vadd.f32 0.0, %v3381
    %v3383 = vpop.f32.mrf.mxu0
    %3384 = vmatprep.mubr.f32.mxu0 0.0
    %3385 = vmatmul.mubr.f32.gmra.mxu0 %v3292
    %v3386 = vpop.f32.mrf.mxu0
    %v3387 = vadd.f32 0.0, %v3386
    %v3388 = vpop.f32.mrf.mxu0
    %3389 = vmatprep.mubr.f32.mxu0 0.0
    %3390 = vmatmul.mubr.f32.gmra.mxu0 %v3295
    %v3391 = vpop.f32.mrf.mxu0
    %v3392 = vadd.f32 0.0, %v3391
    %v3393 = vpop.f32.mrf.mxu0
    %3394 = vmatprep.mubr.f32.mxu0 0.0
    %3395 = vmatmul.mubr.f32.gmra.mxu0 %v3298
    %v3396 = vpop.f32.mrf.mxu0
    %v3397 = vadd.f32 0.0, %v3396
    %v3398 = vpop.f32.mrf.mxu0
    %3399 = vmatprep.mubr.f32.mxu0 0.0
    %3400 = vmatmul.mubr.f32.gmra.mxu0 %v3301
    %v3401 = vpop.f32.mrf.mxu0
    %v3402 = vadd.f32 0.0, %v3401
    %v3403 = vpop.f32.mrf.mxu0
    %3404 = vmatprep.mubr.f32.mxu0 0.0
    %3405 = vmatmul.mubr.f32.gmra.mxu0 %v3304
    %v3406 = vpop.f32.mrf.mxu0
    %v3407 = vadd.f32 0.0, %v3406
    %v3408 = vpop.f32.mrf.mxu0
    %3409 = vmatprep.mubr.f32.mxu0 0.0
    %3410 = vmatmul.mubr.f32.gmra.mxu0 %v3307
    %v3411 = vpop.f32.mrf.mxu0
    %v3412 = vadd.f32 0.0, %v3411
    %v3413 = vpop.f32.mrf.mxu0
    %3414 = vmatprep.mubr.f32.mxu0 0.0
    %3415 = vmatmul.mubr.f32.gmra.mxu0 %v3310
    %v3416 = vpop.f32.mrf.mxu0
    %v3417 = vadd.f32 0.0, %v3416
    %v3418 = vpop.f32.mrf.mxu0
    %3419 = vdwg.mxu0
    %v3421 = vsel %vm69, %v3278, 0
    %v3424 = vsel %vm69, %v3279, 0
    %v3427 = vsel %vm69, %v3280, 0
    %v3430 = vsel %vm69, %v3281, 0
    %v3433 = vsel %vm69, %v3282, 0
    %v3436 = vsel %vm69, %v3283, 0
    %v3439 = vsel %vm69, %v3284, 0
    %v3442 = vsel %vm69, %v3285, 0
    %3444 = vmatprep.subr.mxu0 0.0
    %3445 = vmatpush1.msra.mxu0 0.0
    %3446 = vmatprep.subr.mxu0 0.0
    %3447 = vmatpush1.msra.mxu0 0.0
    %3448 = vmatprep.subr.mxu0 0.0
    %3449 = vmatpush1.msra.mxu0 0.0
    %3450 = vmatprep.subr.mxu0 0.0
    %3451 = vmatpush1.msra.mxu0 0.0
    %3452 = vmatprep.subr.mxu0 0.0
    %3453 = vmatpush1.msra.mxu0 0.0
    %3454 = vmatprep.subr.mxu0 0.0
    %3455 = vmatpush1.msra.mxu0 0.0
    %3456 = vmatprep.subr.mxu0 0.0
    %3457 = vmatpush1.msra.mxu0 0.0
    %3458 = vmatprep.subr.mxu0 0.0
    %3459 = vmatpush1.msra.mxu0 0.0
    %3460 = vmatprep.subr.mxu0 0.0
    %3461 = vmatpush1.msra.mxu0 0.0
    %3462 = vmatprep.subr.mxu0 0.0
    %3463 = vmatpush1.msra.mxu0 0.0
    %3464 = vmatprep.subr.mxu0 0.0
    %3465 = vmatpush1.msra.mxu0 0.0
    %3466 = vmatprep.subr.mxu0 0.0
    %3467 = vmatpush1.msra.mxu0 0.0
    %3468 = vmatprep.subr.mxu0 0.0
    %3469 = vmatpush1.msra.mxu0 0.0
    %3470 = vmatprep.subr.mxu0 0.0
    %3471 = vmatpush1.msra.mxu0 0.0
    %3472 = vmatprep.subr.mxu0 0.0
    %3473 = vmatpush1.msra.mxu0 0.0
    %3474 = vmatprep.subr.mxu0 0.0
    %3475 = vmatpush1.msra.mxu0 %v3313
    %3476 = vmatprep.subr.mxu0 0.0
    %3477 = vmatpush2.msra.mxu0 0.0
    %3478 = vmatprep.subr.mxu0 0.0
    %3479 = vmatpush2.msra.mxu0 0.0
    %3480 = vmatprep.subr.mxu0 0.0
    %3481 = vmatpush2.msra.mxu0 0.0
    %3482 = vmatprep.subr.mxu0 0.0
    %3483 = vmatpush2.msra.mxu0 0.0
    %3484 = vmatprep.subr.mxu0 0.0
    %3485 = vmatpush2.msra.mxu0 0.0
    %3486 = vmatprep.subr.mxu0 0.0
    %3487 = vmatpush2.msra.mxu0 0.0
    %3488 = vmatprep.subr.mxu0 0.0
    %3489 = vmatpush2.msra.mxu0 0.0
    %3490 = vmatprep.subr.mxu0 0.0
    %3491 = vmatpush2.msra.mxu0 0.0
    %3492 = vmatprep.subr.mxu0 0.0
    %3493 = vmatpush2.msra.mxu0 0.0
    %3494 = vmatprep.subr.mxu0 0.0
    %3495 = vmatpush2.msra.mxu0 0.0
    %3496 = vmatprep.subr.mxu0 0.0
    %3497 = vmatpush2.msra.mxu0 0.0
    %3498 = vmatprep.subr.mxu0 0.0
    %3499 = vmatpush2.msra.mxu0 0.0
    %3500 = vmatprep.subr.mxu0 0.0
    %3501 = vmatpush2.msra.mxu0 0.0
    %3502 = vmatprep.subr.mxu0 0.0
    %3503 = vmatpush2.msra.mxu0 0.0
    %3504 = vmatprep.subr.mxu0 0.0
    %3505 = vmatpush2.msra.mxu0 0.0
    %3506 = vmatprep.subr.mxu0 0.0
    %3507 = vmatpush2.msra.mxu0 0.0
    %3508 = vmatprep.mubr.f32.mxu0 0.0
    %3509 = vmatmul.mubr.f32.gmra.mxu0 %v3421
    %v3510 = vpop.f32.mrf.mxu0
    %v3511 = vadd.f32 0.0, %v3510
    %v3512 = vpop.f32.mrf.mxu0
    %3513 = vmatprep.mubr.f32.mxu0 0.0
    %3514 = vmatmul.mubr.f32.gmra.mxu0 %v3424
    %v3515 = vpop.f32.mrf.mxu0
    %v3516 = vadd.f32 0.0, %v3515
    %v3517 = vpop.f32.mrf.mxu0
    %3518 = vmatprep.mubr.f32.mxu0 0.0
    %3519 = vmatmul.mubr.f32.gmra.mxu0 %v3427
    %v3520 = vpop.f32.mrf.mxu0
    %v3521 = vadd.f32 0.0, %v3520
    %v3522 = vpop.f32.mrf.mxu0
    %3523 = vmatprep.mubr.f32.mxu0 0.0
    %3524 = vmatmul.mubr.f32.gmra.mxu0 %v3430
    %v3525 = vpop.f32.mrf.mxu0
    %v3526 = vadd.f32 0.0, %v3525
    %v3527 = vpop.f32.mrf.mxu0
    %3528 = vmatprep.mubr.f32.mxu0 0.0
    %3529 = vmatmul.mubr.f32.gmra.mxu0 %v3433
    %v3530 = vpop.f32.mrf.mxu0
    %v3531 = vadd.f32 0.0, %v3530
    %v3532 = vpop.f32.mrf.mxu0
    %3533 = vmatprep.mubr.f32.mxu0 0.0
    %3534 = vmatmul.mubr.f32.gmra.mxu0 %v3436
    %v3535 = vpop.f32.mrf.mxu0
    %v3536 = vadd.f32 0.0, %v3535
    %v3537 = vpop.f32.mrf.mxu0
    %3538 = vmatprep.mubr.f32.mxu0 0.0
    %3539 = vmatmul.mubr.f32.gmra.mxu0 %v3439
    %v3540 = vpop.f32.mrf.mxu0
    %v3541 = vadd.f32 0.0, %v3540
    %v3542 = vpop.f32.mrf.mxu0
    %3543 = vmatprep.mubr.f32.mxu0 0.0
    %3544 = vmatmul.mubr.f32.gmra.mxu0 %v3442
    %v3545 = vpop.f32.mrf.mxu0
    %v3546 = vadd.f32 0.0, %v3545
    %v3547 = vpop.f32.mrf.mxu0
    %3548 = vdwg.mxu0
    %3549 = vst.msk [vmem:[%s332 + $0x1] sm:$0xff] %vm333, %v3382
    %3550 = vst.msk [vmem:[%s332 + $0x11] sm:$0xff] %vm333, %v3387
    %3551 = vst.msk [vmem:[%s332 + $0x21] sm:$0xff] %vm333, %v3392
    %3552 = vst.msk [vmem:[%s332 + $0x31] sm:$0xff] %vm333, %v3397
    %3553 = vst.msk [vmem:[%s332 + $0x41] sm:$0xff] %vm333, %v3402
    %3554 = vst.msk [vmem:[%s332 + $0x51] sm:$0xff] %vm333, %v3407
    %3555 = vst.msk [vmem:[%s332 + $0x61] sm:$0xff] %vm333, %v3412
    %3556 = vst.msk [vmem:[%s332 + $0x71] sm:$0xff] %vm333, %v3417
    %3565 = vrot.lane.b32.xlu0 %v3511, 8
    %v3566 = vpop.permute.xlu0 %3565
    %3567 = vrot.lane.b32.xlu0 %v3516, 8
    %v3568 = vpop.permute.xlu0 %3567
    %3569 = vrot.lane.b32.xlu0 %v3521, 8
    %v3570 = vpop.permute.xlu0 %3569
    %3571 = vrot.lane.b32.xlu0 %v3526, 8
    %v3572 = vpop.permute.xlu0 %3571
    %3573 = vrot.lane.b32.xlu0 %v3531, 8
    %v3574 = vpop.permute.xlu0 %3573
    %3575 = vrot.lane.b32.xlu0 %v3536, 8
    %v3576 = vpop.permute.xlu0 %3575
    %3577 = vrot.lane.b32.xlu0 %v3541, 8
    %v3578 = vpop.permute.xlu0 %3577
    %3579 = vrot.lane.b32.xlu0 %v3546, 8
    %v3580 = vpop.permute.xlu0 %3579
    %3589 = vst.msk [vmem:[%s332 + $0x1] sm:$0xff] %vm374, %v3566
    %3590 = vst.msk [vmem:[%s332 + $0x11] sm:$0xff] %vm374, %v3568
    %3591 = vst.msk [vmem:[%s332 + $0x21] sm:$0xff] %vm374, %v3570
    %3592 = vst.msk [vmem:[%s332 + $0x31] sm:$0xff] %vm374, %v3572
    %3593 = vst.msk [vmem:[%s332 + $0x41] sm:$0xff] %vm374, %v3574
    %3594 = vst.msk [vmem:[%s332 + $0x51] sm:$0xff] %vm374, %v3576
    %3595 = vst.msk [vmem:[%s332 + $0x61] sm:$0xff] %vm374, %v3578
    %3596 = vst.msk [vmem:[%s332 + $0x71] sm:$0xff] %vm374, %v3580
    %s3597 = scalar_lea.vmem %s3, 1
    %v3598 = vld [vmem:[%s3597] sm:$0x1]
    %v3600 = vlaneseq
    %v3601 = vshrl.u32 %v3600, 7
    %v3602 = vsub.s32 0, %v3601
    %v3603 = vrot.slane %v3598, %v3602
    %3604 = vrot.lane.b32.xlu0 %v3603, 16
    %v3605 = vpop.permute.xlu0 %3604
    %3607 = vst.msk [vmem:[%s332 + $0x1] sm:$0xff] %vm392, %v3605
    %3608 = vst.msk [vmem:[%s332 + $0x11] sm:$0xff] %vm392, %v3605
    %3609 = vst.msk [vmem:[%s332 + $0x21] sm:$0xff] %vm392, %v3605
    %3610 = vst.msk [vmem:[%s332 + $0x31] sm:$0xff] %vm392, %v3605
    %3611 = vst.msk [vmem:[%s332 + $0x41] sm:$0xff] %vm392, %v3605
    %3612 = vst.msk [vmem:[%s332 + $0x51] sm:$0xff] %vm392, %v3605
    %3613 = vst.msk [vmem:[%s332 + $0x61] sm:$0xff] %vm392, %v3605
    %3614 = vst.msk [vmem:[%s332 + $0x71] sm:$0xff] %vm392, %v3605
    %v3615 = vld [vmem:[#allocation2] sm:$0xff]
    %v3616 = vld [vmem:[#allocation2 + $0x10] sm:$0xff]
    %v3617 = vld [vmem:[#allocation2 + $0x20] sm:$0xff]
    %v3618 = vld [vmem:[#allocation2 + $0x30] sm:$0xff]
    %v3619 = vld [vmem:[#allocation2 + $0x40] sm:$0xff]
    %v3620 = vld [vmem:[#allocation2 + $0x50] sm:$0xff]
    %v3621 = vld [vmem:[#allocation2 + $0x60] sm:$0xff]
    %v3622 = vld [vmem:[#allocation2 + $0x70] sm:$0xff]
    %v3623 = vld [vmem:[%s4] sm:$0xff]
    %v3624 = vld [vmem:[%s4 + $0x8] sm:$0xff]
    %v3625 = vld [vmem:[%s4 + $0x10] sm:$0xff]
    %v3626 = vld [vmem:[#allocation2 + $0x1] sm:$0xff]
    %v3627 = vld [vmem:[#allocation2 + $0x11] sm:$0xff]
    %v3628 = vld [vmem:[#allocation2 + $0x21] sm:$0xff]
    %v3629 = vld [vmem:[#allocation2 + $0x31] sm:$0xff]
    %v3630 = vld [vmem:[#allocation2 + $0x41] sm:$0xff]
    %v3631 = vld [vmem:[#allocation2 + $0x51] sm:$0xff]
    %v3632 = vld [vmem:[#allocation2 + $0x61] sm:$0xff]
    %v3633 = vld [vmem:[#allocation2 + $0x71] sm:$0xff]
    %v3634 = vld [vmem:[%s420] sm:$0xff]
    %v3635 = vld [vmem:[%s420 + $0x8] sm:$0xff]
    %v3636 = vld [vmem:[%s420 + $0x10] sm:$0xff]
    %v3638 = vsel %vm30, %v3626, 0
    %v3641 = vsel %vm30, %v3627, 0
    %v3644 = vsel %vm30, %v3628, 0
    %v3647 = vsel %vm30, %v3629, 0
    %v3650 = vsel %vm30, %v3630, 0
    %v3653 = vsel %vm30, %v3631, 0
    %v3656 = vsel %vm30, %v3632, 0
    %v3659 = vsel %vm30, %v3633, 0
    %3661 = vmatprep.subr.mxu0 0.0
    %3662 = vmatpush1.msra.mxu0 0.0
    %3663 = vmatprep.subr.mxu0 0.0
    %3664 = vmatpush1.msra.mxu0 0.0
    %3665 = vmatprep.subr.mxu0 0.0
    %3666 = vmatpush1.msra.mxu0 0.0
    %3667 = vmatprep.subr.mxu0 0.0
    %3668 = vmatpush1.msra.mxu0 0.0
    %3669 = vmatprep.subr.mxu0 0.0
    %3670 = vmatpush1.msra.mxu0 0.0
    %3671 = vmatprep.subr.mxu0 0.0
    %3672 = vmatpush1.msra.mxu0 0.0
    %3673 = vmatprep.subr.mxu0 0.0
    %3674 = vmatpush1.msra.mxu0 0.0
    %3675 = vmatprep.subr.mxu0 0.0
    %3676 = vmatpush1.msra.mxu0 0.0
    %3677 = vmatprep.subr.mxu0 0.0
    %3678 = vmatpush1.msra.mxu0 0.0
    %3679 = vmatprep.subr.mxu0 0.0
    %3680 = vmatpush1.msra.mxu0 0.0
    %3681 = vmatprep.subr.mxu0 0.0
    %3682 = vmatpush1.msra.mxu0 0.0
    %3683 = vmatprep.subr.mxu0 0.0
    %3684 = vmatpush1.msra.mxu0 0.0
    %3685 = vmatprep.subr.mxu0 0.0
    %3686 = vmatpush1.msra.mxu0 0.0
    %3687 = vmatprep.subr.mxu0 0.0
    %3688 = vmatpush1.msra.mxu0 %v3636
    %3689 = vmatprep.subr.mxu0 0.0
    %3690 = vmatpush1.msra.mxu0 %v3635
    %3691 = vmatprep.subr.mxu0 0.0
    %3692 = vmatpush1.msra.mxu0 %v3634
    %3693 = vmatprep.subr.mxu0 0.0
    %3694 = vmatpush2.msra.mxu0 0.0
    %3695 = vmatprep.subr.mxu0 0.0
    %3696 = vmatpush2.msra.mxu0 0.0
    %3697 = vmatprep.subr.mxu0 0.0
    %3698 = vmatpush2.msra.mxu0 0.0
    %3699 = vmatprep.subr.mxu0 0.0
    %3700 = vmatpush2.msra.mxu0 0.0
    %3701 = vmatprep.subr.mxu0 0.0
    %3702 = vmatpush2.msra.mxu0 0.0
    %3703 = vmatprep.subr.mxu0 0.0
    %3704 = vmatpush2.msra.mxu0 0.0
    %3705 = vmatprep.subr.mxu0 0.0
    %3706 = vmatpush2.msra.mxu0 0.0
    %3707 = vmatprep.subr.mxu0 0.0
    %3708 = vmatpush2.msra.mxu0 0.0
    %3709 = vmatprep.subr.mxu0 0.0
    %3710 = vmatpush2.msra.mxu0 0.0
    %3711 = vmatprep.subr.mxu0 0.0
    %3712 = vmatpush2.msra.mxu0 0.0
    %3713 = vmatprep.subr.mxu0 0.0
    %3714 = vmatpush2.msra.mxu0 0.0
    %3715 = vmatprep.subr.mxu0 0.0
    %3716 = vmatpush2.msra.mxu0 0.0
    %3717 = vmatprep.subr.mxu0 0.0
    %3718 = vmatpush2.msra.mxu0 0.0
    %3719 = vmatprep.subr.mxu0 0.0
    %3720 = vmatpush2.msra.mxu0 0.0
    %3721 = vmatprep.subr.mxu0 0.0
    %3722 = vmatpush2.msra.mxu0 0.0
    %3723 = vmatprep.subr.mxu0 0.0
    %3724 = vmatpush2.msra.mxu0 0.0
    %3725 = vmatprep.mubr.f32.mxu0 0.0
    %3726 = vmatmul.mubr.f32.gmra.mxu0 %v3638
    %v3727 = vpop.f32.mrf.mxu0
    %v3728 = vadd.f32 0.0, %v3727
    %v3729 = vpop.f32.mrf.mxu0
    %3730 = vmatprep.mubr.f32.mxu0 0.0
    %3731 = vmatmul.mubr.f32.gmra.mxu0 %v3641
    %v3732 = vpop.f32.mrf.mxu0
    %v3733 = vadd.f32 0.0, %v3732
    %v3734 = vpop.f32.mrf.mxu0
    %3735 = vmatprep.mubr.f32.mxu0 0.0
    %3736 = vmatmul.mubr.f32.gmra.mxu0 %v3644
    %v3737 = vpop.f32.mrf.mxu0
    %v3738 = vadd.f32 0.0, %v3737
    %v3739 = vpop.f32.mrf.mxu0
    %3740 = vmatprep.mubr.f32.mxu0 0.0
    %3741 = vmatmul.mubr.f32.gmra.mxu0 %v3647
    %v3742 = vpop.f32.mrf.mxu0
    %v3743 = vadd.f32 0.0, %v3742
    %v3744 = vpop.f32.mrf.mxu0
    %3745 = vmatprep.mubr.f32.mxu0 0.0
    %3746 = vmatmul.mubr.f32.gmra.mxu0 %v3650
    %v3747 = vpop.f32.mrf.mxu0
    %v3748 = vadd.f32 0.0, %v3747
    %v3749 = vpop.f32.mrf.mxu0
    %3750 = vmatprep.mubr.f32.mxu0 0.0
    %3751 = vmatmul.mubr.f32.gmra.mxu0 %v3653
    %v3752 = vpop.f32.mrf.mxu0
    %v3753 = vadd.f32 0.0, %v3752
    %v3754 = vpop.f32.mrf.mxu0
    %3755 = vmatprep.mubr.f32.mxu0 0.0
    %3756 = vmatmul.mubr.f32.gmra.mxu0 %v3656
    %v3757 = vpop.f32.mrf.mxu0
    %v3758 = vadd.f32 0.0, %v3757
    %v3759 = vpop.f32.mrf.mxu0
    %3760 = vmatprep.mubr.f32.mxu0 0.0
    %3761 = vmatmul.mubr.f32.gmra.mxu0 %v3659
    %v3762 = vpop.f32.mrf.mxu0
    %v3763 = vadd.f32 0.0, %v3762
    %v3764 = vpop.f32.mrf.mxu0
    %3765 = vdwg.mxu0
    %v3767 = vsel %vm30, %v3615, 0
    %v3770 = vsel %vm30, %v3616, 0
    %v3773 = vsel %vm30, %v3617, 0
    %v3776 = vsel %vm30, %v3618, 0
    %v3779 = vsel %vm30, %v3619, 0
    %v3782 = vsel %vm30, %v3620, 0
    %v3785 = vsel %vm30, %v3621, 0
    %v3788 = vsel %vm30, %v3622, 0
    %3790 = vmatprep.subr.mxu0 0.0
    %3791 = vmatpush1.msra.mxu0 0.0
    %3792 = vmatprep.subr.mxu0 0.0
    %3793 = vmatpush1.msra.mxu0 0.0
    %3794 = vmatprep.subr.mxu0 0.0
    %3795 = vmatpush1.msra.mxu0 0.0
    %3796 = vmatprep.subr.mxu0 0.0
    %3797 = vmatpush1.msra.mxu0 0.0
    %3798 = vmatprep.subr.mxu0 0.0
    %3799 = vmatpush1.msra.mxu0 0.0
    %3800 = vmatprep.subr.mxu0 0.0
    %3801 = vmatpush1.msra.mxu0 0.0
    %3802 = vmatprep.subr.mxu0 0.0
    %3803 = vmatpush1.msra.mxu0 0.0
    %3804 = vmatprep.subr.mxu0 0.0
    %3805 = vmatpush1.msra.mxu0 0.0
    %3806 = vmatprep.subr.mxu0 0.0
    %3807 = vmatpush1.msra.mxu0 0.0
    %3808 = vmatprep.subr.mxu0 0.0
    %3809 = vmatpush1.msra.mxu0 0.0
    %3810 = vmatprep.subr.mxu0 0.0
    %3811 = vmatpush1.msra.mxu0 0.0
    %3812 = vmatprep.subr.mxu0 0.0
    %3813 = vmatpush1.msra.mxu0 0.0
    %3814 = vmatprep.subr.mxu0 0.0
    %3815 = vmatpush1.msra.mxu0 0.0
    %3816 = vmatprep.subr.mxu0 0.0
    %3817 = vmatpush1.msra.mxu0 %v3625
    %3818 = vmatprep.subr.mxu0 0.0
    %3819 = vmatpush1.msra.mxu0 %v3624
    %3820 = vmatprep.subr.mxu0 0.0
    %3821 = vmatpush1.msra.mxu0 %v3623
    %3822 = vmatprep.subr.mxu0 0.0
    %3823 = vmatpush2.msra.mxu0 0.0
    %3824 = vmatprep.subr.mxu0 0.0
    %3825 = vmatpush2.msra.mxu0 0.0
    %3826 = vmatprep.subr.mxu0 0.0
    %3827 = vmatpush2.msra.mxu0 0.0
    %3828 = vmatprep.subr.mxu0 0.0
    %3829 = vmatpush2.msra.mxu0 0.0
    %3830 = vmatprep.subr.mxu0 0.0
    %3831 = vmatpush2.msra.mxu0 0.0
    %3832 = vmatprep.subr.mxu0 0.0
    %3833 = vmatpush2.msra.mxu0 0.0
    %3834 = vmatprep.subr.mxu0 0.0
    %3835 = vmatpush2.msra.mxu0 0.0
    %3836 = vmatprep.subr.mxu0 0.0
    %3837 = vmatpush2.msra.mxu0 0.0
    %3838 = vmatprep.subr.mxu0 0.0
    %3839 = vmatpush2.msra.mxu0 0.0
    %3840 = vmatprep.subr.mxu0 0.0
    %3841 = vmatpush2.msra.mxu0 0.0
    %3842 = vmatprep.subr.mxu0 0.0
    %3843 = vmatpush2.msra.mxu0 0.0
    %3844 = vmatprep.subr.mxu0 0.0
    %3845 = vmatpush2.msra.mxu0 0.0
    %3846 = vmatprep.subr.mxu0 0.0
    %3847 = vmatpush2.msra.mxu0 0.0
    %3848 = vmatprep.subr.mxu0 0.0
    %3849 = vmatpush2.msra.mxu0 0.0
    %3850 = vmatprep.subr.mxu0 0.0
    %3851 = vmatpush2.msra.mxu0 0.0
    %3852 = vmatprep.subr.mxu0 0.0
    %3853 = vmatpush2.msra.mxu0 0.0
    %3854 = vmatprep.mubr.f32.mxu0 0.0
    %3855 = vmatmul.mubr.f32.gmra.mxu0 %v3767
    %v3856 = vpop.f32.mrf.mxu0
    %v3857 = vadd.f32 %v3728, %v3856
    %v3858 = vpop.f32.mrf.mxu0
    %3859 = vmatprep.mubr.f32.mxu0 0.0
    %3860 = vmatmul.mubr.f32.gmra.mxu0 %v3770
    %v3861 = vpop.f32.mrf.mxu0
    %v3862 = vadd.f32 %v3733, %v3861
    %v3863 = vpop.f32.mrf.mxu0
    %3864 = vmatprep.mubr.f32.mxu0 0.0
    %3865 = vmatmul.mubr.f32.gmra.mxu0 %v3773
    %v3866 = vpop.f32.mrf.mxu0
    %v3867 = vadd.f32 %v3738, %v3866
    %v3868 = vpop.f32.mrf.mxu0
    %3869 = vmatprep.mubr.f32.mxu0 0.0
    %3870 = vmatmul.mubr.f32.gmra.mxu0 %v3776
    %v3871 = vpop.f32.mrf.mxu0
    %v3872 = vadd.f32 %v3743, %v3871
    %v3873 = vpop.f32.mrf.mxu0
    %3874 = vmatprep.mubr.f32.mxu0 0.0
    %3875 = vmatmul.mubr.f32.gmra.mxu0 %v3779
    %v3876 = vpop.f32.mrf.mxu0
    %v3877 = vadd.f32 %v3748, %v3876
    %v3878 = vpop.f32.mrf.mxu0
    %3879 = vmatprep.mubr.f32.mxu0 0.0
    %3880 = vmatmul.mubr.f32.gmra.mxu0 %v3782
    %v3881 = vpop.f32.mrf.mxu0
    %v3882 = vadd.f32 %v3753, %v3881
    %v3883 = vpop.f32.mrf.mxu0
    %3884 = vmatprep.mubr.f32.mxu0 0.0
    %3885 = vmatmul.mubr.f32.gmra.mxu0 %v3785
    %v3886 = vpop.f32.mrf.mxu0
    %v3887 = vadd.f32 %v3758, %v3886
    %v3888 = vpop.f32.mrf.mxu0
    %3889 = vmatprep.mubr.f32.mxu0 0.0
    %3890 = vmatmul.mubr.f32.gmra.mxu0 %v3788
    %v3891 = vpop.f32.mrf.mxu0
    %v3892 = vadd.f32 %v3763, %v3891
    %v3893 = vpop.f32.mrf.mxu0
    %3894 = vdwg.mxu0
    %v3895 = vld [vmem:[#allocation2 + $0x2] sm:$0xff]
    %v3896 = vld [vmem:[#allocation2 + $0x12] sm:$0xff]
    %v3897 = vld [vmem:[#allocation2 + $0x22] sm:$0xff]
    %v3898 = vld [vmem:[#allocation2 + $0x32] sm:$0xff]
    %v3899 = vld [vmem:[#allocation2 + $0x42] sm:$0xff]
    %v3900 = vld [vmem:[#allocation2 + $0x52] sm:$0xff]
    %v3901 = vld [vmem:[#allocation2 + $0x62] sm:$0xff]
    %v3902 = vld [vmem:[#allocation2 + $0x72] sm:$0xff]
    %v3903 = vld [vmem:[%s690] sm:$0xff]
    %v3904 = vld [vmem:[%s690 + $0x8] sm:$0xff]
    %v3905 = vld [vmem:[%s690 + $0x10] sm:$0xff]
    %v3907 = vsel %vm30, %v3895, 0
    %v3910 = vsel %vm30, %v3896, 0
    %v3913 = vsel %vm30, %v3897, 0
    %v3916 = vsel %vm30, %v3898, 0
    %v3919 = vsel %vm30, %v3899, 0
    %v3922 = vsel %vm30, %v3900, 0
    %v3925 = vsel %vm30, %v3901, 0
    %v3928 = vsel %vm30, %v3902, 0
    %3930 = vmatprep.subr.mxu0 0.0
    %3931 = vmatpush1.msra.mxu0 0.0
    %3932 = vmatprep.subr.mxu0 0.0
    %3933 = vmatpush1.msra.mxu0 0.0
    %3934 = vmatprep.subr.mxu0 0.0
    %3935 = vmatpush1.msra.mxu0 0.0
    %3936 = vmatprep.subr.mxu0 0.0
    %3937 = vmatpush1.msra.mxu0 0.0
    %3938 = vmatprep.subr.mxu0 0.0
    %3939 = vmatpush1.msra.mxu0 0.0
    %3940 = vmatprep.subr.mxu0 0.0
    %3941 = vmatpush1.msra.mxu0 0.0
    %3942 = vmatprep.subr.mxu0 0.0
    %3943 = vmatpush1.msra.mxu0 0.0
    %3944 = vmatprep.subr.mxu0 0.0
    %3945 = vmatpush1.msra.mxu0 0.0
    %3946 = vmatprep.subr.mxu0 0.0
    %3947 = vmatpush1.msra.mxu0 0.0
    %3948 = vmatprep.subr.mxu0 0.0
    %3949 = vmatpush1.msra.mxu0 0.0
    %3950 = vmatprep.subr.mxu0 0.0
    %3951 = vmatpush1.msra.mxu0 0.0
    %3952 = vmatprep.subr.mxu0 0.0
    %3953 = vmatpush1.msra.mxu0 0.0
    %3954 = vmatprep.subr.mxu0 0.0
    %3955 = vmatpush1.msra.mxu0 0.0
    %3956 = vmatprep.subr.mxu0 0.0
    %3957 = vmatpush1.msra.mxu0 %v3905
    %3958 = vmatprep.subr.mxu0 0.0
    %3959 = vmatpush1.msra.mxu0 %v3904
    %3960 = vmatprep.subr.mxu0 0.0
    %3961 = vmatpush1.msra.mxu0 %v3903
    %3962 = vmatprep.subr.mxu0 0.0
    %3963 = vmatpush2.msra.mxu0 0.0
    %3964 = vmatprep.subr.mxu0 0.0
    %3965 = vmatpush2.msra.mxu0 0.0
    %3966 = vmatprep.subr.mxu0 0.0
    %3967 = vmatpush2.msra.mxu0 0.0
    %3968 = vmatprep.subr.mxu0 0.0
    %3969 = vmatpush2.msra.mxu0 0.0
    %3970 = vmatprep.subr.mxu0 0.0
    %3971 = vmatpush2.msra.mxu0 0.0
    %3972 = vmatprep.subr.mxu0 0.0
    %3973 = vmatpush2.msra.mxu0 0.0
    %3974 = vmatprep.subr.mxu0 0.0
    %3975 = vmatpush2.msra.mxu0 0.0
    %3976 = vmatprep.subr.mxu0 0.0
    %3977 = vmatpush2.msra.mxu0 0.0
    %3978 = vmatprep.subr.mxu0 0.0
    %3979 = vmatpush2.msra.mxu0 0.0
    %3980 = vmatprep.subr.mxu0 0.0
    %3981 = vmatpush2.msra.mxu0 0.0
    %3982 = vmatprep.subr.mxu0 0.0
    %3983 = vmatpush2.msra.mxu0 0.0
    %3984 = vmatprep.subr.mxu0 0.0
    %3985 = vmatpush2.msra.mxu0 0.0
    %3986 = vmatprep.subr.mxu0 0.0
    %3987 = vmatpush2.msra.mxu0 0.0
    %3988 = vmatprep.subr.mxu0 0.0
    %3989 = vmatpush2.msra.mxu0 0.0
    %3990 = vmatprep.subr.mxu0 0.0
    %3991 = vmatpush2.msra.mxu0 0.0
    %3992 = vmatprep.subr.mxu0 0.0
    %3993 = vmatpush2.msra.mxu0 0.0
    %3994 = vmatprep.mubr.f32.mxu0 0.0
    %3995 = vmatmul.mubr.f32.gmra.mxu0 %v3907
    %v3996 = vpop.f32.mrf.mxu0
    %v3997 = vadd.f32 0.0, %v3996
    %v3998 = vpop.f32.mrf.mxu0
    %3999 = vmatprep.mubr.f32.mxu0 0.0
    %4000 = vmatmul.mubr.f32.gmra.mxu0 %v3910
    %v4001 = vpop.f32.mrf.mxu0
    %v4002 = vadd.f32 0.0, %v4001
    %v4003 = vpop.f32.mrf.mxu0
    %4004 = vmatprep.mubr.f32.mxu0 0.0
    %4005 = vmatmul.mubr.f32.gmra.mxu0 %v3913
    %v4006 = vpop.f32.mrf.mxu0
    %v4007 = vadd.f32 0.0, %v4006
    %v4008 = vpop.f32.mrf.mxu0
    %4009 = vmatprep.mubr.f32.mxu0 0.0
    %4010 = vmatmul.mubr.f32.gmra.mxu0 %v3916
    %v4011 = vpop.f32.mrf.mxu0
    %v4012 = vadd.f32 0.0, %v4011
    %v4013 = vpop.f32.mrf.mxu0
    %4014 = vmatprep.mubr.f32.mxu0 0.0
    %4015 = vmatmul.mubr.f32.gmra.mxu0 %v3919
    %v4016 = vpop.f32.mrf.mxu0
    %v4017 = vadd.f32 0.0, %v4016
    %v4018 = vpop.f32.mrf.mxu0
    %4019 = vmatprep.mubr.f32.mxu0 0.0
    %4020 = vmatmul.mubr.f32.gmra.mxu0 %v3922
    %v4021 = vpop.f32.mrf.mxu0
    %v4022 = vadd.f32 0.0, %v4021
    %v4023 = vpop.f32.mrf.mxu0
    %4024 = vmatprep.mubr.f32.mxu0 0.0
    %4025 = vmatmul.mubr.f32.gmra.mxu0 %v3925
    %v4026 = vpop.f32.mrf.mxu0
    %v4027 = vadd.f32 0.0, %v4026
    %v4028 = vpop.f32.mrf.mxu0
    %4029 = vmatprep.mubr.f32.mxu0 0.0
    %4030 = vmatmul.mubr.f32.gmra.mxu0 %v3928
    %v4031 = vpop.f32.mrf.mxu0
    %v4032 = vadd.f32 0.0, %v4031
    %v4033 = vpop.f32.mrf.mxu0
    %4034 = vdwg.mxu0
    %v4035 = vadd.f32 %v3857, %v3997
    %v4036 = vadd.f32 %v3862, %v4002
    %v4037 = vadd.f32 %v3867, %v4007
    %v4038 = vadd.f32 %v3872, %v4012
    %v4039 = vadd.f32 %v3877, %v4017
    %v4040 = vadd.f32 %v3882, %v4022
    %v4041 = vadd.f32 %v3887, %v4027
    %v4042 = vadd.f32 %v3892, %v4032
    %v4043 = vld [vmem:[%s332] sm:$0xff]
    %v4044 = vld [vmem:[%s332 + $0x10] sm:$0xff]
    %v4045 = vld [vmem:[%s332 + $0x20] sm:$0xff]
    %v4046 = vld [vmem:[%s332 + $0x30] sm:$0xff]
    %v4047 = vld [vmem:[%s332 + $0x40] sm:$0xff]
    %v4048 = vld [vmem:[%s332 + $0x50] sm:$0xff]
    %v4049 = vld [vmem:[%s332 + $0x60] sm:$0xff]
    %v4050 = vld [vmem:[%s332 + $0x70] sm:$0xff]
    %v4051 = vld [vmem:[%s839] sm:$0xff]
    %v4052 = vld [vmem:[%s839 + $0x8] sm:$0xff]
    %v4053 = vld [vmem:[%s839 + $0x10] sm:$0xff]
    %v4055 = vsel %vm30, %v4043, 0
    %v4058 = vsel %vm30, %v4044, 0
    %v4061 = vsel %vm30, %v4045, 0
    %v4064 = vsel %vm30, %v4046, 0
    %v4067 = vsel %vm30, %v4047, 0
    %v4070 = vsel %vm30, %v4048, 0
    %v4073 = vsel %vm30, %v4049, 0
    %v4076 = vsel %vm30, %v4050, 0
    %4078 = vmatprep.subr.mxu0 0.0
    %4079 = vmatpush1.msra.mxu0 0.0
    %4080 = vmatprep.subr.mxu0 0.0
    %4081 = vmatpush1.msra.mxu0 0.0
    %4082 = vmatprep.subr.mxu0 0.0
    %4083 = vmatpush1.msra.mxu0 0.0
    %4084 = vmatprep.subr.mxu0 0.0
    %4085 = vmatpush1.msra.mxu0 0.0
    %4086 = vmatprep.subr.mxu0 0.0
    %4087 = vmatpush1.msra.mxu0 0.0
    %4088 = vmatprep.subr.mxu0 0.0
    %4089 = vmatpush1.msra.mxu0 0.0
    %4090 = vmatprep.subr.mxu0 0.0
    %4091 = vmatpush1.msra.mxu0 0.0
    %4092 = vmatprep.subr.mxu0 0.0
    %4093 = vmatpush1.msra.mxu0 0.0
    %4094 = vmatprep.subr.mxu0 0.0
    %4095 = vmatpush1.msra.mxu0 0.0
    %4096 = vmatprep.subr.mxu0 0.0
    %4097 = vmatpush1.msra.mxu0 0.0
    %4098 = vmatprep.subr.mxu0 0.0
    %4099 = vmatpush1.msra.mxu0 0.0
    %4100 = vmatprep.subr.mxu0 0.0
    %4101 = vmatpush1.msra.mxu0 0.0
    %4102 = vmatprep.subr.mxu0 0.0
    %4103 = vmatpush1.msra.mxu0 0.0
    %4104 = vmatprep.subr.mxu0 0.0
    %4105 = vmatpush1.msra.mxu0 %v4053
    %4106 = vmatprep.subr.mxu0 0.0
    %4107 = vmatpush1.msra.mxu0 %v4052
    %4108 = vmatprep.subr.mxu0 0.0
    %4109 = vmatpush1.msra.mxu0 %v4051
    %4110 = vmatprep.subr.mxu0 0.0
    %4111 = vmatpush2.msra.mxu0 0.0
    %4112 = vmatprep.subr.mxu0 0.0
    %4113 = vmatpush2.msra.mxu0 0.0
    %4114 = vmatprep.subr.mxu0 0.0
    %4115 = vmatpush2.msra.mxu0 0.0
    %4116 = vmatprep.subr.mxu0 0.0
    %4117 = vmatpush2.msra.mxu0 0.0
    %4118 = vmatprep.subr.mxu0 0.0
    %4119 = vmatpush2.msra.mxu0 0.0
    %4120 = vmatprep.subr.mxu0 0.0
    %4121 = vmatpush2.msra.mxu0 0.0
    %4122 = vmatprep.subr.mxu0 0.0
    %4123 = vmatpush2.msra.mxu0 0.0
    %4124 = vmatprep.subr.mxu0 0.0
    %4125 = vmatpush2.msra.mxu0 0.0
    %4126 = vmatprep.subr.mxu0 0.0
    %4127 = vmatpush2.msra.mxu0 0.0
    %4128 = vmatprep.subr.mxu0 0.0
    %4129 = vmatpush2.msra.mxu0 0.0
    %4130 = vmatprep.subr.mxu0 0.0
    %4131 = vmatpush2.msra.mxu0 0.0
    %4132 = vmatprep.subr.mxu0 0.0
    %4133 = vmatpush2.msra.mxu0 0.0
    %4134 = vmatprep.subr.mxu0 0.0
    %4135 = vmatpush2.msra.mxu0 0.0
    %4136 = vmatprep.subr.mxu0 0.0
    %4137 = vmatpush2.msra.mxu0 0.0
    %4138 = vmatprep.subr.mxu0 0.0
    %4139 = vmatpush2.msra.mxu0 0.0
    %4140 = vmatprep.subr.mxu0 0.0
    %4141 = vmatpush2.msra.mxu0 0.0
    %4142 = vmatprep.mubr.f32.mxu0 0.0
    %4143 = vmatmul.mubr.f32.gmra.mxu0 %v4055
    %v4144 = vpop.f32.mrf.mxu0
    %v4145 = vadd.f32 0.0, %v4144
    %v4146 = vpop.f32.mrf.mxu0
    %4147 = vmatprep.mubr.f32.mxu0 0.0
    %4148 = vmatmul.mubr.f32.gmra.mxu0 %v4058
    %v4149 = vpop.f32.mrf.mxu0
    %v4150 = vadd.f32 0.0, %v4149
    %v4151 = vpop.f32.mrf.mxu0
    %4152 = vmatprep.mubr.f32.mxu0 0.0
    %4153 = vmatmul.mubr.f32.gmra.mxu0 %v4061
    %v4154 = vpop.f32.mrf.mxu0
    %v4155 = vadd.f32 0.0, %v4154
    %v4156 = vpop.f32.mrf.mxu0
    %4157 = vmatprep.mubr.f32.mxu0 0.0
    %4158 = vmatmul.mubr.f32.gmra.mxu0 %v4064
    %v4159 = vpop.f32.mrf.mxu0
    %v4160 = vadd.f32 0.0, %v4159
    %v4161 = vpop.f32.mrf.mxu0
    %4162 = vmatprep.mubr.f32.mxu0 0.0
    %4163 = vmatmul.mubr.f32.gmra.mxu0 %v4067
    %v4164 = vpop.f32.mrf.mxu0
    %v4165 = vadd.f32 0.0, %v4164
    %v4166 = vpop.f32.mrf.mxu0
    %4167 = vmatprep.mubr.f32.mxu0 0.0
    %4168 = vmatmul.mubr.f32.gmra.mxu0 %v4070
    %v4169 = vpop.f32.mrf.mxu0
    %v4170 = vadd.f32 0.0, %v4169
    %v4171 = vpop.f32.mrf.mxu0
    %4172 = vmatprep.mubr.f32.mxu0 0.0
    %4173 = vmatmul.mubr.f32.gmra.mxu0 %v4073
    %v4174 = vpop.f32.mrf.mxu0
    %v4175 = vadd.f32 0.0, %v4174
    %v4176 = vpop.f32.mrf.mxu0
    %4177 = vmatprep.mubr.f32.mxu0 0.0
    %4178 = vmatmul.mubr.f32.gmra.mxu0 %v4076
    %v4179 = vpop.f32.mrf.mxu0
    %v4180 = vadd.f32 0.0, %v4179
    %v4181 = vpop.f32.mrf.mxu0
    %4182 = vdwg.mxu0
    %v4183 = vadd.f32 %v4035, %v4145
    %v4184 = vadd.f32 %v4036, %v4150
    %v4185 = vadd.f32 %v4037, %v4155
    %v4186 = vadd.f32 %v4038, %v4160
    %v4187 = vadd.f32 %v4039, %v4165
    %v4188 = vadd.f32 %v4040, %v4170
    %v4189 = vadd.f32 %v4041, %v4175
    %v4190 = vadd.f32 %v4042, %v4180
    %v4191 = vld [vmem:[%s332 + $0x1] sm:$0xff]
    %v4192 = vld [vmem:[%s332 + $0x11] sm:$0xff]
    %v4193 = vld [vmem:[%s332 + $0x21] sm:$0xff]
    %v4194 = vld [vmem:[%s332 + $0x31] sm:$0xff]
    %v4195 = vld [vmem:[%s332 + $0x41] sm:$0xff]
    %v4196 = vld [vmem:[%s332 + $0x51] sm:$0xff]
    %v4197 = vld [vmem:[%s332 + $0x61] sm:$0xff]
    %v4198 = vld [vmem:[%s332 + $0x71] sm:$0xff]
    %v4199 = vld [vmem:[%s988] sm:$0xff]
    %v4200 = vld [vmem:[%s988 + $0x8] sm:$0xff]
    %v4201 = vld [vmem:[%s988 + $0x10] sm:$0xff]
    %v4203 = vsel %vm30, %v4191, 0
    %v4206 = vsel %vm30, %v4192, 0
    %v4209 = vsel %vm30, %v4193, 0
    %v4212 = vsel %vm30, %v4194, 0
    %v4215 = vsel %vm30, %v4195, 0
    %v4218 = vsel %vm30, %v4196, 0
    %v4221 = vsel %vm30, %v4197, 0
    %v4224 = vsel %vm30, %v4198, 0
    %4226 = vmatprep.subr.mxu0 0.0
    %4227 = vmatpush1.msra.mxu0 0.0
    %4228 = vmatprep.subr.mxu0 0.0
    %4229 = vmatpush1.msra.mxu0 0.0
    %4230 = vmatprep.subr.mxu0 0.0
    %4231 = vmatpush1.msra.mxu0 0.0
    %4232 = vmatprep.subr.mxu0 0.0
    %4233 = vmatpush1.msra.mxu0 0.0
    %4234 = vmatprep.subr.mxu0 0.0
    %4235 = vmatpush1.msra.mxu0 0.0
    %4236 = vmatprep.subr.mxu0 0.0
    %4237 = vmatpush1.msra.mxu0 0.0
    %4238 = vmatprep.subr.mxu0 0.0
    %4239 = vmatpush1.msra.mxu0 0.0
    %4240 = vmatprep.subr.mxu0 0.0
    %4241 = vmatpush1.msra.mxu0 0.0
    %4242 = vmatprep.subr.mxu0 0.0
    %4243 = vmatpush1.msra.mxu0 0.0
    %4244 = vmatprep.subr.mxu0 0.0
    %4245 = vmatpush1.msra.mxu0 0.0
    %4246 = vmatprep.subr.mxu0 0.0
    %4247 = vmatpush1.msra.mxu0 0.0
    %4248 = vmatprep.subr.mxu0 0.0
    %4249 = vmatpush1.msra.mxu0 0.0
    %4250 = vmatprep.subr.mxu0 0.0
    %4251 = vmatpush1.msra.mxu0 0.0
    %4252 = vmatprep.subr.mxu0 0.0
    %4253 = vmatpush1.msra.mxu0 %v4201
    %4254 = vmatprep.subr.mxu0 0.0
    %4255 = vmatpush1.msra.mxu0 %v4200
    %4256 = vmatprep.subr.mxu0 0.0
    %4257 = vmatpush1.msra.mxu0 %v4199
    %4258 = vmatprep.subr.mxu0 0.0
    %4259 = vmatpush2.msra.mxu0 0.0
    %4260 = vmatprep.subr.mxu0 0.0
    %4261 = vmatpush2.msra.mxu0 0.0
    %4262 = vmatprep.subr.mxu0 0.0
    %4263 = vmatpush2.msra.mxu0 0.0
    %4264 = vmatprep.subr.mxu0 0.0
    %4265 = vmatpush2.msra.mxu0 0.0
    %4266 = vmatprep.subr.mxu0 0.0
    %4267 = vmatpush2.msra.mxu0 0.0
    %4268 = vmatprep.subr.mxu0 0.0
    %4269 = vmatpush2.msra.mxu0 0.0
    %4270 = vmatprep.subr.mxu0 0.0
    %4271 = vmatpush2.msra.mxu0 0.0
    %4272 = vmatprep.subr.mxu0 0.0
    %4273 = vmatpush2.msra.mxu0 0.0
    %4274 = vmatprep.subr.mxu0 0.0
    %4275 = vmatpush2.msra.mxu0 0.0
    %4276 = vmatprep.subr.mxu0 0.0
    %4277 = vmatpush2.msra.mxu0 0.0
    %4278 = vmatprep.subr.mxu0 0.0
    %4279 = vmatpush2.msra.mxu0 0.0
    %4280 = vmatprep.subr.mxu0 0.0
    %4281 = vmatpush2.msra.mxu0 0.0
    %4282 = vmatprep.subr.mxu0 0.0
    %4283 = vmatpush2.msra.mxu0 0.0
    %4284 = vmatprep.subr.mxu0 0.0
    %4285 = vmatpush2.msra.mxu0 0.0
    %4286 = vmatprep.subr.mxu0 0.0
    %4287 = vmatpush2.msra.mxu0 0.0
    %4288 = vmatprep.subr.mxu0 0.0
    %4289 = vmatpush2.msra.mxu0 0.0
    %4290 = vmatprep.mubr.f32.mxu0 0.0
    %4291 = vmatmul.mubr.f32.gmra.mxu0 %v4203
    %v4292 = vpop.f32.mrf.mxu0
    %v4293 = vadd.f32 0.0, %v4292
    %v4294 = vpop.f32.mrf.mxu0
    %4295 = vmatprep.mubr.f32.mxu0 0.0
    %4296 = vmatmul.mubr.f32.gmra.mxu0 %v4206
    %v4297 = vpop.f32.mrf.mxu0
    %v4298 = vadd.f32 0.0, %v4297
    %v4299 = vpop.f32.mrf.mxu0
    %4300 = vmatprep.mubr.f32.mxu0 0.0
    %4301 = vmatmul.mubr.f32.gmra.mxu0 %v4209
    %v4302 = vpop.f32.mrf.mxu0
    %v4303 = vadd.f32 0.0, %v4302
    %v4304 = vpop.f32.mrf.mxu0
    %4305 = vmatprep.mubr.f32.mxu0 0.0
    %4306 = vmatmul.mubr.f32.gmra.mxu0 %v4212
    %v4307 = vpop.f32.mrf.mxu0
    %v4308 = vadd.f32 0.0, %v4307
    %v4309 = vpop.f32.mrf.mxu0
    %4310 = vmatprep.mubr.f32.mxu0 0.0
    %4311 = vmatmul.mubr.f32.gmra.mxu0 %v4215
    %v4312 = vpop.f32.mrf.mxu0
    %v4313 = vadd.f32 0.0, %v4312
    %v4314 = vpop.f32.mrf.mxu0
    %4315 = vmatprep.mubr.f32.mxu0 0.0
    %4316 = vmatmul.mubr.f32.gmra.mxu0 %v4218
    %v4317 = vpop.f32.mrf.mxu0
    %v4318 = vadd.f32 0.0, %v4317
    %v4319 = vpop.f32.mrf.mxu0
    %4320 = vmatprep.mubr.f32.mxu0 0.0
    %4321 = vmatmul.mubr.f32.gmra.mxu0 %v4221
    %v4322 = vpop.f32.mrf.mxu0
    %v4323 = vadd.f32 0.0, %v4322
    %v4324 = vpop.f32.mrf.mxu0
    %4325 = vmatprep.mubr.f32.mxu0 0.0
    %4326 = vmatmul.mubr.f32.gmra.mxu0 %v4224
    %v4327 = vpop.f32.mrf.mxu0
    %v4328 = vadd.f32 0.0, %v4327
    %v4329 = vpop.f32.mrf.mxu0
    %4330 = vdwg.mxu0
    %v4331 = vadd.f32 %v4183, %v4293
    %v4332 = vadd.f32 %v4184, %v4298
    %v4333 = vadd.f32 %v4185, %v4303
    %v4334 = vadd.f32 %v4186, %v4308
    %v4335 = vadd.f32 %v4187, %v4313
    %v4336 = vadd.f32 %v4188, %v4318
    %v4337 = vadd.f32 %v4189, %v4323
    %v4338 = vadd.f32 %v4190, %v4328
    %v4339 = vld [vmem:[%s332 + $0x2] sm:$0xff]
    %v4340 = vld [vmem:[%s332 + $0x12] sm:$0xff]
    %v4341 = vld [vmem:[%s332 + $0x22] sm:$0xff]
    %v4342 = vld [vmem:[%s332 + $0x32] sm:$0xff]
    %v4343 = vld [vmem:[%s332 + $0x42] sm:$0xff]
    %v4344 = vld [vmem:[%s332 + $0x52] sm:$0xff]
    %v4345 = vld [vmem:[%s332 + $0x62] sm:$0xff]
    %v4346 = vld [vmem:[%s332 + $0x72] sm:$0xff]
    %v4347 = vld [vmem:[%s1137] sm:$0xff]
    %v4348 = vld [vmem:[%s1137 + $0x8] sm:$0xff]
    %v4349 = vld [vmem:[%s1137 + $0x10] sm:$0xff]
    %v4351 = vsel %vm30, %v4339, 0
    %v4354 = vsel %vm30, %v4340, 0
    %v4357 = vsel %vm30, %v4341, 0
    %v4360 = vsel %vm30, %v4342, 0
    %v4363 = vsel %vm30, %v4343, 0
    %v4366 = vsel %vm30, %v4344, 0
    %v4369 = vsel %vm30, %v4345, 0
    %v4372 = vsel %vm30, %v4346, 0
    %4374 = vmatprep.subr.mxu0 0.0
    %4375 = vmatpush1.msra.mxu0 0.0
    %4376 = vmatprep.subr.mxu0 0.0
    %4377 = vmatpush1.msra.mxu0 0.0
    %4378 = vmatprep.subr.mxu0 0.0
    %4379 = vmatpush1.msra.mxu0 0.0
    %4380 = vmatprep.subr.mxu0 0.0
    %4381 = vmatpush1.msra.mxu0 0.0
    %4382 = vmatprep.subr.mxu0 0.0
    %4383 = vmatpush1.msra.mxu0 0.0
    %4384 = vmatprep.subr.mxu0 0.0
    %4385 = vmatpush1.msra.mxu0 0.0
    %4386 = vmatprep.subr.mxu0 0.0
    %4387 = vmatpush1.msra.mxu0 0.0
    %4388 = vmatprep.subr.mxu0 0.0
    %4389 = vmatpush1.msra.mxu0 0.0
    %4390 = vmatprep.subr.mxu0 0.0
    %4391 = vmatpush1.msra.mxu0 0.0
    %4392 = vmatprep.subr.mxu0 0.0
    %4393 = vmatpush1.msra.mxu0 0.0
    %4394 = vmatprep.subr.mxu0 0.0
    %4395 = vmatpush1.msra.mxu0 0.0
    %4396 = vmatprep.subr.mxu0 0.0
    %4397 = vmatpush1.msra.mxu0 0.0
    %4398 = vmatprep.subr.mxu0 0.0
    %4399 = vmatpush1.msra.mxu0 0.0
    %4400 = vmatprep.subr.mxu0 0.0
    %4401 = vmatpush1.msra.mxu0 %v4349
    %4402 = vmatprep.subr.mxu0 0.0
    %4403 = vmatpush1.msra.mxu0 %v4348
    %4404 = vmatprep.subr.mxu0 0.0
    %4405 = vmatpush1.msra.mxu0 %v4347
    %4406 = vmatprep.subr.mxu0 0.0
    %4407 = vmatpush2.msra.mxu0 0.0
    %4408 = vmatprep.subr.mxu0 0.0
    %4409 = vmatpush2.msra.mxu0 0.0
    %4410 = vmatprep.subr.mxu0 0.0
    %4411 = vmatpush2.msra.mxu0 0.0
    %4412 = vmatprep.subr.mxu0 0.0
    %4413 = vmatpush2.msra.mxu0 0.0
    %4414 = vmatprep.subr.mxu0 0.0
    %4415 = vmatpush2.msra.mxu0 0.0
    %4416 = vmatprep.subr.mxu0 0.0
    %4417 = vmatpush2.msra.mxu0 0.0
    %4418 = vmatprep.subr.mxu0 0.0
    %4419 = vmatpush2.msra.mxu0 0.0
    %4420 = vmatprep.subr.mxu0 0.0
    %4421 = vmatpush2.msra.mxu0 0.0
    %4422 = vmatprep.subr.mxu0 0.0
    %4423 = vmatpush2.msra.mxu0 0.0
    %4424 = vmatprep.subr.mxu0 0.0
    %4425 = vmatpush2.msra.mxu0 0.0
    %4426 = vmatprep.subr.mxu0 0.0
    %4427 = vmatpush2.msra.mxu0 0.0
    %4428 = vmatprep.subr.mxu0 0.0
    %4429 = vmatpush2.msra.mxu0 0.0
    %4430 = vmatprep.subr.mxu0 0.0
    %4431 = vmatpush2.msra.mxu0 0.0
    %4432 = vmatprep.subr.mxu0 0.0
    %4433 = vmatpush2.msra.mxu0 0.0
    %4434 = vmatprep.subr.mxu0 0.0
    %4435 = vmatpush2.msra.mxu0 0.0
    %4436 = vmatprep.subr.mxu0 0.0
    %4437 = vmatpush2.msra.mxu0 0.0
    %4438 = vmatprep.mubr.f32.mxu0 0.0
    %4439 = vmatmul.mubr.f32.gmra.mxu0 %v4351
    %v4440 = vpop.f32.mrf.mxu0
    %v4441 = vadd.f32 0.0, %v4440
    %v4442 = vpop.f32.mrf.mxu0
    %4443 = vmatprep.mubr.f32.mxu0 0.0
    %4444 = vmatmul.mubr.f32.gmra.mxu0 %v4354
    %v4445 = vpop.f32.mrf.mxu0
    %v4446 = vadd.f32 0.0, %v4445
    %v4447 = vpop.f32.mrf.mxu0
    %4448 = vmatprep.mubr.f32.mxu0 0.0
    %4449 = vmatmul.mubr.f32.gmra.mxu0 %v4357
    %v4450 = vpop.f32.mrf.mxu0
    %v4451 = vadd.f32 0.0, %v4450
    %v4452 = vpop.f32.mrf.mxu0
    %4453 = vmatprep.mubr.f32.mxu0 0.0
    %4454 = vmatmul.mubr.f32.gmra.mxu0 %v4360
    %v4455 = vpop.f32.mrf.mxu0
    %v4456 = vadd.f32 0.0, %v4455
    %v4457 = vpop.f32.mrf.mxu0
    %4458 = vmatprep.mubr.f32.mxu0 0.0
    %4459 = vmatmul.mubr.f32.gmra.mxu0 %v4363
    %v4460 = vpop.f32.mrf.mxu0
    %v4461 = vadd.f32 0.0, %v4460
    %v4462 = vpop.f32.mrf.mxu0
    %4463 = vmatprep.mubr.f32.mxu0 0.0
    %4464 = vmatmul.mubr.f32.gmra.mxu0 %v4366
    %v4465 = vpop.f32.mrf.mxu0
    %v4466 = vadd.f32 0.0, %v4465
    %v4467 = vpop.f32.mrf.mxu0
    %4468 = vmatprep.mubr.f32.mxu0 0.0
    %4469 = vmatmul.mubr.f32.gmra.mxu0 %v4369
    %v4470 = vpop.f32.mrf.mxu0
    %v4471 = vadd.f32 0.0, %v4470
    %v4472 = vpop.f32.mrf.mxu0
    %4473 = vmatprep.mubr.f32.mxu0 0.0
    %4474 = vmatmul.mubr.f32.gmra.mxu0 %v4372
    %v4475 = vpop.f32.mrf.mxu0
    %v4476 = vadd.f32 0.0, %v4475
    %v4477 = vpop.f32.mrf.mxu0
    %4478 = vdwg.mxu0
    %v4479 = vadd.f32 %v4331, %v4441
    %v4480 = vadd.f32 %v4332, %v4446
    %v4481 = vadd.f32 %v4333, %v4451
    %v4482 = vadd.f32 %v4334, %v4456
    %v4483 = vadd.f32 %v4335, %v4461
    %v4484 = vadd.f32 %v4336, %v4466
    %v4485 = vadd.f32 %v4337, %v4471
    %v4486 = vadd.f32 %v4338, %v4476
    %v4487 = vld [vmem:[%s1278] sm:$0xff]
    %v4488 = vld [vmem:[%s1278 + $0x10] sm:$0xff]
    %v4489 = vld [vmem:[%s1278 + $0x20] sm:$0xff]
    %v4490 = vld [vmem:[%s1278 + $0x30] sm:$0xff]
    %v4491 = vld [vmem:[%s1278 + $0x40] sm:$0xff]
    %v4492 = vld [vmem:[%s1278 + $0x50] sm:$0xff]
    %v4493 = vld [vmem:[%s1278 + $0x60] sm:$0xff]
    %v4494 = vld [vmem:[%s1278 + $0x70] sm:$0xff]
    %v4495 = vld [vmem:[%s1287] sm:$0xff]
    %v4496 = vld [vmem:[%s1287 + $0x8] sm:$0xff]
    %v4497 = vld [vmem:[%s1287 + $0x10] sm:$0xff]
    %v4499 = vsel %vm30, %v4487, 0
    %v4502 = vsel %vm30, %v4488, 0
    %v4505 = vsel %vm30, %v4489, 0
    %v4508 = vsel %vm30, %v4490, 0
    %v4511 = vsel %vm30, %v4491, 0
    %v4514 = vsel %vm30, %v4492, 0
    %v4517 = vsel %vm30, %v4493, 0
    %v4520 = vsel %vm30, %v4494, 0
    %4522 = vmatprep.subr.mxu0 0.0
    %4523 = vmatpush1.msra.mxu0 0.0
    %4524 = vmatprep.subr.mxu0 0.0
    %4525 = vmatpush1.msra.mxu0 0.0
    %4526 = vmatprep.subr.mxu0 0.0
    %4527 = vmatpush1.msra.mxu0 0.0
    %4528 = vmatprep.subr.mxu0 0.0
    %4529 = vmatpush1.msra.mxu0 0.0
    %4530 = vmatprep.subr.mxu0 0.0
    %4531 = vmatpush1.msra.mxu0 0.0
    %4532 = vmatprep.subr.mxu0 0.0
    %4533 = vmatpush1.msra.mxu0 0.0
    %4534 = vmatprep.subr.mxu0 0.0
    %4535 = vmatpush1.msra.mxu0 0.0
    %4536 = vmatprep.subr.mxu0 0.0
    %4537 = vmatpush1.msra.mxu0 0.0
    %4538 = vmatprep.subr.mxu0 0.0
    %4539 = vmatpush1.msra.mxu0 0.0
    %4540 = vmatprep.subr.mxu0 0.0
    %4541 = vmatpush1.msra.mxu0 0.0
    %4542 = vmatprep.subr.mxu0 0.0
    %4543 = vmatpush1.msra.mxu0 0.0
    %4544 = vmatprep.subr.mxu0 0.0
    %4545 = vmatpush1.msra.mxu0 0.0
    %4546 = vmatprep.subr.mxu0 0.0
    %4547 = vmatpush1.msra.mxu0 0.0
    %4548 = vmatprep.subr.mxu0 0.0
    %4549 = vmatpush1.msra.mxu0 %v4497
    %4550 = vmatprep.subr.mxu0 0.0
    %4551 = vmatpush1.msra.mxu0 %v4496
    %4552 = vmatprep.subr.mxu0 0.0
    %4553 = vmatpush1.msra.mxu0 %v4495
    %4554 = vmatprep.subr.mxu0 0.0
    %4555 = vmatpush2.msra.mxu0 0.0
    %4556 = vmatprep.subr.mxu0 0.0
    %4557 = vmatpush2.msra.mxu0 0.0
    %4558 = vmatprep.subr.mxu0 0.0
    %4559 = vmatpush2.msra.mxu0 0.0
    %4560 = vmatprep.subr.mxu0 0.0
    %4561 = vmatpush2.msra.mxu0 0.0
    %4562 = vmatprep.subr.mxu0 0.0
    %4563 = vmatpush2.msra.mxu0 0.0
    %4564 = vmatprep.subr.mxu0 0.0
    %4565 = vmatpush2.msra.mxu0 0.0
    %4566 = vmatprep.subr.mxu0 0.0
    %4567 = vmatpush2.msra.mxu0 0.0
    %4568 = vmatprep.subr.mxu0 0.0
    %4569 = vmatpush2.msra.mxu0 0.0
    %4570 = vmatprep.subr.mxu0 0.0
    %4571 = vmatpush2.msra.mxu0 0.0
    %4572 = vmatprep.subr.mxu0 0.0
    %4573 = vmatpush2.msra.mxu0 0.0
    %4574 = vmatprep.subr.mxu0 0.0
    %4575 = vmatpush2.msra.mxu0 0.0
    %4576 = vmatprep.subr.mxu0 0.0
    %4577 = vmatpush2.msra.mxu0 0.0
    %4578 = vmatprep.subr.mxu0 0.0
    %4579 = vmatpush2.msra.mxu0 0.0
    %4580 = vmatprep.subr.mxu0 0.0
    %4581 = vmatpush2.msra.mxu0 0.0
    %4582 = vmatprep.subr.mxu0 0.0
    %4583 = vmatpush2.msra.mxu0 0.0
    %4584 = vmatprep.subr.mxu0 0.0
    %4585 = vmatpush2.msra.mxu0 0.0
    %4586 = vmatprep.mubr.f32.mxu0 0.0
    %4587 = vmatmul.mubr.f32.gmra.mxu0 %v4499
    %v4588 = vpop.f32.mrf.mxu0
    %v4589 = vadd.f32 0.0, %v4588
    %v4590 = vpop.f32.mrf.mxu0
    %4591 = vmatprep.mubr.f32.mxu0 0.0
    %4592 = vmatmul.mubr.f32.gmra.mxu0 %v4502
    %v4593 = vpop.f32.mrf.mxu0
    %v4594 = vadd.f32 0.0, %v4593
    %v4595 = vpop.f32.mrf.mxu0
    %4596 = vmatprep.mubr.f32.mxu0 0.0
    %4597 = vmatmul.mubr.f32.gmra.mxu0 %v4505
    %v4598 = vpop.f32.mrf.mxu0
    %v4599 = vadd.f32 0.0, %v4598
    %v4600 = vpop.f32.mrf.mxu0
    %4601 = vmatprep.mubr.f32.mxu0 0.0
    %4602 = vmatmul.mubr.f32.gmra.mxu0 %v4508
    %v4603 = vpop.f32.mrf.mxu0
    %v4604 = vadd.f32 0.0, %v4603
    %v4605 = vpop.f32.mrf.mxu0
    %4606 = vmatprep.mubr.f32.mxu0 0.0
    %4607 = vmatmul.mubr.f32.gmra.mxu0 %v4511
    %v4608 = vpop.f32.mrf.mxu0
    %v4609 = vadd.f32 0.0, %v4608
    %v4610 = vpop.f32.mrf.mxu0
    %4611 = vmatprep.mubr.f32.mxu0 0.0
    %4612 = vmatmul.mubr.f32.gmra.mxu0 %v4514
    %v4613 = vpop.f32.mrf.mxu0
    %v4614 = vadd.f32 0.0, %v4613
    %v4615 = vpop.f32.mrf.mxu0
    %4616 = vmatprep.mubr.f32.mxu0 0.0
    %4617 = vmatmul.mubr.f32.gmra.mxu0 %v4517
    %v4618 = vpop.f32.mrf.mxu0
    %v4619 = vadd.f32 0.0, %v4618
    %v4620 = vpop.f32.mrf.mxu0
    %4621 = vmatprep.mubr.f32.mxu0 0.0
    %4622 = vmatmul.mubr.f32.gmra.mxu0 %v4520
    %v4623 = vpop.f32.mrf.mxu0
    %v4624 = vadd.f32 0.0, %v4623
    %v4625 = vpop.f32.mrf.mxu0
    %4626 = vdwg.mxu0
    %v4627 = vadd.f32 %v4479, %v4589
    %v4628 = vadd.f32 %v4480, %v4594
    %v4629 = vadd.f32 %v4481, %v4599
    %v4630 = vadd.f32 %v4482, %v4604
    %v4631 = vadd.f32 %v4483, %v4609
    %v4632 = vadd.f32 %v4484, %v4614
    %v4633 = vadd.f32 %v4485, %v4619
    %v4634 = vadd.f32 %v4486, %v4624
    %v4635 = vld [vmem:[%s1278 + $0x1] sm:$0xff]
    %v4636 = vld [vmem:[%s1278 + $0x11] sm:$0xff]
    %v4637 = vld [vmem:[%s1278 + $0x21] sm:$0xff]
    %v4638 = vld [vmem:[%s1278 + $0x31] sm:$0xff]
    %v4639 = vld [vmem:[%s1278 + $0x41] sm:$0xff]
    %v4640 = vld [vmem:[%s1278 + $0x51] sm:$0xff]
    %v4641 = vld [vmem:[%s1278 + $0x61] sm:$0xff]
    %v4642 = vld [vmem:[%s1278 + $0x71] sm:$0xff]
    %v4643 = vld [vmem:[%s1436] sm:$0xff]
    %v4644 = vld [vmem:[%s1436 + $0x8] sm:$0xff]
    %v4645 = vld [vmem:[%s1436 + $0x10] sm:$0xff]
    %v4647 = vsel %vm30, %v4635, 0
    %v4650 = vsel %vm30, %v4636, 0
    %v4653 = vsel %vm30, %v4637, 0
    %v4656 = vsel %vm30, %v4638, 0
    %v4659 = vsel %vm30, %v4639, 0
    %v4662 = vsel %vm30, %v4640, 0
    %v4665 = vsel %vm30, %v4641, 0
    %v4668 = vsel %vm30, %v4642, 0
    %4670 = vmatprep.subr.mxu0 0.0
    %4671 = vmatpush1.msra.mxu0 0.0
    %4672 = vmatprep.subr.mxu0 0.0
    %4673 = vmatpush1.msra.mxu0 0.0
    %4674 = vmatprep.subr.mxu0 0.0
    %4675 = vmatpush1.msra.mxu0 0.0
    %4676 = vmatprep.subr.mxu0 0.0
    %4677 = vmatpush1.msra.mxu0 0.0
    %4678 = vmatprep.subr.mxu0 0.0
    %4679 = vmatpush1.msra.mxu0 0.0
    %4680 = vmatprep.subr.mxu0 0.0
    %4681 = vmatpush1.msra.mxu0 0.0
    %4682 = vmatprep.subr.mxu0 0.0
    %4683 = vmatpush1.msra.mxu0 0.0
    %4684 = vmatprep.subr.mxu0 0.0
    %4685 = vmatpush1.msra.mxu0 0.0
    %4686 = vmatprep.subr.mxu0 0.0
    %4687 = vmatpush1.msra.mxu0 0.0
    %4688 = vmatprep.subr.mxu0 0.0
    %4689 = vmatpush1.msra.mxu0 0.0
    %4690 = vmatprep.subr.mxu0 0.0
    %4691 = vmatpush1.msra.mxu0 0.0
    %4692 = vmatprep.subr.mxu0 0.0
    %4693 = vmatpush1.msra.mxu0 0.0
    %4694 = vmatprep.subr.mxu0 0.0
    %4695 = vmatpush1.msra.mxu0 0.0
    %4696 = vmatprep.subr.mxu0 0.0
    %4697 = vmatpush1.msra.mxu0 %v4645
    %4698 = vmatprep.subr.mxu0 0.0
    %4699 = vmatpush1.msra.mxu0 %v4644
    %4700 = vmatprep.subr.mxu0 0.0
    %4701 = vmatpush1.msra.mxu0 %v4643
    %4702 = vmatprep.subr.mxu0 0.0
    %4703 = vmatpush2.msra.mxu0 0.0
    %4704 = vmatprep.subr.mxu0 0.0
    %4705 = vmatpush2.msra.mxu0 0.0
    %4706 = vmatprep.subr.mxu0 0.0
    %4707 = vmatpush2.msra.mxu0 0.0
    %4708 = vmatprep.subr.mxu0 0.0
    %4709 = vmatpush2.msra.mxu0 0.0
    %4710 = vmatprep.subr.mxu0 0.0
    %4711 = vmatpush2.msra.mxu0 0.0
    %4712 = vmatprep.subr.mxu0 0.0
    %4713 = vmatpush2.msra.mxu0 0.0
    %4714 = vmatprep.subr.mxu0 0.0
    %4715 = vmatpush2.msra.mxu0 0.0
    %4716 = vmatprep.subr.mxu0 0.0
    %4717 = vmatpush2.msra.mxu0 0.0
    %4718 = vmatprep.subr.mxu0 0.0
    %4719 = vmatpush2.msra.mxu0 0.0
    %4720 = vmatprep.subr.mxu0 0.0
    %4721 = vmatpush2.msra.mxu0 0.0
    %4722 = vmatprep.subr.mxu0 0.0
    %4723 = vmatpush2.msra.mxu0 0.0
    %4724 = vmatprep.subr.mxu0 0.0
    %4725 = vmatpush2.msra.mxu0 0.0
    %4726 = vmatprep.subr.mxu0 0.0
    %4727 = vmatpush2.msra.mxu0 0.0
    %4728 = vmatprep.subr.mxu0 0.0
    %4729 = vmatpush2.msra.mxu0 0.0
    %4730 = vmatprep.subr.mxu0 0.0
    %4731 = vmatpush2.msra.mxu0 0.0
    %4732 = vmatprep.subr.mxu0 0.0
    %4733 = vmatpush2.msra.mxu0 0.0
    %4734 = vmatprep.mubr.f32.mxu0 0.0
    %4735 = vmatmul.mubr.f32.gmra.mxu0 %v4647
    %v4736 = vpop.f32.mrf.mxu0
    %v4737 = vadd.f32 0.0, %v4736
    %v4738 = vpop.f32.mrf.mxu0
    %4739 = vmatprep.mubr.f32.mxu0 0.0
    %4740 = vmatmul.mubr.f32.gmra.mxu0 %v4650
    %v4741 = vpop.f32.mrf.mxu0
    %v4742 = vadd.f32 0.0, %v4741
    %v4743 = vpop.f32.mrf.mxu0
    %4744 = vmatprep.mubr.f32.mxu0 0.0
    %4745 = vmatmul.mubr.f32.gmra.mxu0 %v4653
    %v4746 = vpop.f32.mrf.mxu0
    %v4747 = vadd.f32 0.0, %v4746
    %v4748 = vpop.f32.mrf.mxu0
    %4749 = vmatprep.mubr.f32.mxu0 0.0
    %4750 = vmatmul.mubr.f32.gmra.mxu0 %v4656
    %v4751 = vpop.f32.mrf.mxu0
    %v4752 = vadd.f32 0.0, %v4751
    %v4753 = vpop.f32.mrf.mxu0
    %4754 = vmatprep.mubr.f32.mxu0 0.0
    %4755 = vmatmul.mubr.f32.gmra.mxu0 %v4659
    %v4756 = vpop.f32.mrf.mxu0
    %v4757 = vadd.f32 0.0, %v4756
    %v4758 = vpop.f32.mrf.mxu0
    %4759 = vmatprep.mubr.f32.mxu0 0.0
    %4760 = vmatmul.mubr.f32.gmra.mxu0 %v4662
    %v4761 = vpop.f32.mrf.mxu0
    %v4762 = vadd.f32 0.0, %v4761
    %v4763 = vpop.f32.mrf.mxu0
    %4764 = vmatprep.mubr.f32.mxu0 0.0
    %4765 = vmatmul.mubr.f32.gmra.mxu0 %v4665
    %v4766 = vpop.f32.mrf.mxu0
    %v4767 = vadd.f32 0.0, %v4766
    %v4768 = vpop.f32.mrf.mxu0
    %4769 = vmatprep.mubr.f32.mxu0 0.0
    %4770 = vmatmul.mubr.f32.gmra.mxu0 %v4668
    %v4771 = vpop.f32.mrf.mxu0
    %v4772 = vadd.f32 0.0, %v4771
    %v4773 = vpop.f32.mrf.mxu0
    %4774 = vdwg.mxu0
    %v4775 = vadd.f32 %v4627, %v4737
    %v4776 = vadd.f32 %v4628, %v4742
    %v4777 = vadd.f32 %v4629, %v4747
    %v4778 = vadd.f32 %v4630, %v4752
    %v4779 = vadd.f32 %v4631, %v4757
    %v4780 = vadd.f32 %v4632, %v4762
    %v4781 = vadd.f32 %v4633, %v4767
    %v4782 = vadd.f32 %v4634, %v4772
    %v4783 = vld [vmem:[%s1278 + $0x2] sm:$0xff]
    %v4784 = vld [vmem:[%s1278 + $0x12] sm:$0xff]
    %v4785 = vld [vmem:[%s1278 + $0x22] sm:$0xff]
    %v4786 = vld [vmem:[%s1278 + $0x32] sm:$0xff]
    %v4787 = vld [vmem:[%s1278 + $0x42] sm:$0xff]
    %v4788 = vld [vmem:[%s1278 + $0x52] sm:$0xff]
    %v4789 = vld [vmem:[%s1278 + $0x62] sm:$0xff]
    %v4790 = vld [vmem:[%s1278 + $0x72] sm:$0xff]
    %v4791 = vld [vmem:[%s1585] sm:$0xff]
    %v4792 = vld [vmem:[%s1585 + $0x8] sm:$0xff]
    %v4793 = vld [vmem:[%s1585 + $0x10] sm:$0xff]
    %v4795 = vsel %vm30, %v4783, 0
    %v4798 = vsel %vm30, %v4784, 0
    %v4801 = vsel %vm30, %v4785, 0
    %v4804 = vsel %vm30, %v4786, 0
    %v4807 = vsel %vm30, %v4787, 0
    %v4810 = vsel %vm30, %v4788, 0
    %v4813 = vsel %vm30, %v4789, 0
    %v4816 = vsel %vm30, %v4790, 0
    %4818 = vmatprep.subr.mxu0 0.0
    %4819 = vmatpush1.msra.mxu0 0.0
    %4820 = vmatprep.subr.mxu0 0.0
    %4821 = vmatpush1.msra.mxu0 0.0
    %4822 = vmatprep.subr.mxu0 0.0
    %4823 = vmatpush1.msra.mxu0 0.0
    %4824 = vmatprep.subr.mxu0 0.0
    %4825 = vmatpush1.msra.mxu0 0.0
    %4826 = vmatprep.subr.mxu0 0.0
    %4827 = vmatpush1.msra.mxu0 0.0
    %4828 = vmatprep.subr.mxu0 0.0
    %4829 = vmatpush1.msra.mxu0 0.0
    %4830 = vmatprep.subr.mxu0 0.0
    %4831 = vmatpush1.msra.mxu0 0.0
    %4832 = vmatprep.subr.mxu0 0.0
    %4833 = vmatpush1.msra.mxu0 0.0
    %4834 = vmatprep.subr.mxu0 0.0
    %4835 = vmatpush1.msra.mxu0 0.0
    %4836 = vmatprep.subr.mxu0 0.0
    %4837 = vmatpush1.msra.mxu0 0.0
    %4838 = vmatprep.subr.mxu0 0.0
    %4839 = vmatpush1.msra.mxu0 0.0
    %4840 = vmatprep.subr.mxu0 0.0
    %4841 = vmatpush1.msra.mxu0 0.0
    %4842 = vmatprep.subr.mxu0 0.0
    %4843 = vmatpush1.msra.mxu0 0.0
    %4844 = vmatprep.subr.mxu0 0.0
    %4845 = vmatpush1.msra.mxu0 %v4793
    %4846 = vmatprep.subr.mxu0 0.0
    %4847 = vmatpush1.msra.mxu0 %v4792
    %4848 = vmatprep.subr.mxu0 0.0
    %4849 = vmatpush1.msra.mxu0 %v4791
    %4850 = vmatprep.subr.mxu0 0.0
    %4851 = vmatpush2.msra.mxu0 0.0
    %4852 = vmatprep.subr.mxu0 0.0
    %4853 = vmatpush2.msra.mxu0 0.0
    %4854 = vmatprep.subr.mxu0 0.0
    %4855 = vmatpush2.msra.mxu0 0.0
    %4856 = vmatprep.subr.mxu0 0.0
    %4857 = vmatpush2.msra.mxu0 0.0
    %4858 = vmatprep.subr.mxu0 0.0
    %4859 = vmatpush2.msra.mxu0 0.0
    %4860 = vmatprep.subr.mxu0 0.0
    %4861 = vmatpush2.msra.mxu0 0.0
    %4862 = vmatprep.subr.mxu0 0.0
    %4863 = vmatpush2.msra.mxu0 0.0
    %4864 = vmatprep.subr.mxu0 0.0
    %4865 = vmatpush2.msra.mxu0 0.0
    %4866 = vmatprep.subr.mxu0 0.0
    %4867 = vmatpush2.msra.mxu0 0.0
    %4868 = vmatprep.subr.mxu0 0.0
    %4869 = vmatpush2.msra.mxu0 0.0
    %4870 = vmatprep.subr.mxu0 0.0
    %4871 = vmatpush2.msra.mxu0 0.0
    %4872 = vmatprep.subr.mxu0 0.0
    %4873 = vmatpush2.msra.mxu0 0.0
    %4874 = vmatprep.subr.mxu0 0.0
    %4875 = vmatpush2.msra.mxu0 0.0
    %4876 = vmatprep.subr.mxu0 0.0
    %4877 = vmatpush2.msra.mxu0 0.0
    %4878 = vmatprep.subr.mxu0 0.0
    %4879 = vmatpush2.msra.mxu0 0.0
    %4880 = vmatprep.subr.mxu0 0.0
    %4881 = vmatpush2.msra.mxu0 0.0
    %4882 = vmatprep.mubr.f32.mxu0 0.0
    %4883 = vmatmul.mubr.f32.gmra.mxu0 %v4795
    %v4884 = vpop.f32.mrf.mxu0
    %v4885 = vadd.f32 0.0, %v4884
    %v4886 = vpop.f32.mrf.mxu0
    %4887 = vmatprep.mubr.f32.mxu0 0.0
    %4888 = vmatmul.mubr.f32.gmra.mxu0 %v4798
    %v4889 = vpop.f32.mrf.mxu0
    %v4890 = vadd.f32 0.0, %v4889
    %v4891 = vpop.f32.mrf.mxu0
    %4892 = vmatprep.mubr.f32.mxu0 0.0
    %4893 = vmatmul.mubr.f32.gmra.mxu0 %v4801
    %v4894 = vpop.f32.mrf.mxu0
    %v4895 = vadd.f32 0.0, %v4894
    %v4896 = vpop.f32.mrf.mxu0
    %4897 = vmatprep.mubr.f32.mxu0 0.0
    %4898 = vmatmul.mubr.f32.gmra.mxu0 %v4804
    %v4899 = vpop.f32.mrf.mxu0
    %v4900 = vadd.f32 0.0, %v4899
    %v4901 = vpop.f32.mrf.mxu0
    %4902 = vmatprep.mubr.f32.mxu0 0.0
    %4903 = vmatmul.mubr.f32.gmra.mxu0 %v4807
    %v4904 = vpop.f32.mrf.mxu0
    %v4905 = vadd.f32 0.0, %v4904
    %v4906 = vpop.f32.mrf.mxu0
    %4907 = vmatprep.mubr.f32.mxu0 0.0
    %4908 = vmatmul.mubr.f32.gmra.mxu0 %v4810
    %v4909 = vpop.f32.mrf.mxu0
    %v4910 = vadd.f32 0.0, %v4909
    %v4911 = vpop.f32.mrf.mxu0
    %4912 = vmatprep.mubr.f32.mxu0 0.0
    %4913 = vmatmul.mubr.f32.gmra.mxu0 %v4813
    %v4914 = vpop.f32.mrf.mxu0
    %v4915 = vadd.f32 0.0, %v4914
    %v4916 = vpop.f32.mrf.mxu0
    %4917 = vmatprep.mubr.f32.mxu0 0.0
    %4918 = vmatmul.mubr.f32.gmra.mxu0 %v4816
    %v4919 = vpop.f32.mrf.mxu0
    %v4920 = vadd.f32 0.0, %v4919
    %v4921 = vpop.f32.mrf.mxu0
    %4922 = vdwg.mxu0
    %v4923 = vadd.f32 %v4775, %v4885
    %v4924 = vadd.f32 %v4776, %v4890
    %v4925 = vadd.f32 %v4777, %v4895
    %v4926 = vadd.f32 %v4778, %v4900
    %v4927 = vadd.f32 %v4779, %v4905
    %v4928 = vadd.f32 %v4780, %v4910
    %v4929 = vadd.f32 %v4781, %v4915
    %v4930 = vadd.f32 %v4782, %v4920
    %v4931 = vld [vmem:[%s5] sm:$0x1]
    %v4933 = vlaneseq
    %v4934 = vshrl.u32 %v4933, 7
    %v4935 = vsub.s32 0, %v4934
    %v4936 = vrot.slane %v4931, %v4935
    %v4938 = vadd.f32 %v4923, %v4936
    %v4939 = vadd.f32 %v4924, %v4936
    %v4940 = vadd.f32 %v4925, %v4936
    %v4941 = vadd.f32 %v4926, %v4936
    %v4942 = vadd.f32 %v4927, %v4936
    %v4943 = vadd.f32 %v4928, %v4936
    %v4944 = vadd.f32 %v4929, %v4936
    %v4945 = vadd.f32 %v4930, %v4936
    %v4946 = vmax.f32 %v4938, 0.0
    %v4947 = vmax.f32 %v4939, 0.0
    %v4948 = vmax.f32 %v4940, 0.0
    %v4949 = vmax.f32 %v4941, 0.0
    %v4950 = vmax.f32 %v4942, 0.0
    %v4951 = vmax.f32 %v4943, 0.0
    %v4952 = vmax.f32 %v4944, 0.0
    %v4953 = vmax.f32 %v4945, 0.0
    %4954 = vst.msk [vmem:[%s332 + $0x1] sm:$0xff] %vm1749, %v4946
    %4955 = vst.msk [vmem:[%s332 + $0x11] sm:$0xff] %vm1749, %v4947
    %4956 = vst.msk [vmem:[%s332 + $0x21] sm:$0xff] %vm1749, %v4948
    %4957 = vst.msk [vmem:[%s332 + $0x31] sm:$0xff] %vm1749, %v4949
    %4958 = vst.msk [vmem:[%s332 + $0x41] sm:$0xff] %vm1749, %v4950
    %4959 = vst.msk [vmem:[%s332 + $0x51] sm:$0xff] %vm1749, %v4951
    %4960 = vst.msk [vmem:[%s332 + $0x61] sm:$0xff] %vm1749, %v4952
    %4961 = vst.msk [vmem:[%s332 + $0x71] sm:$0xff] %vm1749, %v4953
    %v4962 = vld [vmem:[#allocation2] sm:$0xff]
    %v4963 = vld [vmem:[#allocation2 + $0x10] sm:$0xff]
    %v4964 = vld [vmem:[#allocation2 + $0x20] sm:$0xff]
    %v4965 = vld [vmem:[#allocation2 + $0x30] sm:$0xff]
    %v4966 = vld [vmem:[#allocation2 + $0x40] sm:$0xff]
    %v4967 = vld [vmem:[#allocation2 + $0x50] sm:$0xff]
    %v4968 = vld [vmem:[#allocation2 + $0x60] sm:$0xff]
    %v4969 = vld [vmem:[#allocation2 + $0x70] sm:$0xff]
    %v4970 = vld [vmem:[%s6] sm:$0xff]
    %v4971 = vld [vmem:[%s6 + $0x8] sm:$0xff]
    %v4972 = vld [vmem:[#allocation2 + $0x1] sm:$0xff]
    %v4973 = vld [vmem:[#allocation2 + $0x11] sm:$0xff]
    %v4974 = vld [vmem:[#allocation2 + $0x21] sm:$0xff]
    %v4975 = vld [vmem:[#allocation2 + $0x31] sm:$0xff]
    %v4976 = vld [vmem:[#allocation2 + $0x41] sm:$0xff]
    %v4977 = vld [vmem:[#allocation2 + $0x51] sm:$0xff]
    %v4978 = vld [vmem:[#allocation2 + $0x61] sm:$0xff]
    %v4979 = vld [vmem:[#allocation2 + $0x71] sm:$0xff]
    %v4980 = vld [vmem:[%s1776] sm:$0xff]
    %v4981 = vld [vmem:[%s1776 + $0x8] sm:$0xff]
    %v4983 = vsel %vm1749, %v4972, 0
    %v4986 = vsel %vm1749, %v4973, 0
    %v4989 = vsel %vm1749, %v4974, 0
    %v4992 = vsel %vm1749, %v4975, 0
    %v4995 = vsel %vm1749, %v4976, 0
    %v4998 = vsel %vm1749, %v4977, 0
    %v5001 = vsel %vm1749, %v4978, 0
    %v5004 = vsel %vm1749, %v4979, 0
    %5006 = vmatprep.subr.mxu0 0.0
    %5007 = vmatpush1.msra.mxu0 0.0
    %5008 = vmatprep.subr.mxu0 0.0
    %5009 = vmatpush1.msra.mxu0 0.0
    %5010 = vmatprep.subr.mxu0 0.0
    %5011 = vmatpush1.msra.mxu0 0.0
    %5012 = vmatprep.subr.mxu0 0.0
    %5013 = vmatpush1.msra.mxu0 0.0
    %5014 = vmatprep.subr.mxu0 0.0
    %5015 = vmatpush1.msra.mxu0 0.0
    %5016 = vmatprep.subr.mxu0 0.0
    %5017 = vmatpush1.msra.mxu0 0.0
    %5018 = vmatprep.subr.mxu0 0.0
    %5019 = vmatpush1.msra.mxu0 0.0
    %5020 = vmatprep.subr.mxu0 0.0
    %5021 = vmatpush1.msra.mxu0 0.0
    %5022 = vmatprep.subr.mxu0 0.0
    %5023 = vmatpush1.msra.mxu0 0.0
    %5024 = vmatprep.subr.mxu0 0.0
    %5025 = vmatpush1.msra.mxu0 0.0
    %5026 = vmatprep.subr.mxu0 0.0
    %5027 = vmatpush1.msra.mxu0 0.0
    %5028 = vmatprep.subr.mxu0 0.0
    %5029 = vmatpush1.msra.mxu0 0.0
    %5030 = vmatprep.subr.mxu0 0.0
    %5031 = vmatpush1.msra.mxu0 0.0
    %5032 = vmatprep.subr.mxu0 0.0
    %5033 = vmatpush1.msra.mxu0 0.0
    %5034 = vmatprep.subr.mxu0 0.0
    %5035 = vmatpush1.msra.mxu0 %v4981
    %5036 = vmatprep.subr.mxu0 0.0
    %5037 = vmatpush1.msra.mxu0 %v4980
    %5038 = vmatprep.subr.mxu0 0.0
    %5039 = vmatpush2.msra.mxu0 0.0
    %5040 = vmatprep.subr.mxu0 0.0
    %5041 = vmatpush2.msra.mxu0 0.0
    %5042 = vmatprep.subr.mxu0 0.0
    %5043 = vmatpush2.msra.mxu0 0.0
    %5044 = vmatprep.subr.mxu0 0.0
    %5045 = vmatpush2.msra.mxu0 0.0
    %5046 = vmatprep.subr.mxu0 0.0
    %5047 = vmatpush2.msra.mxu0 0.0
    %5048 = vmatprep.subr.mxu0 0.0
    %5049 = vmatpush2.msra.mxu0 0.0
    %5050 = vmatprep.subr.mxu0 0.0
    %5051 = vmatpush2.msra.mxu0 0.0
    %5052 = vmatprep.subr.mxu0 0.0
    %5053 = vmatpush2.msra.mxu0 0.0
    %5054 = vmatprep.subr.mxu0 0.0
    %5055 = vmatpush2.msra.mxu0 0.0
    %5056 = vmatprep.subr.mxu0 0.0
    %5057 = vmatpush2.msra.mxu0 0.0
    %5058 = vmatprep.subr.mxu0 0.0
    %5059 = vmatpush2.msra.mxu0 0.0
    %5060 = vmatprep.subr.mxu0 0.0
    %5061 = vmatpush2.msra.mxu0 0.0
    %5062 = vmatprep.subr.mxu0 0.0
    %5063 = vmatpush2.msra.mxu0 0.0
    %5064 = vmatprep.subr.mxu0 0.0
    %5065 = vmatpush2.msra.mxu0 0.0
    %5066 = vmatprep.subr.mxu0 0.0
    %5067 = vmatpush2.msra.mxu0 0.0
    %5068 = vmatprep.subr.mxu0 0.0
    %5069 = vmatpush2.msra.mxu0 0.0
    %5070 = vmatprep.mubr.f32.mxu0 0.0
    %5071 = vmatmul.mubr.f32.gmra.mxu0 %v4983
    %v5072 = vpop.f32.mrf.mxu0
    %v5073 = vadd.f32 0.0, %v5072
    %v5074 = vpop.f32.mrf.mxu0
    %5075 = vmatprep.mubr.f32.mxu0 0.0
    %5076 = vmatmul.mubr.f32.gmra.mxu0 %v4986
    %v5077 = vpop.f32.mrf.mxu0
    %v5078 = vadd.f32 0.0, %v5077
    %v5079 = vpop.f32.mrf.mxu0
    %5080 = vmatprep.mubr.f32.mxu0 0.0
    %5081 = vmatmul.mubr.f32.gmra.mxu0 %v4989
    %v5082 = vpop.f32.mrf.mxu0
    %v5083 = vadd.f32 0.0, %v5082
    %v5084 = vpop.f32.mrf.mxu0
    %5085 = vmatprep.mubr.f32.mxu0 0.0
    %5086 = vmatmul.mubr.f32.gmra.mxu0 %v4992
    %v5087 = vpop.f32.mrf.mxu0
    %v5088 = vadd.f32 0.0, %v5087
    %v5089 = vpop.f32.mrf.mxu0
    %5090 = vmatprep.mubr.f32.mxu0 0.0
    %5091 = vmatmul.mubr.f32.gmra.mxu0 %v4995
    %v5092 = vpop.f32.mrf.mxu0
    %v5093 = vadd.f32 0.0, %v5092
    %v5094 = vpop.f32.mrf.mxu0
    %5095 = vmatprep.mubr.f32.mxu0 0.0
    %5096 = vmatmul.mubr.f32.gmra.mxu0 %v4998
    %v5097 = vpop.f32.mrf.mxu0
    %v5098 = vadd.f32 0.0, %v5097
    %v5099 = vpop.f32.mrf.mxu0
    %5100 = vmatprep.mubr.f32.mxu0 0.0
    %5101 = vmatmul.mubr.f32.gmra.mxu0 %v5001
    %v5102 = vpop.f32.mrf.mxu0
    %v5103 = vadd.f32 0.0, %v5102
    %v5104 = vpop.f32.mrf.mxu0
    %5105 = vmatprep.mubr.f32.mxu0 0.0
    %5106 = vmatmul.mubr.f32.gmra.mxu0 %v5004
    %v5107 = vpop.f32.mrf.mxu0
    %v5108 = vadd.f32 0.0, %v5107
    %v5109 = vpop.f32.mrf.mxu0
    %5110 = vdwg.mxu0
    %v5112 = vsel %vm1749, %v4962, 0
    %v5115 = vsel %vm1749, %v4963, 0
    %v5118 = vsel %vm1749, %v4964, 0
    %v5121 = vsel %vm1749, %v4965, 0
    %v5124 = vsel %vm1749, %v4966, 0
    %v5127 = vsel %vm1749, %v4967, 0
    %v5130 = vsel %vm1749, %v4968, 0
    %v5133 = vsel %vm1749, %v4969, 0
    %5135 = vmatprep.subr.mxu0 0.0
    %5136 = vmatpush1.msra.mxu0 0.0
    %5137 = vmatprep.subr.mxu0 0.0
    %5138 = vmatpush1.msra.mxu0 0.0
    %5139 = vmatprep.subr.mxu0 0.0
    %5140 = vmatpush1.msra.mxu0 0.0
    %5141 = vmatprep.subr.mxu0 0.0
    %5142 = vmatpush1.msra.mxu0 0.0
    %5143 = vmatprep.subr.mxu0 0.0
    %5144 = vmatpush1.msra.mxu0 0.0
    %5145 = vmatprep.subr.mxu0 0.0
    %5146 = vmatpush1.msra.mxu0 0.0
    %5147 = vmatprep.subr.mxu0 0.0
    %5148 = vmatpush1.msra.mxu0 0.0
    %5149 = vmatprep.subr.mxu0 0.0
    %5150 = vmatpush1.msra.mxu0 0.0
    %5151 = vmatprep.subr.mxu0 0.0
    %5152 = vmatpush1.msra.mxu0 0.0
    %5153 = vmatprep.subr.mxu0 0.0
    %5154 = vmatpush1.msra.mxu0 0.0
    %5155 = vmatprep.subr.mxu0 0.0
    %5156 = vmatpush1.msra.mxu0 0.0
    %5157 = vmatprep.subr.mxu0 0.0
    %5158 = vmatpush1.msra.mxu0 0.0
    %5159 = vmatprep.subr.mxu0 0.0
    %5160 = vmatpush1.msra.mxu0 0.0
    %5161 = vmatprep.subr.mxu0 0.0
    %5162 = vmatpush1.msra.mxu0 0.0
    %5163 = vmatprep.subr.mxu0 0.0
    %5164 = vmatpush1.msra.mxu0 %v4971
    %5165 = vmatprep.subr.mxu0 0.0
    %5166 = vmatpush1.msra.mxu0 %v4970
    %5167 = vmatprep.subr.mxu0 0.0
    %5168 = vmatpush2.msra.mxu0 0.0
    %5169 = vmatprep.subr.mxu0 0.0
    %5170 = vmatpush2.msra.mxu0 0.0
    %5171 = vmatprep.subr.mxu0 0.0
    %5172 = vmatpush2.msra.mxu0 0.0
    %5173 = vmatprep.subr.mxu0 0.0
    %5174 = vmatpush2.msra.mxu0 0.0
    %5175 = vmatprep.subr.mxu0 0.0
    %5176 = vmatpush2.msra.mxu0 0.0
    %5177 = vmatprep.subr.mxu0 0.0
    %5178 = vmatpush2.msra.mxu0 0.0
    %5179 = vmatprep.subr.mxu0 0.0
    %5180 = vmatpush2.msra.mxu0 0.0
    %5181 = vmatprep.subr.mxu0 0.0
    %5182 = vmatpush2.msra.mxu0 0.0
    %5183 = vmatprep.subr.mxu0 0.0
    %5184 = vmatpush2.msra.mxu0 0.0
    %5185 = vmatprep.subr.mxu0 0.0
    %5186 = vmatpush2.msra.mxu0 0.0
    %5187 = vmatprep.subr.mxu0 0.0
    %5188 = vmatpush2.msra.mxu0 0.0
    %5189 = vmatprep.subr.mxu0 0.0
    %5190 = vmatpush2.msra.mxu0 0.0
    %5191 = vmatprep.subr.mxu0 0.0
    %5192 = vmatpush2.msra.mxu0 0.0
    %5193 = vmatprep.subr.mxu0 0.0
    %5194 = vmatpush2.msra.mxu0 0.0
    %5195 = vmatprep.subr.mxu0 0.0
    %5196 = vmatpush2.msra.mxu0 0.0
    %5197 = vmatprep.subr.mxu0 0.0
    %5198 = vmatpush2.msra.mxu0 0.0
    %5199 = vmatprep.mubr.f32.mxu0 0.0
    %5200 = vmatmul.mubr.f32.gmra.mxu0 %v5112
    %v5201 = vpop.f32.mrf.mxu0
    %v5202 = vadd.f32 %v5073, %v5201
    %v5203 = vpop.f32.mrf.mxu0
    %5204 = vmatprep.mubr.f32.mxu0 0.0
    %5205 = vmatmul.mubr.f32.gmra.mxu0 %v5115
    %v5206 = vpop.f32.mrf.mxu0
    %v5207 = vadd.f32 %v5078, %v5206
    %v5208 = vpop.f32.mrf.mxu0
    %5209 = vmatprep.mubr.f32.mxu0 0.0
    %5210 = vmatmul.mubr.f32.gmra.mxu0 %v5118
    %v5211 = vpop.f32.mrf.mxu0
    %v5212 = vadd.f32 %v5083, %v5211
    %v5213 = vpop.f32.mrf.mxu0
    %5214 = vmatprep.mubr.f32.mxu0 0.0
    %5215 = vmatmul.mubr.f32.gmra.mxu0 %v5121
    %v5216 = vpop.f32.mrf.mxu0
    %v5217 = vadd.f32 %v5088, %v5216
    %v5218 = vpop.f32.mrf.mxu0
    %5219 = vmatprep.mubr.f32.mxu0 0.0
    %5220 = vmatmul.mubr.f32.gmra.mxu0 %v5124
    %v5221 = vpop.f32.mrf.mxu0
    %v5222 = vadd.f32 %v5093, %v5221
    %v5223 = vpop.f32.mrf.mxu0
    %5224 = vmatprep.mubr.f32.mxu0 0.0
    %5225 = vmatmul.mubr.f32.gmra.mxu0 %v5127
    %v5226 = vpop.f32.mrf.mxu0
    %v5227 = vadd.f32 %v5098, %v5226
    %v5228 = vpop.f32.mrf.mxu0
    %5229 = vmatprep.mubr.f32.mxu0 0.0
    %5230 = vmatmul.mubr.f32.gmra.mxu0 %v5130
    %v5231 = vpop.f32.mrf.mxu0
    %v5232 = vadd.f32 %v5103, %v5231
    %v5233 = vpop.f32.mrf.mxu0
    %5234 = vmatprep.mubr.f32.mxu0 0.0
    %5235 = vmatmul.mubr.f32.gmra.mxu0 %v5133
    %v5236 = vpop.f32.mrf.mxu0
    %v5237 = vadd.f32 %v5108, %v5236
    %v5238 = vpop.f32.mrf.mxu0
    %5239 = vdwg.mxu0
    %v5240 = vld [vmem:[#allocation2 + $0x2] sm:$0xff]
    %v5241 = vld [vmem:[#allocation2 + $0x12] sm:$0xff]
    %v5242 = vld [vmem:[#allocation2 + $0x22] sm:$0xff]
    %v5243 = vld [vmem:[#allocation2 + $0x32] sm:$0xff]
    %v5244 = vld [vmem:[#allocation2 + $0x42] sm:$0xff]
    %v5245 = vld [vmem:[#allocation2 + $0x52] sm:$0xff]
    %v5246 = vld [vmem:[#allocation2 + $0x62] sm:$0xff]
    %v5247 = vld [vmem:[#allocation2 + $0x72] sm:$0xff]
    %v5248 = vld [vmem:[%s2045] sm:$0xff]
    %v5249 = vld [vmem:[%s2045 + $0x8] sm:$0xff]
    %v5251 = vsel %vm1749, %v5240, 0
    %v5254 = vsel %vm1749, %v5241, 0
    %v5257 = vsel %vm1749, %v5242, 0
    %v5260 = vsel %vm1749, %v5243, 0
    %v5263 = vsel %vm1749, %v5244, 0
    %v5266 = vsel %vm1749, %v5245, 0
    %v5269 = vsel %vm1749, %v5246, 0
    %v5272 = vsel %vm1749, %v5247, 0
    %5274 = vmatprep.subr.mxu0 0.0
    %5275 = vmatpush1.msra.mxu0 0.0
    %5276 = vmatprep.subr.mxu0 0.0
    %5277 = vmatpush1.msra.mxu0 0.0
    %5278 = vmatprep.subr.mxu0 0.0
    %5279 = vmatpush1.msra.mxu0 0.0
    %5280 = vmatprep.subr.mxu0 0.0
    %5281 = vmatpush1.msra.mxu0 0.0
    %5282 = vmatprep.subr.mxu0 0.0
    %5283 = vmatpush1.msra.mxu0 0.0
    %5284 = vmatprep.subr.mxu0 0.0
    %5285 = vmatpush1.msra.mxu0 0.0
    %5286 = vmatprep.subr.mxu0 0.0
    %5287 = vmatpush1.msra.mxu0 0.0
    %5288 = vmatprep.subr.mxu0 0.0
    %5289 = vmatpush1.msra.mxu0 0.0
    %5290 = vmatprep.subr.mxu0 0.0
    %5291 = vmatpush1.msra.mxu0 0.0
    %5292 = vmatprep.subr.mxu0 0.0
    %5293 = vmatpush1.msra.mxu0 0.0
    %5294 = vmatprep.subr.mxu0 0.0
    %5295 = vmatpush1.msra.mxu0 0.0
    %5296 = vmatprep.subr.mxu0 0.0
    %5297 = vmatpush1.msra.mxu0 0.0
    %5298 = vmatprep.subr.mxu0 0.0
    %5299 = vmatpush1.msra.mxu0 0.0
    %5300 = vmatprep.subr.mxu0 0.0
    %5301 = vmatpush1.msra.mxu0 0.0
    %5302 = vmatprep.subr.mxu0 0.0
    %5303 = vmatpush1.msra.mxu0 %v5249
    %5304 = vmatprep.subr.mxu0 0.0
    %5305 = vmatpush1.msra.mxu0 %v5248
    %5306 = vmatprep.subr.mxu0 0.0
    %5307 = vmatpush2.msra.mxu0 0.0
    %5308 = vmatprep.subr.mxu0 0.0
    %5309 = vmatpush2.msra.mxu0 0.0
    %5310 = vmatprep.subr.mxu0 0.0
    %5311 = vmatpush2.msra.mxu0 0.0
    %5312 = vmatprep.subr.mxu0 0.0
    %5313 = vmatpush2.msra.mxu0 0.0
    %5314 = vmatprep.subr.mxu0 0.0
    %5315 = vmatpush2.msra.mxu0 0.0
    %5316 = vmatprep.subr.mxu0 0.0
    %5317 = vmatpush2.msra.mxu0 0.0
    %5318 = vmatprep.subr.mxu0 0.0
    %5319 = vmatpush2.msra.mxu0 0.0
    %5320 = vmatprep.subr.mxu0 0.0
    %5321 = vmatpush2.msra.mxu0 0.0
    %5322 = vmatprep.subr.mxu0 0.0
    %5323 = vmatpush2.msra.mxu0 0.0
    %5324 = vmatprep.subr.mxu0 0.0
    %5325 = vmatpush2.msra.mxu0 0.0
    %5326 = vmatprep.subr.mxu0 0.0
    %5327 = vmatpush2.msra.mxu0 0.0
    %5328 = vmatprep.subr.mxu0 0.0
    %5329 = vmatpush2.msra.mxu0 0.0
    %5330 = vmatprep.subr.mxu0 0.0
    %5331 = vmatpush2.msra.mxu0 0.0
    %5332 = vmatprep.subr.mxu0 0.0
    %5333 = vmatpush2.msra.mxu0 0.0
    %5334 = vmatprep.subr.mxu0 0.0
    %5335 = vmatpush2.msra.mxu0 0.0
    %5336 = vmatprep.subr.mxu0 0.0
    %5337 = vmatpush2.msra.mxu0 0.0
    %5338 = vmatprep.mubr.f32.mxu0 0.0
    %5339 = vmatmul.mubr.f32.gmra.mxu0 %v5251
    %v5340 = vpop.f32.mrf.mxu0
    %v5341 = vadd.f32 0.0, %v5340
    %v5342 = vpop.f32.mrf.mxu0
    %5343 = vmatprep.mubr.f32.mxu0 0.0
    %5344 = vmatmul.mubr.f32.gmra.mxu0 %v5254
    %v5345 = vpop.f32.mrf.mxu0
    %v5346 = vadd.f32 0.0, %v5345
    %v5347 = vpop.f32.mrf.mxu0
    %5348 = vmatprep.mubr.f32.mxu0 0.0
    %5349 = vmatmul.mubr.f32.gmra.mxu0 %v5257
    %v5350 = vpop.f32.mrf.mxu0
    %v5351 = vadd.f32 0.0, %v5350
    %v5352 = vpop.f32.mrf.mxu0
    %5353 = vmatprep.mubr.f32.mxu0 0.0
    %5354 = vmatmul.mubr.f32.gmra.mxu0 %v5260
    %v5355 = vpop.f32.mrf.mxu0
    %v5356 = vadd.f32 0.0, %v5355
    %v5357 = vpop.f32.mrf.mxu0
    %5358 = vmatprep.mubr.f32.mxu0 0.0
    %5359 = vmatmul.mubr.f32.gmra.mxu0 %v5263
    %v5360 = vpop.f32.mrf.mxu0
    %v5361 = vadd.f32 0.0, %v5360
    %v5362 = vpop.f32.mrf.mxu0
    %5363 = vmatprep.mubr.f32.mxu0 0.0
    %5364 = vmatmul.mubr.f32.gmra.mxu0 %v5266
    %v5365 = vpop.f32.mrf.mxu0
    %v5366 = vadd.f32 0.0, %v5365
    %v5367 = vpop.f32.mrf.mxu0
    %5368 = vmatprep.mubr.f32.mxu0 0.0
    %5369 = vmatmul.mubr.f32.gmra.mxu0 %v5269
    %v5370 = vpop.f32.mrf.mxu0
    %v5371 = vadd.f32 0.0, %v5370
    %v5372 = vpop.f32.mrf.mxu0
    %5373 = vmatprep.mubr.f32.mxu0 0.0
    %5374 = vmatmul.mubr.f32.gmra.mxu0 %v5272
    %v5375 = vpop.f32.mrf.mxu0
    %v5376 = vadd.f32 0.0, %v5375
    %v5377 = vpop.f32.mrf.mxu0
    %5378 = vdwg.mxu0
    %v5379 = vadd.f32 %v5202, %v5341
    %v5380 = vadd.f32 %v5207, %v5346
    %v5381 = vadd.f32 %v5212, %v5351
    %v5382 = vadd.f32 %v5217, %v5356
    %v5383 = vadd.f32 %v5222, %v5361
    %v5384 = vadd.f32 %v5227, %v5366
    %v5385 = vadd.f32 %v5232, %v5371
    %v5386 = vadd.f32 %v5237, %v5376
    %v5387 = vld [vmem:[%s332] sm:$0xff]
    %v5388 = vld [vmem:[%s332 + $0x10] sm:$0xff]
    %v5389 = vld [vmem:[%s332 + $0x20] sm:$0xff]
    %v5390 = vld [vmem:[%s332 + $0x30] sm:$0xff]
    %v5391 = vld [vmem:[%s332 + $0x40] sm:$0xff]
    %v5392 = vld [vmem:[%s332 + $0x50] sm:$0xff]
    %v5393 = vld [vmem:[%s332 + $0x60] sm:$0xff]
    %v5394 = vld [vmem:[%s332 + $0x70] sm:$0xff]
    %v5395 = vld [vmem:[%s2193] sm:$0xff]
    %v5396 = vld [vmem:[%s2193 + $0x8] sm:$0xff]
    %v5398 = vsel %vm1749, %v5387, 0
    %v5401 = vsel %vm1749, %v5388, 0
    %v5404 = vsel %vm1749, %v5389, 0
    %v5407 = vsel %vm1749, %v5390, 0
    %v5410 = vsel %vm1749, %v5391, 0
    %v5413 = vsel %vm1749, %v5392, 0
    %v5416 = vsel %vm1749, %v5393, 0
    %v5419 = vsel %vm1749, %v5394, 0
    %5421 = vmatprep.subr.mxu0 0.0
    %5422 = vmatpush1.msra.mxu0 0.0
    %5423 = vmatprep.subr.mxu0 0.0
    %5424 = vmatpush1.msra.mxu0 0.0
    %5425 = vmatprep.subr.mxu0 0.0
    %5426 = vmatpush1.msra.mxu0 0.0
    %5427 = vmatprep.subr.mxu0 0.0
    %5428 = vmatpush1.msra.mxu0 0.0
    %5429 = vmatprep.subr.mxu0 0.0
    %5430 = vmatpush1.msra.mxu0 0.0
    %5431 = vmatprep.subr.mxu0 0.0
    %5432 = vmatpush1.msra.mxu0 0.0
    %5433 = vmatprep.subr.mxu0 0.0
    %5434 = vmatpush1.msra.mxu0 0.0
    %5435 = vmatprep.subr.mxu0 0.0
    %5436 = vmatpush1.msra.mxu0 0.0
    %5437 = vmatprep.subr.mxu0 0.0
    %5438 = vmatpush1.msra.mxu0 0.0
    %5439 = vmatprep.subr.mxu0 0.0
    %5440 = vmatpush1.msra.mxu0 0.0
    %5441 = vmatprep.subr.mxu0 0.0
    %5442 = vmatpush1.msra.mxu0 0.0
    %5443 = vmatprep.subr.mxu0 0.0
    %5444 = vmatpush1.msra.mxu0 0.0
    %5445 = vmatprep.subr.mxu0 0.0
    %5446 = vmatpush1.msra.mxu0 0.0
    %5447 = vmatprep.subr.mxu0 0.0
    %5448 = vmatpush1.msra.mxu0 0.0
    %5449 = vmatprep.subr.mxu0 0.0
    %5450 = vmatpush1.msra.mxu0 %v5396
    %5451 = vmatprep.subr.mxu0 0.0
    %5452 = vmatpush1.msra.mxu0 %v5395
    %5453 = vmatprep.subr.mxu0 0.0
    %5454 = vmatpush2.msra.mxu0 0.0
    %5455 = vmatprep.subr.mxu0 0.0
    %5456 = vmatpush2.msra.mxu0 0.0
    %5457 = vmatprep.subr.mxu0 0.0
    %5458 = vmatpush2.msra.mxu0 0.0
    %5459 = vmatprep.subr.mxu0 0.0
    %5460 = vmatpush2.msra.mxu0 0.0
    %5461 = vmatprep.subr.mxu0 0.0
    %5462 = vmatpush2.msra.mxu0 0.0
    %5463 = vmatprep.subr.mxu0 0.0
    %5464 = vmatpush2.msra.mxu0 0.0
    %5465 = vmatprep.subr.mxu0 0.0
    %5466 = vmatpush2.msra.mxu0 0.0
    %5467 = vmatprep.subr.mxu0 0.0
    %5468 = vmatpush2.msra.mxu0 0.0
    %5469 = vmatprep.subr.mxu0 0.0
    %5470 = vmatpush2.msra.mxu0 0.0
    %5471 = vmatprep.subr.mxu0 0.0
    %5472 = vmatpush2.msra.mxu0 0.0
    %5473 = vmatprep.subr.mxu0 0.0
    %5474 = vmatpush2.msra.mxu0 0.0
    %5475 = vmatprep.subr.mxu0 0.0
    %5476 = vmatpush2.msra.mxu0 0.0
    %5477 = vmatprep.subr.mxu0 0.0
    %5478 = vmatpush2.msra.mxu0 0.0
    %5479 = vmatprep.subr.mxu0 0.0
    %5480 = vmatpush2.msra.mxu0 0.0
    %5481 = vmatprep.subr.mxu0 0.0
    %5482 = vmatpush2.msra.mxu0 0.0
    %5483 = vmatprep.subr.mxu0 0.0
    %5484 = vmatpush2.msra.mxu0 0.0
    %5485 = vmatprep.mubr.f32.mxu0 0.0
    %5486 = vmatmul.mubr.f32.gmra.mxu0 %v5398
    %v5487 = vpop.f32.mrf.mxu0
    %v5488 = vadd.f32 0.0, %v5487
    %v5489 = vpop.f32.mrf.mxu0
    %5490 = vmatprep.mubr.f32.mxu0 0.0
    %5491 = vmatmul.mubr.f32.gmra.mxu0 %v5401
    %v5492 = vpop.f32.mrf.mxu0
    %v5493 = vadd.f32 0.0, %v5492
    %v5494 = vpop.f32.mrf.mxu0
    %5495 = vmatprep.mubr.f32.mxu0 0.0
    %5496 = vmatmul.mubr.f32.gmra.mxu0 %v5404
    %v5497 = vpop.f32.mrf.mxu0
    %v5498 = vadd.f32 0.0, %v5497
    %v5499 = vpop.f32.mrf.mxu0
    %5500 = vmatprep.mubr.f32.mxu0 0.0
    %5501 = vmatmul.mubr.f32.gmra.mxu0 %v5407
    %v5502 = vpop.f32.mrf.mxu0
    %v5503 = vadd.f32 0.0, %v5502
    %v5504 = vpop.f32.mrf.mxu0
    %5505 = vmatprep.mubr.f32.mxu0 0.0
    %5506 = vmatmul.mubr.f32.gmra.mxu0 %v5410
    %v5507 = vpop.f32.mrf.mxu0
    %v5508 = vadd.f32 0.0, %v5507
    %v5509 = vpop.f32.mrf.mxu0
    %5510 = vmatprep.mubr.f32.mxu0 0.0
    %5511 = vmatmul.mubr.f32.gmra.mxu0 %v5413
    %v5512 = vpop.f32.mrf.mxu0
    %v5513 = vadd.f32 0.0, %v5512
    %v5514 = vpop.f32.mrf.mxu0
    %5515 = vmatprep.mubr.f32.mxu0 0.0
    %5516 = vmatmul.mubr.f32.gmra.mxu0 %v5416
    %v5517 = vpop.f32.mrf.mxu0
    %v5518 = vadd.f32 0.0, %v5517
    %v5519 = vpop.f32.mrf.mxu0
    %5520 = vmatprep.mubr.f32.mxu0 0.0
    %5521 = vmatmul.mubr.f32.gmra.mxu0 %v5419
    %v5522 = vpop.f32.mrf.mxu0
    %v5523 = vadd.f32 0.0, %v5522
    %v5524 = vpop.f32.mrf.mxu0
    %5525 = vdwg.mxu0
    %v5526 = vadd.f32 %v5379, %v5488
    %v5527 = vadd.f32 %v5380, %v5493
    %v5528 = vadd.f32 %v5381, %v5498
    %v5529 = vadd.f32 %v5382, %v5503
    %v5530 = vadd.f32 %v5383, %v5508
    %v5531 = vadd.f32 %v5384, %v5513
    %v5532 = vadd.f32 %v5385, %v5518
    %v5533 = vadd.f32 %v5386, %v5523
    %v5534 = vld [vmem:[%s332 + $0x1] sm:$0xff]
    %v5535 = vld [vmem:[%s332 + $0x11] sm:$0xff]
    %v5536 = vld [vmem:[%s332 + $0x21] sm:$0xff]
    %v5537 = vld [vmem:[%s332 + $0x31] sm:$0xff]
    %v5538 = vld [vmem:[%s332 + $0x41] sm:$0xff]
    %v5539 = vld [vmem:[%s332 + $0x51] sm:$0xff]
    %v5540 = vld [vmem:[%s332 + $0x61] sm:$0xff]
    %v5541 = vld [vmem:[%s332 + $0x71] sm:$0xff]
    %v5542 = vld [vmem:[%s2341] sm:$0xff]
    %v5543 = vld [vmem:[%s2341 + $0x8] sm:$0xff]
    %v5545 = vsel %vm1749, %v5534, 0
    %v5548 = vsel %vm1749, %v5535, 0
    %v5551 = vsel %vm1749, %v5536, 0
    %v5554 = vsel %vm1749, %v5537, 0
    %v5557 = vsel %vm1749, %v5538, 0
    %v5560 = vsel %vm1749, %v5539, 0
    %v5563 = vsel %vm1749, %v5540, 0
    %v5566 = vsel %vm1749, %v5541, 0
    %5568 = vmatprep.subr.mxu0 0.0
    %5569 = vmatpush1.msra.mxu0 0.0
    %5570 = vmatprep.subr.mxu0 0.0
    %5571 = vmatpush1.msra.mxu0 0.0
    %5572 = vmatprep.subr.mxu0 0.0
    %5573 = vmatpush1.msra.mxu0 0.0
    %5574 = vmatprep.subr.mxu0 0.0
    %5575 = vmatpush1.msra.mxu0 0.0
    %5576 = vmatprep.subr.mxu0 0.0
    %5577 = vmatpush1.msra.mxu0 0.0
    %5578 = vmatprep.subr.mxu0 0.0
    %5579 = vmatpush1.msra.mxu0 0.0
    %5580 = vmatprep.subr.mxu0 0.0
    %5581 = vmatpush1.msra.mxu0 0.0
    %5582 = vmatprep.subr.mxu0 0.0
    %5583 = vmatpush1.msra.mxu0 0.0
    %5584 = vmatprep.subr.mxu0 0.0
    %5585 = vmatpush1.msra.mxu0 0.0
    %5586 = vmatprep.subr.mxu0 0.0
    %5587 = vmatpush1.msra.mxu0 0.0
    %5588 = vmatprep.subr.mxu0 0.0
    %5589 = vmatpush1.msra.mxu0 0.0
    %5590 = vmatprep.subr.mxu0 0.0
    %5591 = vmatpush1.msra.mxu0 0.0
    %5592 = vmatprep.subr.mxu0 0.0
    %5593 = vmatpush1.msra.mxu0 0.0
    %5594 = vmatprep.subr.mxu0 0.0
    %5595 = vmatpush1.msra.mxu0 0.0
    %5596 = vmatprep.subr.mxu0 0.0
    %5597 = vmatpush1.msra.mxu0 %v5543
    %5598 = vmatprep.subr.mxu0 0.0
    %5599 = vmatpush1.msra.mxu0 %v5542
    %5600 = vmatprep.subr.mxu0 0.0
    %5601 = vmatpush2.msra.mxu0 0.0
    %5602 = vmatprep.subr.mxu0 0.0
    %5603 = vmatpush2.msra.mxu0 0.0
    %5604 = vmatprep.subr.mxu0 0.0
    %5605 = vmatpush2.msra.mxu0 0.0
    %5606 = vmatprep.subr.mxu0 0.0
    %5607 = vmatpush2.msra.mxu0 0.0
    %5608 = vmatprep.subr.mxu0 0.0
    %5609 = vmatpush2.msra.mxu0 0.0
    %5610 = vmatprep.subr.mxu0 0.0
    %5611 = vmatpush2.msra.mxu0 0.0
    %5612 = vmatprep.subr.mxu0 0.0
    %5613 = vmatpush2.msra.mxu0 0.0
    %5614 = vmatprep.subr.mxu0 0.0
    %5615 = vmatpush2.msra.mxu0 0.0
    %5616 = vmatprep.subr.mxu0 0.0
    %5617 = vmatpush2.msra.mxu0 0.0
    %5618 = vmatprep.subr.mxu0 0.0
    %5619 = vmatpush2.msra.mxu0 0.0
    %5620 = vmatprep.subr.mxu0 0.0
    %5621 = vmatpush2.msra.mxu0 0.0
    %5622 = vmatprep.subr.mxu0 0.0
    %5623 = vmatpush2.msra.mxu0 0.0
    %5624 = vmatprep.subr.mxu0 0.0
    %5625 = vmatpush2.msra.mxu0 0.0
    %5626 = vmatprep.subr.mxu0 0.0
    %5627 = vmatpush2.msra.mxu0 0.0
    %5628 = vmatprep.subr.mxu0 0.0
    %5629 = vmatpush2.msra.mxu0 0.0
    %5630 = vmatprep.subr.mxu0 0.0
    %5631 = vmatpush2.msra.mxu0 0.0
    %5632 = vmatprep.mubr.f32.mxu0 0.0
    %5633 = vmatmul.mubr.f32.gmra.mxu0 %v5545
    %v5634 = vpop.f32.mrf.mxu0
    %v5635 = vadd.f32 0.0, %v5634
    %v5636 = vpop.f32.mrf.mxu0
    %5637 = vmatprep.mubr.f32.mxu0 0.0
    %5638 = vmatmul.mubr.f32.gmra.mxu0 %v5548
    %v5639 = vpop.f32.mrf.mxu0
    %v5640 = vadd.f32 0.0, %v5639
    %v5641 = vpop.f32.mrf.mxu0
    %5642 = vmatprep.mubr.f32.mxu0 0.0
    %5643 = vmatmul.mubr.f32.gmra.mxu0 %v5551
    %v5644 = vpop.f32.mrf.mxu0
    %v5645 = vadd.f32 0.0, %v5644
    %v5646 = vpop.f32.mrf.mxu0
    %5647 = vmatprep.mubr.f32.mxu0 0.0
    %5648 = vmatmul.mubr.f32.gmra.mxu0 %v5554
    %v5649 = vpop.f32.mrf.mxu0
    %v5650 = vadd.f32 0.0, %v5649
    %v5651 = vpop.f32.mrf.mxu0
    %5652 = vmatprep.mubr.f32.mxu0 0.0
    %5653 = vmatmul.mubr.f32.gmra.mxu0 %v5557
    %v5654 = vpop.f32.mrf.mxu0
    %v5655 = vadd.f32 0.0, %v5654
    %v5656 = vpop.f32.mrf.mxu0
    %5657 = vmatprep.mubr.f32.mxu0 0.0
    %5658 = vmatmul.mubr.f32.gmra.mxu0 %v5560
    %v5659 = vpop.f32.mrf.mxu0
    %v5660 = vadd.f32 0.0, %v5659
    %v5661 = vpop.f32.mrf.mxu0
    %5662 = vmatprep.mubr.f32.mxu0 0.0
    %5663 = vmatmul.mubr.f32.gmra.mxu0 %v5563
    %v5664 = vpop.f32.mrf.mxu0
    %v5665 = vadd.f32 0.0, %v5664
    %v5666 = vpop.f32.mrf.mxu0
    %5667 = vmatprep.mubr.f32.mxu0 0.0
    %5668 = vmatmul.mubr.f32.gmra.mxu0 %v5566
    %v5669 = vpop.f32.mrf.mxu0
    %v5670 = vadd.f32 0.0, %v5669
    %v5671 = vpop.f32.mrf.mxu0
    %5672 = vdwg.mxu0
    %v5673 = vadd.f32 %v5526, %v5635
    %v5674 = vadd.f32 %v5527, %v5640
    %v5675 = vadd.f32 %v5528, %v5645
    %v5676 = vadd.f32 %v5529, %v5650
    %v5677 = vadd.f32 %v5530, %v5655
    %v5678 = vadd.f32 %v5531, %v5660
    %v5679 = vadd.f32 %v5532, %v5665
    %v5680 = vadd.f32 %v5533, %v5670
    %v5681 = vld [vmem:[%s332 + $0x2] sm:$0xff]
    %v5682 = vld [vmem:[%s332 + $0x12] sm:$0xff]
    %v5683 = vld [vmem:[%s332 + $0x22] sm:$0xff]
    %v5684 = vld [vmem:[%s332 + $0x32] sm:$0xff]
    %v5685 = vld [vmem:[%s332 + $0x42] sm:$0xff]
    %v5686 = vld [vmem:[%s332 + $0x52] sm:$0xff]
    %v5687 = vld [vmem:[%s332 + $0x62] sm:$0xff]
    %v5688 = vld [vmem:[%s332 + $0x72] sm:$0xff]
    %v5689 = vld [vmem:[%s2489] sm:$0xff]
    %v5690 = vld [vmem:[%s2489 + $0x8] sm:$0xff]
    %v5692 = vsel %vm1749, %v5681, 0
    %v5695 = vsel %vm1749, %v5682, 0
    %v5698 = vsel %vm1749, %v5683, 0
    %v5701 = vsel %vm1749, %v5684, 0
    %v5704 = vsel %vm1749, %v5685, 0
    %v5707 = vsel %vm1749, %v5686, 0
    %v5710 = vsel %vm1749, %v5687, 0
    %v5713 = vsel %vm1749, %v5688, 0
    %5715 = vmatprep.subr.mxu0 0.0
    %5716 = vmatpush1.msra.mxu0 0.0
    %5717 = vmatprep.subr.mxu0 0.0
    %5718 = vmatpush1.msra.mxu0 0.0
    %5719 = vmatprep.subr.mxu0 0.0
    %5720 = vmatpush1.msra.mxu0 0.0
    %5721 = vmatprep.subr.mxu0 0.0
    %5722 = vmatpush1.msra.mxu0 0.0
    %5723 = vmatprep.subr.mxu0 0.0
    %5724 = vmatpush1.msra.mxu0 0.0
    %5725 = vmatprep.subr.mxu0 0.0
    %5726 = vmatpush1.msra.mxu0 0.0
    %5727 = vmatprep.subr.mxu0 0.0
    %5728 = vmatpush1.msra.mxu0 0.0
    %5729 = vmatprep.subr.mxu0 0.0
    %5730 = vmatpush1.msra.mxu0 0.0
    %5731 = vmatprep.subr.mxu0 0.0
    %5732 = vmatpush1.msra.mxu0 0.0
    %5733 = vmatprep.subr.mxu0 0.0
    %5734 = vmatpush1.msra.mxu0 0.0
    %5735 = vmatprep.subr.mxu0 0.0
    %5736 = vmatpush1.msra.mxu0 0.0
    %5737 = vmatprep.subr.mxu0 0.0
    %5738 = vmatpush1.msra.mxu0 0.0
    %5739 = vmatprep.subr.mxu0 0.0
    %5740 = vmatpush1.msra.mxu0 0.0
    %5741 = vmatprep.subr.mxu0 0.0
    %5742 = vmatpush1.msra.mxu0 0.0
    %5743 = vmatprep.subr.mxu0 0.0
    %5744 = vmatpush1.msra.mxu0 %v5690
    %5745 = vmatprep.subr.mxu0 0.0
    %5746 = vmatpush1.msra.mxu0 %v5689
    %5747 = vmatprep.subr.mxu0 0.0
    %5748 = vmatpush2.msra.mxu0 0.0
    %5749 = vmatprep.subr.mxu0 0.0
    %5750 = vmatpush2.msra.mxu0 0.0
    %5751 = vmatprep.subr.mxu0 0.0
    %5752 = vmatpush2.msra.mxu0 0.0
    %5753 = vmatprep.subr.mxu0 0.0
    %5754 = vmatpush2.msra.mxu0 0.0
    %5755 = vmatprep.subr.mxu0 0.0
    %5756 = vmatpush2.msra.mxu0 0.0
    %5757 = vmatprep.subr.mxu0 0.0
    %5758 = vmatpush2.msra.mxu0 0.0
    %5759 = vmatprep.subr.mxu0 0.0
    %5760 = vmatpush2.msra.mxu0 0.0
    %5761 = vmatprep.subr.mxu0 0.0
    %5762 = vmatpush2.msra.mxu0 0.0
    %5763 = vmatprep.subr.mxu0 0.0
    %5764 = vmatpush2.msra.mxu0 0.0
    %5765 = vmatprep.subr.mxu0 0.0
    %5766 = vmatpush2.msra.mxu0 0.0
    %5767 = vmatprep.subr.mxu0 0.0
    %5768 = vmatpush2.msra.mxu0 0.0
    %5769 = vmatprep.subr.mxu0 0.0
    %5770 = vmatpush2.msra.mxu0 0.0
    %5771 = vmatprep.subr.mxu0 0.0
    %5772 = vmatpush2.msra.mxu0 0.0
    %5773 = vmatprep.subr.mxu0 0.0
    %5774 = vmatpush2.msra.mxu0 0.0
    %5775 = vmatprep.subr.mxu0 0.0
    %5776 = vmatpush2.msra.mxu0 0.0
    %5777 = vmatprep.subr.mxu0 0.0
    %5778 = vmatpush2.msra.mxu0 0.0
    %5779 = vmatprep.mubr.f32.mxu0 0.0
    %5780 = vmatmul.mubr.f32.gmra.mxu0 %v5692
    %v5781 = vpop.f32.mrf.mxu0
    %v5782 = vadd.f32 0.0, %v5781
    %v5783 = vpop.f32.mrf.mxu0
    %5784 = vmatprep.mubr.f32.mxu0 0.0
    %5785 = vmatmul.mubr.f32.gmra.mxu0 %v5695
    %v5786 = vpop.f32.mrf.mxu0
    %v5787 = vadd.f32 0.0, %v5786
    %v5788 = vpop.f32.mrf.mxu0
    %5789 = vmatprep.mubr.f32.mxu0 0.0
    %5790 = vmatmul.mubr.f32.gmra.mxu0 %v5698
    %v5791 = vpop.f32.mrf.mxu0
    %v5792 = vadd.f32 0.0, %v5791
    %v5793 = vpop.f32.mrf.mxu0
    %5794 = vmatprep.mubr.f32.mxu0 0.0
    %5795 = vmatmul.mubr.f32.gmra.mxu0 %v5701
    %v5796 = vpop.f32.mrf.mxu0
    %v5797 = vadd.f32 0.0, %v5796
    %v5798 = vpop.f32.mrf.mxu0
    %5799 = vmatprep.mubr.f32.mxu0 0.0
    %5800 = vmatmul.mubr.f32.gmra.mxu0 %v5704
    %v5801 = vpop.f32.mrf.mxu0
    %v5802 = vadd.f32 0.0, %v5801
    %v5803 = vpop.f32.mrf.mxu0
    %5804 = vmatprep.mubr.f32.mxu0 0.0
    %5805 = vmatmul.mubr.f32.gmra.mxu0 %v5707
    %v5806 = vpop.f32.mrf.mxu0
    %v5807 = vadd.f32 0.0, %v5806
    %v5808 = vpop.f32.mrf.mxu0
    %5809 = vmatprep.mubr.f32.mxu0 0.0
    %5810 = vmatmul.mubr.f32.gmra.mxu0 %v5710
    %v5811 = vpop.f32.mrf.mxu0
    %v5812 = vadd.f32 0.0, %v5811
    %v5813 = vpop.f32.mrf.mxu0
    %5814 = vmatprep.mubr.f32.mxu0 0.0
    %5815 = vmatmul.mubr.f32.gmra.mxu0 %v5713
    %v5816 = vpop.f32.mrf.mxu0
    %v5817 = vadd.f32 0.0, %v5816
    %v5818 = vpop.f32.mrf.mxu0
    %5819 = vdwg.mxu0
    %v5820 = vadd.f32 %v5673, %v5782
    %v5821 = vadd.f32 %v5674, %v5787
    %v5822 = vadd.f32 %v5675, %v5792
    %v5823 = vadd.f32 %v5676, %v5797
    %v5824 = vadd.f32 %v5677, %v5802
    %v5825 = vadd.f32 %v5678, %v5807
    %v5826 = vadd.f32 %v5679, %v5812
    %v5827 = vadd.f32 %v5680, %v5817
    %v5828 = vld [vmem:[%s1278] sm:$0xff]
    %v5829 = vld [vmem:[%s1278 + $0x10] sm:$0xff]
    %v5830 = vld [vmem:[%s1278 + $0x20] sm:$0xff]
    %v5831 = vld [vmem:[%s1278 + $0x30] sm:$0xff]
    %v5832 = vld [vmem:[%s1278 + $0x40] sm:$0xff]
    %v5833 = vld [vmem:[%s1278 + $0x50] sm:$0xff]
    %v5834 = vld [vmem:[%s1278 + $0x60] sm:$0xff]
    %v5835 = vld [vmem:[%s1278 + $0x70] sm:$0xff]
    %v5836 = vld [vmem:[%s2637] sm:$0xff]
    %v5837 = vld [vmem:[%s2637 + $0x8] sm:$0xff]
    %v5839 = vsel %vm1749, %v5828, 0
    %v5842 = vsel %vm1749, %v5829, 0
    %v5845 = vsel %vm1749, %v5830, 0
    %v5848 = vsel %vm1749, %v5831, 0
    %v5851 = vsel %vm1749, %v5832, 0
    %v5854 = vsel %vm1749, %v5833, 0
    %v5857 = vsel %vm1749, %v5834, 0
    %v5860 = vsel %vm1749, %v5835, 0
    %5862 = vmatprep.subr.mxu0 0.0
    %5863 = vmatpush1.msra.mxu0 0.0
    %5864 = vmatprep.subr.mxu0 0.0
    %5865 = vmatpush1.msra.mxu0 0.0
    %5866 = vmatprep.subr.mxu0 0.0
    %5867 = vmatpush1.msra.mxu0 0.0
    %5868 = vmatprep.subr.mxu0 0.0
    %5869 = vmatpush1.msra.mxu0 0.0
    %5870 = vmatprep.subr.mxu0 0.0
    %5871 = vmatpush1.msra.mxu0 0.0
    %5872 = vmatprep.subr.mxu0 0.0
    %5873 = vmatpush1.msra.mxu0 0.0
    %5874 = vmatprep.subr.mxu0 0.0
    %5875 = vmatpush1.msra.mxu0 0.0
    %5876 = vmatprep.subr.mxu0 0.0
    %5877 = vmatpush1.msra.mxu0 0.0
    %5878 = vmatprep.subr.mxu0 0.0
    %5879 = vmatpush1.msra.mxu0 0.0
    %5880 = vmatprep.subr.mxu0 0.0
    %5881 = vmatpush1.msra.mxu0 0.0
    %5882 = vmatprep.subr.mxu0 0.0
    %5883 = vmatpush1.msra.mxu0 0.0
    %5884 = vmatprep.subr.mxu0 0.0
    %5885 = vmatpush1.msra.mxu0 0.0
    %5886 = vmatprep.subr.mxu0 0.0
    %5887 = vmatpush1.msra.mxu0 0.0
    %5888 = vmatprep.subr.mxu0 0.0
    %5889 = vmatpush1.msra.mxu0 0.0
    %5890 = vmatprep.subr.mxu0 0.0
    %5891 = vmatpush1.msra.mxu0 %v5837
    %5892 = vmatprep.subr.mxu0 0.0
    %5893 = vmatpush1.msra.mxu0 %v5836
    %5894 = vmatprep.subr.mxu0 0.0
    %5895 = vmatpush2.msra.mxu0 0.0
    %5896 = vmatprep.subr.mxu0 0.0
    %5897 = vmatpush2.msra.mxu0 0.0
    %5898 = vmatprep.subr.mxu0 0.0
    %5899 = vmatpush2.msra.mxu0 0.0
    %5900 = vmatprep.subr.mxu0 0.0
    %5901 = vmatpush2.msra.mxu0 0.0
    %5902 = vmatprep.subr.mxu0 0.0
    %5903 = vmatpush2.msra.mxu0 0.0
    %5904 = vmatprep.subr.mxu0 0.0
    %5905 = vmatpush2.msra.mxu0 0.0
    %5906 = vmatprep.subr.mxu0 0.0
    %5907 = vmatpush2.msra.mxu0 0.0
    %5908 = vmatprep.subr.mxu0 0.0
    %5909 = vmatpush2.msra.mxu0 0.0
    %5910 = vmatprep.subr.mxu0 0.0
    %5911 = vmatpush2.msra.mxu0 0.0
    %5912 = vmatprep.subr.mxu0 0.0
    %5913 = vmatpush2.msra.mxu0 0.0
    %5914 = vmatprep.subr.mxu0 0.0
    %5915 = vmatpush2.msra.mxu0 0.0
    %5916 = vmatprep.subr.mxu0 0.0
    %5917 = vmatpush2.msra.mxu0 0.0
    %5918 = vmatprep.subr.mxu0 0.0
    %5919 = vmatpush2.msra.mxu0 0.0
    %5920 = vmatprep.subr.mxu0 0.0
    %5921 = vmatpush2.msra.mxu0 0.0
    %5922 = vmatprep.subr.mxu0 0.0
    %5923 = vmatpush2.msra.mxu0 0.0
    %5924 = vmatprep.subr.mxu0 0.0
    %5925 = vmatpush2.msra.mxu0 0.0
    %5926 = vmatprep.mubr.f32.mxu0 0.0
    %5927 = vmatmul.mubr.f32.gmra.mxu0 %v5839
    %v5928 = vpop.f32.mrf.mxu0
    %v5929 = vadd.f32 0.0, %v5928
    %v5930 = vpop.f32.mrf.mxu0
    %5931 = vmatprep.mubr.f32.mxu0 0.0
    %5932 = vmatmul.mubr.f32.gmra.mxu0 %v5842
    %v5933 = vpop.f32.mrf.mxu0
    %v5934 = vadd.f32 0.0, %v5933
    %v5935 = vpop.f32.mrf.mxu0
    %5936 = vmatprep.mubr.f32.mxu0 0.0
    %5937 = vmatmul.mubr.f32.gmra.mxu0 %v5845
    %v5938 = vpop.f32.mrf.mxu0
    %v5939 = vadd.f32 0.0, %v5938
    %v5940 = vpop.f32.mrf.mxu0
    %5941 = vmatprep.mubr.f32.mxu0 0.0
    %5942 = vmatmul.mubr.f32.gmra.mxu0 %v5848
    %v5943 = vpop.f32.mrf.mxu0
    %v5944 = vadd.f32 0.0, %v5943
    %v5945 = vpop.f32.mrf.mxu0
    %5946 = vmatprep.mubr.f32.mxu0 0.0
    %5947 = vmatmul.mubr.f32.gmra.mxu0 %v5851
    %v5948 = vpop.f32.mrf.mxu0
    %v5949 = vadd.f32 0.0, %v5948
    %v5950 = vpop.f32.mrf.mxu0
    %5951 = vmatprep.mubr.f32.mxu0 0.0
    %5952 = vmatmul.mubr.f32.gmra.mxu0 %v5854
    %v5953 = vpop.f32.mrf.mxu0
    %v5954 = vadd.f32 0.0, %v5953
    %v5955 = vpop.f32.mrf.mxu0
    %5956 = vmatprep.mubr.f32.mxu0 0.0
    %5957 = vmatmul.mubr.f32.gmra.mxu0 %v5857
    %v5958 = vpop.f32.mrf.mxu0
    %v5959 = vadd.f32 0.0, %v5958
    %v5960 = vpop.f32.mrf.mxu0
    %5961 = vmatprep.mubr.f32.mxu0 0.0
    %5962 = vmatmul.mubr.f32.gmra.mxu0 %v5860
    %v5963 = vpop.f32.mrf.mxu0
    %v5964 = vadd.f32 0.0, %v5963
    %v5965 = vpop.f32.mrf.mxu0
    %5966 = vdwg.mxu0
    %v5967 = vadd.f32 %v5820, %v5929
    %v5968 = vadd.f32 %v5821, %v5934
    %v5969 = vadd.f32 %v5822, %v5939
    %v5970 = vadd.f32 %v5823, %v5944
    %v5971 = vadd.f32 %v5824, %v5949
    %v5972 = vadd.f32 %v5825, %v5954
    %v5973 = vadd.f32 %v5826, %v5959
    %v5974 = vadd.f32 %v5827, %v5964
    %v5975 = vld [vmem:[%s1278 + $0x1] sm:$0xff]
    %v5976 = vld [vmem:[%s1278 + $0x11] sm:$0xff]
    %v5977 = vld [vmem:[%s1278 + $0x21] sm:$0xff]
    %v5978 = vld [vmem:[%s1278 + $0x31] sm:$0xff]
    %v5979 = vld [vmem:[%s1278 + $0x41] sm:$0xff]
    %v5980 = vld [vmem:[%s1278 + $0x51] sm:$0xff]
    %v5981 = vld [vmem:[%s1278 + $0x61] sm:$0xff]
    %v5982 = vld [vmem:[%s1278 + $0x71] sm:$0xff]
    %v5983 = vld [vmem:[%s2785] sm:$0xff]
    %v5984 = vld [vmem:[%s2785 + $0x8] sm:$0xff]
    %v5986 = vsel %vm1749, %v5975, 0
    %v5989 = vsel %vm1749, %v5976, 0
    %v5992 = vsel %vm1749, %v5977, 0
    %v5995 = vsel %vm1749, %v5978, 0
    %v5998 = vsel %vm1749, %v5979, 0
    %v6001 = vsel %vm1749, %v5980, 0
    %v6004 = vsel %vm1749, %v5981, 0
    %v6007 = vsel %vm1749, %v5982, 0
    %6009 = vmatprep.subr.mxu0 0.0
    %6010 = vmatpush1.msra.mxu0 0.0
    %6011 = vmatprep.subr.mxu0 0.0
    %6012 = vmatpush1.msra.mxu0 0.0
    %6013 = vmatprep.subr.mxu0 0.0
    %6014 = vmatpush1.msra.mxu0 0.0
    %6015 = vmatprep.subr.mxu0 0.0
    %6016 = vmatpush1.msra.mxu0 0.0
    %6017 = vmatprep.subr.mxu0 0.0
    %6018 = vmatpush1.msra.mxu0 0.0
    %6019 = vmatprep.subr.mxu0 0.0
    %6020 = vmatpush1.msra.mxu0 0.0
    %6021 = vmatprep.subr.mxu0 0.0
    %6022 = vmatpush1.msra.mxu0 0.0
    %6023 = vmatprep.subr.mxu0 0.0
    %6024 = vmatpush1.msra.mxu0 0.0
    %6025 = vmatprep.subr.mxu0 0.0
    %6026 = vmatpush1.msra.mxu0 0.0
    %6027 = vmatprep.subr.mxu0 0.0
    %6028 = vmatpush1.msra.mxu0 0.0
    %6029 = vmatprep.subr.mxu0 0.0
    %6030 = vmatpush1.msra.mxu0 0.0
    %6031 = vmatprep.subr.mxu0 0.0
    %6032 = vmatpush1.msra.mxu0 0.0
    %6033 = vmatprep.subr.mxu0 0.0
    %6034 = vmatpush1.msra.mxu0 0.0
    %6035 = vmatprep.subr.mxu0 0.0
    %6036 = vmatpush1.msra.mxu0 0.0
    %6037 = vmatprep.subr.mxu0 0.0
    %6038 = vmatpush1.msra.mxu0 %v5984
    %6039 = vmatprep.subr.mxu0 0.0
    %6040 = vmatpush1.msra.mxu0 %v5983
    %6041 = vmatprep.subr.mxu0 0.0
    %6042 = vmatpush2.msra.mxu0 0.0
    %6043 = vmatprep.subr.mxu0 0.0
    %6044 = vmatpush2.msra.mxu0 0.0
    %6045 = vmatprep.subr.mxu0 0.0
    %6046 = vmatpush2.msra.mxu0 0.0
    %6047 = vmatprep.subr.mxu0 0.0
    %6048 = vmatpush2.msra.mxu0 0.0
    %6049 = vmatprep.subr.mxu0 0.0
    %6050 = vmatpush2.msra.mxu0 0.0
    %6051 = vmatprep.subr.mxu0 0.0
    %6052 = vmatpush2.msra.mxu0 0.0
    %6053 = vmatprep.subr.mxu0 0.0
    %6054 = vmatpush2.msra.mxu0 0.0
    %6055 = vmatprep.subr.mxu0 0.0
    %6056 = vmatpush2.msra.mxu0 0.0
    %6057 = vmatprep.subr.mxu0 0.0
    %6058 = vmatpush2.msra.mxu0 0.0
    %6059 = vmatprep.subr.mxu0 0.0
    %6060 = vmatpush2.msra.mxu0 0.0
    %6061 = vmatprep.subr.mxu0 0.0
    %6062 = vmatpush2.msra.mxu0 0.0
    %6063 = vmatprep.subr.mxu0 0.0
    %6064 = vmatpush2.msra.mxu0 0.0
    %6065 = vmatprep.subr.mxu0 0.0
    %6066 = vmatpush2.msra.mxu0 0.0
    %6067 = vmatprep.subr.mxu0 0.0
    %6068 = vmatpush2.msra.mxu0 0.0
    %6069 = vmatprep.subr.mxu0 0.0
    %6070 = vmatpush2.msra.mxu0 0.0
    %6071 = vmatprep.subr.mxu0 0.0
    %6072 = vmatpush2.msra.mxu0 0.0
    %6073 = vmatprep.mubr.f32.mxu0 0.0
    %6074 = vmatmul.mubr.f32.gmra.mxu0 %v5986
    %v6075 = vpop.f32.mrf.mxu0
    %v6076 = vadd.f32 0.0, %v6075
    %v6077 = vpop.f32.mrf.mxu0
    %6078 = vmatprep.mubr.f32.mxu0 0.0
    %6079 = vmatmul.mubr.f32.gmra.mxu0 %v5989
    %v6080 = vpop.f32.mrf.mxu0
    %v6081 = vadd.f32 0.0, %v6080
    %v6082 = vpop.f32.mrf.mxu0
    %6083 = vmatprep.mubr.f32.mxu0 0.0
    %6084 = vmatmul.mubr.f32.gmra.mxu0 %v5992
    %v6085 = vpop.f32.mrf.mxu0
    %v6086 = vadd.f32 0.0, %v6085
    %v6087 = vpop.f32.mrf.mxu0
    %6088 = vmatprep.mubr.f32.mxu0 0.0
    %6089 = vmatmul.mubr.f32.gmra.mxu0 %v5995
    %v6090 = vpop.f32.mrf.mxu0
    %v6091 = vadd.f32 0.0, %v6090
    %v6092 = vpop.f32.mrf.mxu0
    %6093 = vmatprep.mubr.f32.mxu0 0.0
    %6094 = vmatmul.mubr.f32.gmra.mxu0 %v5998
    %v6095 = vpop.f32.mrf.mxu0
    %v6096 = vadd.f32 0.0, %v6095
    %v6097 = vpop.f32.mrf.mxu0
    %6098 = vmatprep.mubr.f32.mxu0 0.0
    %6099 = vmatmul.mubr.f32.gmra.mxu0 %v6001
    %v6100 = vpop.f32.mrf.mxu0
    %v6101 = vadd.f32 0.0, %v6100
    %v6102 = vpop.f32.mrf.mxu0
    %6103 = vmatprep.mubr.f32.mxu0 0.0
    %6104 = vmatmul.mubr.f32.gmra.mxu0 %v6004
    %v6105 = vpop.f32.mrf.mxu0
    %v6106 = vadd.f32 0.0, %v6105
    %v6107 = vpop.f32.mrf.mxu0
    %6108 = vmatprep.mubr.f32.mxu0 0.0
    %6109 = vmatmul.mubr.f32.gmra.mxu0 %v6007
    %v6110 = vpop.f32.mrf.mxu0
    %v6111 = vadd.f32 0.0, %v6110
    %v6112 = vpop.f32.mrf.mxu0
    %6113 = vdwg.mxu0
    %v6114 = vadd.f32 %v5967, %v6076
    %v6115 = vadd.f32 %v5968, %v6081
    %v6116 = vadd.f32 %v5969, %v6086
    %v6117 = vadd.f32 %v5970, %v6091
    %v6118 = vadd.f32 %v5971, %v6096
    %v6119 = vadd.f32 %v5972, %v6101
    %v6120 = vadd.f32 %v5973, %v6106
    %v6121 = vadd.f32 %v5974, %v6111
    %v6122 = vld [vmem:[%s1278 + $0x2] sm:$0xff]
    %v6123 = vld [vmem:[%s1278 + $0x12] sm:$0xff]
    %v6124 = vld [vmem:[%s1278 + $0x22] sm:$0xff]
    %v6125 = vld [vmem:[%s1278 + $0x32] sm:$0xff]
    %v6126 = vld [vmem:[%s1278 + $0x42] sm:$0xff]
    %v6127 = vld [vmem:[%s1278 + $0x52] sm:$0xff]
    %v6128 = vld [vmem:[%s1278 + $0x62] sm:$0xff]
    %v6129 = vld [vmem:[%s1278 + $0x72] sm:$0xff]
    %v6130 = vld [vmem:[%s2933] sm:$0xff]
    %v6131 = vld [vmem:[%s2933 + $0x8] sm:$0xff]
    %v6133 = vsel %vm1749, %v6122, 0
    %v6136 = vsel %vm1749, %v6123, 0
    %v6139 = vsel %vm1749, %v6124, 0
    %v6142 = vsel %vm1749, %v6125, 0
    %v6145 = vsel %vm1749, %v6126, 0
    %v6148 = vsel %vm1749, %v6127, 0
    %v6151 = vsel %vm1749, %v6128, 0
    %v6154 = vsel %vm1749, %v6129, 0
    %6156 = vmatprep.subr.mxu0 0.0
    %6157 = vmatpush1.msra.mxu0 0.0
    %6158 = vmatprep.subr.mxu0 0.0
    %6159 = vmatpush1.msra.mxu0 0.0
    %6160 = vmatprep.subr.mxu0 0.0
    %6161 = vmatpush1.msra.mxu0 0.0
    %6162 = vmatprep.subr.mxu0 0.0
    %6163 = vmatpush1.msra.mxu0 0.0
    %6164 = vmatprep.subr.mxu0 0.0
    %6165 = vmatpush1.msra.mxu0 0.0
    %6166 = vmatprep.subr.mxu0 0.0
    %6167 = vmatpush1.msra.mxu0 0.0
    %6168 = vmatprep.subr.mxu0 0.0
    %6169 = vmatpush1.msra.mxu0 0.0
    %6170 = vmatprep.subr.mxu0 0.0
    %6171 = vmatpush1.msra.mxu0 0.0
    %6172 = vmatprep.subr.mxu0 0.0
    %6173 = vmatpush1.msra.mxu0 0.0
    %6174 = vmatprep.subr.mxu0 0.0
    %6175 = vmatpush1.msra.mxu0 0.0
    %6176 = vmatprep.subr.mxu0 0.0
    %6177 = vmatpush1.msra.mxu0 0.0
    %6178 = vmatprep.subr.mxu0 0.0
    %6179 = vmatpush1.msra.mxu0 0.0
    %6180 = vmatprep.subr.mxu0 0.0
    %6181 = vmatpush1.msra.mxu0 0.0
    %6182 = vmatprep.subr.mxu0 0.0
    %6183 = vmatpush1.msra.mxu0 0.0
    %6184 = vmatprep.subr.mxu0 0.0
    %6185 = vmatpush1.msra.mxu0 %v6131
    %6186 = vmatprep.subr.mxu0 0.0
    %6187 = vmatpush1.msra.mxu0 %v6130
    %6188 = vmatprep.subr.mxu0 0.0
    %6189 = vmatpush2.msra.mxu0 0.0
    %6190 = vmatprep.subr.mxu0 0.0
    %6191 = vmatpush2.msra.mxu0 0.0
    %6192 = vmatprep.subr.mxu0 0.0
    %6193 = vmatpush2.msra.mxu0 0.0
    %6194 = vmatprep.subr.mxu0 0.0
    %6195 = vmatpush2.msra.mxu0 0.0
    %6196 = vmatprep.subr.mxu0 0.0
    %6197 = vmatpush2.msra.mxu0 0.0
    %6198 = vmatprep.subr.mxu0 0.0
    %6199 = vmatpush2.msra.mxu0 0.0
    %6200 = vmatprep.subr.mxu0 0.0
    %6201 = vmatpush2.msra.mxu0 0.0
    %6202 = vmatprep.subr.mxu0 0.0
    %6203 = vmatpush2.msra.mxu0 0.0
    %6204 = vmatprep.subr.mxu0 0.0
    %6205 = vmatpush2.msra.mxu0 0.0
    %6206 = vmatprep.subr.mxu0 0.0
    %6207 = vmatpush2.msra.mxu0 0.0
    %6208 = vmatprep.subr.mxu0 0.0
    %6209 = vmatpush2.msra.mxu0 0.0
    %6210 = vmatprep.subr.mxu0 0.0
    %6211 = vmatpush2.msra.mxu0 0.0
    %6212 = vmatprep.subr.mxu0 0.0
    %6213 = vmatpush2.msra.mxu0 0.0
    %6214 = vmatprep.subr.mxu0 0.0
    %6215 = vmatpush2.msra.mxu0 0.0
    %6216 = vmatprep.subr.mxu0 0.0
    %6217 = vmatpush2.msra.mxu0 0.0
    %6218 = vmatprep.subr.mxu0 0.0
    %6219 = vmatpush2.msra.mxu0 0.0
    %6220 = vmatprep.mubr.f32.mxu0 0.0
    %6221 = vmatmul.mubr.f32.gmra.mxu0 %v6133
    %v6222 = vpop.f32.mrf.mxu0
    %v6223 = vadd.f32 0.0, %v6222
    %v6224 = vpop.f32.mrf.mxu0
    %6225 = vmatprep.mubr.f32.mxu0 0.0
    %6226 = vmatmul.mubr.f32.gmra.mxu0 %v6136
    %v6227 = vpop.f32.mrf.mxu0
    %v6228 = vadd.f32 0.0, %v6227
    %v6229 = vpop.f32.mrf.mxu0
    %6230 = vmatprep.mubr.f32.mxu0 0.0
    %6231 = vmatmul.mubr.f32.gmra.mxu0 %v6139
    %v6232 = vpop.f32.mrf.mxu0
    %v6233 = vadd.f32 0.0, %v6232
    %v6234 = vpop.f32.mrf.mxu0
    %6235 = vmatprep.mubr.f32.mxu0 0.0
    %6236 = vmatmul.mubr.f32.gmra.mxu0 %v6142
    %v6237 = vpop.f32.mrf.mxu0
    %v6238 = vadd.f32 0.0, %v6237
    %v6239 = vpop.f32.mrf.mxu0
    %6240 = vmatprep.mubr.f32.mxu0 0.0
    %6241 = vmatmul.mubr.f32.gmra.mxu0 %v6145
    %v6242 = vpop.f32.mrf.mxu0
    %v6243 = vadd.f32 0.0, %v6242
    %v6244 = vpop.f32.mrf.mxu0
    %6245 = vmatprep.mubr.f32.mxu0 0.0
    %6246 = vmatmul.mubr.f32.gmra.mxu0 %v6148
    %v6247 = vpop.f32.mrf.mxu0
    %v6248 = vadd.f32 0.0, %v6247
    %v6249 = vpop.f32.mrf.mxu0
    %6250 = vmatprep.mubr.f32.mxu0 0.0
    %6251 = vmatmul.mubr.f32.gmra.mxu0 %v6151
    %v6252 = vpop.f32.mrf.mxu0
    %v6253 = vadd.f32 0.0, %v6252
    %v6254 = vpop.f32.mrf.mxu0
    %6255 = vmatprep.mubr.f32.mxu0 0.0
    %6256 = vmatmul.mubr.f32.gmra.mxu0 %v6154
    %v6257 = vpop.f32.mrf.mxu0
    %v6258 = vadd.f32 0.0, %v6257
    %v6259 = vpop.f32.mrf.mxu0
    %6260 = vdwg.mxu0
    %v6261 = vadd.f32 %v6114, %v6223
    %v6262 = vadd.f32 %v6115, %v6228
    %v6263 = vadd.f32 %v6116, %v6233
    %v6264 = vadd.f32 %v6117, %v6238
    %v6265 = vadd.f32 %v6118, %v6243
    %v6266 = vadd.f32 %v6119, %v6248
    %v6267 = vadd.f32 %v6120, %v6253
    %v6268 = vadd.f32 %v6121, %v6258
    %v6269 = vld [vmem:[%s7] sm:$0x1]
    %v6271 = vlaneseq
    %v6272 = vshrl.u32 %v6271, 7
    %v6273 = vsub.s32 0, %v6272
    %v6274 = vrot.slane %v6269, %v6273
    %v6276 = vadd.f32 %v6261, %v6274
    %v6277 = vadd.f32 %v6262, %v6274
    %v6278 = vadd.f32 %v6263, %v6274
    %v6279 = vadd.f32 %v6264, %v6274
    %v6280 = vadd.f32 %v6265, %v6274
    %v6281 = vadd.f32 %v6266, %v6274
    %v6282 = vadd.f32 %v6267, %v6274
    %v6283 = vadd.f32 %v6268, %v6274
    %v6284 = vsel %vm69, %v3269, 0.0
    %v6285 = vsel %vm69, %v3270, 0.0
    %v6286 = vadd.f32 %v6284, %v6285
    %v6287 = vsel %vm69, %v3271, 0.0
    %v6288 = vadd.f32 %v6286, %v6287
    %v6289 = vsel %vm69, %v3272, 0.0
    %v6290 = vadd.f32 %v6288, %v6289
    %v6291 = vsel %vm69, %v3273, 0.0
    %v6292 = vadd.f32 %v6290, %v6291
    %v6293 = vsel %vm69, %v3274, 0.0
    %v6294 = vadd.f32 %v6292, %v6293
    %v6295 = vsel %vm69, %v3275, 0.0
    %v6296 = vadd.f32 %v6294, %v6295
    %v6297 = vsel %vm69, %v3276, 0.0
    %v6298 = vadd.f32 %v6296, %v6297
    %v6299 = vrot.slane %v6298, 4
    %v6300 = vadd.f32 %v6298, %v6299
    %v6301 = vrot.slane %v6300, 2
    %v6302 = vadd.f32 %v6300, %v6301
    %v6303 = vrot.slane %v6302, 1
    %v6304 = vadd.f32 %v6302, %v6303
    %v6305 = vmax.f32 %v6304, 1.0
    %v6306 = vrcp.pop %v6305
    %v6307 = vmul.f32 1.0, %v6306
    %v6308 = vsel %vm69, %v3278, 0.0
    %v6309 = vsel %vm69, %v3279, 0.0
    %v6310 = vadd.f32 %v6308, %v6309
    %v6311 = vsel %vm69, %v3280, 0.0
    %v6312 = vadd.f32 %v6310, %v6311
    %v6313 = vsel %vm69, %v3281, 0.0
    %v6314 = vadd.f32 %v6312, %v6313
    %v6315 = vsel %vm69, %v3282, 0.0
    %v6316 = vadd.f32 %v6314, %v6315
    %v6317 = vsel %vm69, %v3283, 0.0
    %v6318 = vadd.f32 %v6316, %v6317
    %v6319 = vsel %vm69, %v3284, 0.0
    %v6320 = vadd.f32 %v6318, %v6319
    %v6321 = vsel %vm69, %v3285, 0.0
    %v6322 = vadd.f32 %v6320, %v6321
    %v6323 = vrot.slane %v6322, 4
    %v6324 = vadd.f32 %v6322, %v6323
    %v6325 = vrot.slane %v6324, 2
    %v6326 = vadd.f32 %v6324, %v6325
    %v6327 = vrot.slane %v6326, 1
    %v6328 = vadd.f32 %v6326, %v6327
    %v6329 = vmax.f32 %v6328, 1.0
    %v6330 = vrcp.pop %v6329
    %v6331 = vmul.f32 1.0, %v6330
    %v6332 = vmul.f32 %v3269, %v6307
    %v6333 = vmul.f32 %v3270, %v6307
    %v6334 = vmul.f32 %v3271, %v6307
    %v6335 = vmul.f32 %v3272, %v6307
    %v6336 = vmul.f32 %v3273, %v6307
    %v6337 = vmul.f32 %v3274, %v6307
    %v6338 = vmul.f32 %v3275, %v6307
    %v6339 = vmul.f32 %v3276, %v6307
    %v6340 = vmul.f32 %v3278, %v6331
    %v6341 = vmul.f32 %v3279, %v6331
    %v6342 = vmul.f32 %v3280, %v6331
    %v6343 = vmul.f32 %v3281, %v6331
    %v6344 = vmul.f32 %v3282, %v6331
    %v6345 = vmul.f32 %v3283, %v6331
    %v6346 = vmul.f32 %v3284, %v6331
    %v6347 = vmul.f32 %v3285, %v6331
    %v6348 = vadd.f32 %v6332, %v6340
    %v6349 = vadd.f32 %v6333, %v6341
    %v6350 = vadd.f32 %v6334, %v6342
    %v6351 = vadd.f32 %v6335, %v6343
    %v6352 = vadd.f32 %v6336, %v6344
    %v6353 = vadd.f32 %v6337, %v6345
    %v6354 = vadd.f32 %v6338, %v6346
    %v6355 = vadd.f32 %v6339, %v6347
    %6356 = vxpose.xlu0.b32.start [1/16] %v6348, 128
    %6357 = vxpose.xlu0.b32.cont [2/16] %v6349, 128
    %6358 = vxpose.xlu0.b32.cont [3/16] %v6350, 128
    %6359 = vxpose.xlu0.b32.cont [4/16] %v6351, 128
    %6360 = vxpose.xlu0.b32.cont [5/16] %v6352, 128
    %6361 = vxpose.xlu0.b32.cont [6/16] %v6353, 128
    %6362 = vxpose.xlu0.b32.cont [7/16] %v6354, 128
    %6363 = vxpose.xlu0.b32.cont [8/16] %v6355, 128
    %6364 = vxpose.xlu0.b32.cont [9/16] 0.0, 128
    %6365 = vxpose.xlu0.b32.cont [10/16] 0.0, 128
    %6366 = vxpose.xlu0.b32.cont [11/16] 0.0, 128
    %6367 = vxpose.xlu0.b32.cont [12/16] 0.0, 128
    %6368 = vxpose.xlu0.b32.cont [13/16] 0.0, 128
    %6369 = vxpose.xlu0.b32.cont [14/16] 0.0, 128
    %6370 = vxpose.xlu0.b32.cont [15/16] 0.0, 128
    %6371 = vxpose.xlu0.b32.end [16/16] 0.0, 128
    %v6372 = vpop.trf.xlu0
    %v6373 = vpop.trf.xlu0
    %v6374 = vpop.trf.xlu0
    %v6375 = vpop.trf.xlu0
    %v6376 = vpop.trf.xlu0
    %v6377 = vpop.trf.xlu0
    %v6378 = vpop.trf.xlu0
    %v6379 = vpop.trf.xlu0
    %v6380 = vpop.trf.xlu0
    %v6381 = vpop.trf.xlu0
    %v6382 = vpop.trf.xlu0
    %v6383 = vpop.trf.xlu0
    %v6384 = vpop.trf.xlu0
    %v6385 = vpop.trf.xlu0
    %v6386 = vpop.trf.xlu0
    %v6387 = vpop.trf.xlu0
    %v6389 = vsel %vm3192, %v6372, 0
    %6391 = vmatprep.subr.mxu0 0.0
    %6392 = vmatpush1.msra.mxu0 0.0
    %6393 = vmatprep.subr.mxu0 0.0
    %6394 = vmatpush1.msra.mxu0 0.0
    %6395 = vmatprep.subr.mxu0 0.0
    %6396 = vmatpush1.msra.mxu0 0.0
    %6397 = vmatprep.subr.mxu0 0.0
    %6398 = vmatpush1.msra.mxu0 0.0
    %6399 = vmatprep.subr.mxu0 0.0
    %6400 = vmatpush1.msra.mxu0 0.0
    %6401 = vmatprep.subr.mxu0 0.0
    %6402 = vmatpush1.msra.mxu0 0.0
    %6403 = vmatprep.subr.mxu0 0.0
    %6404 = vmatpush1.msra.mxu0 0.0
    %6405 = vmatprep.subr.mxu0 0.0
    %6406 = vmatpush1.msra.mxu0 0.0
    %6407 = vmatprep.subr.mxu0 0.0
    %6408 = vmatpush1.msra.mxu0 %v6283
    %6409 = vmatprep.subr.mxu0 0.0
    %6410 = vmatpush1.msra.mxu0 %v6282
    %6411 = vmatprep.subr.mxu0 0.0
    %6412 = vmatpush1.msra.mxu0 %v6281
    %6413 = vmatprep.subr.mxu0 0.0
    %6414 = vmatpush1.msra.mxu0 %v6280
    %6415 = vmatprep.subr.mxu0 0.0
    %6416 = vmatpush1.msra.mxu0 %v6279
    %6417 = vmatprep.subr.mxu0 0.0
    %6418 = vmatpush1.msra.mxu0 %v6278
    %6419 = vmatprep.subr.mxu0 0.0
    %6420 = vmatpush1.msra.mxu0 %v6277
    %6421 = vmatprep.subr.mxu0 0.0
    %6422 = vmatpush1.msra.mxu0 %v6276
    %6423 = vmatprep.subr.mxu0 0.0
    %6424 = vmatpush2.msra.mxu0 0.0
    %6425 = vmatprep.subr.mxu0 0.0
    %6426 = vmatpush2.msra.mxu0 0.0
    %6427 = vmatprep.subr.mxu0 0.0
    %6428 = vmatpush2.msra.mxu0 0.0
    %6429 = vmatprep.subr.mxu0 0.0
    %6430 = vmatpush2.msra.mxu0 0.0
    %6431 = vmatprep.subr.mxu0 0.0
    %6432 = vmatpush2.msra.mxu0 0.0
    %6433 = vmatprep.subr.mxu0 0.0
    %6434 = vmatpush2.msra.mxu0 0.0
    %6435 = vmatprep.subr.mxu0 0.0
    %6436 = vmatpush2.msra.mxu0 0.0
    %6437 = vmatprep.subr.mxu0 0.0
    %6438 = vmatpush2.msra.mxu0 0.0
    %6439 = vmatprep.subr.mxu0 0.0
    %6440 = vmatpush2.msra.mxu0 0.0
    %6441 = vmatprep.subr.mxu0 0.0
    %6442 = vmatpush2.msra.mxu0 0.0
    %6443 = vmatprep.subr.mxu0 0.0
    %6444 = vmatpush2.msra.mxu0 0.0
    %6445 = vmatprep.subr.mxu0 0.0
    %6446 = vmatpush2.msra.mxu0 0.0
    %6447 = vmatprep.subr.mxu0 0.0
    %6448 = vmatpush2.msra.mxu0 0.0
    %6449 = vmatprep.subr.mxu0 0.0
    %6450 = vmatpush2.msra.mxu0 0.0
    %6451 = vmatprep.subr.mxu0 0.0
    %6452 = vmatpush2.msra.mxu0 0.0
    %6453 = vmatprep.subr.mxu0 0.0
    %6454 = vmatpush2.msra.mxu0 0.0
    %6455 = vmatprep.mubr.f32.mxu0 0.0
    %6456 = vmatmul.mubr.f32.gmra.mxu0 %v6389
    %v6457 = vpop.f32.mrf.mxu0
    %v6458 = vadd.f32 0.0, %v6457
    %v6459 = vpop.f32.mrf.mxu0
    %6460 = vdwg.mxu0
    %s6461 = scalar_lea.vmem [#allocation3], 4
    %6462 = vst.msk [vmem:[%s6461] sm:$0xf] %vm3266, %v6458
    // Predicated region
    $region34: #{tpu_custom_call.1} parent=1 // pred_check
      _
    $region35: #{tpu_custom_call.1} parent=1 // pred_check_branch
      %6464 = sbr.rel (0) target = $region37
    $region36: #{tpu_custom_call.1} parent=1 // pred_region
      %s6466 = ssub.s32 128, 128
      %6467 = vsyncadd [#allocation4], %s6466
      %s6468 = sshll.u32 [#allocation3], 4
      %s6469 = int_to_ptr.vmem [resolvable:$true] %s6468
      %6474 = dma.vmem_to_hbm [thread:$0]  %s6469, 128, %s8, [#allocation4], 64, 64, 4
    $region37: #{tpu_custom_call.1} parent=1 // pred_fallthru
      _
    // Predicated region
    $region38: #{tpu_custom_call.1} parent=1 // pred_check
      _
    $region39: #{tpu_custom_call.1} parent=1 // pred_check_branch
      %6476 = sbr.rel (0) target = $region41
    $region40: #{tpu_custom_call.1} parent=1 // pred_region
      %6477 = dma.done [#allocation4], 128
    $region41: #{tpu_custom_call.1} parent=1 // pred_fallthru
      _
    %6478 = vsyncpa [#allocation4], 1

</llo_original>
